<compile_context>
chip_gen: v6e
topology: v6e:2x2x1
jax: 0.10.0
libtpu: 0.0.40
codegen_flags: <defaults>
</compile_context>

<pallas_src>
import jax
import jax.numpy as jnp
from jax import lax
from jax.experimental import pallas as pl
from jax.experimental.pallas import tpu as pltpu

MAX_LENGTH = 10
SOS_token = 0
_NEG_INF = -1e30


def attn_decoder_kernel(embgi_ref, wihc_ref, wf_ref, bf_ref, bih_ref,
                        ua_ref, bu_ref, va_ref, bv_ref,
                        enc_ref, h0_ref,
                        logp_ref, hfin_ref, attn_ref):
    Bb, L, H = enc_ref.shape
    V = embgi_ref.shape[0]
    Vp = logp_ref.shape[2]

    emb_gi = embgi_ref[...]          # (V, 3H)     emb @ Wih[:H] (embedding fold)
    Wih_c = wihc_ref[...]            # (H, 3H)     Wih[H:]  (context half)
    Wf = wf_ref[...]                 # (H, 4H+Vp)  [Wa | Whh | Wo_pad]
    Ua = ua_ref[...]                 # (H, H)
    bu = bu_ref[...]                 # (1, H)
    va = va_ref[...]                 # (1, H)      Va as a row
    bv = bv_ref[0, 0]                # scalar from SMEM
    enc = enc_ref[...]               # (Bb, L, H)

    # Hoist bias broadcasts out of the unrolled loop (JAX does not CSE them).
    bf_b = jnp.broadcast_to(bf_ref[...], (Bb, 4 * H + Vp))   # [ba | bhh | bo_pad]
    bih_b = jnp.broadcast_to(bih_ref[...], (Bb, 3 * H))

    # Ua(keys) is step-invariant: one non-batched contraction, hoisted out of
    # the decode loop (no Ua broadcast, no (B*L, H) reshape).
    keys_proj = lax.dot_general(
        enc, Ua, dimension_numbers=(((2,), (0,)), ((), ())),
        preferred_element_type=jnp.float32) + bu               # (Bb, L, H)

    h = h0_ref[:, 0, :]                                        # (Bb, H)
    iota_v = lax.broadcasted_iota(jnp.int32, (Bb, V), 1)
    # initial decoder input = SOS token, represented as a one-hot row
    x_oh = (iota_v == SOS_token).astype(jnp.float32)           # (Bb, V)

    # Prologue: h0 @ [Wa | Whh | Wo_pad]; only the q/gh half is consumed.
    fused = jnp.dot(h, Wf, preferred_element_type=jnp.float32) + bf_b

    for t in range(MAX_LENGTH):                                # static unroll
        q = fused[:, :H]                                       # (Bb, H)
        gh = fused[:, H:4 * H]                                 # (Bb, 3H)

        # --- Bahdanau attention (exact softmax) ---
        e = jnp.tanh(q[:, None, :] + keys_proj)                # (Bb, L, H)
        # score = <e, Va>: VPU multiply + lane reduce (no N=1 MXU matmul).
        scores = jnp.sum(e * va, axis=-1) + bv                 # (Bb, L)
        smax = jnp.max(scores, axis=-1, keepdims=True)
        sexp = jnp.exp(scores - smax)
        weights = sexp / jnp.sum(sexp, axis=-1, keepdims=True)  # (Bb, L)
        context = jnp.sum(weights[:, :, None] * enc, axis=1)    # (Bb, H)

        # --- GRU cell: embedding folded into the input projection ---
        # (dropout == identity in eval mode)
        gi = (jnp.dot(x_oh, emb_gi, preferred_element_type=jnp.float32)
              + jnp.dot(context, Wih_c, preferred_element_type=jnp.float32)
              + bih_b)                                           # (Bb, 3H)
        r = jax.nn.sigmoid(gi[:, 0:H] + gh[:, 0:H])
        z = jax.nn.sigmoid(gi[:, H:2 * H] + gh[:, H:2 * H])
        n = jnp.tanh(gi[:, 2 * H:3 * H] + r * gh[:, 2 * H:3 * H])
        h = (1.0 - z) * n + z * h                                # (Bb, H)

        # --- fused h @ [Wa | Whh | Wo_pad]: one MXU push yields next step's
        #     q/gh AND this step's lane-padded logits ---
        fused = jnp.dot(h, Wf, preferred_element_type=jnp.float32) + bf_b
        logits = fused[:, 4 * H:]                                # (Bb, Vp)
        lmax = jnp.max(logits, axis=-1, keepdims=True)
        lse = jnp.log(jnp.sum(jnp.exp(logits - lmax), axis=-1,
                              keepdims=True)) + lmax

        # Per-step static-index stores (lane-dense logp slab, vregs freed).
        logp_ref[:, t, :] = logits - lse
        attn_ref[:, t, :] = weights

        # Greedy next token (target_tensor=None branch: topk(1)); padded lanes
        # carry a -1e30 bias and can never win the argmax.
        nxt = jnp.argmax(logits, axis=-1)                        # (Bb,)
        x_oh = (iota_v == nxt[:, None]).astype(jnp.float32)

    hfin_ref[:, 0, :] = h


def _default_batch_programs(B):
    # Decode is serial in T but independent across batch: on v7x (2 TCs/chip)
    # split B across cores; on v5e/v6e the extra grid step is pure overhead.
    try:
        kind = jax.devices()[0].device_kind.lower()
    except Exception:
        return 1
    return 2 if ("v7" in kind and B % 2 == 0) else 1


def _rep2d(arr):
    # Replicated full-array VMEM block (same block for every grid program).
    return pl.BlockSpec(arr.shape, lambda i: (0, 0))


def attn_decoder_forward(params, encoder_outputs, encoder_hidden,
                         batch_programs=None):
    B, L, H = encoder_outputs.shape
    V = params["emb"].shape[0]
    Vp = ((V + 127) // 128) * 128              # lane-dense logits width
    if batch_programs is None:
        batch_programs = _default_batch_programs(B)
    assert B % batch_programs == 0
    Bb = B // batch_programs

    # ---- one-time weight prep (exact arithmetic for the embedding fold) ----
    hi = lax.Precision.HIGHEST
    emb_gi = jnp.dot(params["emb"], params["Wih"][:H, :], precision=hi)   # (V, 3H)
    Wih_ctx = params["Wih"][H:, :]                                        # (H, 3H)
    Wo_pad = jnp.concatenate(
        [params["Wo"], jnp.zeros((H, Vp - V), jnp.float32)], axis=1)      # (H, Vp)
    bo_pad = jnp.concatenate(
        [params["bo"], jnp.full((1, Vp - V), _NEG_INF, jnp.float32)], axis=1)
    W_fused = jnp.concatenate([params["Wa"], params["Whh"], Wo_pad], axis=1)   # (H, 4H+Vp)
    b_fused = jnp.concatenate([params["ba"], params["bhh"], bo_pad], axis=1)   # (1, 4H+Vp)
    va_row = params["Va"].reshape(1, H)                                        # (1, H)
    h0 = encoder_hidden.reshape(B, 1, H)       # (1,B,H) -> (B,1,H), same order

    in_specs = [
        _rep2d(emb_gi), _rep2d(Wih_ctx), _rep2d(W_fused), _rep2d(b_fused),
        _rep2d(params["bih"]), _rep2d(params["Ua"]), _rep2d(params["bu"]),
        _rep2d(va_row),
        pl.BlockSpec((1, 1), lambda i: (0, 0),
                     memory_space=pltpu.MemorySpace.SMEM),        # bv scalar
        pl.BlockSpec((Bb, L, H), lambda i: (i, 0, 0)),            # encoder_outputs
        pl.BlockSpec((Bb, 1, H), lambda i: (i, 0, 0)),            # h0
    ]
    out_specs = (
        pl.BlockSpec((Bb, MAX_LENGTH, Vp), lambda i: (i, 0, 0)),  # logp (padded)
        pl.BlockSpec((Bb, 1, H), lambda i: (i, 0, 0)),            # final hidden
        pl.BlockSpec((Bb, MAX_LENGTH, L), lambda i: (i, 0, 0)),   # attention
    )

    logp_pad, hfin, attn = pl.pallas_call(
        attn_decoder_kernel,
        grid=(batch_programs,),
        out_shape=(jax.ShapeDtypeStruct((B, MAX_LENGTH, Vp), jnp.float32),
                   jax.ShapeDtypeStruct((B, 1, H), jnp.float32),
                   jax.ShapeDtypeStruct((B, MAX_LENGTH, L), jnp.float32)),
        in_specs=in_specs,
        out_specs=out_specs,
        compiler_params=pltpu.CompilerParams(
            dimension_semantics=("parallel",)),
    )(emb_gi, Wih_ctx, W_fused, b_fused, params["bih"],
      params["Ua"], params["bu"], va_row, params["bv"],
      encoder_outputs, h0)

    return logp_pad[..., :V], hfin.reshape(1, B, H), attn


def attn_decoder_reference(params, encoder_outputs, encoder_hidden):
    """Pure-JAX reference mirroring the PyTorch forward (greedy, eval mode)."""
    B, L, H = encoder_outputs.shape
    h = encoder_hidden.reshape(B, H)
    x = jnp.zeros((B,), jnp.int32) + SOS_token
    logps, attns = [], []
    keys_proj = encoder_outputs @ params["Ua"] + params["bu"]
    for _ in range(MAX_LENGTH):
        embedded = params["emb"][x]
        q = h @ params["Wa"] + params["ba"]
        e = jnp.tanh(q[:, None, :] + keys_proj)
        scores = (e @ params["Va"])[..., 0] + params["bv"][0, 0]
        weights = jax.nn.softmax(scores, axis=-1)
        context = jnp.einsum("bl,blh->bh", weights, encoder_outputs)
        xin = jnp.concatenate([embedded, context], axis=-1)
        gi = xin @ params["Wih"] + params["bih"]
        gh = h @ params["Whh"] + params["bhh"]
        r = jax.nn.sigmoid(gi[:, :H] + gh[:, :H])
        z = jax.nn.sigmoid(gi[:, H:2 * H] + gh[:, H:2 * H])
        n = jnp.tanh(gi[:, 2 * H:] + r * gh[:, 2 * H:])
        h = (1.0 - z) * n + z * h
        logits = h @ params["Wo"] + params["bo"]
        logps.append(jax.nn.log_softmax(logits, axis=-1))
        attns.append(weights)
        x = jnp.argmax(logits, axis=-1)
    return (jnp.stack(logps, axis=1), h.reshape(1, B, H), jnp.stack(attns, axis=1))


def init_params(key, hidden_size, output_size):
    H, V = hidden_size, output_size
    ks = jax.random.split(key, 12)
    s = 0.1
    return {
        "emb": s * jax.random.normal(ks[0], (V, H), jnp.float32),
        "Wa":  s * jax.random.normal(ks[1], (H, H), jnp.float32),
        "ba":  s * jax.random.normal(ks[2], (1, H), jnp.float32),
        "Ua":  s * jax.random.normal(ks[3], (H, H), jnp.float32),
        "bu":  s * jax.random.normal(ks[4], (1, H), jnp.float32),
        "Va":  s * jax.random.normal(ks[5], (H, 1), jnp.float32),
        "bv":  s * jax.random.normal(ks[6], (1, 1), jnp.float32),
        "Wih": s * jax.random.normal(ks[7], (2 * H, 3 * H), jnp.float32),
        "bih": s * jax.random.normal(ks[8], (1, 3 * H), jnp.float32),
        "Whh": s * jax.random.normal(ks[9], (H, 3 * H), jnp.float32),
        "bhh": s * jax.random.normal(ks[10], (1, 3 * H), jnp.float32),
        "Wo":  s * jax.random.normal(ks[11], (H, V), jnp.float32),
        "bo":  jnp.zeros((1, V), jnp.float32),
    }


if __name__ == "__main__":
    B, H, V, L = 4, 32, 20, MAX_LENGTH
    key = jax.random.PRNGKey(0)
    kp, ke, kh = jax.random.split(key, 3)
    params = init_params(kp, H, V)
    encoder_outputs = jax.random.normal(ke, (B, L, H), jnp.float32)
    encoder_hidden = jax.random.normal(kh, (1, B, H), jnp.float32)

    logp, h_final, attn = attn_decoder_forward(params, encoder_outputs, encoder_hidden)
    jax.block_until_ready((logp, h_final, attn))

    ref_logp, ref_h, ref_attn = attn_decoder_reference(params, encoder_outputs, encoder_hidden)
    assert logp.shape == (B, MAX_LENGTH, V)
    assert h_final.shape == (1, B, H)
    assert attn.shape == (B, MAX_LENGTH, L)
    assert jnp.allclose(logp, ref_logp, rtol=2e-3, atol=2e-3)
    assert jnp.allclose(h_final, ref_h, rtol=2e-3, atol=2e-3)
    assert jnp.allclose(attn, ref_attn, rtol=2e-3, atol=2e-3)

    print("KERNEL_OK")
</pallas_src>

<mosaic_0001>
module attributes {stable_mosaic.version = 11 : i64} {
  func.func @attn_decoder_kernel(%arg0: i32, %arg1: memref<20x96xf32, #tpu.memory_space<vmem>>, %arg2: memref<32x96xf32, #tpu.memory_space<vmem>>, %arg3: memref<32x256xf32, #tpu.memory_space<vmem>>, %arg4: memref<1x256xf32, #tpu.memory_space<vmem>>, %arg5: memref<1x96xf32, #tpu.memory_space<vmem>>, %arg6: memref<32x32xf32, #tpu.memory_space<vmem>>, %arg7: memref<1x32xf32, #tpu.memory_space<vmem>>, %arg8: memref<1x32xf32, #tpu.memory_space<vmem>>, %arg9: memref<1x1xf32, #tpu.memory_space<smem>>, %arg10: memref<4x10x32xf32, #tpu.memory_space<vmem>>, %arg11: memref<4x1x32xf32, #tpu.memory_space<vmem>>, %arg12: memref<4x10x128xf32, #tpu.memory_space<vmem>>, %arg13: memref<4x1x32xf32, #tpu.memory_space<vmem>>, %arg14: memref<4x10x10xf32, #tpu.memory_space<vmem>>) attributes {dimension_semantics = [#tpu.dimension_semantics<parallel>], iteration_bounds = array<i64: 1>, scalar_prefetch = 0 : i64, scratch_operands = 0 : i64, tpu.core_type = #tpu.core_type<tc>, window_params = [{pipeline_mode = #tpu.pipeline_mode<synchronous>, transform_indices = @transform_0, window_bounds = array<i64: 20, 96>}, {pipeline_mode = #tpu.pipeline_mode<synchronous>, transform_indices = @transform_1, window_bounds = array<i64: 32, 96>}, {pipeline_mode = #tpu.pipeline_mode<synchronous>, transform_indices = @transform_2, window_bounds = array<i64: 32, 256>}, {pipeline_mode = #tpu.pipeline_mode<synchronous>, transform_indices = @transform_3, window_bounds = array<i64: 1, 256>}, {pipeline_mode = #tpu.pipeline_mode<synchronous>, transform_indices = @transform_4, window_bounds = array<i64: 1, 96>}, {pipeline_mode = #tpu.pipeline_mode<synchronous>, transform_indices = @transform_5, window_bounds = array<i64: 32, 32>}, {pipeline_mode = #tpu.pipeline_mode<synchronous>, transform_indices = @transform_6, window_bounds = array<i64: 1, 32>}, {pipeline_mode = #tpu.pipeline_mode<synchronous>, transform_indices = @transform_7, window_bounds = array<i64: 1, 32>}, {transform_indices = @transform_8, window_bounds = array<i64: 1, 1>}, {transform_indices = @transform_9, window_bounds = array<i64: 4, 10, 32>}, {transform_indices = @transform_10, window_bounds = array<i64: 4, 1, 32>}, {transform_indices = @transform_11, window_bounds = array<i64: 4, 10, 128>}, {transform_indices = @transform_12, window_bounds = array<i64: 4, 1, 32>}, {transform_indices = @transform_13, window_bounds = array<i64: 4, 10, 10>}]} {
    %c0 = arith.constant 0 : index
    %c0_0 = arith.constant 0 : index
    %0 = vector.load %arg1[%c0, %c0_0] : memref<20x96xf32, #tpu.memory_space<vmem>>, vector<20x96xf32>
    %c0_1 = arith.constant 0 : index
    %c0_2 = arith.constant 0 : index
    %1 = vector.load %arg2[%c0_1, %c0_2] : memref<32x96xf32, #tpu.memory_space<vmem>>, vector<32x96xf32>
    %c0_3 = arith.constant 0 : index
    %c0_4 = arith.constant 0 : index
    %2 = vector.load %arg3[%c0_3, %c0_4] : memref<32x256xf32, #tpu.memory_space<vmem>>, vector<32x256xf32>
    %c0_5 = arith.constant 0 : index
    %c0_6 = arith.constant 0 : index
    %3 = vector.load %arg6[%c0_5, %c0_6] : memref<32x32xf32, #tpu.memory_space<vmem>>, vector<32x32xf32>
    %c0_7 = arith.constant 0 : index
    %c0_8 = arith.constant 0 : index
    %4 = vector.load %arg7[%c0_7, %c0_8] : memref<1x32xf32, #tpu.memory_space<vmem>>, vector<1x32xf32>
    %c0_9 = arith.constant 0 : index
    %c0_10 = arith.constant 0 : index
    %5 = vector.load %arg8[%c0_9, %c0_10] : memref<1x32xf32, #tpu.memory_space<vmem>>, vector<1x32xf32>
    %c0_11 = arith.constant 0 : index
    %c0_12 = arith.constant 0 : index
    %6 = memref.load %arg9[%c0_11, %c0_12] : memref<1x1xf32, #tpu.memory_space<smem>>
    %c0_13 = arith.constant 0 : index
    %c0_14 = arith.constant 0 : index
    %c0_15 = arith.constant 0 : index
    %7 = vector.load %arg10[%c0_13, %c0_14, %c0_15] : memref<4x10x32xf32, #tpu.memory_space<vmem>>, vector<4x10x32xf32>
    %c0_16 = arith.constant 0 : index
    %c0_17 = arith.constant 0 : index
    %8 = vector.load %arg4[%c0_16, %c0_17] : memref<1x256xf32, #tpu.memory_space<vmem>>, vector<1x256xf32>
    %9 = vector.shape_cast %8 : vector<1x256xf32> to vector<1x256xf32>
    %10 = vector.broadcast %9 : vector<1x256xf32> to vector<4x256xf32>
    %c0_18 = arith.constant 0 : index
    %c0_19 = arith.constant 0 : index
    %11 = vector.load %arg5[%c0_18, %c0_19] : memref<1x96xf32, #tpu.memory_space<vmem>>, vector<1x96xf32>
    %12 = vector.shape_cast %11 : vector<1x96xf32> to vector<1x96xf32>
    %13 = vector.broadcast %12 : vector<1x96xf32> to vector<4x96xf32>
    %cst = arith.constant dense<0.000000e+00> : vector<4x10x32xf32>
    %14 = tpu.matmul %7, %3, %cst {dimension_numbers = #tpu.dot_dimension_numbers<[2], [0], [0, 1], [1], [0, 0, 0, 1, 1, 1], [], []>} : vector<4x10x32xf32>, vector<32x32xf32>, vector<4x10x32xf32> -> vector<4x10x32xf32>
    %15 = vector.shape_cast %4 : vector<1x32xf32> to vector<1x1x32xf32>
    %16 = vector.broadcast %15 : vector<1x1x32xf32> to vector<4x10x32xf32>
    %17 = arith.addf %14, %16 : vector<4x10x32xf32>
    %c0_20 = arith.constant 0 : index
    %c0_21 = arith.constant 0 : index
    %c0_22 = arith.constant 0 : index
    %18 = vector.load %arg11[%c0_20, %c0_21, %c0_22] : memref<4x1x32xf32, #tpu.memory_space<vmem>>, vector<4x1x32xf32>
    %19 = vector.shape_cast %18 : vector<4x1x32xf32> to vector<4x32xf32>
    %20 = tpu.iota {dimensions = array<i32: 1>} : vector<4x20xi32>
    %c0_i32 = arith.constant 0 : i32
    %21 = vector.broadcast %c0_i32 : i32 to vector<4x20xi32>
    %22 = arith.cmpi eq, %20, %21 : vector<4x20xi32>
    %23 = arith.extui %22 : vector<4x20xi1> to vector<4x20xi32>
    %24 = arith.sitofp %23 : vector<4x20xi32> to vector<4x20xf32>
    %cst_23 = arith.constant dense<0.000000e+00> : vector<4x256xf32>
    %25 = tpu.matmul %19, %2, %cst_23 {dimension_numbers = #tpu.dot_dimension_numbers<[1], [0], [0], [1], [0, 0, 1, 1], [], []>} : vector<4x32xf32>, vector<32x256xf32>, vector<4x256xf32> -> vector<4x256xf32>
    %26 = arith.addf %25, %10 : vector<4x256xf32>
    %27 = vector.extract_strided_slice %26 {offsets = [0, 0], sizes = [4, 32], strides = [1, 1]} : vector<4x256xf32> to vector<4x32xf32>
    %28 = vector.extract_strided_slice %26 {offsets = [0, 32], sizes = [4, 96], strides = [1, 1]} : vector<4x256xf32> to vector<4x96xf32>
    %29 = vector.shape_cast %27 : vector<4x32xf32> to vector<4x1x32xf32>
    %30 = vector.broadcast %29 : vector<4x1x32xf32> to vector<4x10x32xf32>
    %31 = arith.addf %30, %17 : vector<4x10x32xf32>
    %32 = math.tanh %31 : vector<4x10x32xf32>
    %33 = vector.shape_cast %5 : vector<1x32xf32> to vector<1x1x32xf32>
    %34 = vector.broadcast %33 : vector<1x1x32xf32> to vector<4x10x32xf32>
    %35 = arith.mulf %32, %34 : vector<4x10x32xf32>
    %cst_24 = arith.constant dense<0.000000e+00> : vector<4x10xf32>
    %36 = vector.multi_reduction <add>, %35, %cst_24 [2] : vector<4x10x32xf32> to vector<4x10xf32>
    %37 = vector.broadcast %6 : f32 to vector<4x10xf32>
    %38 = arith.addf %36, %37 : vector<4x10xf32>
    %cst_25 = arith.constant dense<0xFF800000> : vector<4xf32>
    %39 = vector.multi_reduction <maximumf>, %38, %cst_25 [1] : vector<4x10xf32> to vector<4xf32>
    %40 = vector.shape_cast %39 : vector<4xf32> to vector<4x1xf32>
    %41 = vector.broadcast %40 : vector<4x1xf32> to vector<4x10xf32>
    %42 = arith.subf %38, %41 : vector<4x10xf32>
    %43 = math.exp %42 : vector<4x10xf32>
    %cst_26 = arith.constant dense<0.000000e+00> : vector<4xf32>
    %44 = vector.multi_reduction <add>, %43, %cst_26 [1] : vector<4x10xf32> to vector<4xf32>
    %45 = vector.shape_cast %44 : vector<4xf32> to vector<4x1xf32>
    %46 = vector.broadcast %45 : vector<4x1xf32> to vector<4x10xf32>
    %47 = arith.divf %43, %46 : vector<4x10xf32>
    %48 = vector.shape_cast %47 : vector<4x10xf32> to vector<4x10x1xf32>
    %49 = vector.broadcast %48 : vector<4x10x1xf32> to vector<4x10x32xf32>
    %50 = arith.mulf %49, %7 : vector<4x10x32xf32>
    %cst_27 = arith.constant dense<0.000000e+00> : vector<4x32xf32>
    %51 = vector.multi_reduction <add>, %50, %cst_27 [1] : vector<4x10x32xf32> to vector<4x32xf32>
    %cst_28 = arith.constant dense<0.000000e+00> : vector<4x96xf32>
    %52 = tpu.matmul %24, %0, %cst_28 {dimension_numbers = #tpu.dot_dimension_numbers<[1], [0], [0], [1], [0, 0, 1, 1], [], []>} : vector<4x20xf32>, vector<20x96xf32>, vector<4x96xf32> -> vector<4x96xf32>
    %cst_29 = arith.constant dense<0.000000e+00> : vector<4x96xf32>
    %53 = tpu.matmul %51, %1, %cst_29 {dimension_numbers = #tpu.dot_dimension_numbers<[1], [0], [0], [1], [0, 0, 1, 1], [], []>} : vector<4x32xf32>, vector<32x96xf32>, vector<4x96xf32> -> vector<4x96xf32>
    %54 = arith.addf %52, %53 : vector<4x96xf32>
    %55 = arith.addf %54, %13 : vector<4x96xf32>
    %56 = vector.extract_strided_slice %55 {offsets = [0, 0], sizes = [4, 32], strides = [1, 1]} : vector<4x96xf32> to vector<4x32xf32>
    %57 = vector.extract_strided_slice %28 {offsets = [0, 0], sizes = [4, 32], strides = [1, 1]} : vector<4x96xf32> to vector<4x32xf32>
    %58 = arith.addf %56, %57 : vector<4x32xf32>
    %59 = arith.negf %58 : vector<4x32xf32>
    %60 = math.exp %59 : vector<4x32xf32>
    %cst_30 = arith.constant 1.000000e+00 : f32
    %61 = vector.broadcast %cst_30 : f32 to vector<4x32xf32>
    %62 = arith.addf %61, %60 : vector<4x32xf32>
    %63 = arith.divf %61, %62 : vector<4x32xf32>
    %64 = vector.extract_strided_slice %55 {offsets = [0, 32], sizes = [4, 32], strides = [1, 1]} : vector<4x96xf32> to vector<4x32xf32>
    %65 = vector.extract_strided_slice %28 {offsets = [0, 32], sizes = [4, 32], strides = [1, 1]} : vector<4x96xf32> to vector<4x32xf32>
    %66 = arith.addf %64, %65 : vector<4x32xf32>
    %67 = arith.negf %66 : vector<4x32xf32>
    %68 = math.exp %67 : vector<4x32xf32>
    %cst_31 = arith.constant 1.000000e+00 : f32
    %69 = vector.broadcast %cst_31 : f32 to vector<4x32xf32>
    %70 = arith.addf %69, %68 : vector<4x32xf32>
    %71 = arith.divf %69, %70 : vector<4x32xf32>
    %72 = vector.extract_strided_slice %55 {offsets = [0, 64], sizes = [4, 32], strides = [1, 1]} : vector<4x96xf32> to vector<4x32xf32>
    %73 = vector.extract_strided_slice %28 {offsets = [0, 64], sizes = [4, 32], strides = [1, 1]} : vector<4x96xf32> to vector<4x32xf32>
    %74 = arith.mulf %63, %73 : vector<4x32xf32>
    %75 = arith.addf %72, %74 : vector<4x32xf32>
    %76 = math.tanh %75 : vector<4x32xf32>
    %cst_32 = arith.constant 1.000000e+00 : f32
    %77 = vector.broadcast %cst_32 : f32 to vector<4x32xf32>
    %78 = arith.subf %77, %71 : vector<4x32xf32>
    %79 = arith.mulf %78, %76 : vector<4x32xf32>
    %80 = arith.mulf %71, %19 : vector<4x32xf32>
    %81 = arith.addf %79, %80 : vector<4x32xf32>
    %cst_33 = arith.constant dense<0.000000e+00> : vector<4x256xf32>
    %82 = tpu.matmul %81, %2, %cst_33 {dimension_numbers = #tpu.dot_dimension_numbers<[1], [0], [0], [1], [0, 0, 1, 1], [], []>} : vector<4x32xf32>, vector<32x256xf32>, vector<4x256xf32> -> vector<4x256xf32>
    %83 = arith.addf %82, %10 : vector<4x256xf32>
    %84 = vector.extract_strided_slice %83 {offsets = [0, 128], sizes = [4, 128], strides = [1, 1]} : vector<4x256xf32> to vector<4x128xf32>
    %cst_34 = arith.constant dense<0xFF800000> : vector<4xf32>
    %85 = vector.multi_reduction <maximumf>, %84, %cst_34 [1] : vector<4x128xf32> to vector<4xf32>
    %86 = vector.shape_cast %85 : vector<4xf32> to vector<4x1xf32>
    %87 = vector.broadcast %86 : vector<4x1xf32> to vector<4x128xf32>
    %88 = arith.subf %84, %87 : vector<4x128xf32>
    %89 = math.exp %88 : vector<4x128xf32>
    %cst_35 = arith.constant dense<0.000000e+00> : vector<4xf32>
    %90 = vector.multi_reduction <add>, %89, %cst_35 [1] : vector<4x128xf32> to vector<4xf32>
    %91 = vector.shape_cast %90 : vector<4xf32> to vector<4x1xf32>
    %92 = math.log %91 : vector<4x1xf32>
    %93 = arith.addf %92, %86 : vector<4x1xf32>
    %94 = vector.broadcast %93 : vector<4x1xf32> to vector<4x128xf32>
    %95 = arith.subf %84, %94 : vector<4x128xf32>
    %c0_36 = arith.constant 0 : index
    %c0_37 = arith.constant 0 : index
    %c0_38 = arith.constant 0 : index
    %96 = vector.load %arg12[%c0_36, %c0_37, %c0_38] : memref<4x10x128xf32, #tpu.memory_space<vmem>>, vector<4x1x128xf32>
    %97 = vector.shape_cast %96 : vector<4x1x128xf32> to vector<4x128xf32>
    %98 = vector.shape_cast %95 : vector<4x128xf32> to vector<4x1x128xf32>
    tpu.vector_store %arg12[%c0_36, %c0_37, %c0_38], %98 {strides = array<i32>} : memref<4x10x128xf32, #tpu.memory_space<vmem>>, vector<4x1x128xf32>,
    %c0_39 = arith.constant 0 : index
    %c0_40 = arith.constant 0 : index
    %c0_41 = arith.constant 0 : index
    %99 = vector.load %arg14[%c0_39, %c0_40, %c0_41] : memref<4x10x10xf32, #tpu.memory_space<vmem>>, vector<4x1x10xf32>
    %100 = vector.shape_cast %99 : vector<4x1x10xf32> to vector<4x10xf32>
    %101 = vector.shape_cast %47 : vector<4x10xf32> to vector<4x1x10xf32>
    tpu.vector_store %arg14[%c0_39, %c0_40, %c0_41], %101 {strides = array<i32>} : memref<4x10x10xf32, #tpu.memory_space<vmem>>, vector<4x1x10xf32>,
    %102 = tpu.reduce_index %84 {axis = 1 : i32, kind = #tpu.reduction_kind<arg_max>} : vector<4x128xf32> -> vector<4xi32>
    %103 = vector.shape_cast %102 : vector<4xi32> to vector<4x1xi32>
    %104 = vector.broadcast %103 : vector<4x1xi32> to vector<4x20xi32>
    %105 = arith.cmpi eq, %20, %104 : vector<4x20xi32>
    %106 = arith.extui %105 : vector<4x20xi1> to vector<4x20xi32>
    %107 = arith.sitofp %106 : vector<4x20xi32> to vector<4x20xf32>
    %108 = vector.extract_strided_slice %83 {offsets = [0, 0], sizes = [4, 32], strides = [1, 1]} : vector<4x256xf32> to vector<4x32xf32>
    %109 = vector.extract_strided_slice %83 {offsets = [0, 32], sizes = [4, 96], strides = [1, 1]} : vector<4x256xf32> to vector<4x96xf32>
    %110 = vector.shape_cast %108 : vector<4x32xf32> to vector<4x1x32xf32>
    %111 = vector.broadcast %110 : vector<4x1x32xf32> to vector<4x10x32xf32>
    %112 = arith.addf %111, %17 : vector<4x10x32xf32>
    %113 = math.tanh %112 : vector<4x10x32xf32>
    %114 = vector.shape_cast %5 : vector<1x32xf32> to vector<1x1x32xf32>
    %115 = vector.broadcast %114 : vector<1x1x32xf32> to vector<4x10x32xf32>
    %116 = arith.mulf %113, %115 : vector<4x10x32xf32>
    %cst_42 = arith.constant dense<0.000000e+00> : vector<4x10xf32>
    %117 = vector.multi_reduction <add>, %116, %cst_42 [2] : vector<4x10x32xf32> to vector<4x10xf32>
    %118 = vector.broadcast %6 : f32 to vector<4x10xf32>
    %119 = arith.addf %117, %118 : vector<4x10xf32>
    %cst_43 = arith.constant dense<0xFF800000> : vector<4xf32>
    %120 = vector.multi_reduction <maximumf>, %119, %cst_43 [1] : vector<4x10xf32> to vector<4xf32>
    %121 = vector.shape_cast %120 : vector<4xf32> to vector<4x1xf32>
    %122 = vector.broadcast %121 : vector<4x1xf32> to vector<4x10xf32>
    %123 = arith.subf %119, %122 : vector<4x10xf32>
    %124 = math.exp %123 : vector<4x10xf32>
    %cst_44 = arith.constant dense<0.000000e+00> : vector<4xf32>
    %125 = vector.multi_reduction <add>, %124, %cst_44 [1] : vector<4x10xf32> to vector<4xf32>
    %126 = vector.shape_cast %125 : vector<4xf32> to vector<4x1xf32>
    %127 = vector.broadcast %126 : vector<4x1xf32> to vector<4x10xf32>
    %128 = arith.divf %124, %127 : vector<4x10xf32>
    %129 = vector.shape_cast %128 : vector<4x10xf32> to vector<4x10x1xf32>
    %130 = vector.broadcast %129 : vector<4x10x1xf32> to vector<4x10x32xf32>
    %131 = arith.mulf %130, %7 : vector<4x10x32xf32>
    %cst_45 = arith.constant dense<0.000000e+00> : vector<4x32xf32>
    %132 = vector.multi_reduction <add>, %131, %cst_45 [1] : vector<4x10x32xf32> to vector<4x32xf32>
    %cst_46 = arith.constant dense<0.000000e+00> : vector<4x96xf32>
    %133 = tpu.matmul %107, %0, %cst_46 {dimension_numbers = #tpu.dot_dimension_numbers<[1], [0], [0], [1], [0, 0, 1, 1], [], []>} : vector<4x20xf32>, vector<20x96xf32>, vector<4x96xf32> -> vector<4x96xf32>
    %cst_47 = arith.constant dense<0.000000e+00> : vector<4x96xf32>
    %134 = tpu.matmul %132, %1, %cst_47 {dimension_numbers = #tpu.dot_dimension_numbers<[1], [0], [0], [1], [0, 0, 1, 1], [], []>} : vector<4x32xf32>, vector<32x96xf32>, vector<4x96xf32> -> vector<4x96xf32>
    %135 = arith.addf %133, %134 : vector<4x96xf32>
    %136 = arith.addf %135, %13 : vector<4x96xf32>
    %137 = vector.extract_strided_slice %136 {offsets = [0, 0], sizes = [4, 32], strides = [1, 1]} : vector<4x96xf32> to vector<4x32xf32>
    %138 = vector.extract_strided_slice %109 {offsets = [0, 0], sizes = [4, 32], strides = [1, 1]} : vector<4x96xf32> to vector<4x32xf32>
    %139 = arith.addf %137, %138 : vector<4x32xf32>
    %140 = arith.negf %139 : vector<4x32xf32>
    %141 = math.exp %140 : vector<4x32xf32>
    %cst_48 = arith.constant 1.000000e+00 : f32
    %142 = vector.broadcast %cst_48 : f32 to vector<4x32xf32>
    %143 = arith.addf %142, %141 : vector<4x32xf32>
    %144 = arith.divf %142, %143 : vector<4x32xf32>
    %145 = vector.extract_strided_slice %136 {offsets = [0, 32], sizes = [4, 32], strides = [1, 1]} : vector<4x96xf32> to vector<4x32xf32>
    %146 = vector.extract_strided_slice %109 {offsets = [0, 32], sizes = [4, 32], strides = [1, 1]} : vector<4x96xf32> to vector<4x32xf32>
    %147 = arith.addf %145, %146 : vector<4x32xf32>
    %148 = arith.negf %147 : vector<4x32xf32>
    %149 = math.exp %148 : vector<4x32xf32>
    %cst_49 = arith.constant 1.000000e+00 : f32
    %150 = vector.broadcast %cst_49 : f32 to vector<4x32xf32>
    %151 = arith.addf %150, %149 : vector<4x32xf32>
    %152 = arith.divf %150, %151 : vector<4x32xf32>
    %153 = vector.extract_strided_slice %136 {offsets = [0, 64], sizes = [4, 32], strides = [1, 1]} : vector<4x96xf32> to vector<4x32xf32>
    %154 = vector.extract_strided_slice %109 {offsets = [0, 64], sizes = [4, 32], strides = [1, 1]} : vector<4x96xf32> to vector<4x32xf32>
    %155 = arith.mulf %144, %154 : vector<4x32xf32>
    %156 = arith.addf %153, %155 : vector<4x32xf32>
    %157 = math.tanh %156 : vector<4x32xf32>
    %cst_50 = arith.constant 1.000000e+00 : f32
    %158 = vector.broadcast %cst_50 : f32 to vector<4x32xf32>
    %159 = arith.subf %158, %152 : vector<4x32xf32>
    %160 = arith.mulf %159, %157 : vector<4x32xf32>
    %161 = arith.mulf %152, %81 : vector<4x32xf32>
    %162 = arith.addf %160, %161 : vector<4x32xf32>
    %cst_51 = arith.constant dense<0.000000e+00> : vector<4x256xf32>
    %163 = tpu.matmul %162, %2, %cst_51 {dimension_numbers = #tpu.dot_dimension_numbers<[1], [0], [0], [1], [0, 0, 1, 1], [], []>} : vector<4x32xf32>, vector<32x256xf32>, vector<4x256xf32> -> vector<4x256xf32>
    %164 = arith.addf %163, %10 : vector<4x256xf32>
    %165 = vector.extract_strided_slice %164 {offsets = [0, 128], sizes = [4, 128], strides = [1, 1]} : vector<4x256xf32> to vector<4x128xf32>
    %cst_52 = arith.constant dense<0xFF800000> : vector<4xf32>
    %166 = vector.multi_reduction <maximumf>, %165, %cst_52 [1] : vector<4x128xf32> to vector<4xf32>
    %167 = vector.shape_cast %166 : vector<4xf32> to vector<4x1xf32>
    %168 = vector.broadcast %167 : vector<4x1xf32> to vector<4x128xf32>
    %169 = arith.subf %165, %168 : vector<4x128xf32>
    %170 = math.exp %169 : vector<4x128xf32>
    %cst_53 = arith.constant dense<0.000000e+00> : vector<4xf32>
    %171 = vector.multi_reduction <add>, %170, %cst_53 [1] : vector<4x128xf32> to vector<4xf32>
    %172 = vector.shape_cast %171 : vector<4xf32> to vector<4x1xf32>
    %173 = math.log %172 : vector<4x1xf32>
    %174 = arith.addf %173, %167 : vector<4x1xf32>
    %175 = vector.broadcast %174 : vector<4x1xf32> to vector<4x128xf32>
    %176 = arith.subf %165, %175 : vector<4x128xf32>
    %c0_54 = arith.constant 0 : index
    %c1 = arith.constant 1 : index
    %c0_55 = arith.constant 0 : index
    %177 = vector.load %arg12[%c0_54, %c1, %c0_55] : memref<4x10x128xf32, #tpu.memory_space<vmem>>, vector<4x1x128xf32>
    %178 = vector.shape_cast %177 : vector<4x1x128xf32> to vector<4x128xf32>
    %179 = vector.shape_cast %176 : vector<4x128xf32> to vector<4x1x128xf32>
    tpu.vector_store %arg12[%c0_54, %c1, %c0_55], %179 {strides = array<i32>} : memref<4x10x128xf32, #tpu.memory_space<vmem>>, vector<4x1x128xf32>,
    %c0_56 = arith.constant 0 : index
    %c1_57 = arith.constant 1 : index
    %c0_58 = arith.constant 0 : index
    %180 = vector.load %arg14[%c0_56, %c1_57, %c0_58] : memref<4x10x10xf32, #tpu.memory_space<vmem>>, vector<4x1x10xf32>
    %181 = vector.shape_cast %180 : vector<4x1x10xf32> to vector<4x10xf32>
    %182 = vector.shape_cast %128 : vector<4x10xf32> to vector<4x1x10xf32>
    tpu.vector_store %arg14[%c0_56, %c1_57, %c0_58], %182 {strides = array<i32>} : memref<4x10x10xf32, #tpu.memory_space<vmem>>, vector<4x1x10xf32>,
    %183 = tpu.reduce_index %165 {axis = 1 : i32, kind = #tpu.reduction_kind<arg_max>} : vector<4x128xf32> -> vector<4xi32>
    %184 = vector.shape_cast %183 : vector<4xi32> to vector<4x1xi32>
    %185 = vector.broadcast %184 : vector<4x1xi32> to vector<4x20xi32>
    %186 = arith.cmpi eq, %20, %185 : vector<4x20xi32>
    %187 = arith.extui %186 : vector<4x20xi1> to vector<4x20xi32>
    %188 = arith.sitofp %187 : vector<4x20xi32> to vector<4x20xf32>
    %189 = vector.extract_strided_slice %164 {offsets = [0, 0], sizes = [4, 32], strides = [1, 1]} : vector<4x256xf32> to vector<4x32xf32>
    %190 = vector.extract_strided_slice %164 {offsets = [0, 32], sizes = [4, 96], strides = [1, 1]} : vector<4x256xf32> to vector<4x96xf32>
    %191 = vector.shape_cast %189 : vector<4x32xf32> to vector<4x1x32xf32>
    %192 = vector.broadcast %191 : vector<4x1x32xf32> to vector<4x10x32xf32>
    %193 = arith.addf %192, %17 : vector<4x10x32xf32>
    %194 = math.tanh %193 : vector<4x10x32xf32>
    %195 = vector.shape_cast %5 : vector<1x32xf32> to vector<1x1x32xf32>
    %196 = vector.broadcast %195 : vector<1x1x32xf32> to vector<4x10x32xf32>
    %197 = arith.mulf %194, %196 : vector<4x10x32xf32>
    %cst_59 = arith.constant dense<0.000000e+00> : vector<4x10xf32>
    %198 = vector.multi_reduction <add>, %197, %cst_59 [2] : vector<4x10x32xf32> to vector<4x10xf32>
    %199 = vector.broadcast %6 : f32 to vector<4x10xf32>
    %200 = arith.addf %198, %199 : vector<4x10xf32>
    %cst_60 = arith.constant dense<0xFF800000> : vector<4xf32>
    %201 = vector.multi_reduction <maximumf>, %200, %cst_60 [1] : vector<4x10xf32> to vector<4xf32>
    %202 = vector.shape_cast %201 : vector<4xf32> to vector<4x1xf32>
    %203 = vector.broadcast %202 : vector<4x1xf32> to vector<4x10xf32>
    %204 = arith.subf %200, %203 : vector<4x10xf32>
    %205 = math.exp %204 : vector<4x10xf32>
    %cst_61 = arith.constant dense<0.000000e+00> : vector<4xf32>
    %206 = vector.multi_reduction <add>, %205, %cst_61 [1] : vector<4x10xf32> to vector<4xf32>
    %207 = vector.shape_cast %206 : vector<4xf32> to vector<4x1xf32>
    %208 = vector.broadcast %207 : vector<4x1xf32> to vector<4x10xf32>
    %209 = arith.divf %205, %208 : vector<4x10xf32>
    %210 = vector.shape_cast %209 : vector<4x10xf32> to vector<4x10x1xf32>
    %211 = vector.broadcast %210 : vector<4x10x1xf32> to vector<4x10x32xf32>
    %212 = arith.mulf %211, %7 : vector<4x10x32xf32>
    %cst_62 = arith.constant dense<0.000000e+00> : vector<4x32xf32>
    %213 = vector.multi_reduction <add>, %212, %cst_62 [1] : vector<4x10x32xf32> to vector<4x32xf32>
    %cst_63 = arith.constant dense<0.000000e+00> : vector<4x96xf32>
    %214 = tpu.matmul %188, %0, %cst_63 {dimension_numbers = #tpu.dot_dimension_numbers<[1], [0], [0], [1], [0, 0, 1, 1], [], []>} : vector<4x20xf32>, vector<20x96xf32>, vector<4x96xf32> -> vector<4x96xf32>
    %cst_64 = arith.constant dense<0.000000e+00> : vector<4x96xf32>
    %215 = tpu.matmul %213, %1, %cst_64 {dimension_numbers = #tpu.dot_dimension_numbers<[1], [0], [0], [1], [0, 0, 1, 1], [], []>} : vector<4x32xf32>, vector<32x96xf32>, vector<4x96xf32> -> vector<4x96xf32>
    %216 = arith.addf %214, %215 : vector<4x96xf32>
    %217 = arith.addf %216, %13 : vector<4x96xf32>
    %218 = vector.extract_strided_slice %217 {offsets = [0, 0], sizes = [4, 32], strides = [1, 1]} : vector<4x96xf32> to vector<4x32xf32>
    %219 = vector.extract_strided_slice %190 {offsets = [0, 0], sizes = [4, 32], strides = [1, 1]} : vector<4x96xf32> to vector<4x32xf32>
    %220 = arith.addf %218, %219 : vector<4x32xf32>
    %221 = arith.negf %220 : vector<4x32xf32>
    %222 = math.exp %221 : vector<4x32xf32>
    %cst_65 = arith.constant 1.000000e+00 : f32
    %223 = vector.broadcast %cst_65 : f32 to vector<4x32xf32>
    %224 = arith.addf %223, %222 : vector<4x32xf32>
    %225 = arith.divf %223, %224 : vector<4x32xf32>
    %226 = vector.extract_strided_slice %217 {offsets = [0, 32], sizes = [4, 32], strides = [1, 1]} : vector<4x96xf32> to vector<4x32xf32>
    %227 = vector.extract_strided_slice %190 {offsets = [0, 32], sizes = [4, 32], strides = [1, 1]} : vector<4x96xf32> to vector<4x32xf32>
    %228 = arith.addf %226, %227 : vector<4x32xf32>
    %229 = arith.negf %228 : vector<4x32xf32>
    %230 = math.exp %229 : vector<4x32xf32>
    %cst_66 = arith.constant 1.000000e+00 : f32
    %231 = vector.broadcast %cst_66 : f32 to vector<4x32xf32>
    %232 = arith.addf %231, %230 : vector<4x32xf32>
    %233 = arith.divf %231, %232 : vector<4x32xf32>
    %234 = vector.extract_strided_slice %217 {offsets = [0, 64], sizes = [4, 32], strides = [1, 1]} : vector<4x96xf32> to vector<4x32xf32>
    %235 = vector.extract_strided_slice %190 {offsets = [0, 64], sizes = [4, 32], strides = [1, 1]} : vector<4x96xf32> to vector<4x32xf32>
    %236 = arith.mulf %225, %235 : vector<4x32xf32>
    %237 = arith.addf %234, %236 : vector<4x32xf32>
    %238 = math.tanh %237 : vector<4x32xf32>
    %cst_67 = arith.constant 1.000000e+00 : f32
    %239 = vector.broadcast %cst_67 : f32 to vector<4x32xf32>
    %240 = arith.subf %239, %233 : vector<4x32xf32>
    %241 = arith.mulf %240, %238 : vector<4x32xf32>
    %242 = arith.mulf %233, %162 : vector<4x32xf32>
    %243 = arith.addf %241, %242 : vector<4x32xf32>
    %cst_68 = arith.constant dense<0.000000e+00> : vector<4x256xf32>
    %244 = tpu.matmul %243, %2, %cst_68 {dimension_numbers = #tpu.dot_dimension_numbers<[1], [0], [0], [1], [0, 0, 1, 1], [], []>} : vector<4x32xf32>, vector<32x256xf32>, vector<4x256xf32> -> vector<4x256xf32>
    %245 = arith.addf %244, %10 : vector<4x256xf32>
    %246 = vector.extract_strided_slice %245 {offsets = [0, 128], sizes = [4, 128], strides = [1, 1]} : vector<4x256xf32> to vector<4x128xf32>
    %cst_69 = arith.constant dense<0xFF800000> : vector<4xf32>
    %247 = vector.multi_reduction <maximumf>, %246, %cst_69 [1] : vector<4x128xf32> to vector<4xf32>
    %248 = vector.shape_cast %247 : vector<4xf32> to vector<4x1xf32>
    %249 = vector.broadcast %248 : vector<4x1xf32> to vector<4x128xf32>
    %250 = arith.subf %246, %249 : vector<4x128xf32>
    %251 = math.exp %250 : vector<4x128xf32>
    %cst_70 = arith.constant dense<0.000000e+00> : vector<4xf32>
    %252 = vector.multi_reduction <add>, %251, %cst_70 [1] : vector<4x128xf32> to vector<4xf32>
    %253 = vector.shape_cast %252 : vector<4xf32> to vector<4x1xf32>
    %254 = math.log %253 : vector<4x1xf32>
    %255 = arith.addf %254, %248 : vector<4x1xf32>
    %256 = vector.broadcast %255 : vector<4x1xf32> to vector<4x128xf32>
    %257 = arith.subf %246, %256 : vector<4x128xf32>
    %c0_71 = arith.constant 0 : index
    %c2 = arith.constant 2 : index
    %c0_72 = arith.constant 0 : index
    %258 = vector.load %arg12[%c0_71, %c2, %c0_72] : memref<4x10x128xf32, #tpu.memory_space<vmem>>, vector<4x1x128xf32>
    %259 = vector.shape_cast %258 : vector<4x1x128xf32> to vector<4x128xf32>
    %260 = vector.shape_cast %257 : vector<4x128xf32> to vector<4x1x128xf32>
    tpu.vector_store %arg12[%c0_71, %c2, %c0_72], %260 {strides = array<i32>} : memref<4x10x128xf32, #tpu.memory_space<vmem>>, vector<4x1x128xf32>,
    %c0_73 = arith.constant 0 : index
    %c2_74 = arith.constant 2 : index
    %c0_75 = arith.constant 0 : index
    %261 = vector.load %arg14[%c0_73, %c2_74, %c0_75] : memref<4x10x10xf32, #tpu.memory_space<vmem>>, vector<4x1x10xf32>
    %262 = vector.shape_cast %261 : vector<4x1x10xf32> to vector<4x10xf32>
    %263 = vector.shape_cast %209 : vector<4x10xf32> to vector<4x1x10xf32>
    tpu.vector_store %arg14[%c0_73, %c2_74, %c0_75], %263 {strides = array<i32>} : memref<4x10x10xf32, #tpu.memory_space<vmem>>, vector<4x1x10xf32>,
    %264 = tpu.reduce_index %246 {axis = 1 : i32, kind = #tpu.reduction_kind<arg_max>} : vector<4x128xf32> -> vector<4xi32>
    %265 = vector.shape_cast %264 : vector<4xi32> to vector<4x1xi32>
    %266 = vector.broadcast %265 : vector<4x1xi32> to vector<4x20xi32>
    %267 = arith.cmpi eq, %20, %266 : vector<4x20xi32>
    %268 = arith.extui %267 : vector<4x20xi1> to vector<4x20xi32>
    %269 = arith.sitofp %268 : vector<4x20xi32> to vector<4x20xf32>
    %270 = vector.extract_strided_slice %245 {offsets = [0, 0], sizes = [4, 32], strides = [1, 1]} : vector<4x256xf32> to vector<4x32xf32>
    %271 = vector.extract_strided_slice %245 {offsets = [0, 32], sizes = [4, 96], strides = [1, 1]} : vector<4x256xf32> to vector<4x96xf32>
    %272 = vector.shape_cast %270 : vector<4x32xf32> to vector<4x1x32xf32>
    %273 = vector.broadcast %272 : vector<4x1x32xf32> to vector<4x10x32xf32>
    %274 = arith.addf %273, %17 : vector<4x10x32xf32>
    %275 = math.tanh %274 : vector<4x10x32xf32>
    %276 = vector.shape_cast %5 : vector<1x32xf32> to vector<1x1x32xf32>
    %277 = vector.broadcast %276 : vector<1x1x32xf32> to vector<4x10x32xf32>
    %278 = arith.mulf %275, %277 : vector<4x10x32xf32>
    %cst_76 = arith.constant dense<0.000000e+00> : vector<4x10xf32>
    %279 = vector.multi_reduction <add>, %278, %cst_76 [2] : vector<4x10x32xf32> to vector<4x10xf32>
    %280 = vector.broadcast %6 : f32 to vector<4x10xf32>
    %281 = arith.addf %279, %280 : vector<4x10xf32>
    %cst_77 = arith.constant dense<0xFF800000> : vector<4xf32>
    %282 = vector.multi_reduction <maximumf>, %281, %cst_77 [1] : vector<4x10xf32> to vector<4xf32>
    %283 = vector.shape_cast %282 : vector<4xf32> to vector<4x1xf32>
    %284 = vector.broadcast %283 : vector<4x1xf32> to vector<4x10xf32>
    %285 = arith.subf %281, %284 : vector<4x10xf32>
    %286 = math.exp %285 : vector<4x10xf32>
    %cst_78 = arith.constant dense<0.000000e+00> : vector<4xf32>
    %287 = vector.multi_reduction <add>, %286, %cst_78 [1] : vector<4x10xf32> to vector<4xf32>
    %288 = vector.shape_cast %287 : vector<4xf32> to vector<4x1xf32>
    %289 = vector.broadcast %288 : vector<4x1xf32> to vector<4x10xf32>
    %290 = arith.divf %286, %289 : vector<4x10xf32>
    %291 = vector.shape_cast %290 : vector<4x10xf32> to vector<4x10x1xf32>
    %292 = vector.broadcast %291 : vector<4x10x1xf32> to vector<4x10x32xf32>
    %293 = arith.mulf %292, %7 : vector<4x10x32xf32>
    %cst_79 = arith.constant dense<0.000000e+00> : vector<4x32xf32>
    %294 = vector.multi_reduction <add>, %293, %cst_79 [1] : vector<4x10x32xf32> to vector<4x32xf32>
    %cst_80 = arith.constant dense<0.000000e+00> : vector<4x96xf32>
    %295 = tpu.matmul %269, %0, %cst_80 {dimension_numbers = #tpu.dot_dimension_numbers<[1], [0], [0], [1], [0, 0, 1, 1], [], []>} : vector<4x20xf32>, vector<20x96xf32>, vector<4x96xf32> -> vector<4x96xf32>
    %cst_81 = arith.constant dense<0.000000e+00> : vector<4x96xf32>
    %296 = tpu.matmul %294, %1, %cst_81 {dimension_numbers = #tpu.dot_dimension_numbers<[1], [0], [0], [1], [0, 0, 1, 1], [], []>} : vector<4x32xf32>, vector<32x96xf32>, vector<4x96xf32> -> vector<4x96xf32>
    %297 = arith.addf %295, %296 : vector<4x96xf32>
    %298 = arith.addf %297, %13 : vector<4x96xf32>
    %299 = vector.extract_strided_slice %298 {offsets = [0, 0], sizes = [4, 32], strides = [1, 1]} : vector<4x96xf32> to vector<4x32xf32>
    %300 = vector.extract_strided_slice %271 {offsets = [0, 0], sizes = [4, 32], strides = [1, 1]} : vector<4x96xf32> to vector<4x32xf32>
    %301 = arith.addf %299, %300 : vector<4x32xf32>
    %302 = arith.negf %301 : vector<4x32xf32>
    %303 = math.exp %302 : vector<4x32xf32>
    %cst_82 = arith.constant 1.000000e+00 : f32
    %304 = vector.broadcast %cst_82 : f32 to vector<4x32xf32>
    %305 = arith.addf %304, %303 : vector<4x32xf32>
    %306 = arith.divf %304, %305 : vector<4x32xf32>
    %307 = vector.extract_strided_slice %298 {offsets = [0, 32], sizes = [4, 32], strides = [1, 1]} : vector<4x96xf32> to vector<4x32xf32>
    %308 = vector.extract_strided_slice %271 {offsets = [0, 32], sizes = [4, 32], strides = [1, 1]} : vector<4x96xf32> to vector<4x32xf32>
    %309 = arith.addf %307, %308 : vector<4x32xf32>
    %310 = arith.negf %309 : vector<4x32xf32>
    %311 = math.exp %310 : vector<4x32xf32>
    %cst_83 = arith.constant 1.000000e+00 : f32
    %312 = vector.broadcast %cst_83 : f32 to vector<4x32xf32>
    %313 = arith.addf %312, %311 : vector<4x32xf32>
    %314 = arith.divf %312, %313 : vector<4x32xf32>
    %315 = vector.extract_strided_slice %298 {offsets = [0, 64], sizes = [4, 32], strides = [1, 1]} : vector<4x96xf32> to vector<4x32xf32>
    %316 = vector.extract_strided_slice %271 {offsets = [0, 64], sizes = [4, 32], strides = [1, 1]} : vector<4x96xf32> to vector<4x32xf32>
    %317 = arith.mulf %306, %316 : vector<4x32xf32>
    %318 = arith.addf %315, %317 : vector<4x32xf32>
    %319 = math.tanh %318 : vector<4x32xf32>
    %cst_84 = arith.constant 1.000000e+00 : f32
    %320 = vector.broadcast %cst_84 : f32 to vector<4x32xf32>
    %321 = arith.subf %320, %314 : vector<4x32xf32>
    %322 = arith.mulf %321, %319 : vector<4x32xf32>
    %323 = arith.mulf %314, %243 : vector<4x32xf32>
    %324 = arith.addf %322, %323 : vector<4x32xf32>
    %cst_85 = arith.constant dense<0.000000e+00> : vector<4x256xf32>
    %325 = tpu.matmul %324, %2, %cst_85 {dimension_numbers = #tpu.dot_dimension_numbers<[1], [0], [0], [1], [0, 0, 1, 1], [], []>} : vector<4x32xf32>, vector<32x256xf32>, vector<4x256xf32> -> vector<4x256xf32>
    %326 = arith.addf %325, %10 : vector<4x256xf32>
    %327 = vector.extract_strided_slice %326 {offsets = [0, 128], sizes = [4, 128], strides = [1, 1]} : vector<4x256xf32> to vector<4x128xf32>
    %cst_86 = arith.constant dense<0xFF800000> : vector<4xf32>
    %328 = vector.multi_reduction <maximumf>, %327, %cst_86 [1] : vector<4x128xf32> to vector<4xf32>
    %329 = vector.shape_cast %328 : vector<4xf32> to vector<4x1xf32>
    %330 = vector.broadcast %329 : vector<4x1xf32> to vector<4x128xf32>
    %331 = arith.subf %327, %330 : vector<4x128xf32>
    %332 = math.exp %331 : vector<4x128xf32>
    %cst_87 = arith.constant dense<0.000000e+00> : vector<4xf32>
    %333 = vector.multi_reduction <add>, %332, %cst_87 [1] : vector<4x128xf32> to vector<4xf32>
    %334 = vector.shape_cast %333 : vector<4xf32> to vector<4x1xf32>
    %335 = math.log %334 : vector<4x1xf32>
    %336 = arith.addf %335, %329 : vector<4x1xf32>
    %337 = vector.broadcast %336 : vector<4x1xf32> to vector<4x128xf32>
    %338 = arith.subf %327, %337 : vector<4x128xf32>
    %c0_88 = arith.constant 0 : index
    %c3 = arith.constant 3 : index
    %c0_89 = arith.constant 0 : index
    %339 = vector.load %arg12[%c0_88, %c3, %c0_89] : memref<4x10x128xf32, #tpu.memory_space<vmem>>, vector<4x1x128xf32>
    %340 = vector.shape_cast %339 : vector<4x1x128xf32> to vector<4x128xf32>
    %341 = vector.shape_cast %338 : vector<4x128xf32> to vector<4x1x128xf32>
    tpu.vector_store %arg12[%c0_88, %c3, %c0_89], %341 {strides = array<i32>} : memref<4x10x128xf32, #tpu.memory_space<vmem>>, vector<4x1x128xf32>,
    %c0_90 = arith.constant 0 : index
    %c3_91 = arith.constant 3 : index
    %c0_92 = arith.constant 0 : index
    %342 = vector.load %arg14[%c0_90, %c3_91, %c0_92] : memref<4x10x10xf32, #tpu.memory_space<vmem>>, vector<4x1x10xf32>
    %343 = vector.shape_cast %342 : vector<4x1x10xf32> to vector<4x10xf32>
    %344 = vector.shape_cast %290 : vector<4x10xf32> to vector<4x1x10xf32>
    tpu.vector_store %arg14[%c0_90, %c3_91, %c0_92], %344 {strides = array<i32>} : memref<4x10x10xf32, #tpu.memory_space<vmem>>, vector<4x1x10xf32>,
    %345 = tpu.reduce_index %327 {axis = 1 : i32, kind = #tpu.reduction_kind<arg_max>} : vector<4x128xf32> -> vector<4xi32>
    %346 = vector.shape_cast %345 : vector<4xi32> to vector<4x1xi32>
    %347 = vector.broadcast %346 : vector<4x1xi32> to vector<4x20xi32>
    %348 = arith.cmpi eq, %20, %347 : vector<4x20xi32>
    %349 = arith.extui %348 : vector<4x20xi1> to vector<4x20xi32>
    %350 = arith.sitofp %349 : vector<4x20xi32> to vector<4x20xf32>
    %351 = vector.extract_strided_slice %326 {offsets = [0, 0], sizes = [4, 32], strides = [1, 1]} : vector<4x256xf32> to vector<4x32xf32>
    %352 = vector.extract_strided_slice %326 {offsets = [0, 32], sizes = [4, 96], strides = [1, 1]} : vector<4x256xf32> to vector<4x96xf32>
    %353 = vector.shape_cast %351 : vector<4x32xf32> to vector<4x1x32xf32>
    %354 = vector.broadcast %353 : vector<4x1x32xf32> to vector<4x10x32xf32>
    %355 = arith.addf %354, %17 : vector<4x10x32xf32>
    %356 = math.tanh %355 : vector<4x10x32xf32>
    %357 = vector.shape_cast %5 : vector<1x32xf32> to vector<1x1x32xf32>
    %358 = vector.broadcast %357 : vector<1x1x32xf32> to vector<4x10x32xf32>
    %359 = arith.mulf %356, %358 : vector<4x10x32xf32>
    %cst_93 = arith.constant dense<0.000000e+00> : vector<4x10xf32>
    %360 = vector.multi_reduction <add>, %359, %cst_93 [2] : vector<4x10x32xf32> to vector<4x10xf32>
    %361 = vector.broadcast %6 : f32 to vector<4x10xf32>
    %362 = arith.addf %360, %361 : vector<4x10xf32>
    %cst_94 = arith.constant dense<0xFF800000> : vector<4xf32>
    %363 = vector.multi_reduction <maximumf>, %362, %cst_94 [1] : vector<4x10xf32> to vector<4xf32>
    %364 = vector.shape_cast %363 : vector<4xf32> to vector<4x1xf32>
    %365 = vector.broadcast %364 : vector<4x1xf32> to vector<4x10xf32>
    %366 = arith.subf %362, %365 : vector<4x10xf32>
    %367 = math.exp %366 : vector<4x10xf32>
    %cst_95 = arith.constant dense<0.000000e+00> : vector<4xf32>
    %368 = vector.multi_reduction <add>, %367, %cst_95 [1] : vector<4x10xf32> to vector<4xf32>
    %369 = vector.shape_cast %368 : vector<4xf32> to vector<4x1xf32>
    %370 = vector.broadcast %369 : vector<4x1xf32> to vector<4x10xf32>
    %371 = arith.divf %367, %370 : vector<4x10xf32>
    %372 = vector.shape_cast %371 : vector<4x10xf32> to vector<4x10x1xf32>
    %373 = vector.broadcast %372 : vector<4x10x1xf32> to vector<4x10x32xf32>
    %374 = arith.mulf %373, %7 : vector<4x10x32xf32>
    %cst_96 = arith.constant dense<0.000000e+00> : vector<4x32xf32>
    %375 = vector.multi_reduction <add>, %374, %cst_96 [1] : vector<4x10x32xf32> to vector<4x32xf32>
    %cst_97 = arith.constant dense<0.000000e+00> : vector<4x96xf32>
    %376 = tpu.matmul %350, %0, %cst_97 {dimension_numbers = #tpu.dot_dimension_numbers<[1], [0], [0], [1], [0, 0, 1, 1], [], []>} : vector<4x20xf32>, vector<20x96xf32>, vector<4x96xf32> -> vector<4x96xf32>
    %cst_98 = arith.constant dense<0.000000e+00> : vector<4x96xf32>
    %377 = tpu.matmul %375, %1, %cst_98 {dimension_numbers = #tpu.dot_dimension_numbers<[1], [0], [0], [1], [0, 0, 1, 1], [], []>} : vector<4x32xf32>, vector<32x96xf32>, vector<4x96xf32> -> vector<4x96xf32>
    %378 = arith.addf %376, %377 : vector<4x96xf32>
    %379 = arith.addf %378, %13 : vector<4x96xf32>
    %380 = vector.extract_strided_slice %379 {offsets = [0, 0], sizes = [4, 32], strides = [1, 1]} : vector<4x96xf32> to vector<4x32xf32>
    %381 = vector.extract_strided_slice %352 {offsets = [0, 0], sizes = [4, 32], strides = [1, 1]} : vector<4x96xf32> to vector<4x32xf32>
    %382 = arith.addf %380, %381 : vector<4x32xf32>
    %383 = arith.negf %382 : vector<4x32xf32>
    %384 = math.exp %383 : vector<4x32xf32>
    %cst_99 = arith.constant 1.000000e+00 : f32
    %385 = vector.broadcast %cst_99 : f32 to vector<4x32xf32>
    %386 = arith.addf %385, %384 : vector<4x32xf32>
    %387 = arith.divf %385, %386 : vector<4x32xf32>
    %388 = vector.extract_strided_slice %379 {offsets = [0, 32], sizes = [4, 32], strides = [1, 1]} : vector<4x96xf32> to vector<4x32xf32>
    %389 = vector.extract_strided_slice %352 {offsets = [0, 32], sizes = [4, 32], strides = [1, 1]} : vector<4x96xf32> to vector<4x32xf32>
    %390 = arith.addf %388, %389 : vector<4x32xf32>
    %391 = arith.negf %390 : vector<4x32xf32>
    %392 = math.exp %391 : vector<4x32xf32>
    %cst_100 = arith.constant 1.000000e+00 : f32
    %393 = vector.broadcast %cst_100 : f32 to vector<4x32xf32>
    %394 = arith.addf %393, %392 : vector<4x32xf32>
    %395 = arith.divf %393, %394 : vector<4x32xf32>
    %396 = vector.extract_strided_slice %379 {offsets = [0, 64], sizes = [4, 32], strides = [1, 1]} : vector<4x96xf32> to vector<4x32xf32>
    %397 = vector.extract_strided_slice %352 {offsets = [0, 64], sizes = [4, 32], strides = [1, 1]} : vector<4x96xf32> to vector<4x32xf32>
    %398 = arith.mulf %387, %397 : vector<4x32xf32>
    %399 = arith.addf %396, %398 : vector<4x32xf32>
    %400 = math.tanh %399 : vector<4x32xf32>
    %cst_101 = arith.constant 1.000000e+00 : f32
    %401 = vector.broadcast %cst_101 : f32 to vector<4x32xf32>
    %402 = arith.subf %401, %395 : vector<4x32xf32>
    %403 = arith.mulf %402, %400 : vector<4x32xf32>
    %404 = arith.mulf %395, %324 : vector<4x32xf32>
    %405 = arith.addf %403, %404 : vector<4x32xf32>
    %cst_102 = arith.constant dense<0.000000e+00> : vector<4x256xf32>
    %406 = tpu.matmul %405, %2, %cst_102 {dimension_numbers = #tpu.dot_dimension_numbers<[1], [0], [0], [1], [0, 0, 1, 1], [], []>} : vector<4x32xf32>, vector<32x256xf32>, vector<4x256xf32> -> vector<4x256xf32>
    %407 = arith.addf %406, %10 : vector<4x256xf32>
    %408 = vector.extract_strided_slice %407 {offsets = [0, 128], sizes = [4, 128], strides = [1, 1]} : vector<4x256xf32> to vector<4x128xf32>
    %cst_103 = arith.constant dense<0xFF800000> : vector<4xf32>
    %409 = vector.multi_reduction <maximumf>, %408, %cst_103 [1] : vector<4x128xf32> to vector<4xf32>
    %410 = vector.shape_cast %409 : vector<4xf32> to vector<4x1xf32>
    %411 = vector.broadcast %410 : vector<4x1xf32> to vector<4x128xf32>
    %412 = arith.subf %408, %411 : vector<4x128xf32>
    %413 = math.exp %412 : vector<4x128xf32>
    %cst_104 = arith.constant dense<0.000000e+00> : vector<4xf32>
    %414 = vector.multi_reduction <add>, %413, %cst_104 [1] : vector<4x128xf32> to vector<4xf32>
    %415 = vector.shape_cast %414 : vector<4xf32> to vector<4x1xf32>
    %416 = math.log %415 : vector<4x1xf32>
    %417 = arith.addf %416, %410 : vector<4x1xf32>
    %418 = vector.broadcast %417 : vector<4x1xf32> to vector<4x128xf32>
    %419 = arith.subf %408, %418 : vector<4x128xf32>
    %c0_105 = arith.constant 0 : index
    %c4 = arith.constant 4 : index
    %c0_106 = arith.constant 0 : index
    %420 = vector.load %arg12[%c0_105, %c4, %c0_106] : memref<4x10x128xf32, #tpu.memory_space<vmem>>, vector<4x1x128xf32>
    %421 = vector.shape_cast %420 : vector<4x1x128xf32> to vector<4x128xf32>
    %422 = vector.shape_cast %419 : vector<4x128xf32> to vector<4x1x128xf32>
    tpu.vector_store %arg12[%c0_105, %c4, %c0_106], %422 {strides = array<i32>} : memref<4x10x128xf32, #tpu.memory_space<vmem>>, vector<4x1x128xf32>,
    %c0_107 = arith.constant 0 : index
    %c4_108 = arith.constant 4 : index
    %c0_109 = arith.constant 0 : index
    %423 = vector.load %arg14[%c0_107, %c4_108, %c0_109] : memref<4x10x10xf32, #tpu.memory_space<vmem>>, vector<4x1x10xf32>
    %424 = vector.shape_cast %423 : vector<4x1x10xf32> to vector<4x10xf32>
    %425 = vector.shape_cast %371 : vector<4x10xf32> to vector<4x1x10xf32>
    tpu.vector_store %arg14[%c0_107, %c4_108, %c0_109], %425 {strides = array<i32>} : memref<4x10x10xf32, #tpu.memory_space<vmem>>, vector<4x1x10xf32>,
    %426 = tpu.reduce_index %408 {axis = 1 : i32, kind = #tpu.reduction_kind<arg_max>} : vector<4x128xf32> -> vector<4xi32>
    %427 = vector.shape_cast %426 : vector<4xi32> to vector<4x1xi32>
    %428 = vector.broadcast %427 : vector<4x1xi32> to vector<4x20xi32>
    %429 = arith.cmpi eq, %20, %428 : vector<4x20xi32>
    %430 = arith.extui %429 : vector<4x20xi1> to vector<4x20xi32>
    %431 = arith.sitofp %430 : vector<4x20xi32> to vector<4x20xf32>
    %432 = vector.extract_strided_slice %407 {offsets = [0, 0], sizes = [4, 32], strides = [1, 1]} : vector<4x256xf32> to vector<4x32xf32>
    %433 = vector.extract_strided_slice %407 {offsets = [0, 32], sizes = [4, 96], strides = [1, 1]} : vector<4x256xf32> to vector<4x96xf32>
    %434 = vector.shape_cast %432 : vector<4x32xf32> to vector<4x1x32xf32>
    %435 = vector.broadcast %434 : vector<4x1x32xf32> to vector<4x10x32xf32>
    %436 = arith.addf %435, %17 : vector<4x10x32xf32>
    %437 = math.tanh %436 : vector<4x10x32xf32>
    %438 = vector.shape_cast %5 : vector<1x32xf32> to vector<1x1x32xf32>
    %439 = vector.broadcast %438 : vector<1x1x32xf32> to vector<4x10x32xf32>
    %440 = arith.mulf %437, %439 : vector<4x10x32xf32>
    %cst_110 = arith.constant dense<0.000000e+00> : vector<4x10xf32>
    %441 = vector.multi_reduction <add>, %440, %cst_110 [2] : vector<4x10x32xf32> to vector<4x10xf32>
    %442 = vector.broadcast %6 : f32 to vector<4x10xf32>
    %443 = arith.addf %441, %442 : vector<4x10xf32>
    %cst_111 = arith.constant dense<0xFF800000> : vector<4xf32>
    %444 = vector.multi_reduction <maximumf>, %443, %cst_111 [1] : vector<4x10xf32> to vector<4xf32>
    %445 = vector.shape_cast %444 : vector<4xf32> to vector<4x1xf32>
    %446 = vector.broadcast %445 : vector<4x1xf32> to vector<4x10xf32>
    %447 = arith.subf %443, %446 : vector<4x10xf32>
    %448 = math.exp %447 : vector<4x10xf32>
    %cst_112 = arith.constant dense<0.000000e+00> : vector<4xf32>
    %449 = vector.multi_reduction <add>, %448, %cst_112 [1] : vector<4x10xf32> to vector<4xf32>
    %450 = vector.shape_cast %449 : vector<4xf32> to vector<4x1xf32>
    %451 = vector.broadcast %450 : vector<4x1xf32> to vector<4x10xf32>
    %452 = arith.divf %448, %451 : vector<4x10xf32>
    %453 = vector.shape_cast %452 : vector<4x10xf32> to vector<4x10x1xf32>
    %454 = vector.broadcast %453 : vector<4x10x1xf32> to vector<4x10x32xf32>
    %455 = arith.mulf %454, %7 : vector<4x10x32xf32>
    %cst_113 = arith.constant dense<0.000000e+00> : vector<4x32xf32>
    %456 = vector.multi_reduction <add>, %455, %cst_113 [1] : vector<4x10x32xf32> to vector<4x32xf32>
    %cst_114 = arith.constant dense<0.000000e+00> : vector<4x96xf32>
    %457 = tpu.matmul %431, %0, %cst_114 {dimension_numbers = #tpu.dot_dimension_numbers<[1], [0], [0], [1], [0, 0, 1, 1], [], []>} : vector<4x20xf32>, vector<20x96xf32>, vector<4x96xf32> -> vector<4x96xf32>
    %cst_115 = arith.constant dense<0.000000e+00> : vector<4x96xf32>
    %458 = tpu.matmul %456, %1, %cst_115 {dimension_numbers = #tpu.dot_dimension_numbers<[1], [0], [0], [1], [0, 0, 1, 1], [], []>} : vector<4x32xf32>, vector<32x96xf32>, vector<4x96xf32> -> vector<4x96xf32>
    %459 = arith.addf %457, %458 : vector<4x96xf32>
    %460 = arith.addf %459, %13 : vector<4x96xf32>
    %461 = vector.extract_strided_slice %460 {offsets = [0, 0], sizes = [4, 32], strides = [1, 1]} : vector<4x96xf32> to vector<4x32xf32>
    %462 = vector.extract_strided_slice %433 {offsets = [0, 0], sizes = [4, 32], strides = [1, 1]} : vector<4x96xf32> to vector<4x32xf32>
    %463 = arith.addf %461, %462 : vector<4x32xf32>
    %464 = arith.negf %463 : vector<4x32xf32>
    %465 = math.exp %464 : vector<4x32xf32>
    %cst_116 = arith.constant 1.000000e+00 : f32
    %466 = vector.broadcast %cst_116 : f32 to vector<4x32xf32>
    %467 = arith.addf %466, %465 : vector<4x32xf32>
    %468 = arith.divf %466, %467 : vector<4x32xf32>
    %469 = vector.extract_strided_slice %460 {offsets = [0, 32], sizes = [4, 32], strides = [1, 1]} : vector<4x96xf32> to vector<4x32xf32>
    %470 = vector.extract_strided_slice %433 {offsets = [0, 32], sizes = [4, 32], strides = [1, 1]} : vector<4x96xf32> to vector<4x32xf32>
    %471 = arith.addf %469, %470 : vector<4x32xf32>
    %472 = arith.negf %471 : vector<4x32xf32>
    %473 = math.exp %472 : vector<4x32xf32>
    %cst_117 = arith.constant 1.000000e+00 : f32
    %474 = vector.broadcast %cst_117 : f32 to vector<4x32xf32>
    %475 = arith.addf %474, %473 : vector<4x32xf32>
    %476 = arith.divf %474, %475 : vector<4x32xf32>
    %477 = vector.extract_strided_slice %460 {offsets = [0, 64], sizes = [4, 32], strides = [1, 1]} : vector<4x96xf32> to vector<4x32xf32>
    %478 = vector.extract_strided_slice %433 {offsets = [0, 64], sizes = [4, 32], strides = [1, 1]} : vector<4x96xf32> to vector<4x32xf32>
    %479 = arith.mulf %468, %478 : vector<4x32xf32>
    %480 = arith.addf %477, %479 : vector<4x32xf32>
    %481 = math.tanh %480 : vector<4x32xf32>
    %cst_118 = arith.constant 1.000000e+00 : f32
    %482 = vector.broadcast %cst_118 : f32 to vector<4x32xf32>
    %483 = arith.subf %482, %476 : vector<4x32xf32>
    %484 = arith.mulf %483, %481 : vector<4x32xf32>
    %485 = arith.mulf %476, %405 : vector<4x32xf32>
    %486 = arith.addf %484, %485 : vector<4x32xf32>
    %cst_119 = arith.constant dense<0.000000e+00> : vector<4x256xf32>
    %487 = tpu.matmul %486, %2, %cst_119 {dimension_numbers = #tpu.dot_dimension_numbers<[1], [0], [0], [1], [0, 0, 1, 1], [], []>} : vector<4x32xf32>, vector<32x256xf32>, vector<4x256xf32> -> vector<4x256xf32>
    %488 = arith.addf %487, %10 : vector<4x256xf32>
    %489 = vector.extract_strided_slice %488 {offsets = [0, 128], sizes = [4, 128], strides = [1, 1]} : vector<4x256xf32> to vector<4x128xf32>
    %cst_120 = arith.constant dense<0xFF800000> : vector<4xf32>
    %490 = vector.multi_reduction <maximumf>, %489, %cst_120 [1] : vector<4x128xf32> to vector<4xf32>
    %491 = vector.shape_cast %490 : vector<4xf32> to vector<4x1xf32>
    %492 = vector.broadcast %491 : vector<4x1xf32> to vector<4x128xf32>
    %493 = arith.subf %489, %492 : vector<4x128xf32>
    %494 = math.exp %493 : vector<4x128xf32>
    %cst_121 = arith.constant dense<0.000000e+00> : vector<4xf32>
    %495 = vector.multi_reduction <add>, %494, %cst_121 [1] : vector<4x128xf32> to vector<4xf32>
    %496 = vector.shape_cast %495 : vector<4xf32> to vector<4x1xf32>
    %497 = math.log %496 : vector<4x1xf32>
    %498 = arith.addf %497, %491 : vector<4x1xf32>
    %499 = vector.broadcast %498 : vector<4x1xf32> to vector<4x128xf32>
    %500 = arith.subf %489, %499 : vector<4x128xf32>
    %c0_122 = arith.constant 0 : index
    %c5 = arith.constant 5 : index
    %c0_123 = arith.constant 0 : index
    %501 = vector.load %arg12[%c0_122, %c5, %c0_123] : memref<4x10x128xf32, #tpu.memory_space<vmem>>, vector<4x1x128xf32>
    %502 = vector.shape_cast %501 : vector<4x1x128xf32> to vector<4x128xf32>
    %503 = vector.shape_cast %500 : vector<4x128xf32> to vector<4x1x128xf32>
    tpu.vector_store %arg12[%c0_122, %c5, %c0_123], %503 {strides = array<i32>} : memref<4x10x128xf32, #tpu.memory_space<vmem>>, vector<4x1x128xf32>,
    %c0_124 = arith.constant 0 : index
    %c5_125 = arith.constant 5 : index
    %c0_126 = arith.constant 0 : index
    %504 = vector.load %arg14[%c0_124, %c5_125, %c0_126] : memref<4x10x10xf32, #tpu.memory_space<vmem>>, vector<4x1x10xf32>
    %505 = vector.shape_cast %504 : vector<4x1x10xf32> to vector<4x10xf32>
    %506 = vector.shape_cast %452 : vector<4x10xf32> to vector<4x1x10xf32>
    tpu.vector_store %arg14[%c0_124, %c5_125, %c0_126], %506 {strides = array<i32>} : memref<4x10x10xf32, #tpu.memory_space<vmem>>, vector<4x1x10xf32>,
    %507 = tpu.reduce_index %489 {axis = 1 : i32, kind = #tpu.reduction_kind<arg_max>} : vector<4x128xf32> -> vector<4xi32>
    %508 = vector.shape_cast %507 : vector<4xi32> to vector<4x1xi32>
    %509 = vector.broadcast %508 : vector<4x1xi32> to vector<4x20xi32>
    %510 = arith.cmpi eq, %20, %509 : vector<4x20xi32>
    %511 = arith.extui %510 : vector<4x20xi1> to vector<4x20xi32>
    %512 = arith.sitofp %511 : vector<4x20xi32> to vector<4x20xf32>
    %513 = vector.extract_strided_slice %488 {offsets = [0, 0], sizes = [4, 32], strides = [1, 1]} : vector<4x256xf32> to vector<4x32xf32>
    %514 = vector.extract_strided_slice %488 {offsets = [0, 32], sizes = [4, 96], strides = [1, 1]} : vector<4x256xf32> to vector<4x96xf32>
    %515 = vector.shape_cast %513 : vector<4x32xf32> to vector<4x1x32xf32>
    %516 = vector.broadcast %515 : vector<4x1x32xf32> to vector<4x10x32xf32>
    %517 = arith.addf %516, %17 : vector<4x10x32xf32>
    %518 = math.tanh %517 : vector<4x10x32xf32>
    %519 = vector.shape_cast %5 : vector<1x32xf32> to vector<1x1x32xf32>
    %520 = vector.broadcast %519 : vector<1x1x32xf32> to vector<4x10x32xf32>
    %521 = arith.mulf %518, %520 : vector<4x10x32xf32>
    %cst_127 = arith.constant dense<0.000000e+00> : vector<4x10xf32>
    %522 = vector.multi_reduction <add>, %521, %cst_127 [2] : vector<4x10x32xf32> to vector<4x10xf32>
    %523 = vector.broadcast %6 : f32 to vector<4x10xf32>
    %524 = arith.addf %522, %523 : vector<4x10xf32>
    %cst_128 = arith.constant dense<0xFF800000> : vector<4xf32>
    %525 = vector.multi_reduction <maximumf>, %524, %cst_128 [1] : vector<4x10xf32> to vector<4xf32>
    %526 = vector.shape_cast %525 : vector<4xf32> to vector<4x1xf32>
    %527 = vector.broadcast %526 : vector<4x1xf32> to vector<4x10xf32>
    %528 = arith.subf %524, %527 : vector<4x10xf32>
    %529 = math.exp %528 : vector<4x10xf32>
    %cst_129 = arith.constant dense<0.000000e+00> : vector<4xf32>
    %530 = vector.multi_reduction <add>, %529, %cst_129 [1] : vector<4x10xf32> to vector<4xf32>
    %531 = vector.shape_cast %530 : vector<4xf32> to vector<4x1xf32>
    %532 = vector.broadcast %531 : vector<4x1xf32> to vector<4x10xf32>
    %533 = arith.divf %529, %532 : vector<4x10xf32>
    %534 = vector.shape_cast %533 : vector<4x10xf32> to vector<4x10x1xf32>
    %535 = vector.broadcast %534 : vector<4x10x1xf32> to vector<4x10x32xf32>
    %536 = arith.mulf %535, %7 : vector<4x10x32xf32>
    %cst_130 = arith.constant dense<0.000000e+00> : vector<4x32xf32>
    %537 = vector.multi_reduction <add>, %536, %cst_130 [1] : vector<4x10x32xf32> to vector<4x32xf32>
    %cst_131 = arith.constant dense<0.000000e+00> : vector<4x96xf32>
    %538 = tpu.matmul %512, %0, %cst_131 {dimension_numbers = #tpu.dot_dimension_numbers<[1], [0], [0], [1], [0, 0, 1, 1], [], []>} : vector<4x20xf32>, vector<20x96xf32>, vector<4x96xf32> -> vector<4x96xf32>
    %cst_132 = arith.constant dense<0.000000e+00> : vector<4x96xf32>
    %539 = tpu.matmul %537, %1, %cst_132 {dimension_numbers = #tpu.dot_dimension_numbers<[1], [0], [0], [1], [0, 0, 1, 1], [], []>} : vector<4x32xf32>, vector<32x96xf32>, vector<4x96xf32> -> vector<4x96xf32>
    %540 = arith.addf %538, %539 : vector<4x96xf32>
    %541 = arith.addf %540, %13 : vector<4x96xf32>
    %542 = vector.extract_strided_slice %541 {offsets = [0, 0], sizes = [4, 32], strides = [1, 1]} : vector<4x96xf32> to vector<4x32xf32>
    %543 = vector.extract_strided_slice %514 {offsets = [0, 0], sizes = [4, 32], strides = [1, 1]} : vector<4x96xf32> to vector<4x32xf32>
    %544 = arith.addf %542, %543 : vector<4x32xf32>
    %545 = arith.negf %544 : vector<4x32xf32>
    %546 = math.exp %545 : vector<4x32xf32>
    %cst_133 = arith.constant 1.000000e+00 : f32
    %547 = vector.broadcast %cst_133 : f32 to vector<4x32xf32>
    %548 = arith.addf %547, %546 : vector<4x32xf32>
    %549 = arith.divf %547, %548 : vector<4x32xf32>
    %550 = vector.extract_strided_slice %541 {offsets = [0, 32], sizes = [4, 32], strides = [1, 1]} : vector<4x96xf32> to vector<4x32xf32>
    %551 = vector.extract_strided_slice %514 {offsets = [0, 32], sizes = [4, 32], strides = [1, 1]} : vector<4x96xf32> to vector<4x32xf32>
    %552 = arith.addf %550, %551 : vector<4x32xf32>
    %553 = arith.negf %552 : vector<4x32xf32>
    %554 = math.exp %553 : vector<4x32xf32>
    %cst_134 = arith.constant 1.000000e+00 : f32
    %555 = vector.broadcast %cst_134 : f32 to vector<4x32xf32>
    %556 = arith.addf %555, %554 : vector<4x32xf32>
    %557 = arith.divf %555, %556 : vector<4x32xf32>
    %558 = vector.extract_strided_slice %541 {offsets = [0, 64], sizes = [4, 32], strides = [1, 1]} : vector<4x96xf32> to vector<4x32xf32>
    %559 = vector.extract_strided_slice %514 {offsets = [0, 64], sizes = [4, 32], strides = [1, 1]} : vector<4x96xf32> to vector<4x32xf32>
    %560 = arith.mulf %549, %559 : vector<4x32xf32>
    %561 = arith.addf %558, %560 : vector<4x32xf32>
    %562 = math.tanh %561 : vector<4x32xf32>
    %cst_135 = arith.constant 1.000000e+00 : f32
    %563 = vector.broadcast %cst_135 : f32 to vector<4x32xf32>
    %564 = arith.subf %563, %557 : vector<4x32xf32>
    %565 = arith.mulf %564, %562 : vector<4x32xf32>
    %566 = arith.mulf %557, %486 : vector<4x32xf32>
    %567 = arith.addf %565, %566 : vector<4x32xf32>
    %cst_136 = arith.constant dense<0.000000e+00> : vector<4x256xf32>
    %568 = tpu.matmul %567, %2, %cst_136 {dimension_numbers = #tpu.dot_dimension_numbers<[1], [0], [0], [1], [0, 0, 1, 1], [], []>} : vector<4x32xf32>, vector<32x256xf32>, vector<4x256xf32> -> vector<4x256xf32>
    %569 = arith.addf %568, %10 : vector<4x256xf32>
    %570 = vector.extract_strided_slice %569 {offsets = [0, 128], sizes = [4, 128], strides = [1, 1]} : vector<4x256xf32> to vector<4x128xf32>
    %cst_137 = arith.constant dense<0xFF800000> : vector<4xf32>
    %571 = vector.multi_reduction <maximumf>, %570, %cst_137 [1] : vector<4x128xf32> to vector<4xf32>
    %572 = vector.shape_cast %571 : vector<4xf32> to vector<4x1xf32>
    %573 = vector.broadcast %572 : vector<4x1xf32> to vector<4x128xf32>
    %574 = arith.subf %570, %573 : vector<4x128xf32>
    %575 = math.exp %574 : vector<4x128xf32>
    %cst_138 = arith.constant dense<0.000000e+00> : vector<4xf32>
    %576 = vector.multi_reduction <add>, %575, %cst_138 [1] : vector<4x128xf32> to vector<4xf32>
    %577 = vector.shape_cast %576 : vector<4xf32> to vector<4x1xf32>
    %578 = math.log %577 : vector<4x1xf32>
    %579 = arith.addf %578, %572 : vector<4x1xf32>
    %580 = vector.broadcast %579 : vector<4x1xf32> to vector<4x128xf32>
    %581 = arith.subf %570, %580 : vector<4x128xf32>
    %c0_139 = arith.constant 0 : index
    %c6 = arith.constant 6 : index
    %c0_140 = arith.constant 0 : index
    %582 = vector.load %arg12[%c0_139, %c6, %c0_140] : memref<4x10x128xf32, #tpu.memory_space<vmem>>, vector<4x1x128xf32>
    %583 = vector.shape_cast %582 : vector<4x1x128xf32> to vector<4x128xf32>
    %584 = vector.shape_cast %581 : vector<4x128xf32> to vector<4x1x128xf32>
    tpu.vector_store %arg12[%c0_139, %c6, %c0_140], %584 {strides = array<i32>} : memref<4x10x128xf32, #tpu.memory_space<vmem>>, vector<4x1x128xf32>,
    %c0_141 = arith.constant 0 : index
    %c6_142 = arith.constant 6 : index
    %c0_143 = arith.constant 0 : index
    %585 = vector.load %arg14[%c0_141, %c6_142, %c0_143] : memref<4x10x10xf32, #tpu.memory_space<vmem>>, vector<4x1x10xf32>
    %586 = vector.shape_cast %585 : vector<4x1x10xf32> to vector<4x10xf32>
    %587 = vector.shape_cast %533 : vector<4x10xf32> to vector<4x1x10xf32>
    tpu.vector_store %arg14[%c0_141, %c6_142, %c0_143], %587 {strides = array<i32>} : memref<4x10x10xf32, #tpu.memory_space<vmem>>, vector<4x1x10xf32>,
    %588 = tpu.reduce_index %570 {axis = 1 : i32, kind = #tpu.reduction_kind<arg_max>} : vector<4x128xf32> -> vector<4xi32>
    %589 = vector.shape_cast %588 : vector<4xi32> to vector<4x1xi32>
    %590 = vector.broadcast %589 : vector<4x1xi32> to vector<4x20xi32>
    %591 = arith.cmpi eq, %20, %590 : vector<4x20xi32>
    %592 = arith.extui %591 : vector<4x20xi1> to vector<4x20xi32>
    %593 = arith.sitofp %592 : vector<4x20xi32> to vector<4x20xf32>
    %594 = vector.extract_strided_slice %569 {offsets = [0, 0], sizes = [4, 32], strides = [1, 1]} : vector<4x256xf32> to vector<4x32xf32>
    %595 = vector.extract_strided_slice %569 {offsets = [0, 32], sizes = [4, 96], strides = [1, 1]} : vector<4x256xf32> to vector<4x96xf32>
    %596 = vector.shape_cast %594 : vector<4x32xf32> to vector<4x1x32xf32>
    %597 = vector.broadcast %596 : vector<4x1x32xf32> to vector<4x10x32xf32>
    %598 = arith.addf %597, %17 : vector<4x10x32xf32>
    %599 = math.tanh %598 : vector<4x10x32xf32>
    %600 = vector.shape_cast %5 : vector<1x32xf32> to vector<1x1x32xf32>
    %601 = vector.broadcast %600 : vector<1x1x32xf32> to vector<4x10x32xf32>
    %602 = arith.mulf %599, %601 : vector<4x10x32xf32>
    %cst_144 = arith.constant dense<0.000000e+00> : vector<4x10xf32>
    %603 = vector.multi_reduction <add>, %602, %cst_144 [2] : vector<4x10x32xf32> to vector<4x10xf32>
    %604 = vector.broadcast %6 : f32 to vector<4x10xf32>
    %605 = arith.addf %603, %604 : vector<4x10xf32>
    %cst_145 = arith.constant dense<0xFF800000> : vector<4xf32>
    %606 = vector.multi_reduction <maximumf>, %605, %cst_145 [1] : vector<4x10xf32> to vector<4xf32>
    %607 = vector.shape_cast %606 : vector<4xf32> to vector<4x1xf32>
    %608 = vector.broadcast %607 : vector<4x1xf32> to vector<4x10xf32>
    %609 = arith.subf %605, %608 : vector<4x10xf32>
    %610 = math.exp %609 : vector<4x10xf32>
    %cst_146 = arith.constant dense<0.000000e+00> : vector<4xf32>
    %611 = vector.multi_reduction <add>, %610, %cst_146 [1] : vector<4x10xf32> to vector<4xf32>
    %612 = vector.shape_cast %611 : vector<4xf32> to vector<4x1xf32>
    %613 = vector.broadcast %612 : vector<4x1xf32> to vector<4x10xf32>
    %614 = arith.divf %610, %613 : vector<4x10xf32>
    %615 = vector.shape_cast %614 : vector<4x10xf32> to vector<4x10x1xf32>
    %616 = vector.broadcast %615 : vector<4x10x1xf32> to vector<4x10x32xf32>
    %617 = arith.mulf %616, %7 : vector<4x10x32xf32>
    %cst_147 = arith.constant dense<0.000000e+00> : vector<4x32xf32>
    %618 = vector.multi_reduction <add>, %617, %cst_147 [1] : vector<4x10x32xf32> to vector<4x32xf32>
    %cst_148 = arith.constant dense<0.000000e+00> : vector<4x96xf32>
    %619 = tpu.matmul %593, %0, %cst_148 {dimension_numbers = #tpu.dot_dimension_numbers<[1], [0], [0], [1], [0, 0, 1, 1], [], []>} : vector<4x20xf32>, vector<20x96xf32>, vector<4x96xf32> -> vector<4x96xf32>
    %cst_149 = arith.constant dense<0.000000e+00> : vector<4x96xf32>
    %620 = tpu.matmul %618, %1, %cst_149 {dimension_numbers = #tpu.dot_dimension_numbers<[1], [0], [0], [1], [0, 0, 1, 1], [], []>} : vector<4x32xf32>, vector<32x96xf32>, vector<4x96xf32> -> vector<4x96xf32>
    %621 = arith.addf %619, %620 : vector<4x96xf32>
    %622 = arith.addf %621, %13 : vector<4x96xf32>
    %623 = vector.extract_strided_slice %622 {offsets = [0, 0], sizes = [4, 32], strides = [1, 1]} : vector<4x96xf32> to vector<4x32xf32>
    %624 = vector.extract_strided_slice %595 {offsets = [0, 0], sizes = [4, 32], strides = [1, 1]} : vector<4x96xf32> to vector<4x32xf32>
    %625 = arith.addf %623, %624 : vector<4x32xf32>
    %626 = arith.negf %625 : vector<4x32xf32>
    %627 = math.exp %626 : vector<4x32xf32>
    %cst_150 = arith.constant 1.000000e+00 : f32
    %628 = vector.broadcast %cst_150 : f32 to vector<4x32xf32>
    %629 = arith.addf %628, %627 : vector<4x32xf32>
    %630 = arith.divf %628, %629 : vector<4x32xf32>
    %631 = vector.extract_strided_slice %622 {offsets = [0, 32], sizes = [4, 32], strides = [1, 1]} : vector<4x96xf32> to vector<4x32xf32>
    %632 = vector.extract_strided_slice %595 {offsets = [0, 32], sizes = [4, 32], strides = [1, 1]} : vector<4x96xf32> to vector<4x32xf32>
    %633 = arith.addf %631, %632 : vector<4x32xf32>
    %634 = arith.negf %633 : vector<4x32xf32>
    %635 = math.exp %634 : vector<4x32xf32>
    %cst_151 = arith.constant 1.000000e+00 : f32
    %636 = vector.broadcast %cst_151 : f32 to vector<4x32xf32>
    %637 = arith.addf %636, %635 : vector<4x32xf32>
    %638 = arith.divf %636, %637 : vector<4x32xf32>
    %639 = vector.extract_strided_slice %622 {offsets = [0, 64], sizes = [4, 32], strides = [1, 1]} : vector<4x96xf32> to vector<4x32xf32>
    %640 = vector.extract_strided_slice %595 {offsets = [0, 64], sizes = [4, 32], strides = [1, 1]} : vector<4x96xf32> to vector<4x32xf32>
    %641 = arith.mulf %630, %640 : vector<4x32xf32>
    %642 = arith.addf %639, %641 : vector<4x32xf32>
    %643 = math.tanh %642 : vector<4x32xf32>
    %cst_152 = arith.constant 1.000000e+00 : f32
    %644 = vector.broadcast %cst_152 : f32 to vector<4x32xf32>
    %645 = arith.subf %644, %638 : vector<4x32xf32>
    %646 = arith.mulf %645, %643 : vector<4x32xf32>
    %647 = arith.mulf %638, %567 : vector<4x32xf32>
    %648 = arith.addf %646, %647 : vector<4x32xf32>
    %cst_153 = arith.constant dense<0.000000e+00> : vector<4x256xf32>
    %649 = tpu.matmul %648, %2, %cst_153 {dimension_numbers = #tpu.dot_dimension_numbers<[1], [0], [0], [1], [0, 0, 1, 1], [], []>} : vector<4x32xf32>, vector<32x256xf32>, vector<4x256xf32> -> vector<4x256xf32>
    %650 = arith.addf %649, %10 : vector<4x256xf32>
    %651 = vector.extract_strided_slice %650 {offsets = [0, 128], sizes = [4, 128], strides = [1, 1]} : vector<4x256xf32> to vector<4x128xf32>
    %cst_154 = arith.constant dense<0xFF800000> : vector<4xf32>
    %652 = vector.multi_reduction <maximumf>, %651, %cst_154 [1] : vector<4x128xf32> to vector<4xf32>
    %653 = vector.shape_cast %652 : vector<4xf32> to vector<4x1xf32>
    %654 = vector.broadcast %653 : vector<4x1xf32> to vector<4x128xf32>
    %655 = arith.subf %651, %654 : vector<4x128xf32>
    %656 = math.exp %655 : vector<4x128xf32>
    %cst_155 = arith.constant dense<0.000000e+00> : vector<4xf32>
    %657 = vector.multi_reduction <add>, %656, %cst_155 [1] : vector<4x128xf32> to vector<4xf32>
    %658 = vector.shape_cast %657 : vector<4xf32> to vector<4x1xf32>
    %659 = math.log %658 : vector<4x1xf32>
    %660 = arith.addf %659, %653 : vector<4x1xf32>
    %661 = vector.broadcast %660 : vector<4x1xf32> to vector<4x128xf32>
    %662 = arith.subf %651, %661 : vector<4x128xf32>
    %c0_156 = arith.constant 0 : index
    %c7 = arith.constant 7 : index
    %c0_157 = arith.constant 0 : index
    %663 = vector.load %arg12[%c0_156, %c7, %c0_157] : memref<4x10x128xf32, #tpu.memory_space<vmem>>, vector<4x1x128xf32>
    %664 = vector.shape_cast %663 : vector<4x1x128xf32> to vector<4x128xf32>
    %665 = vector.shape_cast %662 : vector<4x128xf32> to vector<4x1x128xf32>
    tpu.vector_store %arg12[%c0_156, %c7, %c0_157], %665 {strides = array<i32>} : memref<4x10x128xf32, #tpu.memory_space<vmem>>, vector<4x1x128xf32>,
    %c0_158 = arith.constant 0 : index
    %c7_159 = arith.constant 7 : index
    %c0_160 = arith.constant 0 : index
    %666 = vector.load %arg14[%c0_158, %c7_159, %c0_160] : memref<4x10x10xf32, #tpu.memory_space<vmem>>, vector<4x1x10xf32>
    %667 = vector.shape_cast %666 : vector<4x1x10xf32> to vector<4x10xf32>
    %668 = vector.shape_cast %614 : vector<4x10xf32> to vector<4x1x10xf32>
    tpu.vector_store %arg14[%c0_158, %c7_159, %c0_160], %668 {strides = array<i32>} : memref<4x10x10xf32, #tpu.memory_space<vmem>>, vector<4x1x10xf32>,
    %669 = tpu.reduce_index %651 {axis = 1 : i32, kind = #tpu.reduction_kind<arg_max>} : vector<4x128xf32> -> vector<4xi32>
    %670 = vector.shape_cast %669 : vector<4xi32> to vector<4x1xi32>
    %671 = vector.broadcast %670 : vector<4x1xi32> to vector<4x20xi32>
    %672 = arith.cmpi eq, %20, %671 : vector<4x20xi32>
    %673 = arith.extui %672 : vector<4x20xi1> to vector<4x20xi32>
    %674 = arith.sitofp %673 : vector<4x20xi32> to vector<4x20xf32>
    %675 = vector.extract_strided_slice %650 {offsets = [0, 0], sizes = [4, 32], strides = [1, 1]} : vector<4x256xf32> to vector<4x32xf32>
    %676 = vector.extract_strided_slice %650 {offsets = [0, 32], sizes = [4, 96], strides = [1, 1]} : vector<4x256xf32> to vector<4x96xf32>
    %677 = vector.shape_cast %675 : vector<4x32xf32> to vector<4x1x32xf32>
    %678 = vector.broadcast %677 : vector<4x1x32xf32> to vector<4x10x32xf32>
    %679 = arith.addf %678, %17 : vector<4x10x32xf32>
    %680 = math.tanh %679 : vector<4x10x32xf32>
    %681 = vector.shape_cast %5 : vector<1x32xf32> to vector<1x1x32xf32>
    %682 = vector.broadcast %681 : vector<1x1x32xf32> to vector<4x10x32xf32>
    %683 = arith.mulf %680, %682 : vector<4x10x32xf32>
    %cst_161 = arith.constant dense<0.000000e+00> : vector<4x10xf32>
    %684 = vector.multi_reduction <add>, %683, %cst_161 [2] : vector<4x10x32xf32> to vector<4x10xf32>
    %685 = vector.broadcast %6 : f32 to vector<4x10xf32>
    %686 = arith.addf %684, %685 : vector<4x10xf32>
    %cst_162 = arith.constant dense<0xFF800000> : vector<4xf32>
    %687 = vector.multi_reduction <maximumf>, %686, %cst_162 [1] : vector<4x10xf32> to vector<4xf32>
    %688 = vector.shape_cast %687 : vector<4xf32> to vector<4x1xf32>
    %689 = vector.broadcast %688 : vector<4x1xf32> to vector<4x10xf32>
    %690 = arith.subf %686, %689 : vector<4x10xf32>
    %691 = math.exp %690 : vector<4x10xf32>
    %cst_163 = arith.constant dense<0.000000e+00> : vector<4xf32>
    %692 = vector.multi_reduction <add>, %691, %cst_163 [1] : vector<4x10xf32> to vector<4xf32>
    %693 = vector.shape_cast %692 : vector<4xf32> to vector<4x1xf32>
    %694 = vector.broadcast %693 : vector<4x1xf32> to vector<4x10xf32>
    %695 = arith.divf %691, %694 : vector<4x10xf32>
    %696 = vector.shape_cast %695 : vector<4x10xf32> to vector<4x10x1xf32>
    %697 = vector.broadcast %696 : vector<4x10x1xf32> to vector<4x10x32xf32>
    %698 = arith.mulf %697, %7 : vector<4x10x32xf32>
    %cst_164 = arith.constant dense<0.000000e+00> : vector<4x32xf32>
    %699 = vector.multi_reduction <add>, %698, %cst_164 [1] : vector<4x10x32xf32> to vector<4x32xf32>
    %cst_165 = arith.constant dense<0.000000e+00> : vector<4x96xf32>
    %700 = tpu.matmul %674, %0, %cst_165 {dimension_numbers = #tpu.dot_dimension_numbers<[1], [0], [0], [1], [0, 0, 1, 1], [], []>} : vector<4x20xf32>, vector<20x96xf32>, vector<4x96xf32> -> vector<4x96xf32>
    %cst_166 = arith.constant dense<0.000000e+00> : vector<4x96xf32>
    %701 = tpu.matmul %699, %1, %cst_166 {dimension_numbers = #tpu.dot_dimension_numbers<[1], [0], [0], [1], [0, 0, 1, 1], [], []>} : vector<4x32xf32>, vector<32x96xf32>, vector<4x96xf32> -> vector<4x96xf32>
    %702 = arith.addf %700, %701 : vector<4x96xf32>
    %703 = arith.addf %702, %13 : vector<4x96xf32>
    %704 = vector.extract_strided_slice %703 {offsets = [0, 0], sizes = [4, 32], strides = [1, 1]} : vector<4x96xf32> to vector<4x32xf32>
    %705 = vector.extract_strided_slice %676 {offsets = [0, 0], sizes = [4, 32], strides = [1, 1]} : vector<4x96xf32> to vector<4x32xf32>
    %706 = arith.addf %704, %705 : vector<4x32xf32>
    %707 = arith.negf %706 : vector<4x32xf32>
    %708 = math.exp %707 : vector<4x32xf32>
    %cst_167 = arith.constant 1.000000e+00 : f32
    %709 = vector.broadcast %cst_167 : f32 to vector<4x32xf32>
    %710 = arith.addf %709, %708 : vector<4x32xf32>
    %711 = arith.divf %709, %710 : vector<4x32xf32>
    %712 = vector.extract_strided_slice %703 {offsets = [0, 32], sizes = [4, 32], strides = [1, 1]} : vector<4x96xf32> to vector<4x32xf32>
    %713 = vector.extract_strided_slice %676 {offsets = [0, 32], sizes = [4, 32], strides = [1, 1]} : vector<4x96xf32> to vector<4x32xf32>
    %714 = arith.addf %712, %713 : vector<4x32xf32>
    %715 = arith.negf %714 : vector<4x32xf32>
    %716 = math.exp %715 : vector<4x32xf32>
    %cst_168 = arith.constant 1.000000e+00 : f32
    %717 = vector.broadcast %cst_168 : f32 to vector<4x32xf32>
    %718 = arith.addf %717, %716 : vector<4x32xf32>
    %719 = arith.divf %717, %718 : vector<4x32xf32>
    %720 = vector.extract_strided_slice %703 {offsets = [0, 64], sizes = [4, 32], strides = [1, 1]} : vector<4x96xf32> to vector<4x32xf32>
    %721 = vector.extract_strided_slice %676 {offsets = [0, 64], sizes = [4, 32], strides = [1, 1]} : vector<4x96xf32> to vector<4x32xf32>
    %722 = arith.mulf %711, %721 : vector<4x32xf32>
    %723 = arith.addf %720, %722 : vector<4x32xf32>
    %724 = math.tanh %723 : vector<4x32xf32>
    %cst_169 = arith.constant 1.000000e+00 : f32
    %725 = vector.broadcast %cst_169 : f32 to vector<4x32xf32>
    %726 = arith.subf %725, %719 : vector<4x32xf32>
    %727 = arith.mulf %726, %724 : vector<4x32xf32>
    %728 = arith.mulf %719, %648 : vector<4x32xf32>
    %729 = arith.addf %727, %728 : vector<4x32xf32>
    %cst_170 = arith.constant dense<0.000000e+00> : vector<4x256xf32>
    %730 = tpu.matmul %729, %2, %cst_170 {dimension_numbers = #tpu.dot_dimension_numbers<[1], [0], [0], [1], [0, 0, 1, 1], [], []>} : vector<4x32xf32>, vector<32x256xf32>, vector<4x256xf32> -> vector<4x256xf32>
    %731 = arith.addf %730, %10 : vector<4x256xf32>
    %732 = vector.extract_strided_slice %731 {offsets = [0, 128], sizes = [4, 128], strides = [1, 1]} : vector<4x256xf32> to vector<4x128xf32>
    %cst_171 = arith.constant dense<0xFF800000> : vector<4xf32>
    %733 = vector.multi_reduction <maximumf>, %732, %cst_171 [1] : vector<4x128xf32> to vector<4xf32>
    %734 = vector.shape_cast %733 : vector<4xf32> to vector<4x1xf32>
    %735 = vector.broadcast %734 : vector<4x1xf32> to vector<4x128xf32>
    %736 = arith.subf %732, %735 : vector<4x128xf32>
    %737 = math.exp %736 : vector<4x128xf32>
    %cst_172 = arith.constant dense<0.000000e+00> : vector<4xf32>
    %738 = vector.multi_reduction <add>, %737, %cst_172 [1] : vector<4x128xf32> to vector<4xf32>
    %739 = vector.shape_cast %738 : vector<4xf32> to vector<4x1xf32>
    %740 = math.log %739 : vector<4x1xf32>
    %741 = arith.addf %740, %734 : vector<4x1xf32>
    %742 = vector.broadcast %741 : vector<4x1xf32> to vector<4x128xf32>
    %743 = arith.subf %732, %742 : vector<4x128xf32>
    %c0_173 = arith.constant 0 : index
    %c8 = arith.constant 8 : index
    %c0_174 = arith.constant 0 : index
    %744 = vector.load %arg12[%c0_173, %c8, %c0_174] : memref<4x10x128xf32, #tpu.memory_space<vmem>>, vector<4x1x128xf32>
    %745 = vector.shape_cast %744 : vector<4x1x128xf32> to vector<4x128xf32>
    %746 = vector.shape_cast %743 : vector<4x128xf32> to vector<4x1x128xf32>
    tpu.vector_store %arg12[%c0_173, %c8, %c0_174], %746 {strides = array<i32>} : memref<4x10x128xf32, #tpu.memory_space<vmem>>, vector<4x1x128xf32>,
    %c0_175 = arith.constant 0 : index
    %c8_176 = arith.constant 8 : index
    %c0_177 = arith.constant 0 : index
    %747 = vector.load %arg14[%c0_175, %c8_176, %c0_177] : memref<4x10x10xf32, #tpu.memory_space<vmem>>, vector<4x1x10xf32>
    %748 = vector.shape_cast %747 : vector<4x1x10xf32> to vector<4x10xf32>
    %749 = vector.shape_cast %695 : vector<4x10xf32> to vector<4x1x10xf32>
    tpu.vector_store %arg14[%c0_175, %c8_176, %c0_177], %749 {strides = array<i32>} : memref<4x10x10xf32, #tpu.memory_space<vmem>>, vector<4x1x10xf32>,
    %750 = tpu.reduce_index %732 {axis = 1 : i32, kind = #tpu.reduction_kind<arg_max>} : vector<4x128xf32> -> vector<4xi32>
    %751 = vector.shape_cast %750 : vector<4xi32> to vector<4x1xi32>
    %752 = vector.broadcast %751 : vector<4x1xi32> to vector<4x20xi32>
    %753 = arith.cmpi eq, %20, %752 : vector<4x20xi32>
    %754 = arith.extui %753 : vector<4x20xi1> to vector<4x20xi32>
    %755 = arith.sitofp %754 : vector<4x20xi32> to vector<4x20xf32>
    %756 = vector.extract_strided_slice %731 {offsets = [0, 0], sizes = [4, 32], strides = [1, 1]} : vector<4x256xf32> to vector<4x32xf32>
    %757 = vector.extract_strided_slice %731 {offsets = [0, 32], sizes = [4, 96], strides = [1, 1]} : vector<4x256xf32> to vector<4x96xf32>
    %758 = vector.shape_cast %756 : vector<4x32xf32> to vector<4x1x32xf32>
    %759 = vector.broadcast %758 : vector<4x1x32xf32> to vector<4x10x32xf32>
    %760 = arith.addf %759, %17 : vector<4x10x32xf32>
    %761 = math.tanh %760 : vector<4x10x32xf32>
    %762 = vector.shape_cast %5 : vector<1x32xf32> to vector<1x1x32xf32>
    %763 = vector.broadcast %762 : vector<1x1x32xf32> to vector<4x10x32xf32>
    %764 = arith.mulf %761, %763 : vector<4x10x32xf32>
    %cst_178 = arith.constant dense<0.000000e+00> : vector<4x10xf32>
    %765 = vector.multi_reduction <add>, %764, %cst_178 [2] : vector<4x10x32xf32> to vector<4x10xf32>
    %766 = vector.broadcast %6 : f32 to vector<4x10xf32>
    %767 = arith.addf %765, %766 : vector<4x10xf32>
    %cst_179 = arith.constant dense<0xFF800000> : vector<4xf32>
    %768 = vector.multi_reduction <maximumf>, %767, %cst_179 [1] : vector<4x10xf32> to vector<4xf32>
    %769 = vector.shape_cast %768 : vector<4xf32> to vector<4x1xf32>
    %770 = vector.broadcast %769 : vector<4x1xf32> to vector<4x10xf32>
    %771 = arith.subf %767, %770 : vector<4x10xf32>
    %772 = math.exp %771 : vector<4x10xf32>
    %cst_180 = arith.constant dense<0.000000e+00> : vector<4xf32>
    %773 = vector.multi_reduction <add>, %772, %cst_180 [1] : vector<4x10xf32> to vector<4xf32>
    %774 = vector.shape_cast %773 : vector<4xf32> to vector<4x1xf32>
    %775 = vector.broadcast %774 : vector<4x1xf32> to vector<4x10xf32>
    %776 = arith.divf %772, %775 : vector<4x10xf32>
    %777 = vector.shape_cast %776 : vector<4x10xf32> to vector<4x10x1xf32>
    %778 = vector.broadcast %777 : vector<4x10x1xf32> to vector<4x10x32xf32>
    %779 = arith.mulf %778, %7 : vector<4x10x32xf32>
    %cst_181 = arith.constant dense<0.000000e+00> : vector<4x32xf32>
    %780 = vector.multi_reduction <add>, %779, %cst_181 [1] : vector<4x10x32xf32> to vector<4x32xf32>
    %cst_182 = arith.constant dense<0.000000e+00> : vector<4x96xf32>
    %781 = tpu.matmul %755, %0, %cst_182 {dimension_numbers = #tpu.dot_dimension_numbers<[1], [0], [0], [1], [0, 0, 1, 1], [], []>} : vector<4x20xf32>, vector<20x96xf32>, vector<4x96xf32> -> vector<4x96xf32>
    %cst_183 = arith.constant dense<0.000000e+00> : vector<4x96xf32>
    %782 = tpu.matmul %780, %1, %cst_183 {dimension_numbers = #tpu.dot_dimension_numbers<[1], [0], [0], [1], [0, 0, 1, 1], [], []>} : vector<4x32xf32>, vector<32x96xf32>, vector<4x96xf32> -> vector<4x96xf32>
    %783 = arith.addf %781, %782 : vector<4x96xf32>
    %784 = arith.addf %783, %13 : vector<4x96xf32>
    %785 = vector.extract_strided_slice %784 {offsets = [0, 0], sizes = [4, 32], strides = [1, 1]} : vector<4x96xf32> to vector<4x32xf32>
    %786 = vector.extract_strided_slice %757 {offsets = [0, 0], sizes = [4, 32], strides = [1, 1]} : vector<4x96xf32> to vector<4x32xf32>
    %787 = arith.addf %785, %786 : vector<4x32xf32>
    %788 = arith.negf %787 : vector<4x32xf32>
    %789 = math.exp %788 : vector<4x32xf32>
    %cst_184 = arith.constant 1.000000e+00 : f32
    %790 = vector.broadcast %cst_184 : f32 to vector<4x32xf32>
    %791 = arith.addf %790, %789 : vector<4x32xf32>
    %792 = arith.divf %790, %791 : vector<4x32xf32>
    %793 = vector.extract_strided_slice %784 {offsets = [0, 32], sizes = [4, 32], strides = [1, 1]} : vector<4x96xf32> to vector<4x32xf32>
    %794 = vector.extract_strided_slice %757 {offsets = [0, 32], sizes = [4, 32], strides = [1, 1]} : vector<4x96xf32> to vector<4x32xf32>
    %795 = arith.addf %793, %794 : vector<4x32xf32>
    %796 = arith.negf %795 : vector<4x32xf32>
    %797 = math.exp %796 : vector<4x32xf32>
    %cst_185 = arith.constant 1.000000e+00 : f32
    %798 = vector.broadcast %cst_185 : f32 to vector<4x32xf32>
    %799 = arith.addf %798, %797 : vector<4x32xf32>
    %800 = arith.divf %798, %799 : vector<4x32xf32>
    %801 = vector.extract_strided_slice %784 {offsets = [0, 64], sizes = [4, 32], strides = [1, 1]} : vector<4x96xf32> to vector<4x32xf32>
    %802 = vector.extract_strided_slice %757 {offsets = [0, 64], sizes = [4, 32], strides = [1, 1]} : vector<4x96xf32> to vector<4x32xf32>
    %803 = arith.mulf %792, %802 : vector<4x32xf32>
    %804 = arith.addf %801, %803 : vector<4x32xf32>
    %805 = math.tanh %804 : vector<4x32xf32>
    %cst_186 = arith.constant 1.000000e+00 : f32
    %806 = vector.broadcast %cst_186 : f32 to vector<4x32xf32>
    %807 = arith.subf %806, %800 : vector<4x32xf32>
    %808 = arith.mulf %807, %805 : vector<4x32xf32>
    %809 = arith.mulf %800, %729 : vector<4x32xf32>
    %810 = arith.addf %808, %809 : vector<4x32xf32>
    %cst_187 = arith.constant dense<0.000000e+00> : vector<4x256xf32>
    %811 = tpu.matmul %810, %2, %cst_187 {dimension_numbers = #tpu.dot_dimension_numbers<[1], [0], [0], [1], [0, 0, 1, 1], [], []>} : vector<4x32xf32>, vector<32x256xf32>, vector<4x256xf32> -> vector<4x256xf32>
    %812 = arith.addf %811, %10 : vector<4x256xf32>
    %813 = vector.extract_strided_slice %812 {offsets = [0, 128], sizes = [4, 128], strides = [1, 1]} : vector<4x256xf32> to vector<4x128xf32>
    %cst_188 = arith.constant dense<0xFF800000> : vector<4xf32>
    %814 = vector.multi_reduction <maximumf>, %813, %cst_188 [1] : vector<4x128xf32> to vector<4xf32>
    %815 = vector.shape_cast %814 : vector<4xf32> to vector<4x1xf32>
    %816 = vector.broadcast %815 : vector<4x1xf32> to vector<4x128xf32>
    %817 = arith.subf %813, %816 : vector<4x128xf32>
    %818 = math.exp %817 : vector<4x128xf32>
    %cst_189 = arith.constant dense<0.000000e+00> : vector<4xf32>
    %819 = vector.multi_reduction <add>, %818, %cst_189 [1] : vector<4x128xf32> to vector<4xf32>
    %820 = vector.shape_cast %819 : vector<4xf32> to vector<4x1xf32>
    %821 = math.log %820 : vector<4x1xf32>
    %822 = arith.addf %821, %815 : vector<4x1xf32>
    %823 = vector.broadcast %822 : vector<4x1xf32> to vector<4x128xf32>
    %824 = arith.subf %813, %823 : vector<4x128xf32>
    %c0_190 = arith.constant 0 : index
    %c9 = arith.constant 9 : index
    %c0_191 = arith.constant 0 : index
    %825 = vector.load %arg12[%c0_190, %c9, %c0_191] : memref<4x10x128xf32, #tpu.memory_space<vmem>>, vector<4x1x128xf32>
    %826 = vector.shape_cast %825 : vector<4x1x128xf32> to vector<4x128xf32>
    %827 = vector.shape_cast %824 : vector<4x128xf32> to vector<4x1x128xf32>
    tpu.vector_store %arg12[%c0_190, %c9, %c0_191], %827 {strides = array<i32>} : memref<4x10x128xf32, #tpu.memory_space<vmem>>, vector<4x1x128xf32>,
    %c0_192 = arith.constant 0 : index
    %c9_193 = arith.constant 9 : index
    %c0_194 = arith.constant 0 : index
    %828 = vector.load %arg14[%c0_192, %c9_193, %c0_194] : memref<4x10x10xf32, #tpu.memory_space<vmem>>, vector<4x1x10xf32>
    %829 = vector.shape_cast %828 : vector<4x1x10xf32> to vector<4x10xf32>
    %830 = vector.shape_cast %776 : vector<4x10xf32> to vector<4x1x10xf32>
    tpu.vector_store %arg14[%c0_192, %c9_193, %c0_194], %830 {strides = array<i32>} : memref<4x10x10xf32, #tpu.memory_space<vmem>>, vector<4x1x10xf32>,
    %c0_195 = arith.constant 0 : index
    %c0_196 = arith.constant 0 : index
    %c0_197 = arith.constant 0 : index
    %831 = vector.load %arg13[%c0_195, %c0_196, %c0_197] : memref<4x1x32xf32, #tpu.memory_space<vmem>>, vector<4x1x32xf32>
    %832 = vector.shape_cast %831 : vector<4x1x32xf32> to vector<4x32xf32>
    %833 = vector.shape_cast %810 : vector<4x32xf32> to vector<4x1x32xf32>
    tpu.vector_store %arg13[%c0_195, %c0_196, %c0_197], %833 {strides = array<i32>} : memref<4x1x32xf32, #tpu.memory_space<vmem>>, vector<4x1x32xf32>,
    return
  }
  func.func @transform_0(%arg0: i32) -> (i32, i32) {
    %c0_i32 = arith.constant 0 : i32
    %c0_i32_0 = arith.constant 0 : i32
    %c0_i32_1 = arith.constant 0 : i32
    return %c0_i32, %c0_i32_0 : i32, i32
  }
  func.func @transform_1(%arg0: i32) -> (i32, i32) {
    %c0_i32 = arith.constant 0 : i32
    %c0_i32_0 = arith.constant 0 : i32
    %c0_i32_1 = arith.constant 0 : i32
    return %c0_i32, %c0_i32_0 : i32, i32
  }
  func.func @transform_2(%arg0: i32) -> (i32, i32) {
    %c0_i32 = arith.constant 0 : i32
    %c0_i32_0 = arith.constant 0 : i32
    %c0_i32_1 = arith.constant 0 : i32
    return %c0_i32, %c0_i32_0 : i32, i32
  }
  func.func @transform_3(%arg0: i32) -> (i32, i32) {
    %c0_i32 = arith.constant 0 : i32
    %c0_i32_0 = arith.constant 0 : i32
    %c0_i32_1 = arith.constant 0 : i32
    return %c0_i32, %c0_i32_0 : i32, i32
  }
  func.func @transform_4(%arg0: i32) -> (i32, i32) {
    %c0_i32 = arith.constant 0 : i32
    %c0_i32_0 = arith.constant 0 : i32
    %c0_i32_1 = arith.constant 0 : i32
    return %c0_i32, %c0_i32_0 : i32, i32
  }
  func.func @transform_5(%arg0: i32) -> (i32, i32) {
    %c0_i32 = arith.constant 0 : i32
    %c0_i32_0 = arith.constant 0 : i32
    %c0_i32_1 = arith.constant 0 : i32
    return %c0_i32, %c0_i32_0 : i32, i32
  }
  func.func @transform_6(%arg0: i32) -> (i32, i32) {
    %c0_i32 = arith.constant 0 : i32
    %c0_i32_0 = arith.constant 0 : i32
    %c0_i32_1 = arith.constant 0 : i32
    return %c0_i32, %c0_i32_0 : i32, i32
  }
  func.func @transform_7(%arg0: i32) -> (i32, i32) {
    %c0_i32 = arith.constant 0 : i32
    %c0_i32_0 = arith.constant 0 : i32
    %c0_i32_1 = arith.constant 0 : i32
    return %c0_i32, %c0_i32_0 : i32, i32
  }
  func.func @transform_8(%arg0: i32) -> (i32, i32) {
    %c0_i32 = arith.constant 0 : i32
    %c0_i32_0 = arith.constant 0 : i32
    %c0_i32_1 = arith.constant 0 : i32
    return %c0_i32, %c0_i32_0 : i32, i32
  }
  func.func @transform_9(%arg0: i32) -> (i32, i32, i32) {
    %c0_i32 = arith.constant 0 : i32
    %c0_i32_0 = arith.constant 0 : i32
    %c0_i32_1 = arith.constant 0 : i32
    return %arg0, %c0_i32, %c0_i32_0 : i32, i32, i32
  }
  func.func @transform_10(%arg0: i32) -> (i32, i32, i32) {
    %c0_i32 = arith.constant 0 : i32
    %c0_i32_0 = arith.constant 0 : i32
    %c0_i32_1 = arith.constant 0 : i32
    return %arg0, %c0_i32, %c0_i32_0 : i32, i32, i32
  }
  func.func @transform_11(%arg0: i32) -> (i32, i32, i32) {
    %c0_i32 = arith.constant 0 : i32
    %c0_i32_0 = arith.constant 0 : i32
    %c0_i32_1 = arith.constant 0 : i32
    return %arg0, %c0_i32, %c0_i32_0 : i32, i32, i32
  }
  func.func @transform_12(%arg0: i32) -> (i32, i32, i32) {
    %c0_i32 = arith.constant 0 : i32
    %c0_i32_0 = arith.constant 0 : i32
    %c0_i32_1 = arith.constant 0 : i32
    return %arg0, %c0_i32, %c0_i32_0 : i32, i32, i32
  }
  func.func @transform_13(%arg0: i32) -> (i32, i32, i32) {
    %c0_i32 = arith.constant 0 : i32
    %c0_i32_0 = arith.constant 0 : i32
    %c0_i32_1 = arith.constant 0 : i32
    return %arg0, %c0_i32, %c0_i32_0 : i32, i32, i32
  }
}

</mosaic_0001>

<llo_original>
// kernel: tpu_custom_call.1
$region0: #{tpu_custom_call.1}
  #allocation0 [shape = 'u32[]', space=smem, size = 0x4, offset = 0x4, fixed_abs, tag = 'smem constant byte address 0x4 - core index']
  #allocation1 [shape = 'u32[144,128]{1,0:T(1,128)}', space=vmem, size = 0x12000, scoped, tag = 'internal scratch']
  #allocation2 [shape = 'f32[1,1]{1,0:T(1,128)S(6)}', space=smem, size = 0x200, scoped, tag = 'scoped memory for tpu_custom_call.1']
  %s0 = inlined_call_operand.hbm [shape: f32[20,96], index: 0, kind: input, shape index: {}]
  %s1 = inlined_call_operand.vmem [shape: f32[32,96], index: 1, kind: input, shape index: {}]
  %s2 = inlined_call_operand.vmem [shape: f32[32,256], index: 2, kind: input, shape index: {}]
  %s3 = inlined_call_operand.vmem [shape: f32[1,256], index: 3, kind: input, shape index: {}]
  %s4 = inlined_call_operand.vmem [shape: f32[1,96], index: 4, kind: input, shape index: {}]
  %s5 = inlined_call_operand.hbm [shape: f32[32,32], index: 5, kind: input, shape index: {}]
  %s6 = inlined_call_operand.vmem [shape: f32[1,32], index: 6, kind: input, shape index: {}]
  %s7 = inlined_call_operand.vmem [shape: f32[1,32], index: 7, kind: input, shape index: {}]
  %s8 = inlined_call_operand.<no memory space> [shape: f32[1,1], index: 8, kind: input, shape index: {}]
  %s9 = inlined_call_operand.vmem [shape: f32[4,10,32], index: 9, kind: input, shape index: {}]
  %s10 = inlined_call_operand.vmem [shape: f32[4,1,32], index: 10, kind: input, shape index: {}]
  %s11 = inlined_call_operand.vmem [shape: f32[4,10,128], index: 11, kind: output, shape index: {0}]
  %s12 = inlined_call_operand.hbm [shape: f32[4,1,32], index: 12, kind: output, shape index: {1}]
  %s13 = inlined_call_operand.vmem [shape: f32[4,10,10], index: 13, kind: output, shape index: {2}]
  %14 = xla_tuple %s11, %s12, %s13
  %s15 = sld [smem:[#allocation0]]
  $region78: #{tpu_custom_call.1} parent=0
    _
  %s17 = ssub.s32 1, %s15
  %s18 = scalar_select 0, %s17, %s15
  %19 = sst [smem:[#allocation2]] %s8
  $region1: #{tpu_custom_call.1} parent=0
    #allocation3 [shape = 'u8[12288]{0}', space=vmem, size = 0x3000, scoped, tag = 'input window, operand 0, single buffered']
    #allocation4 [shape = 's32[1]{0}', space=sflag, size = 0x4, scoped, tag = 'scoped memory for tpu_custom_call.1']
    #allocation5 [shape = 's32[1]{0}', space=sflag, size = 0x4, scoped, tag = 'scoped memory for tpu_custom_call.1']
    #allocation6 [shape = 'u8[16384]{0}', space=vmem, size = 0x4000, scoped, tag = 'input window, operand 5, single buffered']
    #allocation7 [shape = 's32[1]{0}', space=sflag, size = 0x4, scoped, tag = 'scoped memory for tpu_custom_call.1']
    #allocation8 [shape = 'u8[2048]{0}', space=vmem, size = 0x800, scoped, tag = 'output window, operand 1, single buffered']
    %20 = vsyncpa [#allocation4], 0
    %21 = vsyncpa [#allocation7], 0
    %22 = vsyncpa [#allocation5], 0
    // Predicated region
    $region2: #{tpu_custom_call.1} parent=1 // pred_check
      _
    $region3: #{tpu_custom_call.1} parent=1 // pred_check_branch
      %24 = sbr.rel (0) target = $region5
    $region4: #{tpu_custom_call.1} parent=1 // pred_region
      %s26 = ssub.s32 384, 384
      %27 = vsyncadd [#allocation4], %s26
      %s28 = sshll.u32 [#allocation3], 4
      %s29 = int_to_ptr.vmem [resolvable:$true] %s28
      %34 = dma.hbm_to_vmem [thread:$0]  %s0, 384, %s29, [#allocation4], 128, 128, 8
    $region5: #{tpu_custom_call.1} parent=1 // pred_fallthru
      _
    // Predicated region
    $region6: #{tpu_custom_call.1} parent=1 // pred_check
      _
    $region7: #{tpu_custom_call.1} parent=1 // pred_check_branch
      %36 = sbr.rel (0) target = $region9
    $region8: #{tpu_custom_call.1} parent=1 // pred_region
      _
    $region9: #{tpu_custom_call.1} parent=1 // pred_fallthru
      _
    // Predicated region
    $region10: #{tpu_custom_call.1} parent=1 // pred_check
      _
    $region11: #{tpu_custom_call.1} parent=1 // pred_check_branch
      %38 = sbr.rel (0) target = $region13
    $region12: #{tpu_custom_call.1} parent=1 // pred_region
      _
    $region13: #{tpu_custom_call.1} parent=1 // pred_fallthru
      _
    // Predicated region
    $region14: #{tpu_custom_call.1} parent=1 // pred_check
      _
    $region15: #{tpu_custom_call.1} parent=1 // pred_check_branch
      %40 = sbr.rel (0) target = $region17
    $region16: #{tpu_custom_call.1} parent=1 // pred_region
      _
    $region17: #{tpu_custom_call.1} parent=1 // pred_fallthru
      _
    // Predicated region
    $region18: #{tpu_custom_call.1} parent=1 // pred_check
      _
    $region19: #{tpu_custom_call.1} parent=1 // pred_check_branch
      %42 = sbr.rel (0) target = $region21
    $region20: #{tpu_custom_call.1} parent=1 // pred_region
      _
    $region21: #{tpu_custom_call.1} parent=1 // pred_fallthru
      _
    // Predicated region
    $region22: #{tpu_custom_call.1} parent=1 // pred_check
      _
    $region23: #{tpu_custom_call.1} parent=1 // pred_check_branch
      %44 = sbr.rel (0) target = $region25
    $region24: #{tpu_custom_call.1} parent=1 // pred_region
      %s46 = ssub.s32 512, 512
      %47 = vsyncadd [#allocation7], %s46
      %s48 = sshll.u32 [#allocation6], 4
      %s49 = int_to_ptr.vmem [resolvable:$true] %s48
      %54 = dma.hbm_to_vmem [thread:$0]  %s5, 512, %s49, [#allocation7], 128, 128, 8
    $region25: #{tpu_custom_call.1} parent=1 // pred_fallthru
      _
    // Predicated region
    $region26: #{tpu_custom_call.1} parent=1 // pred_check
      _
    $region27: #{tpu_custom_call.1} parent=1 // pred_check_branch
      %56 = sbr.rel (0) target = $region29
    $region28: #{tpu_custom_call.1} parent=1 // pred_region
      _
    $region29: #{tpu_custom_call.1} parent=1 // pred_fallthru
      _
    // Predicated region
    $region30: #{tpu_custom_call.1} parent=1 // pred_check
      _
    $region31: #{tpu_custom_call.1} parent=1 // pred_check_branch
      %58 = sbr.rel (0) target = $region33
    $region32: #{tpu_custom_call.1} parent=1 // pred_region
      _
    $region33: #{tpu_custom_call.1} parent=1 // pred_fallthru
      _
    // Predicated region
    $region34: #{tpu_custom_call.1} parent=1 // pred_check
      _
    $region35: #{tpu_custom_call.1} parent=1 // pred_check_branch
      %60 = sbr.rel (0) target = $region37
    $region36: #{tpu_custom_call.1} parent=1 // pred_region
      _
    $region37: #{tpu_custom_call.1} parent=1 // pred_fallthru
      _
    // Predicated region
    $region38: #{tpu_custom_call.1} parent=1 // pred_check
      _
    $region39: #{tpu_custom_call.1} parent=1 // pred_check_branch
      %62 = sbr.rel (0) target = $region41
    $region40: #{tpu_custom_call.1} parent=1 // pred_region
      _
    $region41: #{tpu_custom_call.1} parent=1 // pred_fallthru
      _
    // Predicated region
    $region42: #{tpu_custom_call.1} parent=1 // pred_check
      _
    $region43: #{tpu_custom_call.1} parent=1 // pred_check_branch
      %64 = sbr.rel (0) target = $region45
    $region44: #{tpu_custom_call.1} parent=1 // pred_region
      _
    $region45: #{tpu_custom_call.1} parent=1 // pred_fallthru
      _
    // Predicated region
    $region46: #{tpu_custom_call.1} parent=1 // pred_check
      _
    $region47: #{tpu_custom_call.1} parent=1 // pred_check_branch
      %66 = sbr.rel (0) target = $region49
    $region48: #{tpu_custom_call.1} parent=1 // pred_region
      %67 = dma.done [#allocation4], 384
    $region49: #{tpu_custom_call.1} parent=1 // pred_fallthru
      _
    // Predicated region
    $region50: #{tpu_custom_call.1} parent=1 // pred_check
      _
    $region51: #{tpu_custom_call.1} parent=1 // pred_check_branch
      %69 = sbr.rel (0) target = $region53
    $region52: #{tpu_custom_call.1} parent=1 // pred_region
      %70 = dma.done [#allocation7], 512
    $region53: #{tpu_custom_call.1} parent=1 // pred_fallthru
      _
    %v71 = vld [vmem:[#allocation3] sm:$0xff]
    %v72 = vld [vmem:[#allocation3 + $0x8] sm:$0xff]
    %v73 = vld [vmem:[#allocation3 + $0x10] sm:$0xf]
    %v74 = vld [vmem:[%s1] sm:$0xff]
    %v75 = vld [vmem:[%s1 + $0x8] sm:$0xff]
    %v76 = vld [vmem:[%s1 + $0x10] sm:$0xff]
    %v77 = vld [vmem:[%s1 + $0x18] sm:$0xff]
    %v78 = vld [vmem:[%s2] sm:$0xff]
    %v79 = vld [vmem:[%s2 + $0x8] sm:$0xff]
    %v80 = vld [vmem:[%s2 + $0x10] sm:$0xff]
    %v81 = vld [vmem:[%s2 + $0x18] sm:$0xff]
    %v82 = vld [vmem:[%s2 + $0x20] sm:$0xff]
    %v83 = vld [vmem:[%s2 + $0x28] sm:$0xff]
    %v84 = vld [vmem:[%s2 + $0x30] sm:$0xff]
    %v85 = vld [vmem:[%s2 + $0x38] sm:$0xff]
    %v86 = vld [vmem:[#allocation6] sm:$0xff]
    %v87 = vld [vmem:[#allocation6 + $0x8] sm:$0xff]
    %v88 = vld [vmem:[#allocation6 + $0x10] sm:$0xff]
    %v89 = vld [vmem:[#allocation6 + $0x18] sm:$0xff]
    %v90 = vld [vmem:[%s6] sm:$0x1]
    %v91 = vld [vmem:[%s7] sm:$0x1]
    %s92 = sld [smem:[#allocation2]]
    %v93 = vld [vmem:[%s9] sm:$0xff]
    %v94 = vld [vmem:[%s9 + $0x8] sm:$0x3]
    %v95 = vld [vmem:[%s9 + $0x10] sm:$0xff]
    %v96 = vld [vmem:[%s9 + $0x18] sm:$0x3]
    %v97 = vld [vmem:[%s9 + $0x20] sm:$0xff]
    %v98 = vld [vmem:[%s9 + $0x28] sm:$0x3]
    %v99 = vld [vmem:[%s9 + $0x30] sm:$0xff]
    %v100 = vld [vmem:[%s9 + $0x38] sm:$0x3]
    %v101 = vld [vmem:[%s3] sm:$0x3]
    %v103 = vlaneseq
    %v104 = vshrl.u32 %v103, 7
    %v105 = vsub.s32 0, %v104
    %v106 = vrot.slane %v101, %v105
    %v107 = vlaneseq
    %v108 = vshrl.u32 %v107, 7
    %v109 = vsub.s32 1, %v108
    %v110 = vrot.slane %v101, %v109
    %v113 = vld [vmem:[%s4] sm:$0x1]
    %v115 = vlaneseq
    %v116 = vshrl.u32 %v115, 7
    %v117 = vsub.s32 0, %v116
    %v118 = vrot.slane %v113, %v117
    %v121 = vlaneseq
    %v122 = vshrl.u32 %v121, 7
    %v123 = vsub.s32 0, %v122
    %v124 = vrot.slane %v90, %v123
    %v133 = vcombine.high %v93, %v93
    %v135 = vunpack.c.l.s4 1983009808
    %v136 = vunpack.c.0.s8 %v135
    %v137 = vlaneseq
    %v138 = vshrl.u32 %v137, 7
    %v139 = vsub.s32 %v136, %v138
    %v140 = vrot.slane %v93, %v139
    %v142 = vunpack.c.l.s4 1983009808
    %v143 = vunpack.c.0.s8 %v142
    %v144 = vlaneseq
    %v145 = vshrl.u32 %v144, 7
    %v146 = vsub.s32 %v143, %v145
    %v147 = vrot.slane %v133, %v146
    %v148 = vcombine.high %v140, %v140
    %v149 = vcombine.high %v147, %v147
    %v151 = vunpack.c.l.s4 1983009808
    %v152 = vunpack.c.0.s8 %v151
    %v153 = vlaneseq
    %v154 = vshrl.u32 %v153, 7
    %v155 = vsub.s32 %v152, %v154
    %v156 = vrot.slane %v94, %v155
    %v157 = vcombine.high %v95, %v95
    %v159 = vunpack.c.l.s4 1983009808
    %v160 = vunpack.c.0.s8 %v159
    %v161 = vlaneseq
    %v162 = vshrl.u32 %v161, 7
    %v163 = vsub.s32 %v160, %v162
    %v164 = vrot.slane %v95, %v163
    %v166 = vunpack.c.l.s4 1983009808
    %v167 = vunpack.c.0.s8 %v166
    %v168 = vlaneseq
    %v169 = vshrl.u32 %v168, 7
    %v170 = vsub.s32 %v167, %v169
    %v171 = vrot.slane %v157, %v170
    %v172 = vcombine.high %v164, %v164
    %v173 = vcombine.high %v171, %v171
    %v175 = vunpack.c.l.s4 1983009808
    %v176 = vunpack.c.0.s8 %v175
    %v177 = vlaneseq
    %v178 = vshrl.u32 %v177, 7
    %v179 = vsub.s32 %v176, %v178
    %v180 = vrot.slane %v96, %v179
    %v181 = vcombine.high %v97, %v97
    %v183 = vunpack.c.l.s4 1983009808
    %v184 = vunpack.c.0.s8 %v183
    %v185 = vlaneseq
    %v186 = vshrl.u32 %v185, 7
    %v187 = vsub.s32 %v184, %v186
    %v188 = vrot.slane %v97, %v187
    %v190 = vunpack.c.l.s4 1983009808
    %v191 = vunpack.c.0.s8 %v190
    %v192 = vlaneseq
    %v193 = vshrl.u32 %v192, 7
    %v194 = vsub.s32 %v191, %v193
    %v195 = vrot.slane %v181, %v194
    %v196 = vcombine.high %v188, %v188
    %v197 = vcombine.high %v195, %v195
    %v199 = vunpack.c.l.s4 1983009808
    %v200 = vunpack.c.0.s8 %v199
    %v201 = vlaneseq
    %v202 = vshrl.u32 %v201, 7
    %v203 = vsub.s32 %v200, %v202
    %v204 = vrot.slane %v98, %v203
    %v205 = vcombine.high %v99, %v99
    %v207 = vunpack.c.l.s4 1983009808
    %v208 = vunpack.c.0.s8 %v207
    %v209 = vlaneseq
    %v210 = vshrl.u32 %v209, 7
    %v211 = vsub.s32 %v208, %v210
    %v212 = vrot.slane %v99, %v211
    %v214 = vunpack.c.l.s4 1983009808
    %v215 = vunpack.c.0.s8 %v214
    %v216 = vlaneseq
    %v217 = vshrl.u32 %v216, 7
    %v218 = vsub.s32 %v215, %v217
    %v219 = vrot.slane %v205, %v218
    %v220 = vcombine.high %v212, %v212
    %v221 = vcombine.high %v219, %v219
    %v223 = vunpack.c.l.s4 1983009808
    %v224 = vunpack.c.0.s8 %v223
    %v225 = vlaneseq
    %v226 = vshrl.u32 %v225, 7
    %v227 = vsub.s32 %v224, %v226
    %v228 = vrot.slane %v100, %v227
    %v229 = vcombine.high %v124, %v124
    %v231 = vunpack.c.l.s4 1983009808
    %v232 = vunpack.c.0.s8 %v231
    %v233 = vlaneseq
    %v234 = vshrl.u32 %v233, 7
    %v235 = vsub.s32 %v232, %v234
    %v236 = vrot.slane %v124, %v235
    %v238 = vunpack.c.l.s4 1983009808
    %v239 = vunpack.c.0.s8 %v238
    %v240 = vlaneseq
    %v241 = vshrl.u32 %v240, 7
    %v242 = vsub.s32 %v239, %v241
    %v243 = vrot.slane %v229, %v242
    %v244 = vcombine.high %v236, %v236
    %v245 = vcombine.high %v243, %v243
    %v246 = vcombine.low %v140, %v148
    %v247 = vcombine.low %v147, %v149
    %v249 = vunpack.c.l.s4 1983009808
    %v250 = vunpack.c.0.s8 %v249
    %v251 = vlaneseq
    %v252 = vshrl.u32 %v251, 7
    %v253 = vsub.s32 %v250, %v252
    %v254 = vrot.slane %v246, %v253
    %v256 = vunpack.c.l.s4 1983009808
    %v257 = vunpack.c.0.s8 %v256
    %v258 = vlaneseq
    %v259 = vshrl.u32 %v258, 7
    %v260 = vsub.s32 %v257, %v259
    %v261 = vrot.slane %v247, %v260
    %v262 = vcombine.low %v254, %v261
    %v263 = vcombine.low %v156, %v164
    %v264 = vcombine.low %v172, %v171
    %v266 = vunpack.c.l.s4 1983009808
    %v267 = vunpack.c.0.s8 %v266
    %v268 = vlaneseq
    %v269 = vshrl.u32 %v268, 7
    %v270 = vsub.s32 %v267, %v269
    %v271 = vrot.slane %v263, %v270
    %v273 = vunpack.c.l.s4 1983009808
    %v274 = vunpack.c.0.s8 %v273
    %v275 = vlaneseq
    %v276 = vshrl.u32 %v275, 7
    %v277 = vsub.s32 %v274, %v276
    %v278 = vrot.slane %v264, %v277
    %v279 = vcombine.low %v271, %v278
    %v280 = vcombine.low %v173, %v180
    %v281 = vcombine.low %v188, %v196
    %v283 = vunpack.c.l.s4 1983009808
    %v284 = vunpack.c.0.s8 %v283
    %v285 = vlaneseq
    %v286 = vshrl.u32 %v285, 7
    %v287 = vsub.s32 %v284, %v286
    %v288 = vrot.slane %v280, %v287
    %v290 = vunpack.c.l.s4 1983009808
    %v291 = vunpack.c.0.s8 %v290
    %v292 = vlaneseq
    %v293 = vshrl.u32 %v292, 7
    %v294 = vsub.s32 %v291, %v293
    %v295 = vrot.slane %v281, %v294
    %v296 = vcombine.low %v288, %v295
    %v297 = vcombine.low %v195, %v197
    %v298 = vcombine.low %v204, %v212
    %v300 = vunpack.c.l.s4 1983009808
    %v301 = vunpack.c.0.s8 %v300
    %v302 = vlaneseq
    %v303 = vshrl.u32 %v302, 7
    %v304 = vsub.s32 %v301, %v303
    %v305 = vrot.slane %v297, %v304
    %v307 = vunpack.c.l.s4 1983009808
    %v308 = vunpack.c.0.s8 %v307
    %v309 = vlaneseq
    %v310 = vshrl.u32 %v309, 7
    %v311 = vsub.s32 %v308, %v310
    %v312 = vrot.slane %v298, %v311
    %v313 = vcombine.low %v305, %v312
    %v314 = vcombine.low %v220, %v219
    %v315 = vcombine.low %v221, %v228
    %v317 = vunpack.c.l.s4 1983009808
    %v318 = vunpack.c.0.s8 %v317
    %v319 = vlaneseq
    %v320 = vshrl.u32 %v319, 7
    %v321 = vsub.s32 %v318, %v320
    %v322 = vrot.slane %v314, %v321
    %v324 = vunpack.c.l.s4 1983009808
    %v325 = vunpack.c.0.s8 %v324
    %v326 = vlaneseq
    %v327 = vshrl.u32 %v326, 7
    %v328 = vsub.s32 %v325, %v327
    %v329 = vrot.slane %v315, %v328
    %v330 = vcombine.low %v322, %v329
    %v331 = vcombine.low %v236, %v244
    %v332 = vcombine.low %v243, %v245
    %v334 = vunpack.c.l.s4 1983009808
    %v335 = vunpack.c.0.s8 %v334
    %v336 = vlaneseq
    %v337 = vshrl.u32 %v336, 7
    %v338 = vsub.s32 %v335, %v337
    %v339 = vrot.slane %v331, %v338
    %v341 = vunpack.c.l.s4 1983009808
    %v342 = vunpack.c.0.s8 %v341
    %v343 = vlaneseq
    %v344 = vshrl.u32 %v343, 7
    %v345 = vsub.s32 %v342, %v344
    %v346 = vrot.slane %v332, %v345
    %v347 = vcombine.low %v339, %v346
    %v348 = vcombine.low %v236, %v236
    %v349 = vcombine.low %v244, %v243
    %v351 = vunpack.c.l.s4 1983009808
    %v352 = vunpack.c.0.s8 %v351
    %v353 = vlaneseq
    %v354 = vshrl.u32 %v353, 7
    %v355 = vsub.s32 %v352, %v354
    %v356 = vrot.slane %v348, %v355
    %v358 = vunpack.c.l.s4 1983009808
    %v359 = vunpack.c.0.s8 %v358
    %v360 = vlaneseq
    %v361 = vshrl.u32 %v360, 7
    %v362 = vsub.s32 %v359, %v361
    %v363 = vrot.slane %v349, %v362
    %v364 = vcombine.low %v356, %v363
    %v365 = vcombine.low %v245, %v236
    %v367 = vunpack.c.l.s4 1983009808
    %v368 = vunpack.c.0.s8 %v367
    %v369 = vlaneseq
    %v370 = vshrl.u32 %v369, 7
    %v371 = vsub.s32 %v368, %v370
    %v372 = vrot.slane %v365, %v371
    %v373 = vcombine.low %v372, %v339
    %v374 = vcombine.low %v346, %v356
    %v375 = vcombine.low %v363, %v372
    %vm381 = vcmask 261120
    %v382 = vsel %vm381, %v262, 0
    %v384 = vsel %vm381, %v279, 0
    %v386 = vsel %vm381, %v296, 0
    %v388 = vsel %vm381, %v313, 0
    %v390 = vsel %vm381, %v330, 0
    %392 = vmatprep.subr.mxu0 0.0
    %393 = vmatpush1.msra.mxu0 0.0
    %394 = vmatprep.subr.mxu0 0.0
    %395 = vmatpush1.msra.mxu0 0.0
    %396 = vmatprep.subr.mxu0 0.0
    %397 = vmatpush1.msra.mxu0 0.0
    %398 = vmatprep.subr.mxu0 0.0
    %399 = vmatpush1.msra.mxu0 0.0
    %400 = vmatprep.subr.mxu0 0.0
    %401 = vmatpush1.msra.mxu0 0.0
    %402 = vmatprep.subr.mxu0 0.0
    %403 = vmatpush1.msra.mxu0 0.0
    %404 = vmatprep.subr.mxu0 0.0
    %405 = vmatpush1.msra.mxu0 0.0
    %406 = vmatprep.subr.mxu0 0.0
    %407 = vmatpush1.msra.mxu0 0.0
    %408 = vmatprep.subr.mxu0 0.0
    %409 = vmatpush1.msra.mxu0 0.0
    %410 = vmatprep.subr.mxu0 0.0
    %411 = vmatpush1.msra.mxu0 0.0
    %412 = vmatprep.subr.mxu0 0.0
    %413 = vmatpush1.msra.mxu0 0.0
    %414 = vmatprep.subr.mxu0 0.0
    %415 = vmatpush1.msra.mxu0 0.0
    %416 = vmatprep.subr.mxu0 0.0
    %417 = vmatpush1.msra.mxu0 %v89
    %418 = vmatprep.subr.mxu0 0.0
    %419 = vmatpush1.msra.mxu0 %v88
    %420 = vmatprep.subr.mxu0 0.0
    %421 = vmatpush1.msra.mxu0 %v87
    %422 = vmatprep.subr.mxu0 0.0
    %423 = vmatpush1.msra.mxu0 %v86
    %424 = vmatprep.subr.mxu0 0.0
    %425 = vmatpush2.msra.mxu0 0.0
    %426 = vmatprep.subr.mxu0 0.0
    %427 = vmatpush2.msra.mxu0 0.0
    %428 = vmatprep.subr.mxu0 0.0
    %429 = vmatpush2.msra.mxu0 0.0
    %430 = vmatprep.subr.mxu0 0.0
    %431 = vmatpush2.msra.mxu0 0.0
    %432 = vmatprep.subr.mxu0 0.0
    %433 = vmatpush2.msra.mxu0 0.0
    %434 = vmatprep.subr.mxu0 0.0
    %435 = vmatpush2.msra.mxu0 0.0
    %436 = vmatprep.subr.mxu0 0.0
    %437 = vmatpush2.msra.mxu0 0.0
    %438 = vmatprep.subr.mxu0 0.0
    %439 = vmatpush2.msra.mxu0 0.0
    %440 = vmatprep.subr.mxu0 0.0
    %441 = vmatpush2.msra.mxu0 0.0
    %442 = vmatprep.subr.mxu0 0.0
    %443 = vmatpush2.msra.mxu0 0.0
    %444 = vmatprep.subr.mxu0 0.0
    %445 = vmatpush2.msra.mxu0 0.0
    %446 = vmatprep.subr.mxu0 0.0
    %447 = vmatpush2.msra.mxu0 0.0
    %448 = vmatprep.subr.mxu0 0.0
    %449 = vmatpush2.msra.mxu0 0.0
    %450 = vmatprep.subr.mxu0 0.0
    %451 = vmatpush2.msra.mxu0 0.0
    %452 = vmatprep.subr.mxu0 0.0
    %453 = vmatpush2.msra.mxu0 0.0
    %454 = vmatprep.subr.mxu0 0.0
    %455 = vmatpush2.msra.mxu0 0.0
    %456 = vmatprep.mubr.f32.mxu0 0.0
    %457 = vmatmul.mubr.f32.gmra.mxu0 %v382
    %v458 = vpop.f32.mrf.mxu0
    %v459 = vadd.f32 %v347, %v458
    %v460 = vpop.f32.mrf.mxu0
    %461 = vmatprep.mubr.f32.mxu0 0.0
    %462 = vmatmul.mubr.f32.gmra.mxu0 %v384
    %v463 = vpop.f32.mrf.mxu0
    %v464 = vadd.f32 %v364, %v463
    %v465 = vpop.f32.mrf.mxu0
    %466 = vmatprep.mubr.f32.mxu0 0.0
    %467 = vmatmul.mubr.f32.gmra.mxu0 %v386
    %v468 = vpop.f32.mrf.mxu0
    %v469 = vadd.f32 %v373, %v468
    %v470 = vpop.f32.mrf.mxu0
    %471 = vmatprep.mubr.f32.mxu0 0.0
    %472 = vmatmul.mubr.f32.gmra.mxu0 %v388
    %v473 = vpop.f32.mrf.mxu0
    %v474 = vadd.f32 %v374, %v473
    %v475 = vpop.f32.mrf.mxu0
    %476 = vmatprep.mubr.f32.mxu0 0.0
    %477 = vmatmul.mubr.f32.gmra.mxu0 %v390
    %v478 = vpop.f32.mrf.mxu0
    %v479 = vadd.f32 %v375, %v478
    %v480 = vpop.f32.mrf.mxu0
    %481 = vdwg.mxu0
    %v487 = vcombine.high %v459, %v459
    %v489 = vunpack.c.l.s4 1983009808
    %v490 = vunpack.c.0.s8 %v489
    %v491 = vlaneseq
    %v492 = vshrl.u32 %v491, 7
    %v493 = vsub.s32 %v490, %v492
    %v494 = vrot.slane %v459, %v493
    %v496 = vunpack.c.l.s4 1983009808
    %v497 = vunpack.c.0.s8 %v496
    %v498 = vlaneseq
    %v499 = vshrl.u32 %v498, 7
    %v500 = vsub.s32 %v497, %v499
    %v501 = vrot.slane %v487, %v500
    %v502 = vcombine.high %v494, %v494
    %v503 = vcombine.high %v501, %v501
    %v504 = vcombine.high %v464, %v464
    %v506 = vunpack.c.l.s4 1983009808
    %v507 = vunpack.c.0.s8 %v506
    %v508 = vlaneseq
    %v509 = vshrl.u32 %v508, 7
    %v510 = vsub.s32 %v507, %v509
    %v511 = vrot.slane %v464, %v510
    %v513 = vunpack.c.l.s4 1983009808
    %v514 = vunpack.c.0.s8 %v513
    %v515 = vlaneseq
    %v516 = vshrl.u32 %v515, 7
    %v517 = vsub.s32 %v514, %v516
    %v518 = vrot.slane %v504, %v517
    %v519 = vcombine.high %v511, %v511
    %v520 = vcombine.high %v518, %v518
    %v521 = vcombine.high %v469, %v469
    %v523 = vunpack.c.l.s4 1983009808
    %v524 = vunpack.c.0.s8 %v523
    %v525 = vlaneseq
    %v526 = vshrl.u32 %v525, 7
    %v527 = vsub.s32 %v524, %v526
    %v528 = vrot.slane %v469, %v527
    %v530 = vunpack.c.l.s4 1983009808
    %v531 = vunpack.c.0.s8 %v530
    %v532 = vlaneseq
    %v533 = vshrl.u32 %v532, 7
    %v534 = vsub.s32 %v531, %v533
    %v535 = vrot.slane %v521, %v534
    %v536 = vcombine.high %v528, %v528
    %v537 = vcombine.high %v535, %v535
    %v538 = vcombine.high %v474, %v474
    %v540 = vunpack.c.l.s4 1983009808
    %v541 = vunpack.c.0.s8 %v540
    %v542 = vlaneseq
    %v543 = vshrl.u32 %v542, 7
    %v544 = vsub.s32 %v541, %v543
    %v545 = vrot.slane %v474, %v544
    %v547 = vunpack.c.l.s4 1983009808
    %v548 = vunpack.c.0.s8 %v547
    %v549 = vlaneseq
    %v550 = vshrl.u32 %v549, 7
    %v551 = vsub.s32 %v548, %v550
    %v552 = vrot.slane %v538, %v551
    %v553 = vcombine.high %v545, %v545
    %v554 = vcombine.high %v552, %v552
    %v555 = vcombine.high %v479, %v479
    %v557 = vunpack.c.l.s4 1983009808
    %v558 = vunpack.c.0.s8 %v557
    %v559 = vlaneseq
    %v560 = vshrl.u32 %v559, 7
    %v561 = vsub.s32 %v558, %v560
    %v562 = vrot.slane %v479, %v561
    %v564 = vunpack.c.l.s4 1983009808
    %v565 = vunpack.c.0.s8 %v564
    %v566 = vlaneseq
    %v567 = vshrl.u32 %v566, 7
    %v568 = vsub.s32 %v565, %v567
    %v569 = vrot.slane %v555, %v568
    %v570 = vcombine.high %v562, %v562
    %v571 = vcombine.high %v569, %v569
    %v572 = vld [vmem:[%s10] sm:$0x1]
    %v573 = vld [vmem:[%s10 + $0x1] sm:$0x1]
    %v574 = vld [vmem:[%s10 + $0x2] sm:$0x1]
    %v575 = vld [vmem:[%s10 + $0x3] sm:$0x1]
    %v576 = vlaneseq
    %v577 = vand.u32 %v576, 127
    %vm578 = vcmp.eq.s32.totalorder %v577, 0
    %v579 = vsel %vm578, 1, 0
    %v580 = vcvt.s32.f32 %v579
    %v585 = vcombine.low %v572, %v573
    %v586 = vcombine.low %v574, %v575
    %v588 = vunpack.c.l.s4 1966171168
    %v589 = vunpack.c.0.s8 %v588
    %v590 = vlaneseq
    %v591 = vshrl.u32 %v590, 7
    %v592 = vsub.s32 %v589, %v591
    %v593 = vrot.slane %v585, %v592
    %v595 = vunpack.c.l.s4 1966171168
    %v596 = vunpack.c.0.s8 %v595
    %v597 = vlaneseq
    %v598 = vshrl.u32 %v597, 7
    %v599 = vsub.s32 %v596, %v598
    %v600 = vrot.slane %v586, %v599
    %v601 = vcombine.low %v593, %v600
    %v603 = vunpack.c.l.s4 1966171168
    %v604 = vunpack.c.0.s8 %v603
    %v605 = vlaneseq
    %v606 = vshrl.u32 %v605, 7
    %v607 = vsub.s32 %v604, %v606
    %v608 = vrot.slane %v601, %v607
    %v609 = vsel %vm381, %v608, 0
    %611 = vmatprep.subr.mxu0 0.0
    %612 = vmatpush1.msra.mxu0 0.0
    %613 = vmatprep.subr.mxu0 0.0
    %614 = vmatpush1.msra.mxu0 0.0
    %615 = vmatprep.subr.mxu0 0.0
    %616 = vmatpush1.msra.mxu0 0.0
    %617 = vmatprep.subr.mxu0 0.0
    %618 = vmatpush1.msra.mxu0 0.0
    %619 = vmatprep.subr.mxu0 0.0
    %620 = vmatpush1.msra.mxu0 0.0
    %621 = vmatprep.subr.mxu0 0.0
    %622 = vmatpush1.msra.mxu0 0.0
    %623 = vmatprep.subr.mxu0 0.0
    %624 = vmatpush1.msra.mxu0 0.0
    %625 = vmatprep.subr.mxu0 0.0
    %626 = vmatpush1.msra.mxu0 0.0
    %627 = vmatprep.subr.mxu0 0.0
    %628 = vmatpush1.msra.mxu0 0.0
    %629 = vmatprep.subr.mxu0 0.0
    %630 = vmatpush1.msra.mxu0 0.0
    %631 = vmatprep.subr.mxu0 0.0
    %632 = vmatpush1.msra.mxu0 0.0
    %633 = vmatprep.subr.mxu0 0.0
    %634 = vmatpush1.msra.mxu0 0.0
    %635 = vmatprep.subr.mxu0 %v85
    %636 = vmatpush1.msra.mxu0 %v84
    %637 = vmatprep.subr.mxu0 %v83
    %638 = vmatpush1.msra.mxu0 %v82
    %639 = vmatprep.subr.mxu0 %v81
    %640 = vmatpush1.msra.mxu0 %v80
    %641 = vmatprep.subr.mxu0 %v79
    %642 = vmatpush1.msra.mxu0 %v78
    %643 = vmatprep.subr.mxu0 0.0
    %644 = vmatpush2.msra.mxu0 0.0
    %645 = vmatprep.subr.mxu0 0.0
    %646 = vmatpush2.msra.mxu0 0.0
    %647 = vmatprep.subr.mxu0 0.0
    %648 = vmatpush2.msra.mxu0 0.0
    %649 = vmatprep.subr.mxu0 0.0
    %650 = vmatpush2.msra.mxu0 0.0
    %651 = vmatprep.subr.mxu0 0.0
    %652 = vmatpush2.msra.mxu0 0.0
    %653 = vmatprep.subr.mxu0 0.0
    %654 = vmatpush2.msra.mxu0 0.0
    %655 = vmatprep.subr.mxu0 0.0
    %656 = vmatpush2.msra.mxu0 0.0
    %657 = vmatprep.subr.mxu0 0.0
    %658 = vmatpush2.msra.mxu0 0.0
    %659 = vmatprep.subr.mxu0 0.0
    %660 = vmatpush2.msra.mxu0 0.0
    %661 = vmatprep.subr.mxu0 0.0
    %662 = vmatpush2.msra.mxu0 0.0
    %663 = vmatprep.subr.mxu0 0.0
    %664 = vmatpush2.msra.mxu0 0.0
    %665 = vmatprep.subr.mxu0 0.0
    %666 = vmatpush2.msra.mxu0 0.0
    %667 = vmatprep.subr.mxu0 0.0
    %668 = vmatpush2.msra.mxu0 0.0
    %669 = vmatprep.subr.mxu0 0.0
    %670 = vmatpush2.msra.mxu0 0.0
    %671 = vmatprep.subr.mxu0 0.0
    %672 = vmatpush2.msra.mxu0 0.0
    %673 = vmatprep.subr.mxu0 0.0
    %674 = vmatpush2.msra.mxu0 0.0
    %675 = vmatprep.mubr.f32.mxu0 0.0
    %676 = vmatmul.mubr.f32.gmra.mxu0 %v609
    %v677 = vpop.f32.mrf.mxu0
    %v678 = vadd.f32 %v106, %v677
    %v679 = vpop.f32.mrf.mxu0
    %680 = vdwg.mxu0
    %v683 = vunpack.c.l.s4 1966171168
    %v684 = vunpack.c.0.s8 %v683
    %v685 = vlaneseq
    %v686 = vshrl.u32 %v685, 7
    %v687 = vsub.s32 %v684, %v686
    %v688 = vrot.slane %v678, %v687
    %v689 = vcombine.high %v688, %v688
    %v691 = vunpack.c.l.s4 1966171168
    %v692 = vunpack.c.0.s8 %v691
    %v693 = vlaneseq
    %v694 = vshrl.u32 %v693, 7
    %v695 = vsub.s32 %v692, %v694
    %v696 = vrot.slane %v688, %v695
    %v698 = vunpack.c.l.s4 1966171168
    %v699 = vunpack.c.0.s8 %v698
    %v700 = vlaneseq
    %v701 = vshrl.u32 %v700, 7
    %v702 = vsub.s32 %v699, %v701
    %v703 = vrot.slane %v689, %v702
    %v704 = vcombine.high %v696, %v696
    %v705 = vcombine.high %v703, %v703
    %v706 = vlaneseq
    %v707 = vshrl.u32 %v706, 7
    %v708 = vsub.s32 0, %v707
    %v709 = vrot.slane %v696, %v708
    %v710 = vlaneseq
    %v711 = vshrl.u32 %v710, 7
    %v712 = vsub.s32 0, %v711
    %v713 = vrot.slane %v703, %v712
    %v714 = vlaneseq
    %v715 = vshrl.u32 %v714, 7
    %v716 = vsub.s32 0, %v715
    %v717 = vrot.slane %v704, %v716
    %v718 = vlaneseq
    %v719 = vshrl.u32 %v718, 7
    %v720 = vsub.s32 0, %v719
    %v721 = vrot.slane %v705, %v720
    %v726 = vcombine.low %v494, %v502
    %v727 = vcombine.low %v501, %v503
    %v729 = vunpack.c.l.s4 1983009808
    %v730 = vunpack.c.0.s8 %v729
    %v731 = vlaneseq
    %v732 = vshrl.u32 %v731, 7
    %v733 = vsub.s32 %v730, %v732
    %v734 = vrot.slane %v726, %v733
    %v736 = vunpack.c.l.s4 1983009808
    %v737 = vunpack.c.0.s8 %v736
    %v738 = vlaneseq
    %v739 = vshrl.u32 %v738, 7
    %v740 = vsub.s32 %v737, %v739
    %v741 = vrot.slane %v727, %v740
    %v742 = vcombine.low %v734, %v741
    %v744 = vunpack.c.l.s4 1983009808
    %v745 = vunpack.c.0.s8 %v744
    %v746 = vlaneseq
    %v747 = vshrl.u32 %v746, 7
    %v748 = vsub.s32 %v745, %v747
    %v749 = vrot.slane %v511, %v748
    %v750 = vcombine.low %v519, %v518
    %v751 = vcombine.low %v520, %v528
    %v753 = vunpack.c.l.s4 1983009808
    %v754 = vunpack.c.0.s8 %v753
    %v755 = vlaneseq
    %v756 = vshrl.u32 %v755, 7
    %v757 = vsub.s32 %v754, %v756
    %v758 = vrot.slane %v750, %v757
    %v760 = vunpack.c.l.s4 1983009808
    %v761 = vunpack.c.0.s8 %v760
    %v762 = vlaneseq
    %v763 = vshrl.u32 %v762, 7
    %v764 = vsub.s32 %v761, %v763
    %v765 = vrot.slane %v751, %v764
    %v766 = vcombine.low %v758, %v765
    %v768 = vunpack.c.l.s4 1983009808
    %v769 = vunpack.c.0.s8 %v768
    %v770 = vlaneseq
    %v771 = vshrl.u32 %v770, 7
    %v772 = vsub.s32 %v769, %v771
    %v773 = vrot.slane %v536, %v772
    %v774 = vcombine.low %v535, %v537
    %v775 = vcombine.low %v545, %v553
    %v777 = vunpack.c.l.s4 1983009808
    %v778 = vunpack.c.0.s8 %v777
    %v779 = vlaneseq
    %v780 = vshrl.u32 %v779, 7
    %v781 = vsub.s32 %v778, %v780
    %v782 = vrot.slane %v774, %v781
    %v784 = vunpack.c.l.s4 1983009808
    %v785 = vunpack.c.0.s8 %v784
    %v786 = vlaneseq
    %v787 = vshrl.u32 %v786, 7
    %v788 = vsub.s32 %v785, %v787
    %v789 = vrot.slane %v775, %v788
    %v790 = vcombine.low %v782, %v789
    %v792 = vunpack.c.l.s4 1983009808
    %v793 = vunpack.c.0.s8 %v792
    %v794 = vlaneseq
    %v795 = vshrl.u32 %v794, 7
    %v796 = vsub.s32 %v793, %v795
    %v797 = vrot.slane %v552, %v796
    %v798 = vcombine.low %v554, %v562
    %v799 = vcombine.low %v570, %v569
    %v801 = vunpack.c.l.s4 1983009808
    %v802 = vunpack.c.0.s8 %v801
    %v803 = vlaneseq
    %v804 = vshrl.u32 %v803, 7
    %v805 = vsub.s32 %v802, %v804
    %v806 = vrot.slane %v798, %v805
    %v808 = vunpack.c.l.s4 1983009808
    %v809 = vunpack.c.0.s8 %v808
    %v810 = vlaneseq
    %v811 = vshrl.u32 %v810, 7
    %v812 = vsub.s32 %v809, %v811
    %v813 = vrot.slane %v799, %v812
    %v814 = vcombine.low %v806, %v813
    %v816 = vunpack.c.l.s4 1983009808
    %v817 = vunpack.c.0.s8 %v816
    %v818 = vlaneseq
    %v819 = vshrl.u32 %v818, 7
    %v820 = vsub.s32 %v817, %v819
    %v821 = vrot.slane %v571, %v820
    %v830 = vadd.f32 %v709, %v742
    %v831 = vadd.f32 %v709, %v749
    %v832 = vadd.f32 %v713, %v766
    %v833 = vadd.f32 %v713, %v773
    %v834 = vadd.f32 %v717, %v790
    %v835 = vadd.f32 %v717, %v797
    %v836 = vadd.f32 %v721, %v814
    %v837 = vadd.f32 %v721, %v821
    %v838 = vtanh.pop %v830
    %v839 = vtanh.pop %v831
    %v840 = vtanh.pop %v832
    %v841 = vtanh.pop %v833
    %v842 = vtanh.pop %v834
    %v843 = vtanh.pop %v835
    %v844 = vtanh.pop %v836
    %v845 = vtanh.pop %v837
    %v847 = vlaneseq
    %v848 = vshrl.u32 %v847, 7
    %v849 = vsub.s32 0, %v848
    %v850 = vrot.slane %v91, %v849
    %v852 = vmul.f32 %v838, %v850
    %v853 = vmul.f32 %v839, %v850
    %v854 = vmul.f32 %v840, %v850
    %v855 = vmul.f32 %v841, %v850
    %v856 = vmul.f32 %v842, %v850
    %v857 = vmul.f32 %v843, %v850
    %v858 = vmul.f32 %v844, %v850
    %v859 = vmul.f32 %v845, %v850
    %v860 = vsel %vm381, %v852, 0.0
    %861 = vadd.xlane.f32.xlu0 %v860
    %v862 = vpop.xlane.xlu0 %861
    %vm863 = vcmask 254976
    %v864 = vsel %vm863, %v853, 0.0
    %865 = vadd.xlane.f32.xlu0 %v864
    %v866 = vpop.xlane.xlu0 %865
    %v867 = vsel %vm381, %v854, 0.0
    %868 = vadd.xlane.f32.xlu0 %v867
    %v869 = vpop.xlane.xlu0 %868
    %v870 = vsel %vm863, %v855, 0.0
    %871 = vadd.xlane.f32.xlu0 %v870
    %v872 = vpop.xlane.xlu0 %871
    %v873 = vsel %vm381, %v856, 0.0
    %874 = vadd.xlane.f32.xlu0 %v873
    %v875 = vpop.xlane.xlu0 %874
    %v876 = vsel %vm863, %v857, 0.0
    %877 = vadd.xlane.f32.xlu0 %v876
    %v878 = vpop.xlane.xlu0 %877
    %v879 = vsel %vm381, %v858, 0.0
    %880 = vadd.xlane.f32.xlu0 %v879
    %v881 = vpop.xlane.xlu0 %880
    %v882 = vsel %vm863, %v859, 0.0
    %883 = vadd.xlane.f32.xlu0 %v882
    %v884 = vpop.xlane.xlu0 %883
    %v885 = vstv %s92
    %v886 = vadd.f32 %v862, %v885
    %v887 = vadd.f32 %v866, %v885
    %v888 = vadd.f32 %v869, %v885
    %v889 = vadd.f32 %v872, %v885
    %v890 = vadd.f32 %v875, %v885
    %v891 = vadd.f32 %v878, %v885
    %v892 = vadd.f32 %v881, %v885
    %v893 = vadd.f32 %v884, %v885
    %v902 = vlaneseq
    %v903 = vshrl.u32 %v902, 7
    %v904 = vsub.s32 %v577, %v903
    %v905 = vrot.slane %v886, %v904
    %v906 = vadd.s32 %v577, 4294967288
    %v907 = vlaneseq
    %v908 = vshrl.u32 %v907, 7
    %v909 = vsub.s32 %v906, %v908
    %v910 = vrot.slane %v887, %v909
    %vm911 = vcmask 130112
    %v912 = vsel %vm911, %v910, %v905
    %v913 = vlaneseq
    %v914 = vshrl.u32 %v913, 7
    %v915 = vsub.s32 %v577, %v914
    %v916 = vrot.slane %v888, %v915
    %v917 = vlaneseq
    %v918 = vshrl.u32 %v917, 7
    %v919 = vsub.s32 %v906, %v918
    %v920 = vrot.slane %v889, %v919
    %v921 = vsel %vm911, %v920, %v916
    %v922 = vlaneseq
    %v923 = vshrl.u32 %v922, 7
    %v924 = vsub.s32 %v577, %v923
    %v925 = vrot.slane %v890, %v924
    %v926 = vlaneseq
    %v927 = vshrl.u32 %v926, 7
    %v928 = vsub.s32 %v906, %v927
    %v929 = vrot.slane %v891, %v928
    %v930 = vsel %vm911, %v929, %v925
    %v931 = vlaneseq
    %v932 = vshrl.u32 %v931, 7
    %v933 = vsub.s32 %v577, %v932
    %v934 = vrot.slane %v892, %v933
    %v935 = vlaneseq
    %v936 = vshrl.u32 %v935, 7
    %v937 = vsub.s32 %v906, %v936
    %v938 = vrot.slane %v893, %v937
    %v939 = vsel %vm911, %v938, %v934
    %vm940 = vcmask 1041409
    %v941 = vsel %vm940, %v921, %v912
    %vm942 = vcmask 1042434
    %v943 = vsel %vm942, %v930, %v941
    %vm944 = vcmask 1043459
    %v945 = vsel %vm944, %v939, %v943
    %vm947 = vcmask 76800
    %v948 = vsel %vm947, %v945, -inf
    %949 = vmax.xlane.f32.xlu0 %v948
    %v950 = vpop.xlane.xlu0 %949
    %v952 = vlaneseq
    %v953 = vshrl.u32 %v952, 7
    %v954 = vsub.s32 0, %v953
    %v955 = vrot.slane %v950, %v954
    %v956 = vlaneseq
    %v957 = vshrl.u32 %v956, 7
    %v958 = vsub.s32 1, %v957
    %v959 = vrot.slane %v950, %v958
    %v960 = vlaneseq
    %v961 = vshrl.u32 %v960, 7
    %v962 = vsub.s32 2, %v961
    %v963 = vrot.slane %v950, %v962
    %v964 = vlaneseq
    %v965 = vshrl.u32 %v964, 7
    %v966 = vsub.s32 3, %v965
    %v967 = vrot.slane %v950, %v966
    %v972 = vsub.f32 %v886, %v955
    %v973 = vsub.f32 %v887, %v955
    %v974 = vsub.f32 %v888, %v959
    %v975 = vsub.f32 %v889, %v959
    %v976 = vsub.f32 %v890, %v963
    %v977 = vsub.f32 %v891, %v963
    %v978 = vsub.f32 %v892, %v967
    %v979 = vsub.f32 %v893, %v967
    %v980 = vmul.f32 %v972, 1.442695
    %v981 = vpow.pop %v980
    %v982 = vmul.f32 %v973, 1.442695
    %v983 = vpow.pop %v982
    %v984 = vmul.f32 %v974, 1.442695
    %v985 = vpow.pop %v984
    %v986 = vmul.f32 %v975, 1.442695
    %v987 = vpow.pop %v986
    %v988 = vmul.f32 %v976, 1.442695
    %v989 = vpow.pop %v988
    %v990 = vmul.f32 %v977, 1.442695
    %v991 = vpow.pop %v990
    %v992 = vmul.f32 %v978, 1.442695
    %v993 = vpow.pop %v992
    %v994 = vmul.f32 %v979, 1.442695
    %v995 = vpow.pop %v994
    %1004 = vset.pattern.permute.xlu0 0
    %1005 = vperm.xlu0 %1004, %v981
    %v1006 = vpop.permute.xlu0 %1005
    %1007 = vset.pattern.permute.xlu0 0
    %1008 = vperm.xlu0 %1007, %v983
    %v1009 = vpop.permute.xlu0 %1008
    %1010 = vset.pattern.permute.xlu0 0
    %1011 = vperm.xlu0 %1010, %v985
    %v1012 = vpop.permute.xlu0 %1011
    %1013 = vset.pattern.permute.xlu0 0
    %1014 = vperm.xlu0 %1013, %v987
    %v1015 = vpop.permute.xlu0 %1014
    %1016 = vset.pattern.permute.xlu0 0
    %1017 = vperm.xlu0 %1016, %v989
    %v1018 = vpop.permute.xlu0 %1017
    %1019 = vset.pattern.permute.xlu0 0
    %1020 = vperm.xlu0 %1019, %v991
    %v1021 = vpop.permute.xlu0 %1020
    %1022 = vset.pattern.permute.xlu0 0
    %1023 = vperm.xlu0 %1022, %v993
    %v1024 = vpop.permute.xlu0 %1023
    %1025 = vset.pattern.permute.xlu0 0
    %1026 = vperm.xlu0 %1025, %v995
    %v1027 = vpop.permute.xlu0 %1026
    %v1028 = vlaneseq
    %v1029 = vshrl.u32 %v1028, 7
    %v1030 = vsub.s32 %v577, %v1029
    %v1031 = vrot.slane %v1006, %v1030
    %v1032 = vlaneseq
    %v1033 = vshrl.u32 %v1032, 7
    %v1034 = vsub.s32 %v906, %v1033
    %v1035 = vrot.slane %v1009, %v1034
    %v1036 = vsel %vm911, %v1035, %v1031
    %v1037 = vlaneseq
    %v1038 = vshrl.u32 %v1037, 7
    %v1039 = vsub.s32 %v577, %v1038
    %v1040 = vrot.slane %v1012, %v1039
    %v1041 = vlaneseq
    %v1042 = vshrl.u32 %v1041, 7
    %v1043 = vsub.s32 %v906, %v1042
    %v1044 = vrot.slane %v1015, %v1043
    %v1045 = vsel %vm911, %v1044, %v1040
    %v1046 = vlaneseq
    %v1047 = vshrl.u32 %v1046, 7
    %v1048 = vsub.s32 %v577, %v1047
    %v1049 = vrot.slane %v1018, %v1048
    %v1050 = vlaneseq
    %v1051 = vshrl.u32 %v1050, 7
    %v1052 = vsub.s32 %v906, %v1051
    %v1053 = vrot.slane %v1021, %v1052
    %v1054 = vsel %vm911, %v1053, %v1049
    %v1055 = vlaneseq
    %v1056 = vshrl.u32 %v1055, 7
    %v1057 = vsub.s32 %v577, %v1056
    %v1058 = vrot.slane %v1024, %v1057
    %v1059 = vlaneseq
    %v1060 = vshrl.u32 %v1059, 7
    %v1061 = vsub.s32 %v906, %v1060
    %v1062 = vrot.slane %v1027, %v1061
    %v1063 = vsel %vm911, %v1062, %v1058
    %v1064 = vsel %vm940, %v1045, %v1036
    %v1065 = vsel %vm942, %v1054, %v1064
    %v1066 = vsel %vm944, %v1063, %v1065
    %v1068 = vsel %vm947, %v1066, 0.0
    %1069 = vadd.xlane.f32.xlu0 %v1068
    %v1070 = vpop.xlane.xlu0 %1069
    %v1072 = vlaneseq
    %v1073 = vshrl.u32 %v1072, 7
    %v1074 = vsub.s32 0, %v1073
    %v1075 = vrot.slane %v1070, %v1074
    %v1076 = vlaneseq
    %v1077 = vshrl.u32 %v1076, 7
    %v1078 = vsub.s32 1, %v1077
    %v1079 = vrot.slane %v1070, %v1078
    %v1080 = vlaneseq
    %v1081 = vshrl.u32 %v1080, 7
    %v1082 = vsub.s32 2, %v1081
    %v1083 = vrot.slane %v1070, %v1082
    %v1084 = vlaneseq
    %v1085 = vshrl.u32 %v1084, 7
    %v1086 = vsub.s32 3, %v1085
    %v1087 = vrot.slane %v1070, %v1086
    %v1092 = vrcp.pop %v1075
    %v1093 = vmul.f32 %v981, %v1092
    %v1094 = vmul.f32 %v983, %v1092
    %v1095 = vrcp.pop %v1079
    %v1096 = vmul.f32 %v985, %v1095
    %v1097 = vmul.f32 %v987, %v1095
    %v1098 = vrcp.pop %v1083
    %v1099 = vmul.f32 %v989, %v1098
    %v1100 = vmul.f32 %v991, %v1098
    %v1101 = vrcp.pop %v1087
    %v1102 = vmul.f32 %v993, %v1101
    %v1103 = vmul.f32 %v995, %v1101
    %1105 = vset.pattern.permute.xlu0 0
    %1106 = vperm.xlu0 %1105, %v1093
    %v1107 = vpop.permute.xlu0 %1106
    %1110 = vset.pattern.permute.xlu0 0
    %1111 = vperm.xlu0 %1110, %v1094
    %v1112 = vpop.permute.xlu0 %1111
    %1115 = vset.pattern.permute.xlu0 0
    %1116 = vperm.xlu0 %1115, %v1096
    %v1117 = vpop.permute.xlu0 %1116
    %1120 = vset.pattern.permute.xlu0 0
    %1121 = vperm.xlu0 %1120, %v1097
    %v1122 = vpop.permute.xlu0 %1121
    %1125 = vset.pattern.permute.xlu0 0
    %1126 = vperm.xlu0 %1125, %v1099
    %v1127 = vpop.permute.xlu0 %1126
    %1130 = vset.pattern.permute.xlu0 0
    %1131 = vperm.xlu0 %1130, %v1100
    %v1132 = vpop.permute.xlu0 %1131
    %1135 = vset.pattern.permute.xlu0 0
    %1136 = vperm.xlu0 %1135, %v1102
    %v1137 = vpop.permute.xlu0 %1136
    %1140 = vset.pattern.permute.xlu0 0
    %1141 = vperm.xlu0 %1140, %v1103
    %v1142 = vpop.permute.xlu0 %1141
    %v1144 = vmul.f32 %v1107, %v93
    %v1145 = vmul.f32 %v1112, %v94
    %v1146 = vmul.f32 %v1117, %v95
    %v1147 = vmul.f32 %v1122, %v96
    %v1148 = vmul.f32 %v1127, %v97
    %v1149 = vmul.f32 %v1132, %v98
    %v1150 = vmul.f32 %v1137, %v99
    %v1151 = vmul.f32 %v1142, %v100
    %v1152 = vsel %vm381, %v1144, 0.0
    %v1153 = vsel %vm863, %v1145, 0.0
    %v1154 = vadd.f32 %v1152, %v1153
    %v1155 = vrot.slane %v1154, 4
    %v1156 = vadd.f32 %v1154, %v1155
    %v1157 = vrot.slane %v1156, 2
    %v1158 = vadd.f32 %v1156, %v1157
    %v1159 = vrot.slane %v1158, 1
    %v1160 = vadd.f32 %v1158, %v1159
    %v1161 = vsel %vm381, %v1146, 0.0
    %v1162 = vsel %vm863, %v1147, 0.0
    %v1163 = vadd.f32 %v1161, %v1162
    %v1164 = vrot.slane %v1163, 4
    %v1165 = vadd.f32 %v1163, %v1164
    %v1166 = vrot.slane %v1165, 2
    %v1167 = vadd.f32 %v1165, %v1166
    %v1168 = vrot.slane %v1167, 1
    %v1169 = vadd.f32 %v1167, %v1168
    %v1170 = vsel %vm381, %v1148, 0.0
    %v1171 = vsel %vm863, %v1149, 0.0
    %v1172 = vadd.f32 %v1170, %v1171
    %v1173 = vrot.slane %v1172, 4
    %v1174 = vadd.f32 %v1172, %v1173
    %v1175 = vrot.slane %v1174, 2
    %v1176 = vadd.f32 %v1174, %v1175
    %v1177 = vrot.slane %v1176, 1
    %v1178 = vadd.f32 %v1176, %v1177
    %v1179 = vsel %vm381, %v1150, 0.0
    %v1180 = vsel %vm863, %v1151, 0.0
    %v1181 = vadd.f32 %v1179, %v1180
    %v1182 = vrot.slane %v1181, 4
    %v1183 = vadd.f32 %v1181, %v1182
    %v1184 = vrot.slane %v1183, 2
    %v1185 = vadd.f32 %v1183, %v1184
    %v1186 = vrot.slane %v1185, 1
    %v1187 = vadd.f32 %v1185, %v1186
    %v1192 = vsel %vm940, %v1169, %v1160
    %v1193 = vsel %vm942, %v1178, %v1192
    %v1194 = vsel %vm944, %v1187, %v1193
    %v1195 = vsel %vm381, %v1194, 0
    %1197 = vmatprep.subr.mxu0 0.0
    %1198 = vmatpush1.msra.mxu0 0.0
    %1199 = vmatprep.subr.mxu0 0.0
    %1200 = vmatpush1.msra.mxu0 0.0
    %1201 = vmatprep.subr.mxu0 0.0
    %1202 = vmatpush1.msra.mxu0 0.0
    %1203 = vmatprep.subr.mxu0 0.0
    %1204 = vmatpush1.msra.mxu0 0.0
    %1205 = vmatprep.subr.mxu0 0.0
    %1206 = vmatpush1.msra.mxu0 0.0
    %1207 = vmatprep.subr.mxu0 0.0
    %1208 = vmatpush1.msra.mxu0 0.0
    %1209 = vmatprep.subr.mxu0 0.0
    %1210 = vmatpush1.msra.mxu0 0.0
    %1211 = vmatprep.subr.mxu0 0.0
    %1212 = vmatpush1.msra.mxu0 0.0
    %1213 = vmatprep.subr.mxu0 0.0
    %1214 = vmatpush1.msra.mxu0 0.0
    %1215 = vmatprep.subr.mxu0 0.0
    %1216 = vmatpush1.msra.mxu0 0.0
    %1217 = vmatprep.subr.mxu0 0.0
    %1218 = vmatpush1.msra.mxu0 0.0
    %1219 = vmatprep.subr.mxu0 0.0
    %1220 = vmatpush1.msra.mxu0 0.0
    %1221 = vmatprep.subr.mxu0 0.0
    %1222 = vmatpush1.msra.mxu0 %v77
    %1223 = vmatprep.subr.mxu0 0.0
    %1224 = vmatpush1.msra.mxu0 %v76
    %1225 = vmatprep.subr.mxu0 0.0
    %1226 = vmatpush1.msra.mxu0 %v75
    %1227 = vmatprep.subr.mxu0 0.0
    %1228 = vmatpush1.msra.mxu0 %v74
    %1229 = vmatprep.subr.mxu0 0.0
    %1230 = vmatpush2.msra.mxu0 0.0
    %1231 = vmatprep.subr.mxu0 0.0
    %1232 = vmatpush2.msra.mxu0 0.0
    %1233 = vmatprep.subr.mxu0 0.0
    %1234 = vmatpush2.msra.mxu0 0.0
    %1235 = vmatprep.subr.mxu0 0.0
    %1236 = vmatpush2.msra.mxu0 0.0
    %1237 = vmatprep.subr.mxu0 0.0
    %1238 = vmatpush2.msra.mxu0 0.0
    %1239 = vmatprep.subr.mxu0 0.0
    %1240 = vmatpush2.msra.mxu0 0.0
    %1241 = vmatprep.subr.mxu0 0.0
    %1242 = vmatpush2.msra.mxu0 0.0
    %1243 = vmatprep.subr.mxu0 0.0
    %1244 = vmatpush2.msra.mxu0 0.0
    %1245 = vmatprep.subr.mxu0 0.0
    %1246 = vmatpush2.msra.mxu0 0.0
    %1247 = vmatprep.subr.mxu0 0.0
    %1248 = vmatpush2.msra.mxu0 0.0
    %1249 = vmatprep.subr.mxu0 0.0
    %1250 = vmatpush2.msra.mxu0 0.0
    %1251 = vmatprep.subr.mxu0 0.0
    %1252 = vmatpush2.msra.mxu0 0.0
    %1253 = vmatprep.subr.mxu0 0.0
    %1254 = vmatpush2.msra.mxu0 0.0
    %1255 = vmatprep.subr.mxu0 0.0
    %1256 = vmatpush2.msra.mxu0 0.0
    %1257 = vmatprep.subr.mxu0 0.0
    %1258 = vmatpush2.msra.mxu0 0.0
    %1259 = vmatprep.subr.mxu0 0.0
    %1260 = vmatpush2.msra.mxu0 0.0
    %1261 = vmatprep.mubr.f32.mxu0 0.0
    %1262 = vmatmul.mubr.f32.gmra.mxu0 %v1195
    %v1263 = vpop.f32.mrf.mxu0
    %v1264 = vadd.f32 0.0, %v1263
    %v1265 = vpop.f32.mrf.mxu0
    %1266 = vdwg.mxu0
    %vm1267 = vcmask 162816
    %v1269 = vsel %vm1267, %v580, 0
    %vm1271 = vcmask 1043456
    %v1273 = vsel %vm1271, %v73, 0
    %1275 = vmatprep.subr.mxu0 0.0
    %1276 = vmatpush1.msra.mxu0 0.0
    %1277 = vmatprep.subr.mxu0 0.0
    %1278 = vmatpush1.msra.mxu0 0.0
    %1279 = vmatprep.subr.mxu0 0.0
    %1280 = vmatpush1.msra.mxu0 0.0
    %1281 = vmatprep.subr.mxu0 0.0
    %1282 = vmatpush1.msra.mxu0 0.0
    %1283 = vmatprep.subr.mxu0 0.0
    %1284 = vmatpush1.msra.mxu0 0.0
    %1285 = vmatprep.subr.mxu0 0.0
    %1286 = vmatpush1.msra.mxu0 0.0
    %1287 = vmatprep.subr.mxu0 0.0
    %1288 = vmatpush1.msra.mxu0 0.0
    %1289 = vmatprep.subr.mxu0 0.0
    %1290 = vmatpush1.msra.mxu0 0.0
    %1291 = vmatprep.subr.mxu0 0.0
    %1292 = vmatpush1.msra.mxu0 0.0
    %1293 = vmatprep.subr.mxu0 0.0
    %1294 = vmatpush1.msra.mxu0 0.0
    %1295 = vmatprep.subr.mxu0 0.0
    %1296 = vmatpush1.msra.mxu0 0.0
    %1297 = vmatprep.subr.mxu0 0.0
    %1298 = vmatpush1.msra.mxu0 0.0
    %1299 = vmatprep.subr.mxu0 0.0
    %1300 = vmatpush1.msra.mxu0 0.0
    %1301 = vmatprep.subr.mxu0 0.0
    %1302 = vmatpush1.msra.mxu0 %v1273
    %1303 = vmatprep.subr.mxu0 0.0
    %1304 = vmatpush1.msra.mxu0 %v72
    %1305 = vmatprep.subr.mxu0 0.0
    %1306 = vmatpush1.msra.mxu0 %v71
    %1307 = vmatprep.subr.mxu0 0.0
    %1308 = vmatpush2.msra.mxu0 0.0
    %1309 = vmatprep.subr.mxu0 0.0
    %1310 = vmatpush2.msra.mxu0 0.0
    %1311 = vmatprep.subr.mxu0 0.0
    %1312 = vmatpush2.msra.mxu0 0.0
    %1313 = vmatprep.subr.mxu0 0.0
    %1314 = vmatpush2.msra.mxu0 0.0
    %1315 = vmatprep.subr.mxu0 0.0
    %1316 = vmatpush2.msra.mxu0 0.0
    %1317 = vmatprep.subr.mxu0 0.0
    %1318 = vmatpush2.msra.mxu0 0.0
    %1319 = vmatprep.subr.mxu0 0.0
    %1320 = vmatpush2.msra.mxu0 0.0
    %1321 = vmatprep.subr.mxu0 0.0
    %1322 = vmatpush2.msra.mxu0 0.0
    %1323 = vmatprep.subr.mxu0 0.0
    %1324 = vmatpush2.msra.mxu0 0.0
    %1325 = vmatprep.subr.mxu0 0.0
    %1326 = vmatpush2.msra.mxu0 0.0
    %1327 = vmatprep.subr.mxu0 0.0
    %1328 = vmatpush2.msra.mxu0 0.0
    %1329 = vmatprep.subr.mxu0 0.0
    %1330 = vmatpush2.msra.mxu0 0.0
    %1331 = vmatprep.subr.mxu0 0.0
    %1332 = vmatpush2.msra.mxu0 0.0
    %1333 = vmatprep.subr.mxu0 0.0
    %1334 = vmatpush2.msra.mxu0 0.0
    %1335 = vmatprep.subr.mxu0 0.0
    %1336 = vmatpush2.msra.mxu0 0.0
    %1337 = vmatprep.subr.mxu0 0.0
    %1338 = vmatpush2.msra.mxu0 0.0
    %1339 = vmatprep.mubr.f32.mxu0 0.0
    %1340 = vmatmul.mubr.f32.gmra.mxu0 %v1269
    %v1341 = vpop.f32.mrf.mxu0
    %v1342 = vadd.f32 %v1264, %v1341
    %v1343 = vpop.f32.mrf.mxu0
    %1344 = vdwg.mxu0
    %v1345 = vadd.f32 %v1342, %v118
    %1346 = vrot.lane.b32.xlu0 %v678, 96
    %v1347 = vpop.permute.xlu0 %1346
    %v1349 = vadd.f32 %v1345, %v1347
    %v1350 = vxor.u32 %v1349, 2147483648
    %v1351 = vmul.f32 %v1350, 1.442695
    %v1352 = vpow.pop %v1351
    %v1353 = vadd.f32 %v1352, 1.0
    %v1354 = vrcp.pop %v1353
    %v1355 = vmul.f32 1.0, %v1354
    %1356 = vrot.lane.b32.xlu0 %v678, 32
    %v1357 = vpop.permute.xlu0 %1356
    %v1359 = vmul.f32 %v1355, %v1357
    %1361 = vrot.lane.b32.xlu0 %v1359, 64
    %v1362 = vpop.permute.xlu0 %1361
    %v1364 = vadd.f32 %v1345, %v1362
    %v1365 = vtanh.pop %v1364
    %v1366 = vsub.f32 1.0, %v1355
    %1368 = vrot.lane.b32.xlu0 %v1365, 96
    %v1369 = vpop.permute.xlu0 %1368
    %v1371 = vmul.f32 %v1366, %v1369
    %1372 = vrot.lane.b32.xlu0 %v608, 32
    %v1373 = vpop.permute.xlu0 %1372
    %v1375 = vmul.f32 %v1355, %v1373
    %v1376 = vadd.f32 %v1371, %v1375
    %1378 = vrot.lane.b32.xlu0 %v1376, 96
    %v1379 = vpop.permute.xlu0 %1378
    %v1380 = vsel %vm381, %v1379, 0
    %1382 = vmatprep.subr.mxu0 0.0
    %1383 = vmatpush1.msra.mxu0 0.0
    %1384 = vmatprep.subr.mxu0 0.0
    %1385 = vmatpush1.msra.mxu0 0.0
    %1386 = vmatprep.subr.mxu0 0.0
    %1387 = vmatpush1.msra.mxu0 0.0
    %1388 = vmatprep.subr.mxu0 0.0
    %1389 = vmatpush1.msra.mxu0 0.0
    %1390 = vmatprep.subr.mxu0 0.0
    %1391 = vmatpush1.msra.mxu0 0.0
    %1392 = vmatprep.subr.mxu0 0.0
    %1393 = vmatpush1.msra.mxu0 0.0
    %1394 = vmatprep.subr.mxu0 0.0
    %1395 = vmatpush1.msra.mxu0 0.0
    %1396 = vmatprep.subr.mxu0 0.0
    %1397 = vmatpush1.msra.mxu0 0.0
    %1398 = vmatprep.subr.mxu0 0.0
    %1399 = vmatpush1.msra.mxu0 0.0
    %1400 = vmatprep.subr.mxu0 0.0
    %1401 = vmatpush1.msra.mxu0 0.0
    %1402 = vmatprep.subr.mxu0 0.0
    %1403 = vmatpush1.msra.mxu0 0.0
    %1404 = vmatprep.subr.mxu0 0.0
    %1405 = vmatpush1.msra.mxu0 0.0
    %1406 = vmatprep.subr.mxu0 %v85
    %1407 = vmatpush1.msra.mxu0 %v84
    %1408 = vmatprep.subr.mxu0 %v83
    %1409 = vmatpush1.msra.mxu0 %v82
    %1410 = vmatprep.subr.mxu0 %v81
    %1411 = vmatpush1.msra.mxu0 %v80
    %1412 = vmatprep.subr.mxu0 %v79
    %1413 = vmatpush1.msra.mxu0 %v78
    %1414 = vmatprep.subr.mxu0 0.0
    %1415 = vmatpush2.msra.mxu0 0.0
    %1416 = vmatprep.subr.mxu0 0.0
    %1417 = vmatpush2.msra.mxu0 0.0
    %1418 = vmatprep.subr.mxu0 0.0
    %1419 = vmatpush2.msra.mxu0 0.0
    %1420 = vmatprep.subr.mxu0 0.0
    %1421 = vmatpush2.msra.mxu0 0.0
    %1422 = vmatprep.subr.mxu0 0.0
    %1423 = vmatpush2.msra.mxu0 0.0
    %1424 = vmatprep.subr.mxu0 0.0
    %1425 = vmatpush2.msra.mxu0 0.0
    %1426 = vmatprep.subr.mxu0 0.0
    %1427 = vmatpush2.msra.mxu0 0.0
    %1428 = vmatprep.subr.mxu0 0.0
    %1429 = vmatpush2.msra.mxu0 0.0
    %1430 = vmatprep.subr.mxu0 0.0
    %1431 = vmatpush2.msra.mxu0 0.0
    %1432 = vmatprep.subr.mxu0 0.0
    %1433 = vmatpush2.msra.mxu0 0.0
    %1434 = vmatprep.subr.mxu0 0.0
    %1435 = vmatpush2.msra.mxu0 0.0
    %1436 = vmatprep.subr.mxu0 0.0
    %1437 = vmatpush2.msra.mxu0 0.0
    %1438 = vmatprep.subr.mxu0 0.0
    %1439 = vmatpush2.msra.mxu0 0.0
    %1440 = vmatprep.subr.mxu0 0.0
    %1441 = vmatpush2.msra.mxu0 0.0
    %1442 = vmatprep.subr.mxu0 0.0
    %1443 = vmatpush2.msra.mxu0 0.0
    %1444 = vmatprep.subr.mxu0 0.0
    %1445 = vmatpush2.msra.mxu0 0.0
    %1446 = vmatprep.mubr.f32.mxu0 0.0
    %1447 = vmatmul.mubr.f32.gmra.mxu0 %v1380
    %v1448 = vpop.f32.mrf.mxu0
    %v1449 = vadd.f32 %v106, %v1448
    %v1450 = vpop.f32.mrf.mxu0
    %v1451 = vadd.f32 %v110, %v1450
    %1452 = vdwg.mxu0
    %v1453 = vsel %vm1271, %v1451, -inf
    %1454 = vmax.xlane.f32.xlu0 %v1453
    %v1455 = vpop.xlane.xlu0 %1454
    %v1456 = vsub.f32 %v1451, %v1455
    %v1457 = vmul.f32 %v1456, 1.442695
    %v1458 = vpow.pop %v1457
    %v1459 = vsel %vm1271, %v1458, 0.0
    %1460 = vadd.xlane.f32.xlu0 %v1459
    %v1461 = vpop.xlane.xlu0 %1460
    %v1462 = vlog2.pop %v1461
    %v1463 = vmul.f32 %v1462, 0.6931472
    %v1464 = vadd.f32 %v1463, %v1455
    %v1465 = vsub.f32 %v1451, %v1464
    %v1468 = vunpack.c.l.s4 1966171168
    %v1469 = vunpack.c.0.s8 %v1468
    %v1470 = vlaneseq
    %v1471 = vshrl.u32 %v1470, 7
    %v1472 = vsub.s32 %v1469, %v1471
    %v1473 = vrot.slane %v1465, %v1472
    %v1474 = vcombine.high %v1473, %v1473
    %v1476 = vunpack.c.l.s4 1966171168
    %v1477 = vunpack.c.0.s8 %v1476
    %v1478 = vlaneseq
    %v1479 = vshrl.u32 %v1478, 7
    %v1480 = vsub.s32 %v1477, %v1479
    %v1481 = vrot.slane %v1473, %v1480
    %v1483 = vunpack.c.l.s4 1966171168
    %v1484 = vunpack.c.0.s8 %v1483
    %v1485 = vlaneseq
    %v1486 = vshrl.u32 %v1485, 7
    %v1487 = vsub.s32 %v1484, %v1486
    %v1488 = vrot.slane %v1474, %v1487
    %v1489 = vcombine.high %v1481, %v1481
    %v1490 = vcombine.high %v1488, %v1488
    %1495 = vst [vmem:[%s11] sm:$0x1] %v1481
    %1496 = vst [vmem:[%s11 + $0x10] sm:$0x1] %v1488
    %1497 = vst [vmem:[%s11 + $0x20] sm:$0x1] %v1489
    %1498 = vst [vmem:[%s11 + $0x30] sm:$0x1] %v1490
    %v1499 = vlaneseq
    %v1500 = vshrl.u32 %v1499, 7
    %v1501 = vsub.s32 %v577, %v1500
    %v1502 = vrot.slane %v1107, %v1501
    %v1503 = vlaneseq
    %v1504 = vshrl.u32 %v1503, 7
    %v1505 = vsub.s32 %v906, %v1504
    %v1506 = vrot.slane %v1112, %v1505
    %v1507 = vsel %vm911, %v1506, %v1502
    %v1508 = vlaneseq
    %v1509 = vshrl.u32 %v1508, 7
    %v1510 = vsub.s32 %v577, %v1509
    %v1511 = vrot.slane %v1117, %v1510
    %v1512 = vlaneseq
    %v1513 = vshrl.u32 %v1512, 7
    %v1514 = vsub.s32 %v906, %v1513
    %v1515 = vrot.slane %v1122, %v1514
    %v1516 = vsel %vm911, %v1515, %v1511
    %v1517 = vlaneseq
    %v1518 = vshrl.u32 %v1517, 7
    %v1519 = vsub.s32 %v577, %v1518
    %v1520 = vrot.slane %v1127, %v1519
    %v1521 = vlaneseq
    %v1522 = vshrl.u32 %v1521, 7
    %v1523 = vsub.s32 %v906, %v1522
    %v1524 = vrot.slane %v1132, %v1523
    %v1525 = vsel %vm911, %v1524, %v1520
    %v1526 = vlaneseq
    %v1527 = vshrl.u32 %v1526, 7
    %v1528 = vsub.s32 %v577, %v1527
    %v1529 = vrot.slane %v1137, %v1528
    %v1530 = vlaneseq
    %v1531 = vshrl.u32 %v1530, 7
    %v1532 = vsub.s32 %v906, %v1531
    %v1533 = vrot.slane %v1142, %v1532
    %v1534 = vsel %vm911, %v1533, %v1529
    %vm1539 = vcmask 73728
    %1540 = vst.msk [vmem:[%s13] sm:$0x1] %vm1539, %v1507
    %1541 = vst.msk [vmem:[%s13 + $0x10] sm:$0x1] %vm1539, %v1516
    %1542 = vst.msk [vmem:[%s13 + $0x20] sm:$0x1] %vm1539, %v1525
    %1543 = vst.msk [vmem:[%s13 + $0x30] sm:$0x1] %vm1539, %v1534
    %1544 = vmax.index.xlane.f32.xlu0 %v1453
    %v1545 = vpop.xlane.xlu0 %1544
    %vm1546 = vcmp.eq.s32.totalorder %v577, %v1545
    %v1547 = vsel %vm1546, 1, 0
    %v1548 = vcvt.s32.f32 %v1547
    %v1551 = vunpack.c.l.s4 1966171168
    %v1552 = vunpack.c.0.s8 %v1551
    %v1553 = vlaneseq
    %v1554 = vshrl.u32 %v1553, 7
    %v1555 = vsub.s32 %v1552, %v1554
    %v1556 = vrot.slane %v1449, %v1555
    %v1557 = vcombine.high %v1556, %v1556
    %v1559 = vunpack.c.l.s4 1966171168
    %v1560 = vunpack.c.0.s8 %v1559
    %v1561 = vlaneseq
    %v1562 = vshrl.u32 %v1561, 7
    %v1563 = vsub.s32 %v1560, %v1562
    %v1564 = vrot.slane %v1556, %v1563
    %v1566 = vunpack.c.l.s4 1966171168
    %v1567 = vunpack.c.0.s8 %v1566
    %v1568 = vlaneseq
    %v1569 = vshrl.u32 %v1568, 7
    %v1570 = vsub.s32 %v1567, %v1569
    %v1571 = vrot.slane %v1557, %v1570
    %v1572 = vcombine.high %v1564, %v1564
    %v1573 = vcombine.high %v1571, %v1571
    %v1574 = vlaneseq
    %v1575 = vshrl.u32 %v1574, 7
    %v1576 = vsub.s32 0, %v1575
    %v1577 = vrot.slane %v1564, %v1576
    %v1578 = vlaneseq
    %v1579 = vshrl.u32 %v1578, 7
    %v1580 = vsub.s32 0, %v1579
    %v1581 = vrot.slane %v1571, %v1580
    %v1582 = vlaneseq
    %v1583 = vshrl.u32 %v1582, 7
    %v1584 = vsub.s32 0, %v1583
    %v1585 = vrot.slane %v1572, %v1584
    %v1586 = vlaneseq
    %v1587 = vshrl.u32 %v1586, 7
    %v1588 = vsub.s32 0, %v1587
    %v1589 = vrot.slane %v1573, %v1588
    %v1594 = vadd.f32 %v1577, %v742
    %v1595 = vadd.f32 %v1577, %v749
    %v1596 = vadd.f32 %v1581, %v766
    %v1597 = vadd.f32 %v1581, %v773
    %v1598 = vadd.f32 %v1585, %v790
    %v1599 = vadd.f32 %v1585, %v797
    %v1600 = vadd.f32 %v1589, %v814
    %v1601 = vadd.f32 %v1589, %v821
    %v1602 = vtanh.pop %v1594
    %v1603 = vtanh.pop %v1595
    %v1604 = vtanh.pop %v1596
    %v1605 = vtanh.pop %v1597
    %v1606 = vtanh.pop %v1598
    %v1607 = vtanh.pop %v1599
    %v1608 = vtanh.pop %v1600
    %v1609 = vtanh.pop %v1601
    %v1610 = vmul.f32 %v1602, %v850
    %v1611 = vmul.f32 %v1603, %v850
    %v1612 = vmul.f32 %v1604, %v850
    %v1613 = vmul.f32 %v1605, %v850
    %v1614 = vmul.f32 %v1606, %v850
    %v1615 = vmul.f32 %v1607, %v850
    %v1616 = vmul.f32 %v1608, %v850
    %v1617 = vmul.f32 %v1609, %v850
    %v1618 = vsel %vm381, %v1610, 0.0
    %1619 = vadd.xlane.f32.xlu0 %v1618
    %v1620 = vpop.xlane.xlu0 %1619
    %v1621 = vsel %vm863, %v1611, 0.0
    %1622 = vadd.xlane.f32.xlu0 %v1621
    %v1623 = vpop.xlane.xlu0 %1622
    %v1624 = vsel %vm381, %v1612, 0.0
    %1625 = vadd.xlane.f32.xlu0 %v1624
    %v1626 = vpop.xlane.xlu0 %1625
    %v1627 = vsel %vm863, %v1613, 0.0
    %1628 = vadd.xlane.f32.xlu0 %v1627
    %v1629 = vpop.xlane.xlu0 %1628
    %v1630 = vsel %vm381, %v1614, 0.0
    %1631 = vadd.xlane.f32.xlu0 %v1630
    %v1632 = vpop.xlane.xlu0 %1631
    %v1633 = vsel %vm863, %v1615, 0.0
    %1634 = vadd.xlane.f32.xlu0 %v1633
    %v1635 = vpop.xlane.xlu0 %1634
    %v1636 = vsel %vm381, %v1616, 0.0
    %1637 = vadd.xlane.f32.xlu0 %v1636
    %v1638 = vpop.xlane.xlu0 %1637
    %v1639 = vsel %vm863, %v1617, 0.0
    %1640 = vadd.xlane.f32.xlu0 %v1639
    %v1641 = vpop.xlane.xlu0 %1640
    %v1642 = vadd.f32 %v1620, %v885
    %v1643 = vadd.f32 %v1623, %v885
    %v1644 = vadd.f32 %v1626, %v885
    %v1645 = vadd.f32 %v1629, %v885
    %v1646 = vadd.f32 %v1632, %v885
    %v1647 = vadd.f32 %v1635, %v885
    %v1648 = vadd.f32 %v1638, %v885
    %v1649 = vadd.f32 %v1641, %v885
    %v1658 = vlaneseq
    %v1659 = vshrl.u32 %v1658, 7
    %v1660 = vsub.s32 %v577, %v1659
    %v1661 = vrot.slane %v1642, %v1660
    %v1662 = vlaneseq
    %v1663 = vshrl.u32 %v1662, 7
    %v1664 = vsub.s32 %v906, %v1663
    %v1665 = vrot.slane %v1643, %v1664
    %v1666 = vsel %vm911, %v1665, %v1661
    %v1667 = vlaneseq
    %v1668 = vshrl.u32 %v1667, 7
    %v1669 = vsub.s32 %v577, %v1668
    %v1670 = vrot.slane %v1644, %v1669
    %v1671 = vlaneseq
    %v1672 = vshrl.u32 %v1671, 7
    %v1673 = vsub.s32 %v906, %v1672
    %v1674 = vrot.slane %v1645, %v1673
    %v1675 = vsel %vm911, %v1674, %v1670
    %v1676 = vlaneseq
    %v1677 = vshrl.u32 %v1676, 7
    %v1678 = vsub.s32 %v577, %v1677
    %v1679 = vrot.slane %v1646, %v1678
    %v1680 = vlaneseq
    %v1681 = vshrl.u32 %v1680, 7
    %v1682 = vsub.s32 %v906, %v1681
    %v1683 = vrot.slane %v1647, %v1682
    %v1684 = vsel %vm911, %v1683, %v1679
    %v1685 = vlaneseq
    %v1686 = vshrl.u32 %v1685, 7
    %v1687 = vsub.s32 %v577, %v1686
    %v1688 = vrot.slane %v1648, %v1687
    %v1689 = vlaneseq
    %v1690 = vshrl.u32 %v1689, 7
    %v1691 = vsub.s32 %v906, %v1690
    %v1692 = vrot.slane %v1649, %v1691
    %v1693 = vsel %vm911, %v1692, %v1688
    %v1694 = vsel %vm940, %v1675, %v1666
    %v1695 = vsel %vm942, %v1684, %v1694
    %v1696 = vsel %vm944, %v1693, %v1695
    %v1698 = vsel %vm947, %v1696, -inf
    %1699 = vmax.xlane.f32.xlu0 %v1698
    %v1700 = vpop.xlane.xlu0 %1699
    %v1702 = vlaneseq
    %v1703 = vshrl.u32 %v1702, 7
    %v1704 = vsub.s32 0, %v1703
    %v1705 = vrot.slane %v1700, %v1704
    %v1706 = vlaneseq
    %v1707 = vshrl.u32 %v1706, 7
    %v1708 = vsub.s32 1, %v1707
    %v1709 = vrot.slane %v1700, %v1708
    %v1710 = vlaneseq
    %v1711 = vshrl.u32 %v1710, 7
    %v1712 = vsub.s32 2, %v1711
    %v1713 = vrot.slane %v1700, %v1712
    %v1714 = vlaneseq
    %v1715 = vshrl.u32 %v1714, 7
    %v1716 = vsub.s32 3, %v1715
    %v1717 = vrot.slane %v1700, %v1716
    %v1722 = vsub.f32 %v1642, %v1705
    %v1723 = vsub.f32 %v1643, %v1705
    %v1724 = vsub.f32 %v1644, %v1709
    %v1725 = vsub.f32 %v1645, %v1709
    %v1726 = vsub.f32 %v1646, %v1713
    %v1727 = vsub.f32 %v1647, %v1713
    %v1728 = vsub.f32 %v1648, %v1717
    %v1729 = vsub.f32 %v1649, %v1717
    %v1730 = vmul.f32 %v1722, 1.442695
    %v1731 = vpow.pop %v1730
    %v1732 = vmul.f32 %v1723, 1.442695
    %v1733 = vpow.pop %v1732
    %v1734 = vmul.f32 %v1724, 1.442695
    %v1735 = vpow.pop %v1734
    %v1736 = vmul.f32 %v1725, 1.442695
    %v1737 = vpow.pop %v1736
    %v1738 = vmul.f32 %v1726, 1.442695
    %v1739 = vpow.pop %v1738
    %v1740 = vmul.f32 %v1727, 1.442695
    %v1741 = vpow.pop %v1740
    %v1742 = vmul.f32 %v1728, 1.442695
    %v1743 = vpow.pop %v1742
    %v1744 = vmul.f32 %v1729, 1.442695
    %v1745 = vpow.pop %v1744
    %1754 = vset.pattern.permute.xlu0 0
    %1755 = vperm.xlu0 %1754, %v1731
    %v1756 = vpop.permute.xlu0 %1755
    %1757 = vset.pattern.permute.xlu0 0
    %1758 = vperm.xlu0 %1757, %v1733
    %v1759 = vpop.permute.xlu0 %1758
    %1760 = vset.pattern.permute.xlu0 0
    %1761 = vperm.xlu0 %1760, %v1735
    %v1762 = vpop.permute.xlu0 %1761
    %1763 = vset.pattern.permute.xlu0 0
    %1764 = vperm.xlu0 %1763, %v1737
    %v1765 = vpop.permute.xlu0 %1764
    %1766 = vset.pattern.permute.xlu0 0
    %1767 = vperm.xlu0 %1766, %v1739
    %v1768 = vpop.permute.xlu0 %1767
    %1769 = vset.pattern.permute.xlu0 0
    %1770 = vperm.xlu0 %1769, %v1741
    %v1771 = vpop.permute.xlu0 %1770
    %1772 = vset.pattern.permute.xlu0 0
    %1773 = vperm.xlu0 %1772, %v1743
    %v1774 = vpop.permute.xlu0 %1773
    %1775 = vset.pattern.permute.xlu0 0
    %1776 = vperm.xlu0 %1775, %v1745
    %v1777 = vpop.permute.xlu0 %1776
    %v1778 = vlaneseq
    %v1779 = vshrl.u32 %v1778, 7
    %v1780 = vsub.s32 %v577, %v1779
    %v1781 = vrot.slane %v1756, %v1780
    %v1782 = vlaneseq
    %v1783 = vshrl.u32 %v1782, 7
    %v1784 = vsub.s32 %v906, %v1783
    %v1785 = vrot.slane %v1759, %v1784
    %v1786 = vsel %vm911, %v1785, %v1781
    %v1787 = vlaneseq
    %v1788 = vshrl.u32 %v1787, 7
    %v1789 = vsub.s32 %v577, %v1788
    %v1790 = vrot.slane %v1762, %v1789
    %v1791 = vlaneseq
    %v1792 = vshrl.u32 %v1791, 7
    %v1793 = vsub.s32 %v906, %v1792
    %v1794 = vrot.slane %v1765, %v1793
    %v1795 = vsel %vm911, %v1794, %v1790
    %v1796 = vlaneseq
    %v1797 = vshrl.u32 %v1796, 7
    %v1798 = vsub.s32 %v577, %v1797
    %v1799 = vrot.slane %v1768, %v1798
    %v1800 = vlaneseq
    %v1801 = vshrl.u32 %v1800, 7
    %v1802 = vsub.s32 %v906, %v1801
    %v1803 = vrot.slane %v1771, %v1802
    %v1804 = vsel %vm911, %v1803, %v1799
    %v1805 = vlaneseq
    %v1806 = vshrl.u32 %v1805, 7
    %v1807 = vsub.s32 %v577, %v1806
    %v1808 = vrot.slane %v1774, %v1807
    %v1809 = vlaneseq
    %v1810 = vshrl.u32 %v1809, 7
    %v1811 = vsub.s32 %v906, %v1810
    %v1812 = vrot.slane %v1777, %v1811
    %v1813 = vsel %vm911, %v1812, %v1808
    %v1814 = vsel %vm940, %v1795, %v1786
    %v1815 = vsel %vm942, %v1804, %v1814
    %v1816 = vsel %vm944, %v1813, %v1815
    %v1818 = vsel %vm947, %v1816, 0.0
    %1819 = vadd.xlane.f32.xlu0 %v1818
    %v1820 = vpop.xlane.xlu0 %1819
    %v1822 = vlaneseq
    %v1823 = vshrl.u32 %v1822, 7
    %v1824 = vsub.s32 0, %v1823
    %v1825 = vrot.slane %v1820, %v1824
    %v1826 = vlaneseq
    %v1827 = vshrl.u32 %v1826, 7
    %v1828 = vsub.s32 1, %v1827
    %v1829 = vrot.slane %v1820, %v1828
    %v1830 = vlaneseq
    %v1831 = vshrl.u32 %v1830, 7
    %v1832 = vsub.s32 2, %v1831
    %v1833 = vrot.slane %v1820, %v1832
    %v1834 = vlaneseq
    %v1835 = vshrl.u32 %v1834, 7
    %v1836 = vsub.s32 3, %v1835
    %v1837 = vrot.slane %v1820, %v1836
    %v1842 = vrcp.pop %v1825
    %v1843 = vmul.f32 %v1731, %v1842
    %v1844 = vmul.f32 %v1733, %v1842
    %v1845 = vrcp.pop %v1829
    %v1846 = vmul.f32 %v1735, %v1845
    %v1847 = vmul.f32 %v1737, %v1845
    %v1848 = vrcp.pop %v1833
    %v1849 = vmul.f32 %v1739, %v1848
    %v1850 = vmul.f32 %v1741, %v1848
    %v1851 = vrcp.pop %v1837
    %v1852 = vmul.f32 %v1743, %v1851
    %v1853 = vmul.f32 %v1745, %v1851
    %1855 = vset.pattern.permute.xlu0 0
    %1856 = vperm.xlu0 %1855, %v1843
    %v1857 = vpop.permute.xlu0 %1856
    %1860 = vset.pattern.permute.xlu0 0
    %1861 = vperm.xlu0 %1860, %v1844
    %v1862 = vpop.permute.xlu0 %1861
    %1865 = vset.pattern.permute.xlu0 0
    %1866 = vperm.xlu0 %1865, %v1846
    %v1867 = vpop.permute.xlu0 %1866
    %1870 = vset.pattern.permute.xlu0 0
    %1871 = vperm.xlu0 %1870, %v1847
    %v1872 = vpop.permute.xlu0 %1871
    %1875 = vset.pattern.permute.xlu0 0
    %1876 = vperm.xlu0 %1875, %v1849
    %v1877 = vpop.permute.xlu0 %1876
    %1880 = vset.pattern.permute.xlu0 0
    %1881 = vperm.xlu0 %1880, %v1850
    %v1882 = vpop.permute.xlu0 %1881
    %1885 = vset.pattern.permute.xlu0 0
    %1886 = vperm.xlu0 %1885, %v1852
    %v1887 = vpop.permute.xlu0 %1886
    %1890 = vset.pattern.permute.xlu0 0
    %1891 = vperm.xlu0 %1890, %v1853
    %v1892 = vpop.permute.xlu0 %1891
    %v1894 = vmul.f32 %v1857, %v93
    %v1895 = vmul.f32 %v1862, %v94
    %v1896 = vmul.f32 %v1867, %v95
    %v1897 = vmul.f32 %v1872, %v96
    %v1898 = vmul.f32 %v1877, %v97
    %v1899 = vmul.f32 %v1882, %v98
    %v1900 = vmul.f32 %v1887, %v99
    %v1901 = vmul.f32 %v1892, %v100
    %v1902 = vsel %vm381, %v1894, 0.0
    %v1903 = vsel %vm863, %v1895, 0.0
    %v1904 = vadd.f32 %v1902, %v1903
    %v1905 = vrot.slane %v1904, 4
    %v1906 = vadd.f32 %v1904, %v1905
    %v1907 = vrot.slane %v1906, 2
    %v1908 = vadd.f32 %v1906, %v1907
    %v1909 = vrot.slane %v1908, 1
    %v1910 = vadd.f32 %v1908, %v1909
    %v1911 = vsel %vm381, %v1896, 0.0
    %v1912 = vsel %vm863, %v1897, 0.0
    %v1913 = vadd.f32 %v1911, %v1912
    %v1914 = vrot.slane %v1913, 4
    %v1915 = vadd.f32 %v1913, %v1914
    %v1916 = vrot.slane %v1915, 2
    %v1917 = vadd.f32 %v1915, %v1916
    %v1918 = vrot.slane %v1917, 1
    %v1919 = vadd.f32 %v1917, %v1918
    %v1920 = vsel %vm381, %v1898, 0.0
    %v1921 = vsel %vm863, %v1899, 0.0
    %v1922 = vadd.f32 %v1920, %v1921
    %v1923 = vrot.slane %v1922, 4
    %v1924 = vadd.f32 %v1922, %v1923
    %v1925 = vrot.slane %v1924, 2
    %v1926 = vadd.f32 %v1924, %v1925
    %v1927 = vrot.slane %v1926, 1
    %v1928 = vadd.f32 %v1926, %v1927
    %v1929 = vsel %vm381, %v1900, 0.0
    %v1930 = vsel %vm863, %v1901, 0.0
    %v1931 = vadd.f32 %v1929, %v1930
    %v1932 = vrot.slane %v1931, 4
    %v1933 = vadd.f32 %v1931, %v1932
    %v1934 = vrot.slane %v1933, 2
    %v1935 = vadd.f32 %v1933, %v1934
    %v1936 = vrot.slane %v1935, 1
    %v1937 = vadd.f32 %v1935, %v1936
    %v1942 = vsel %vm940, %v1919, %v1910
    %v1943 = vsel %vm942, %v1928, %v1942
    %v1944 = vsel %vm944, %v1937, %v1943
    %v1945 = vsel %vm381, %v1944, 0
    %1947 = vmatprep.subr.mxu0 0.0
    %1948 = vmatpush1.msra.mxu0 0.0
    %1949 = vmatprep.subr.mxu0 0.0
    %1950 = vmatpush1.msra.mxu0 0.0
    %1951 = vmatprep.subr.mxu0 0.0
    %1952 = vmatpush1.msra.mxu0 0.0
    %1953 = vmatprep.subr.mxu0 0.0
    %1954 = vmatpush1.msra.mxu0 0.0
    %1955 = vmatprep.subr.mxu0 0.0
    %1956 = vmatpush1.msra.mxu0 0.0
    %1957 = vmatprep.subr.mxu0 0.0
    %1958 = vmatpush1.msra.mxu0 0.0
    %1959 = vmatprep.subr.mxu0 0.0
    %1960 = vmatpush1.msra.mxu0 0.0
    %1961 = vmatprep.subr.mxu0 0.0
    %1962 = vmatpush1.msra.mxu0 0.0
    %1963 = vmatprep.subr.mxu0 0.0
    %1964 = vmatpush1.msra.mxu0 0.0
    %1965 = vmatprep.subr.mxu0 0.0
    %1966 = vmatpush1.msra.mxu0 0.0
    %1967 = vmatprep.subr.mxu0 0.0
    %1968 = vmatpush1.msra.mxu0 0.0
    %1969 = vmatprep.subr.mxu0 0.0
    %1970 = vmatpush1.msra.mxu0 0.0
    %1971 = vmatprep.subr.mxu0 0.0
    %1972 = vmatpush1.msra.mxu0 %v77
    %1973 = vmatprep.subr.mxu0 0.0
    %1974 = vmatpush1.msra.mxu0 %v76
    %1975 = vmatprep.subr.mxu0 0.0
    %1976 = vmatpush1.msra.mxu0 %v75
    %1977 = vmatprep.subr.mxu0 0.0
    %1978 = vmatpush1.msra.mxu0 %v74
    %1979 = vmatprep.subr.mxu0 0.0
    %1980 = vmatpush2.msra.mxu0 0.0
    %1981 = vmatprep.subr.mxu0 0.0
    %1982 = vmatpush2.msra.mxu0 0.0
    %1983 = vmatprep.subr.mxu0 0.0
    %1984 = vmatpush2.msra.mxu0 0.0
    %1985 = vmatprep.subr.mxu0 0.0
    %1986 = vmatpush2.msra.mxu0 0.0
    %1987 = vmatprep.subr.mxu0 0.0
    %1988 = vmatpush2.msra.mxu0 0.0
    %1989 = vmatprep.subr.mxu0 0.0
    %1990 = vmatpush2.msra.mxu0 0.0
    %1991 = vmatprep.subr.mxu0 0.0
    %1992 = vmatpush2.msra.mxu0 0.0
    %1993 = vmatprep.subr.mxu0 0.0
    %1994 = vmatpush2.msra.mxu0 0.0
    %1995 = vmatprep.subr.mxu0 0.0
    %1996 = vmatpush2.msra.mxu0 0.0
    %1997 = vmatprep.subr.mxu0 0.0
    %1998 = vmatpush2.msra.mxu0 0.0
    %1999 = vmatprep.subr.mxu0 0.0
    %2000 = vmatpush2.msra.mxu0 0.0
    %2001 = vmatprep.subr.mxu0 0.0
    %2002 = vmatpush2.msra.mxu0 0.0
    %2003 = vmatprep.subr.mxu0 0.0
    %2004 = vmatpush2.msra.mxu0 0.0
    %2005 = vmatprep.subr.mxu0 0.0
    %2006 = vmatpush2.msra.mxu0 0.0
    %2007 = vmatprep.subr.mxu0 0.0
    %2008 = vmatpush2.msra.mxu0 0.0
    %2009 = vmatprep.subr.mxu0 0.0
    %2010 = vmatpush2.msra.mxu0 0.0
    %2011 = vmatprep.mubr.f32.mxu0 0.0
    %2012 = vmatmul.mubr.f32.gmra.mxu0 %v1945
    %v2013 = vpop.f32.mrf.mxu0
    %v2014 = vadd.f32 0.0, %v2013
    %v2015 = vpop.f32.mrf.mxu0
    %2016 = vdwg.mxu0
    %v2018 = vsel %vm1267, %v1548, 0
    %2020 = vmatprep.subr.mxu0 0.0
    %2021 = vmatpush1.msra.mxu0 0.0
    %2022 = vmatprep.subr.mxu0 0.0
    %2023 = vmatpush1.msra.mxu0 0.0
    %2024 = vmatprep.subr.mxu0 0.0
    %2025 = vmatpush1.msra.mxu0 0.0
    %2026 = vmatprep.subr.mxu0 0.0
    %2027 = vmatpush1.msra.mxu0 0.0
    %2028 = vmatprep.subr.mxu0 0.0
    %2029 = vmatpush1.msra.mxu0 0.0
    %2030 = vmatprep.subr.mxu0 0.0
    %2031 = vmatpush1.msra.mxu0 0.0
    %2032 = vmatprep.subr.mxu0 0.0
    %2033 = vmatpush1.msra.mxu0 0.0
    %2034 = vmatprep.subr.mxu0 0.0
    %2035 = vmatpush1.msra.mxu0 0.0
    %2036 = vmatprep.subr.mxu0 0.0
    %2037 = vmatpush1.msra.mxu0 0.0
    %2038 = vmatprep.subr.mxu0 0.0
    %2039 = vmatpush1.msra.mxu0 0.0
    %2040 = vmatprep.subr.mxu0 0.0
    %2041 = vmatpush1.msra.mxu0 0.0
    %2042 = vmatprep.subr.mxu0 0.0
    %2043 = vmatpush1.msra.mxu0 0.0
    %2044 = vmatprep.subr.mxu0 0.0
    %2045 = vmatpush1.msra.mxu0 0.0
    %2046 = vmatprep.subr.mxu0 0.0
    %2047 = vmatpush1.msra.mxu0 %v1273
    %2048 = vmatprep.subr.mxu0 0.0
    %2049 = vmatpush1.msra.mxu0 %v72
    %2050 = vmatprep.subr.mxu0 0.0
    %2051 = vmatpush1.msra.mxu0 %v71
    %2052 = vmatprep.subr.mxu0 0.0
    %2053 = vmatpush2.msra.mxu0 0.0
    %2054 = vmatprep.subr.mxu0 0.0
    %2055 = vmatpush2.msra.mxu0 0.0
    %2056 = vmatprep.subr.mxu0 0.0
    %2057 = vmatpush2.msra.mxu0 0.0
    %2058 = vmatprep.subr.mxu0 0.0
    %2059 = vmatpush2.msra.mxu0 0.0
    %2060 = vmatprep.subr.mxu0 0.0
    %2061 = vmatpush2.msra.mxu0 0.0
    %2062 = vmatprep.subr.mxu0 0.0
    %2063 = vmatpush2.msra.mxu0 0.0
    %2064 = vmatprep.subr.mxu0 0.0
    %2065 = vmatpush2.msra.mxu0 0.0
    %2066 = vmatprep.subr.mxu0 0.0
    %2067 = vmatpush2.msra.mxu0 0.0
    %2068 = vmatprep.subr.mxu0 0.0
    %2069 = vmatpush2.msra.mxu0 0.0
    %2070 = vmatprep.subr.mxu0 0.0
    %2071 = vmatpush2.msra.mxu0 0.0
    %2072 = vmatprep.subr.mxu0 0.0
    %2073 = vmatpush2.msra.mxu0 0.0
    %2074 = vmatprep.subr.mxu0 0.0
    %2075 = vmatpush2.msra.mxu0 0.0
    %2076 = vmatprep.subr.mxu0 0.0
    %2077 = vmatpush2.msra.mxu0 0.0
    %2078 = vmatprep.subr.mxu0 0.0
    %2079 = vmatpush2.msra.mxu0 0.0
    %2080 = vmatprep.subr.mxu0 0.0
    %2081 = vmatpush2.msra.mxu0 0.0
    %2082 = vmatprep.subr.mxu0 0.0
    %2083 = vmatpush2.msra.mxu0 0.0
    %2084 = vmatprep.mubr.f32.mxu0 0.0
    %2085 = vmatmul.mubr.f32.gmra.mxu0 %v2018
    %v2086 = vpop.f32.mrf.mxu0
    %v2087 = vadd.f32 %v2014, %v2086
    %v2088 = vpop.f32.mrf.mxu0
    %2089 = vdwg.mxu0
    %v2090 = vadd.f32 %v2087, %v118
    %2091 = vrot.lane.b32.xlu0 %v1449, 96
    %v2092 = vpop.permute.xlu0 %2091
    %v2094 = vadd.f32 %v2090, %v2092
    %v2095 = vxor.u32 %v2094, 2147483648
    %v2096 = vmul.f32 %v2095, 1.442695
    %v2097 = vpow.pop %v2096
    %v2098 = vadd.f32 %v2097, 1.0
    %v2099 = vrcp.pop %v2098
    %v2100 = vmul.f32 1.0, %v2099
    %2101 = vrot.lane.b32.xlu0 %v1449, 32
    %v2102 = vpop.permute.xlu0 %2101
    %v2104 = vmul.f32 %v2100, %v2102
    %2106 = vrot.lane.b32.xlu0 %v2104, 64
    %v2107 = vpop.permute.xlu0 %2106
    %v2109 = vadd.f32 %v2090, %v2107
    %v2110 = vtanh.pop %v2109
    %v2111 = vsub.f32 1.0, %v2100
    %2113 = vrot.lane.b32.xlu0 %v2110, 96
    %v2114 = vpop.permute.xlu0 %2113
    %v2116 = vmul.f32 %v2111, %v2114
    %v2117 = vmul.f32 %v2100, %v1376
    %v2118 = vadd.f32 %v2116, %v2117
    %2120 = vrot.lane.b32.xlu0 %v2118, 96
    %v2121 = vpop.permute.xlu0 %2120
    %v2122 = vsel %vm381, %v2121, 0
    %2124 = vmatprep.subr.mxu0 0.0
    %2125 = vmatpush1.msra.mxu0 0.0
    %2126 = vmatprep.subr.mxu0 0.0
    %2127 = vmatpush1.msra.mxu0 0.0
    %2128 = vmatprep.subr.mxu0 0.0
    %2129 = vmatpush1.msra.mxu0 0.0
    %2130 = vmatprep.subr.mxu0 0.0
    %2131 = vmatpush1.msra.mxu0 0.0
    %2132 = vmatprep.subr.mxu0 0.0
    %2133 = vmatpush1.msra.mxu0 0.0
    %2134 = vmatprep.subr.mxu0 0.0
    %2135 = vmatpush1.msra.mxu0 0.0
    %2136 = vmatprep.subr.mxu0 0.0
    %2137 = vmatpush1.msra.mxu0 0.0
    %2138 = vmatprep.subr.mxu0 0.0
    %2139 = vmatpush1.msra.mxu0 0.0
    %2140 = vmatprep.subr.mxu0 0.0
    %2141 = vmatpush1.msra.mxu0 0.0
    %2142 = vmatprep.subr.mxu0 0.0
    %2143 = vmatpush1.msra.mxu0 0.0
    %2144 = vmatprep.subr.mxu0 0.0
    %2145 = vmatpush1.msra.mxu0 0.0
    %2146 = vmatprep.subr.mxu0 0.0
    %2147 = vmatpush1.msra.mxu0 0.0
    %2148 = vmatprep.subr.mxu0 %v85
    %2149 = vmatpush1.msra.mxu0 %v84
    %2150 = vmatprep.subr.mxu0 %v83
    %2151 = vmatpush1.msra.mxu0 %v82
    %2152 = vmatprep.subr.mxu0 %v81
    %2153 = vmatpush1.msra.mxu0 %v80
    %2154 = vmatprep.subr.mxu0 %v79
    %2155 = vmatpush1.msra.mxu0 %v78
    %2156 = vmatprep.subr.mxu0 0.0
    %2157 = vmatpush2.msra.mxu0 0.0
    %2158 = vmatprep.subr.mxu0 0.0
    %2159 = vmatpush2.msra.mxu0 0.0
    %2160 = vmatprep.subr.mxu0 0.0
    %2161 = vmatpush2.msra.mxu0 0.0
    %2162 = vmatprep.subr.mxu0 0.0
    %2163 = vmatpush2.msra.mxu0 0.0
    %2164 = vmatprep.subr.mxu0 0.0
    %2165 = vmatpush2.msra.mxu0 0.0
    %2166 = vmatprep.subr.mxu0 0.0
    %2167 = vmatpush2.msra.mxu0 0.0
    %2168 = vmatprep.subr.mxu0 0.0
    %2169 = vmatpush2.msra.mxu0 0.0
    %2170 = vmatprep.subr.mxu0 0.0
    %2171 = vmatpush2.msra.mxu0 0.0
    %2172 = vmatprep.subr.mxu0 0.0
    %2173 = vmatpush2.msra.mxu0 0.0
    %2174 = vmatprep.subr.mxu0 0.0
    %2175 = vmatpush2.msra.mxu0 0.0
    %2176 = vmatprep.subr.mxu0 0.0
    %2177 = vmatpush2.msra.mxu0 0.0
    %2178 = vmatprep.subr.mxu0 0.0
    %2179 = vmatpush2.msra.mxu0 0.0
    %2180 = vmatprep.subr.mxu0 0.0
    %2181 = vmatpush2.msra.mxu0 0.0
    %2182 = vmatprep.subr.mxu0 0.0
    %2183 = vmatpush2.msra.mxu0 0.0
    %2184 = vmatprep.subr.mxu0 0.0
    %2185 = vmatpush2.msra.mxu0 0.0
    %2186 = vmatprep.subr.mxu0 0.0
    %2187 = vmatpush2.msra.mxu0 0.0
    %2188 = vmatprep.mubr.f32.mxu0 0.0
    %2189 = vmatmul.mubr.f32.gmra.mxu0 %v2122
    %v2190 = vpop.f32.mrf.mxu0
    %v2191 = vadd.f32 %v106, %v2190
    %v2192 = vpop.f32.mrf.mxu0
    %v2193 = vadd.f32 %v110, %v2192
    %2194 = vdwg.mxu0
    %v2195 = vsel %vm1271, %v2193, -inf
    %2196 = vmax.xlane.f32.xlu0 %v2195
    %v2197 = vpop.xlane.xlu0 %2196
    %v2198 = vsub.f32 %v2193, %v2197
    %v2199 = vmul.f32 %v2198, 1.442695
    %v2200 = vpow.pop %v2199
    %v2201 = vsel %vm1271, %v2200, 0.0
    %2202 = vadd.xlane.f32.xlu0 %v2201
    %v2203 = vpop.xlane.xlu0 %2202
    %v2204 = vlog2.pop %v2203
    %v2205 = vmul.f32 %v2204, 0.6931472
    %v2206 = vadd.f32 %v2205, %v2197
    %v2207 = vsub.f32 %v2193, %v2206
    %v2210 = vunpack.c.l.s4 1966171168
    %v2211 = vunpack.c.0.s8 %v2210
    %v2212 = vlaneseq
    %v2213 = vshrl.u32 %v2212, 7
    %v2214 = vsub.s32 %v2211, %v2213
    %v2215 = vrot.slane %v2207, %v2214
    %v2216 = vcombine.high %v2215, %v2215
    %v2218 = vunpack.c.l.s4 1966171168
    %v2219 = vunpack.c.0.s8 %v2218
    %v2220 = vlaneseq
    %v2221 = vshrl.u32 %v2220, 7
    %v2222 = vsub.s32 %v2219, %v2221
    %v2223 = vrot.slane %v2215, %v2222
    %v2225 = vunpack.c.l.s4 1966171168
    %v2226 = vunpack.c.0.s8 %v2225
    %v2227 = vlaneseq
    %v2228 = vshrl.u32 %v2227, 7
    %v2229 = vsub.s32 %v2226, %v2228
    %v2230 = vrot.slane %v2216, %v2229
    %v2231 = vcombine.high %v2223, %v2223
    %v2232 = vcombine.high %v2230, %v2230
    %2237 = vst [vmem:[%s11 + $0x1] sm:$0x1] %v2223
    %2238 = vst [vmem:[%s11 + $0x11] sm:$0x1] %v2230
    %2239 = vst [vmem:[%s11 + $0x21] sm:$0x1] %v2231
    %2240 = vst [vmem:[%s11 + $0x31] sm:$0x1] %v2232
    %v2241 = vlaneseq
    %v2242 = vshrl.u32 %v2241, 7
    %v2243 = vsub.s32 %v577, %v2242
    %v2244 = vrot.slane %v1857, %v2243
    %v2245 = vlaneseq
    %v2246 = vshrl.u32 %v2245, 7
    %v2247 = vsub.s32 %v906, %v2246
    %v2248 = vrot.slane %v1862, %v2247
    %v2249 = vsel %vm911, %v2248, %v2244
    %v2250 = vlaneseq
    %v2251 = vshrl.u32 %v2250, 7
    %v2252 = vsub.s32 %v577, %v2251
    %v2253 = vrot.slane %v1867, %v2252
    %v2254 = vlaneseq
    %v2255 = vshrl.u32 %v2254, 7
    %v2256 = vsub.s32 %v906, %v2255
    %v2257 = vrot.slane %v1872, %v2256
    %v2258 = vsel %vm911, %v2257, %v2253
    %v2259 = vlaneseq
    %v2260 = vshrl.u32 %v2259, 7
    %v2261 = vsub.s32 %v577, %v2260
    %v2262 = vrot.slane %v1877, %v2261
    %v2263 = vlaneseq
    %v2264 = vshrl.u32 %v2263, 7
    %v2265 = vsub.s32 %v906, %v2264
    %v2266 = vrot.slane %v1882, %v2265
    %v2267 = vsel %vm911, %v2266, %v2262
    %v2268 = vlaneseq
    %v2269 = vshrl.u32 %v2268, 7
    %v2270 = vsub.s32 %v577, %v2269
    %v2271 = vrot.slane %v1887, %v2270
    %v2272 = vlaneseq
    %v2273 = vshrl.u32 %v2272, 7
    %v2274 = vsub.s32 %v906, %v2273
    %v2275 = vrot.slane %v1892, %v2274
    %v2276 = vsel %vm911, %v2275, %v2271
    %2281 = vst.msk [vmem:[%s13 + $0x1] sm:$0x1] %vm1539, %v2249
    %2282 = vst.msk [vmem:[%s13 + $0x11] sm:$0x1] %vm1539, %v2258
    %2283 = vst.msk [vmem:[%s13 + $0x21] sm:$0x1] %vm1539, %v2267
    %2284 = vst.msk [vmem:[%s13 + $0x31] sm:$0x1] %vm1539, %v2276
    %2285 = vmax.index.xlane.f32.xlu0 %v2195
    %v2286 = vpop.xlane.xlu0 %2285
    %vm2287 = vcmp.eq.s32.totalorder %v577, %v2286
    %v2288 = vsel %vm2287, 1, 0
    %v2289 = vcvt.s32.f32 %v2288
    %v2292 = vunpack.c.l.s4 1966171168
    %v2293 = vunpack.c.0.s8 %v2292
    %v2294 = vlaneseq
    %v2295 = vshrl.u32 %v2294, 7
    %v2296 = vsub.s32 %v2293, %v2295
    %v2297 = vrot.slane %v2191, %v2296
    %v2298 = vcombine.high %v2297, %v2297
    %v2300 = vunpack.c.l.s4 1966171168
    %v2301 = vunpack.c.0.s8 %v2300
    %v2302 = vlaneseq
    %v2303 = vshrl.u32 %v2302, 7
    %v2304 = vsub.s32 %v2301, %v2303
    %v2305 = vrot.slane %v2297, %v2304
    %v2307 = vunpack.c.l.s4 1966171168
    %v2308 = vunpack.c.0.s8 %v2307
    %v2309 = vlaneseq
    %v2310 = vshrl.u32 %v2309, 7
    %v2311 = vsub.s32 %v2308, %v2310
    %v2312 = vrot.slane %v2298, %v2311
    %v2313 = vcombine.high %v2305, %v2305
    %v2314 = vcombine.high %v2312, %v2312
    %v2315 = vlaneseq
    %v2316 = vshrl.u32 %v2315, 7
    %v2317 = vsub.s32 0, %v2316
    %v2318 = vrot.slane %v2305, %v2317
    %v2319 = vlaneseq
    %v2320 = vshrl.u32 %v2319, 7
    %v2321 = vsub.s32 0, %v2320
    %v2322 = vrot.slane %v2312, %v2321
    %v2323 = vlaneseq
    %v2324 = vshrl.u32 %v2323, 7
    %v2325 = vsub.s32 0, %v2324
    %v2326 = vrot.slane %v2313, %v2325
    %v2327 = vlaneseq
    %v2328 = vshrl.u32 %v2327, 7
    %v2329 = vsub.s32 0, %v2328
    %v2330 = vrot.slane %v2314, %v2329
    %v2335 = vadd.f32 %v2318, %v742
    %v2336 = vadd.f32 %v2318, %v749
    %v2337 = vadd.f32 %v2322, %v766
    %v2338 = vadd.f32 %v2322, %v773
    %v2339 = vadd.f32 %v2326, %v790
    %v2340 = vadd.f32 %v2326, %v797
    %v2341 = vadd.f32 %v2330, %v814
    %v2342 = vadd.f32 %v2330, %v821
    %v2343 = vtanh.pop %v2335
    %v2344 = vtanh.pop %v2336
    %v2345 = vtanh.pop %v2337
    %v2346 = vtanh.pop %v2338
    %v2347 = vtanh.pop %v2339
    %v2348 = vtanh.pop %v2340
    %v2349 = vtanh.pop %v2341
    %v2350 = vtanh.pop %v2342
    %v2351 = vmul.f32 %v2343, %v850
    %v2352 = vmul.f32 %v2344, %v850
    %v2353 = vmul.f32 %v2345, %v850
    %v2354 = vmul.f32 %v2346, %v850
    %v2355 = vmul.f32 %v2347, %v850
    %v2356 = vmul.f32 %v2348, %v850
    %v2357 = vmul.f32 %v2349, %v850
    %v2358 = vmul.f32 %v2350, %v850
    %v2359 = vsel %vm381, %v2351, 0.0
    %2360 = vadd.xlane.f32.xlu0 %v2359
    %v2361 = vpop.xlane.xlu0 %2360
    %v2362 = vsel %vm863, %v2352, 0.0
    %2363 = vadd.xlane.f32.xlu0 %v2362
    %v2364 = vpop.xlane.xlu0 %2363
    %v2365 = vsel %vm381, %v2353, 0.0
    %2366 = vadd.xlane.f32.xlu0 %v2365
    %v2367 = vpop.xlane.xlu0 %2366
    %v2368 = vsel %vm863, %v2354, 0.0
    %2369 = vadd.xlane.f32.xlu0 %v2368
    %v2370 = vpop.xlane.xlu0 %2369
    %v2371 = vsel %vm381, %v2355, 0.0
    %2372 = vadd.xlane.f32.xlu0 %v2371
    %v2373 = vpop.xlane.xlu0 %2372
    %v2374 = vsel %vm863, %v2356, 0.0
    %2375 = vadd.xlane.f32.xlu0 %v2374
    %v2376 = vpop.xlane.xlu0 %2375
    %v2377 = vsel %vm381, %v2357, 0.0
    %2378 = vadd.xlane.f32.xlu0 %v2377
    %v2379 = vpop.xlane.xlu0 %2378
    %v2380 = vsel %vm863, %v2358, 0.0
    %2381 = vadd.xlane.f32.xlu0 %v2380
    %v2382 = vpop.xlane.xlu0 %2381
    %v2383 = vadd.f32 %v2361, %v885
    %v2384 = vadd.f32 %v2364, %v885
    %v2385 = vadd.f32 %v2367, %v885
    %v2386 = vadd.f32 %v2370, %v885
    %v2387 = vadd.f32 %v2373, %v885
    %v2388 = vadd.f32 %v2376, %v885
    %v2389 = vadd.f32 %v2379, %v885
    %v2390 = vadd.f32 %v2382, %v885
    %v2399 = vlaneseq
    %v2400 = vshrl.u32 %v2399, 7
    %v2401 = vsub.s32 %v577, %v2400
    %v2402 = vrot.slane %v2383, %v2401
    %v2403 = vlaneseq
    %v2404 = vshrl.u32 %v2403, 7
    %v2405 = vsub.s32 %v906, %v2404
    %v2406 = vrot.slane %v2384, %v2405
    %v2407 = vsel %vm911, %v2406, %v2402
    %v2408 = vlaneseq
    %v2409 = vshrl.u32 %v2408, 7
    %v2410 = vsub.s32 %v577, %v2409
    %v2411 = vrot.slane %v2385, %v2410
    %v2412 = vlaneseq
    %v2413 = vshrl.u32 %v2412, 7
    %v2414 = vsub.s32 %v906, %v2413
    %v2415 = vrot.slane %v2386, %v2414
    %v2416 = vsel %vm911, %v2415, %v2411
    %v2417 = vlaneseq
    %v2418 = vshrl.u32 %v2417, 7
    %v2419 = vsub.s32 %v577, %v2418
    %v2420 = vrot.slane %v2387, %v2419
    %v2421 = vlaneseq
    %v2422 = vshrl.u32 %v2421, 7
    %v2423 = vsub.s32 %v906, %v2422
    %v2424 = vrot.slane %v2388, %v2423
    %v2425 = vsel %vm911, %v2424, %v2420
    %v2426 = vlaneseq
    %v2427 = vshrl.u32 %v2426, 7
    %v2428 = vsub.s32 %v577, %v2427
    %v2429 = vrot.slane %v2389, %v2428
    %v2430 = vlaneseq
    %v2431 = vshrl.u32 %v2430, 7
    %v2432 = vsub.s32 %v906, %v2431
    %v2433 = vrot.slane %v2390, %v2432
    %v2434 = vsel %vm911, %v2433, %v2429
    %v2435 = vsel %vm940, %v2416, %v2407
    %v2436 = vsel %vm942, %v2425, %v2435
    %v2437 = vsel %vm944, %v2434, %v2436
    %v2439 = vsel %vm947, %v2437, -inf
    %2440 = vmax.xlane.f32.xlu0 %v2439
    %v2441 = vpop.xlane.xlu0 %2440
    %v2443 = vlaneseq
    %v2444 = vshrl.u32 %v2443, 7
    %v2445 = vsub.s32 0, %v2444
    %v2446 = vrot.slane %v2441, %v2445
    %v2447 = vlaneseq
    %v2448 = vshrl.u32 %v2447, 7
    %v2449 = vsub.s32 1, %v2448
    %v2450 = vrot.slane %v2441, %v2449
    %v2451 = vlaneseq
    %v2452 = vshrl.u32 %v2451, 7
    %v2453 = vsub.s32 2, %v2452
    %v2454 = vrot.slane %v2441, %v2453
    %v2455 = vlaneseq
    %v2456 = vshrl.u32 %v2455, 7
    %v2457 = vsub.s32 3, %v2456
    %v2458 = vrot.slane %v2441, %v2457
    %v2463 = vsub.f32 %v2383, %v2446
    %v2464 = vsub.f32 %v2384, %v2446
    %v2465 = vsub.f32 %v2385, %v2450
    %v2466 = vsub.f32 %v2386, %v2450
    %v2467 = vsub.f32 %v2387, %v2454
    %v2468 = vsub.f32 %v2388, %v2454
    %v2469 = vsub.f32 %v2389, %v2458
    %v2470 = vsub.f32 %v2390, %v2458
    %v2471 = vmul.f32 %v2463, 1.442695
    %v2472 = vpow.pop %v2471
    %v2473 = vmul.f32 %v2464, 1.442695
    %v2474 = vpow.pop %v2473
    %v2475 = vmul.f32 %v2465, 1.442695
    %v2476 = vpow.pop %v2475
    %v2477 = vmul.f32 %v2466, 1.442695
    %v2478 = vpow.pop %v2477
    %v2479 = vmul.f32 %v2467, 1.442695
    %v2480 = vpow.pop %v2479
    %v2481 = vmul.f32 %v2468, 1.442695
    %v2482 = vpow.pop %v2481
    %v2483 = vmul.f32 %v2469, 1.442695
    %v2484 = vpow.pop %v2483
    %v2485 = vmul.f32 %v2470, 1.442695
    %v2486 = vpow.pop %v2485
    %2495 = vset.pattern.permute.xlu0 0
    %2496 = vperm.xlu0 %2495, %v2472
    %v2497 = vpop.permute.xlu0 %2496
    %2498 = vset.pattern.permute.xlu0 0
    %2499 = vperm.xlu0 %2498, %v2474
    %v2500 = vpop.permute.xlu0 %2499
    %2501 = vset.pattern.permute.xlu0 0
    %2502 = vperm.xlu0 %2501, %v2476
    %v2503 = vpop.permute.xlu0 %2502
    %2504 = vset.pattern.permute.xlu0 0
    %2505 = vperm.xlu0 %2504, %v2478
    %v2506 = vpop.permute.xlu0 %2505
    %2507 = vset.pattern.permute.xlu0 0
    %2508 = vperm.xlu0 %2507, %v2480
    %v2509 = vpop.permute.xlu0 %2508
    %2510 = vset.pattern.permute.xlu0 0
    %2511 = vperm.xlu0 %2510, %v2482
    %v2512 = vpop.permute.xlu0 %2511
    %2513 = vset.pattern.permute.xlu0 0
    %2514 = vperm.xlu0 %2513, %v2484
    %v2515 = vpop.permute.xlu0 %2514
    %2516 = vset.pattern.permute.xlu0 0
    %2517 = vperm.xlu0 %2516, %v2486
    %v2518 = vpop.permute.xlu0 %2517
    %v2519 = vlaneseq
    %v2520 = vshrl.u32 %v2519, 7
    %v2521 = vsub.s32 %v577, %v2520
    %v2522 = vrot.slane %v2497, %v2521
    %v2523 = vlaneseq
    %v2524 = vshrl.u32 %v2523, 7
    %v2525 = vsub.s32 %v906, %v2524
    %v2526 = vrot.slane %v2500, %v2525
    %v2527 = vsel %vm911, %v2526, %v2522
    %v2528 = vlaneseq
    %v2529 = vshrl.u32 %v2528, 7
    %v2530 = vsub.s32 %v577, %v2529
    %v2531 = vrot.slane %v2503, %v2530
    %v2532 = vlaneseq
    %v2533 = vshrl.u32 %v2532, 7
    %v2534 = vsub.s32 %v906, %v2533
    %v2535 = vrot.slane %v2506, %v2534
    %v2536 = vsel %vm911, %v2535, %v2531
    %v2537 = vlaneseq
    %v2538 = vshrl.u32 %v2537, 7
    %v2539 = vsub.s32 %v577, %v2538
    %v2540 = vrot.slane %v2509, %v2539
    %v2541 = vlaneseq
    %v2542 = vshrl.u32 %v2541, 7
    %v2543 = vsub.s32 %v906, %v2542
    %v2544 = vrot.slane %v2512, %v2543
    %v2545 = vsel %vm911, %v2544, %v2540
    %v2546 = vlaneseq
    %v2547 = vshrl.u32 %v2546, 7
    %v2548 = vsub.s32 %v577, %v2547
    %v2549 = vrot.slane %v2515, %v2548
    %v2550 = vlaneseq
    %v2551 = vshrl.u32 %v2550, 7
    %v2552 = vsub.s32 %v906, %v2551
    %v2553 = vrot.slane %v2518, %v2552
    %v2554 = vsel %vm911, %v2553, %v2549
    %v2555 = vsel %vm940, %v2536, %v2527
    %v2556 = vsel %vm942, %v2545, %v2555
    %v2557 = vsel %vm944, %v2554, %v2556
    %v2559 = vsel %vm947, %v2557, 0.0
    %2560 = vadd.xlane.f32.xlu0 %v2559
    %v2561 = vpop.xlane.xlu0 %2560
    %v2563 = vlaneseq
    %v2564 = vshrl.u32 %v2563, 7
    %v2565 = vsub.s32 0, %v2564
    %v2566 = vrot.slane %v2561, %v2565
    %v2567 = vlaneseq
    %v2568 = vshrl.u32 %v2567, 7
    %v2569 = vsub.s32 1, %v2568
    %v2570 = vrot.slane %v2561, %v2569
    %v2571 = vlaneseq
    %v2572 = vshrl.u32 %v2571, 7
    %v2573 = vsub.s32 2, %v2572
    %v2574 = vrot.slane %v2561, %v2573
    %v2575 = vlaneseq
    %v2576 = vshrl.u32 %v2575, 7
    %v2577 = vsub.s32 3, %v2576
    %v2578 = vrot.slane %v2561, %v2577
    %v2583 = vrcp.pop %v2566
    %v2584 = vmul.f32 %v2472, %v2583
    %v2585 = vmul.f32 %v2474, %v2583
    %v2586 = vrcp.pop %v2570
    %v2587 = vmul.f32 %v2476, %v2586
    %v2588 = vmul.f32 %v2478, %v2586
    %v2589 = vrcp.pop %v2574
    %v2590 = vmul.f32 %v2480, %v2589
    %v2591 = vmul.f32 %v2482, %v2589
    %v2592 = vrcp.pop %v2578
    %v2593 = vmul.f32 %v2484, %v2592
    %v2594 = vmul.f32 %v2486, %v2592
    %2596 = vset.pattern.permute.xlu0 0
    %2597 = vperm.xlu0 %2596, %v2584
    %v2598 = vpop.permute.xlu0 %2597
    %2601 = vset.pattern.permute.xlu0 0
    %2602 = vperm.xlu0 %2601, %v2585
    %v2603 = vpop.permute.xlu0 %2602
    %2606 = vset.pattern.permute.xlu0 0
    %2607 = vperm.xlu0 %2606, %v2587
    %v2608 = vpop.permute.xlu0 %2607
    %2611 = vset.pattern.permute.xlu0 0
    %2612 = vperm.xlu0 %2611, %v2588
    %v2613 = vpop.permute.xlu0 %2612
    %2616 = vset.pattern.permute.xlu0 0
    %2617 = vperm.xlu0 %2616, %v2590
    %v2618 = vpop.permute.xlu0 %2617
    %2621 = vset.pattern.permute.xlu0 0
    %2622 = vperm.xlu0 %2621, %v2591
    %v2623 = vpop.permute.xlu0 %2622
    %2626 = vset.pattern.permute.xlu0 0
    %2627 = vperm.xlu0 %2626, %v2593
    %v2628 = vpop.permute.xlu0 %2627
    %2631 = vset.pattern.permute.xlu0 0
    %2632 = vperm.xlu0 %2631, %v2594
    %v2633 = vpop.permute.xlu0 %2632
    %v2635 = vmul.f32 %v2598, %v93
    %v2636 = vmul.f32 %v2603, %v94
    %v2637 = vmul.f32 %v2608, %v95
    %v2638 = vmul.f32 %v2613, %v96
    %v2639 = vmul.f32 %v2618, %v97
    %v2640 = vmul.f32 %v2623, %v98
    %v2641 = vmul.f32 %v2628, %v99
    %v2642 = vmul.f32 %v2633, %v100
    %v2643 = vsel %vm381, %v2635, 0.0
    %v2644 = vsel %vm863, %v2636, 0.0
    %v2645 = vadd.f32 %v2643, %v2644
    %v2646 = vrot.slane %v2645, 4
    %v2647 = vadd.f32 %v2645, %v2646
    %v2648 = vrot.slane %v2647, 2
    %v2649 = vadd.f32 %v2647, %v2648
    %v2650 = vrot.slane %v2649, 1
    %v2651 = vadd.f32 %v2649, %v2650
    %v2652 = vsel %vm381, %v2637, 0.0
    %v2653 = vsel %vm863, %v2638, 0.0
    %v2654 = vadd.f32 %v2652, %v2653
    %v2655 = vrot.slane %v2654, 4
    %v2656 = vadd.f32 %v2654, %v2655
    %v2657 = vrot.slane %v2656, 2
    %v2658 = vadd.f32 %v2656, %v2657
    %v2659 = vrot.slane %v2658, 1
    %v2660 = vadd.f32 %v2658, %v2659
    %v2661 = vsel %vm381, %v2639, 0.0
    %v2662 = vsel %vm863, %v2640, 0.0
    %v2663 = vadd.f32 %v2661, %v2662
    %v2664 = vrot.slane %v2663, 4
    %v2665 = vadd.f32 %v2663, %v2664
    %v2666 = vrot.slane %v2665, 2
    %v2667 = vadd.f32 %v2665, %v2666
    %v2668 = vrot.slane %v2667, 1
    %v2669 = vadd.f32 %v2667, %v2668
    %v2670 = vsel %vm381, %v2641, 0.0
    %v2671 = vsel %vm863, %v2642, 0.0
    %v2672 = vadd.f32 %v2670, %v2671
    %v2673 = vrot.slane %v2672, 4
    %v2674 = vadd.f32 %v2672, %v2673
    %v2675 = vrot.slane %v2674, 2
    %v2676 = vadd.f32 %v2674, %v2675
    %v2677 = vrot.slane %v2676, 1
    %v2678 = vadd.f32 %v2676, %v2677
    %v2683 = vsel %vm940, %v2660, %v2651
    %v2684 = vsel %vm942, %v2669, %v2683
    %v2685 = vsel %vm944, %v2678, %v2684
    %v2686 = vsel %vm381, %v2685, 0
    %2688 = vmatprep.subr.mxu0 0.0
    %2689 = vmatpush1.msra.mxu0 0.0
    %2690 = vmatprep.subr.mxu0 0.0
    %2691 = vmatpush1.msra.mxu0 0.0
    %2692 = vmatprep.subr.mxu0 0.0
    %2693 = vmatpush1.msra.mxu0 0.0
    %2694 = vmatprep.subr.mxu0 0.0
    %2695 = vmatpush1.msra.mxu0 0.0
    %2696 = vmatprep.subr.mxu0 0.0
    %2697 = vmatpush1.msra.mxu0 0.0
    %2698 = vmatprep.subr.mxu0 0.0
    %2699 = vmatpush1.msra.mxu0 0.0
    %2700 = vmatprep.subr.mxu0 0.0
    %2701 = vmatpush1.msra.mxu0 0.0
    %2702 = vmatprep.subr.mxu0 0.0
    %2703 = vmatpush1.msra.mxu0 0.0
    %2704 = vmatprep.subr.mxu0 0.0
    %2705 = vmatpush1.msra.mxu0 0.0
    %2706 = vmatprep.subr.mxu0 0.0
    %2707 = vmatpush1.msra.mxu0 0.0
    %2708 = vmatprep.subr.mxu0 0.0
    %2709 = vmatpush1.msra.mxu0 0.0
    %2710 = vmatprep.subr.mxu0 0.0
    %2711 = vmatpush1.msra.mxu0 0.0
    %2712 = vmatprep.subr.mxu0 0.0
    %2713 = vmatpush1.msra.mxu0 %v77
    %2714 = vmatprep.subr.mxu0 0.0
    %2715 = vmatpush1.msra.mxu0 %v76
    %2716 = vmatprep.subr.mxu0 0.0
    %2717 = vmatpush1.msra.mxu0 %v75
    %2718 = vmatprep.subr.mxu0 0.0
    %2719 = vmatpush1.msra.mxu0 %v74
    %2720 = vmatprep.subr.mxu0 0.0
    %2721 = vmatpush2.msra.mxu0 0.0
    %2722 = vmatprep.subr.mxu0 0.0
    %2723 = vmatpush2.msra.mxu0 0.0
    %2724 = vmatprep.subr.mxu0 0.0
    %2725 = vmatpush2.msra.mxu0 0.0
    %2726 = vmatprep.subr.mxu0 0.0
    %2727 = vmatpush2.msra.mxu0 0.0
    %2728 = vmatprep.subr.mxu0 0.0
    %2729 = vmatpush2.msra.mxu0 0.0
    %2730 = vmatprep.subr.mxu0 0.0
    %2731 = vmatpush2.msra.mxu0 0.0
    %2732 = vmatprep.subr.mxu0 0.0
    %2733 = vmatpush2.msra.mxu0 0.0
    %2734 = vmatprep.subr.mxu0 0.0
    %2735 = vmatpush2.msra.mxu0 0.0
    %2736 = vmatprep.subr.mxu0 0.0
    %2737 = vmatpush2.msra.mxu0 0.0
    %2738 = vmatprep.subr.mxu0 0.0
    %2739 = vmatpush2.msra.mxu0 0.0
    %2740 = vmatprep.subr.mxu0 0.0
    %2741 = vmatpush2.msra.mxu0 0.0
    %2742 = vmatprep.subr.mxu0 0.0
    %2743 = vmatpush2.msra.mxu0 0.0
    %2744 = vmatprep.subr.mxu0 0.0
    %2745 = vmatpush2.msra.mxu0 0.0
    %2746 = vmatprep.subr.mxu0 0.0
    %2747 = vmatpush2.msra.mxu0 0.0
    %2748 = vmatprep.subr.mxu0 0.0
    %2749 = vmatpush2.msra.mxu0 0.0
    %2750 = vmatprep.subr.mxu0 0.0
    %2751 = vmatpush2.msra.mxu0 0.0
    %2752 = vmatprep.mubr.f32.mxu0 0.0
    %2753 = vmatmul.mubr.f32.gmra.mxu0 %v2686
    %v2754 = vpop.f32.mrf.mxu0
    %v2755 = vadd.f32 0.0, %v2754
    %v2756 = vpop.f32.mrf.mxu0
    %2757 = vdwg.mxu0
    %v2759 = vsel %vm1267, %v2289, 0
    %2761 = vmatprep.subr.mxu0 0.0
    %2762 = vmatpush1.msra.mxu0 0.0
    %2763 = vmatprep.subr.mxu0 0.0
    %2764 = vmatpush1.msra.mxu0 0.0
    %2765 = vmatprep.subr.mxu0 0.0
    %2766 = vmatpush1.msra.mxu0 0.0
    %2767 = vmatprep.subr.mxu0 0.0
    %2768 = vmatpush1.msra.mxu0 0.0
    %2769 = vmatprep.subr.mxu0 0.0
    %2770 = vmatpush1.msra.mxu0 0.0
    %2771 = vmatprep.subr.mxu0 0.0
    %2772 = vmatpush1.msra.mxu0 0.0
    %2773 = vmatprep.subr.mxu0 0.0
    %2774 = vmatpush1.msra.mxu0 0.0
    %2775 = vmatprep.subr.mxu0 0.0
    %2776 = vmatpush1.msra.mxu0 0.0
    %2777 = vmatprep.subr.mxu0 0.0
    %2778 = vmatpush1.msra.mxu0 0.0
    %2779 = vmatprep.subr.mxu0 0.0
    %2780 = vmatpush1.msra.mxu0 0.0
    %2781 = vmatprep.subr.mxu0 0.0
    %2782 = vmatpush1.msra.mxu0 0.0
    %2783 = vmatprep.subr.mxu0 0.0
    %2784 = vmatpush1.msra.mxu0 0.0
    %2785 = vmatprep.subr.mxu0 0.0
    %2786 = vmatpush1.msra.mxu0 0.0
    %2787 = vmatprep.subr.mxu0 0.0
    %2788 = vmatpush1.msra.mxu0 %v1273
    %2789 = vmatprep.subr.mxu0 0.0
    %2790 = vmatpush1.msra.mxu0 %v72
    %2791 = vmatprep.subr.mxu0 0.0
    %2792 = vmatpush1.msra.mxu0 %v71
    %2793 = vmatprep.subr.mxu0 0.0
    %2794 = vmatpush2.msra.mxu0 0.0
    %2795 = vmatprep.subr.mxu0 0.0
    %2796 = vmatpush2.msra.mxu0 0.0
    %2797 = vmatprep.subr.mxu0 0.0
    %2798 = vmatpush2.msra.mxu0 0.0
    %2799 = vmatprep.subr.mxu0 0.0
    %2800 = vmatpush2.msra.mxu0 0.0
    %2801 = vmatprep.subr.mxu0 0.0
    %2802 = vmatpush2.msra.mxu0 0.0
    %2803 = vmatprep.subr.mxu0 0.0
    %2804 = vmatpush2.msra.mxu0 0.0
    %2805 = vmatprep.subr.mxu0 0.0
    %2806 = vmatpush2.msra.mxu0 0.0
    %2807 = vmatprep.subr.mxu0 0.0
    %2808 = vmatpush2.msra.mxu0 0.0
    %2809 = vmatprep.subr.mxu0 0.0
    %2810 = vmatpush2.msra.mxu0 0.0
    %2811 = vmatprep.subr.mxu0 0.0
    %2812 = vmatpush2.msra.mxu0 0.0
    %2813 = vmatprep.subr.mxu0 0.0
    %2814 = vmatpush2.msra.mxu0 0.0
    %2815 = vmatprep.subr.mxu0 0.0
    %2816 = vmatpush2.msra.mxu0 0.0
    %2817 = vmatprep.subr.mxu0 0.0
    %2818 = vmatpush2.msra.mxu0 0.0
    %2819 = vmatprep.subr.mxu0 0.0
    %2820 = vmatpush2.msra.mxu0 0.0
    %2821 = vmatprep.subr.mxu0 0.0
    %2822 = vmatpush2.msra.mxu0 0.0
    %2823 = vmatprep.subr.mxu0 0.0
    %2824 = vmatpush2.msra.mxu0 0.0
    %2825 = vmatprep.mubr.f32.mxu0 0.0
    %2826 = vmatmul.mubr.f32.gmra.mxu0 %v2759
    %v2827 = vpop.f32.mrf.mxu0
    %v2828 = vadd.f32 %v2755, %v2827
    %v2829 = vpop.f32.mrf.mxu0
    %2830 = vdwg.mxu0
    %v2831 = vadd.f32 %v2828, %v118
    %2832 = vrot.lane.b32.xlu0 %v2191, 96
    %v2833 = vpop.permute.xlu0 %2832
    %v2835 = vadd.f32 %v2831, %v2833
    %v2836 = vxor.u32 %v2835, 2147483648
    %v2837 = vmul.f32 %v2836, 1.442695
    %v2838 = vpow.pop %v2837
    %v2839 = vadd.f32 %v2838, 1.0
    %v2840 = vrcp.pop %v2839
    %v2841 = vmul.f32 1.0, %v2840
    %2842 = vrot.lane.b32.xlu0 %v2191, 32
    %v2843 = vpop.permute.xlu0 %2842
    %v2845 = vmul.f32 %v2841, %v2843
    %2847 = vrot.lane.b32.xlu0 %v2845, 64
    %v2848 = vpop.permute.xlu0 %2847
    %v2850 = vadd.f32 %v2831, %v2848
    %v2851 = vtanh.pop %v2850
    %v2852 = vsub.f32 1.0, %v2841
    %2854 = vrot.lane.b32.xlu0 %v2851, 96
    %v2855 = vpop.permute.xlu0 %2854
    %v2857 = vmul.f32 %v2852, %v2855
    %v2858 = vmul.f32 %v2841, %v2118
    %v2859 = vadd.f32 %v2857, %v2858
    %2861 = vrot.lane.b32.xlu0 %v2859, 96
    %v2862 = vpop.permute.xlu0 %2861
    %v2863 = vsel %vm381, %v2862, 0
    %2865 = vmatprep.subr.mxu0 0.0
    %2866 = vmatpush1.msra.mxu0 0.0
    %2867 = vmatprep.subr.mxu0 0.0
    %2868 = vmatpush1.msra.mxu0 0.0
    %2869 = vmatprep.subr.mxu0 0.0
    %2870 = vmatpush1.msra.mxu0 0.0
    %2871 = vmatprep.subr.mxu0 0.0
    %2872 = vmatpush1.msra.mxu0 0.0
    %2873 = vmatprep.subr.mxu0 0.0
    %2874 = vmatpush1.msra.mxu0 0.0
    %2875 = vmatprep.subr.mxu0 0.0
    %2876 = vmatpush1.msra.mxu0 0.0
    %2877 = vmatprep.subr.mxu0 0.0
    %2878 = vmatpush1.msra.mxu0 0.0
    %2879 = vmatprep.subr.mxu0 0.0
    %2880 = vmatpush1.msra.mxu0 0.0
    %2881 = vmatprep.subr.mxu0 0.0
    %2882 = vmatpush1.msra.mxu0 0.0
    %2883 = vmatprep.subr.mxu0 0.0
    %2884 = vmatpush1.msra.mxu0 0.0
    %2885 = vmatprep.subr.mxu0 0.0
    %2886 = vmatpush1.msra.mxu0 0.0
    %2887 = vmatprep.subr.mxu0 0.0
    %2888 = vmatpush1.msra.mxu0 0.0
    %2889 = vmatprep.subr.mxu0 %v85
    %2890 = vmatpush1.msra.mxu0 %v84
    %2891 = vmatprep.subr.mxu0 %v83
    %2892 = vmatpush1.msra.mxu0 %v82
    %2893 = vmatprep.subr.mxu0 %v81
    %2894 = vmatpush1.msra.mxu0 %v80
    %2895 = vmatprep.subr.mxu0 %v79
    %2896 = vmatpush1.msra.mxu0 %v78
    %2897 = vmatprep.subr.mxu0 0.0
    %2898 = vmatpush2.msra.mxu0 0.0
    %2899 = vmatprep.subr.mxu0 0.0
    %2900 = vmatpush2.msra.mxu0 0.0
    %2901 = vmatprep.subr.mxu0 0.0
    %2902 = vmatpush2.msra.mxu0 0.0
    %2903 = vmatprep.subr.mxu0 0.0
    %2904 = vmatpush2.msra.mxu0 0.0
    %2905 = vmatprep.subr.mxu0 0.0
    %2906 = vmatpush2.msra.mxu0 0.0
    %2907 = vmatprep.subr.mxu0 0.0
    %2908 = vmatpush2.msra.mxu0 0.0
    %2909 = vmatprep.subr.mxu0 0.0
    %2910 = vmatpush2.msra.mxu0 0.0
    %2911 = vmatprep.subr.mxu0 0.0
    %2912 = vmatpush2.msra.mxu0 0.0
    %2913 = vmatprep.subr.mxu0 0.0
    %2914 = vmatpush2.msra.mxu0 0.0
    %2915 = vmatprep.subr.mxu0 0.0
    %2916 = vmatpush2.msra.mxu0 0.0
    %2917 = vmatprep.subr.mxu0 0.0
    %2918 = vmatpush2.msra.mxu0 0.0
    %2919 = vmatprep.subr.mxu0 0.0
    %2920 = vmatpush2.msra.mxu0 0.0
    %2921 = vmatprep.subr.mxu0 0.0
    %2922 = vmatpush2.msra.mxu0 0.0
    %2923 = vmatprep.subr.mxu0 0.0
    %2924 = vmatpush2.msra.mxu0 0.0
    %2925 = vmatprep.subr.mxu0 0.0
    %2926 = vmatpush2.msra.mxu0 0.0
    %2927 = vmatprep.subr.mxu0 0.0
    %2928 = vmatpush2.msra.mxu0 0.0
    %2929 = vmatprep.mubr.f32.mxu0 0.0
    %2930 = vmatmul.mubr.f32.gmra.mxu0 %v2863
    %v2931 = vpop.f32.mrf.mxu0
    %v2932 = vadd.f32 %v106, %v2931
    %v2933 = vpop.f32.mrf.mxu0
    %v2934 = vadd.f32 %v110, %v2933
    %2935 = vdwg.mxu0
    %v2936 = vsel %vm1271, %v2934, -inf
    %2937 = vmax.xlane.f32.xlu0 %v2936
    %v2938 = vpop.xlane.xlu0 %2937
    %v2939 = vsub.f32 %v2934, %v2938
    %v2940 = vmul.f32 %v2939, 1.442695
    %v2941 = vpow.pop %v2940
    %v2942 = vsel %vm1271, %v2941, 0.0
    %2943 = vadd.xlane.f32.xlu0 %v2942
    %v2944 = vpop.xlane.xlu0 %2943
    %v2945 = vlog2.pop %v2944
    %v2946 = vmul.f32 %v2945, 0.6931472
    %v2947 = vadd.f32 %v2946, %v2938
    %v2948 = vsub.f32 %v2934, %v2947
    %v2951 = vunpack.c.l.s4 1966171168
    %v2952 = vunpack.c.0.s8 %v2951
    %v2953 = vlaneseq
    %v2954 = vshrl.u32 %v2953, 7
    %v2955 = vsub.s32 %v2952, %v2954
    %v2956 = vrot.slane %v2948, %v2955
    %v2957 = vcombine.high %v2956, %v2956
    %v2959 = vunpack.c.l.s4 1966171168
    %v2960 = vunpack.c.0.s8 %v2959
    %v2961 = vlaneseq
    %v2962 = vshrl.u32 %v2961, 7
    %v2963 = vsub.s32 %v2960, %v2962
    %v2964 = vrot.slane %v2956, %v2963
    %v2966 = vunpack.c.l.s4 1966171168
    %v2967 = vunpack.c.0.s8 %v2966
    %v2968 = vlaneseq
    %v2969 = vshrl.u32 %v2968, 7
    %v2970 = vsub.s32 %v2967, %v2969
    %v2971 = vrot.slane %v2957, %v2970
    %v2972 = vcombine.high %v2964, %v2964
    %v2973 = vcombine.high %v2971, %v2971
    %2978 = vst [vmem:[%s11 + $0x2] sm:$0x1] %v2964
    %2979 = vst [vmem:[%s11 + $0x12] sm:$0x1] %v2971
    %2980 = vst [vmem:[%s11 + $0x22] sm:$0x1] %v2972
    %2981 = vst [vmem:[%s11 + $0x32] sm:$0x1] %v2973
    %v2982 = vlaneseq
    %v2983 = vshrl.u32 %v2982, 7
    %v2984 = vsub.s32 %v577, %v2983
    %v2985 = vrot.slane %v2598, %v2984
    %v2986 = vlaneseq
    %v2987 = vshrl.u32 %v2986, 7
    %v2988 = vsub.s32 %v906, %v2987
    %v2989 = vrot.slane %v2603, %v2988
    %v2990 = vsel %vm911, %v2989, %v2985
    %v2991 = vlaneseq
    %v2992 = vshrl.u32 %v2991, 7
    %v2993 = vsub.s32 %v577, %v2992
    %v2994 = vrot.slane %v2608, %v2993
    %v2995 = vlaneseq
    %v2996 = vshrl.u32 %v2995, 7
    %v2997 = vsub.s32 %v906, %v2996
    %v2998 = vrot.slane %v2613, %v2997
    %v2999 = vsel %vm911, %v2998, %v2994
    %v3000 = vlaneseq
    %v3001 = vshrl.u32 %v3000, 7
    %v3002 = vsub.s32 %v577, %v3001
    %v3003 = vrot.slane %v2618, %v3002
    %v3004 = vlaneseq
    %v3005 = vshrl.u32 %v3004, 7
    %v3006 = vsub.s32 %v906, %v3005
    %v3007 = vrot.slane %v2623, %v3006
    %v3008 = vsel %vm911, %v3007, %v3003
    %v3009 = vlaneseq
    %v3010 = vshrl.u32 %v3009, 7
    %v3011 = vsub.s32 %v577, %v3010
    %v3012 = vrot.slane %v2628, %v3011
    %v3013 = vlaneseq
    %v3014 = vshrl.u32 %v3013, 7
    %v3015 = vsub.s32 %v906, %v3014
    %v3016 = vrot.slane %v2633, %v3015
    %v3017 = vsel %vm911, %v3016, %v3012
    %3022 = vst.msk [vmem:[%s13 + $0x2] sm:$0x1] %vm1539, %v2990
    %3023 = vst.msk [vmem:[%s13 + $0x12] sm:$0x1] %vm1539, %v2999
    %3024 = vst.msk [vmem:[%s13 + $0x22] sm:$0x1] %vm1539, %v3008
    %3025 = vst.msk [vmem:[%s13 + $0x32] sm:$0x1] %vm1539, %v3017
    %3026 = vmax.index.xlane.f32.xlu0 %v2936
    %v3027 = vpop.xlane.xlu0 %3026
    %vm3028 = vcmp.eq.s32.totalorder %v577, %v3027
    %v3029 = vsel %vm3028, 1, 0
    %v3030 = vcvt.s32.f32 %v3029
    %v3033 = vunpack.c.l.s4 1966171168
    %v3034 = vunpack.c.0.s8 %v3033
    %v3035 = vlaneseq
    %v3036 = vshrl.u32 %v3035, 7
    %v3037 = vsub.s32 %v3034, %v3036
    %v3038 = vrot.slane %v2932, %v3037
    %v3039 = vcombine.high %v3038, %v3038
    %v3041 = vunpack.c.l.s4 1966171168
    %v3042 = vunpack.c.0.s8 %v3041
    %v3043 = vlaneseq
    %v3044 = vshrl.u32 %v3043, 7
    %v3045 = vsub.s32 %v3042, %v3044
    %v3046 = vrot.slane %v3038, %v3045
    %v3048 = vunpack.c.l.s4 1966171168
    %v3049 = vunpack.c.0.s8 %v3048
    %v3050 = vlaneseq
    %v3051 = vshrl.u32 %v3050, 7
    %v3052 = vsub.s32 %v3049, %v3051
    %v3053 = vrot.slane %v3039, %v3052
    %v3054 = vcombine.high %v3046, %v3046
    %v3055 = vcombine.high %v3053, %v3053
    %v3056 = vlaneseq
    %v3057 = vshrl.u32 %v3056, 7
    %v3058 = vsub.s32 0, %v3057
    %v3059 = vrot.slane %v3046, %v3058
    %v3060 = vlaneseq
    %v3061 = vshrl.u32 %v3060, 7
    %v3062 = vsub.s32 0, %v3061
    %v3063 = vrot.slane %v3053, %v3062
    %v3064 = vlaneseq
    %v3065 = vshrl.u32 %v3064, 7
    %v3066 = vsub.s32 0, %v3065
    %v3067 = vrot.slane %v3054, %v3066
    %v3068 = vlaneseq
    %v3069 = vshrl.u32 %v3068, 7
    %v3070 = vsub.s32 0, %v3069
    %v3071 = vrot.slane %v3055, %v3070
    %v3076 = vadd.f32 %v3059, %v742
    %v3077 = vadd.f32 %v3059, %v749
    %v3078 = vadd.f32 %v3063, %v766
    %v3079 = vadd.f32 %v3063, %v773
    %v3080 = vadd.f32 %v3067, %v790
    %v3081 = vadd.f32 %v3067, %v797
    %v3082 = vadd.f32 %v3071, %v814
    %v3083 = vadd.f32 %v3071, %v821
    %v3084 = vtanh.pop %v3076
    %v3085 = vtanh.pop %v3077
    %v3086 = vtanh.pop %v3078
    %v3087 = vtanh.pop %v3079
    %v3088 = vtanh.pop %v3080
    %v3089 = vtanh.pop %v3081
    %v3090 = vtanh.pop %v3082
    %v3091 = vtanh.pop %v3083
    %v3092 = vmul.f32 %v3084, %v850
    %v3093 = vmul.f32 %v3085, %v850
    %v3094 = vmul.f32 %v3086, %v850
    %v3095 = vmul.f32 %v3087, %v850
    %v3096 = vmul.f32 %v3088, %v850
    %v3097 = vmul.f32 %v3089, %v850
    %v3098 = vmul.f32 %v3090, %v850
    %v3099 = vmul.f32 %v3091, %v850
    %v3100 = vsel %vm381, %v3092, 0.0
    %3101 = vadd.xlane.f32.xlu0 %v3100
    %v3102 = vpop.xlane.xlu0 %3101
    %v3103 = vsel %vm863, %v3093, 0.0
    %3104 = vadd.xlane.f32.xlu0 %v3103
    %v3105 = vpop.xlane.xlu0 %3104
    %v3106 = vsel %vm381, %v3094, 0.0
    %3107 = vadd.xlane.f32.xlu0 %v3106
    %v3108 = vpop.xlane.xlu0 %3107
    %v3109 = vsel %vm863, %v3095, 0.0
    %3110 = vadd.xlane.f32.xlu0 %v3109
    %v3111 = vpop.xlane.xlu0 %3110
    %v3112 = vsel %vm381, %v3096, 0.0
    %3113 = vadd.xlane.f32.xlu0 %v3112
    %v3114 = vpop.xlane.xlu0 %3113
    %v3115 = vsel %vm863, %v3097, 0.0
    %3116 = vadd.xlane.f32.xlu0 %v3115
    %v3117 = vpop.xlane.xlu0 %3116
    %v3118 = vsel %vm381, %v3098, 0.0
    %3119 = vadd.xlane.f32.xlu0 %v3118
    %v3120 = vpop.xlane.xlu0 %3119
    %v3121 = vsel %vm863, %v3099, 0.0
    %3122 = vadd.xlane.f32.xlu0 %v3121
    %v3123 = vpop.xlane.xlu0 %3122
    %v3124 = vadd.f32 %v3102, %v885
    %v3125 = vadd.f32 %v3105, %v885
    %v3126 = vadd.f32 %v3108, %v885
    %v3127 = vadd.f32 %v3111, %v885
    %v3128 = vadd.f32 %v3114, %v885
    %v3129 = vadd.f32 %v3117, %v885
    %v3130 = vadd.f32 %v3120, %v885
    %v3131 = vadd.f32 %v3123, %v885
    %v3140 = vlaneseq
    %v3141 = vshrl.u32 %v3140, 7
    %v3142 = vsub.s32 %v577, %v3141
    %v3143 = vrot.slane %v3124, %v3142
    %v3144 = vlaneseq
    %v3145 = vshrl.u32 %v3144, 7
    %v3146 = vsub.s32 %v906, %v3145
    %v3147 = vrot.slane %v3125, %v3146
    %v3148 = vsel %vm911, %v3147, %v3143
    %v3149 = vlaneseq
    %v3150 = vshrl.u32 %v3149, 7
    %v3151 = vsub.s32 %v577, %v3150
    %v3152 = vrot.slane %v3126, %v3151
    %v3153 = vlaneseq
    %v3154 = vshrl.u32 %v3153, 7
    %v3155 = vsub.s32 %v906, %v3154
    %v3156 = vrot.slane %v3127, %v3155
    %v3157 = vsel %vm911, %v3156, %v3152
    %v3158 = vlaneseq
    %v3159 = vshrl.u32 %v3158, 7
    %v3160 = vsub.s32 %v577, %v3159
    %v3161 = vrot.slane %v3128, %v3160
    %v3162 = vlaneseq
    %v3163 = vshrl.u32 %v3162, 7
    %v3164 = vsub.s32 %v906, %v3163
    %v3165 = vrot.slane %v3129, %v3164
    %v3166 = vsel %vm911, %v3165, %v3161
    %v3167 = vlaneseq
    %v3168 = vshrl.u32 %v3167, 7
    %v3169 = vsub.s32 %v577, %v3168
    %v3170 = vrot.slane %v3130, %v3169
    %v3171 = vlaneseq
    %v3172 = vshrl.u32 %v3171, 7
    %v3173 = vsub.s32 %v906, %v3172
    %v3174 = vrot.slane %v3131, %v3173
    %v3175 = vsel %vm911, %v3174, %v3170
    %v3176 = vsel %vm940, %v3157, %v3148
    %v3177 = vsel %vm942, %v3166, %v3176
    %v3178 = vsel %vm944, %v3175, %v3177
    %v3180 = vsel %vm947, %v3178, -inf
    %3181 = vmax.xlane.f32.xlu0 %v3180
    %v3182 = vpop.xlane.xlu0 %3181
    %v3184 = vlaneseq
    %v3185 = vshrl.u32 %v3184, 7
    %v3186 = vsub.s32 0, %v3185
    %v3187 = vrot.slane %v3182, %v3186
    %v3188 = vlaneseq
    %v3189 = vshrl.u32 %v3188, 7
    %v3190 = vsub.s32 1, %v3189
    %v3191 = vrot.slane %v3182, %v3190
    %v3192 = vlaneseq
    %v3193 = vshrl.u32 %v3192, 7
    %v3194 = vsub.s32 2, %v3193
    %v3195 = vrot.slane %v3182, %v3194
    %v3196 = vlaneseq
    %v3197 = vshrl.u32 %v3196, 7
    %v3198 = vsub.s32 3, %v3197
    %v3199 = vrot.slane %v3182, %v3198
    %v3204 = vsub.f32 %v3124, %v3187
    %v3205 = vsub.f32 %v3125, %v3187
    %v3206 = vsub.f32 %v3126, %v3191
    %v3207 = vsub.f32 %v3127, %v3191
    %v3208 = vsub.f32 %v3128, %v3195
    %v3209 = vsub.f32 %v3129, %v3195
    %v3210 = vsub.f32 %v3130, %v3199
    %v3211 = vsub.f32 %v3131, %v3199
    %v3212 = vmul.f32 %v3204, 1.442695
    %v3213 = vpow.pop %v3212
    %v3214 = vmul.f32 %v3205, 1.442695
    %v3215 = vpow.pop %v3214
    %v3216 = vmul.f32 %v3206, 1.442695
    %v3217 = vpow.pop %v3216
    %v3218 = vmul.f32 %v3207, 1.442695
    %v3219 = vpow.pop %v3218
    %v3220 = vmul.f32 %v3208, 1.442695
    %v3221 = vpow.pop %v3220
    %v3222 = vmul.f32 %v3209, 1.442695
    %v3223 = vpow.pop %v3222
    %v3224 = vmul.f32 %v3210, 1.442695
    %v3225 = vpow.pop %v3224
    %v3226 = vmul.f32 %v3211, 1.442695
    %v3227 = vpow.pop %v3226
    %3236 = vset.pattern.permute.xlu0 0
    %3237 = vperm.xlu0 %3236, %v3213
    %v3238 = vpop.permute.xlu0 %3237
    %3239 = vset.pattern.permute.xlu0 0
    %3240 = vperm.xlu0 %3239, %v3215
    %v3241 = vpop.permute.xlu0 %3240
    %3242 = vset.pattern.permute.xlu0 0
    %3243 = vperm.xlu0 %3242, %v3217
    %v3244 = vpop.permute.xlu0 %3243
    %3245 = vset.pattern.permute.xlu0 0
    %3246 = vperm.xlu0 %3245, %v3219
    %v3247 = vpop.permute.xlu0 %3246
    %3248 = vset.pattern.permute.xlu0 0
    %3249 = vperm.xlu0 %3248, %v3221
    %v3250 = vpop.permute.xlu0 %3249
    %3251 = vset.pattern.permute.xlu0 0
    %3252 = vperm.xlu0 %3251, %v3223
    %v3253 = vpop.permute.xlu0 %3252
    %3254 = vset.pattern.permute.xlu0 0
    %3255 = vperm.xlu0 %3254, %v3225
    %v3256 = vpop.permute.xlu0 %3255
    %3257 = vset.pattern.permute.xlu0 0
    %3258 = vperm.xlu0 %3257, %v3227
    %v3259 = vpop.permute.xlu0 %3258
    %v3260 = vlaneseq
    %v3261 = vshrl.u32 %v3260, 7
    %v3262 = vsub.s32 %v577, %v3261
    %v3263 = vrot.slane %v3238, %v3262
    %v3264 = vlaneseq
    %v3265 = vshrl.u32 %v3264, 7
    %v3266 = vsub.s32 %v906, %v3265
    %v3267 = vrot.slane %v3241, %v3266
    %v3268 = vsel %vm911, %v3267, %v3263
    %v3269 = vlaneseq
    %v3270 = vshrl.u32 %v3269, 7
    %v3271 = vsub.s32 %v577, %v3270
    %v3272 = vrot.slane %v3244, %v3271
    %v3273 = vlaneseq
    %v3274 = vshrl.u32 %v3273, 7
    %v3275 = vsub.s32 %v906, %v3274
    %v3276 = vrot.slane %v3247, %v3275
    %v3277 = vsel %vm911, %v3276, %v3272
    %v3278 = vlaneseq
    %v3279 = vshrl.u32 %v3278, 7
    %v3280 = vsub.s32 %v577, %v3279
    %v3281 = vrot.slane %v3250, %v3280
    %v3282 = vlaneseq
    %v3283 = vshrl.u32 %v3282, 7
    %v3284 = vsub.s32 %v906, %v3283
    %v3285 = vrot.slane %v3253, %v3284
    %v3286 = vsel %vm911, %v3285, %v3281
    %v3287 = vlaneseq
    %v3288 = vshrl.u32 %v3287, 7
    %v3289 = vsub.s32 %v577, %v3288
    %v3290 = vrot.slane %v3256, %v3289
    %v3291 = vlaneseq
    %v3292 = vshrl.u32 %v3291, 7
    %v3293 = vsub.s32 %v906, %v3292
    %v3294 = vrot.slane %v3259, %v3293
    %v3295 = vsel %vm911, %v3294, %v3290
    %v3296 = vsel %vm940, %v3277, %v3268
    %v3297 = vsel %vm942, %v3286, %v3296
    %v3298 = vsel %vm944, %v3295, %v3297
    %v3300 = vsel %vm947, %v3298, 0.0
    %3301 = vadd.xlane.f32.xlu0 %v3300
    %v3302 = vpop.xlane.xlu0 %3301
    %v3304 = vlaneseq
    %v3305 = vshrl.u32 %v3304, 7
    %v3306 = vsub.s32 0, %v3305
    %v3307 = vrot.slane %v3302, %v3306
    %v3308 = vlaneseq
    %v3309 = vshrl.u32 %v3308, 7
    %v3310 = vsub.s32 1, %v3309
    %v3311 = vrot.slane %v3302, %v3310
    %v3312 = vlaneseq
    %v3313 = vshrl.u32 %v3312, 7
    %v3314 = vsub.s32 2, %v3313
    %v3315 = vrot.slane %v3302, %v3314
    %v3316 = vlaneseq
    %v3317 = vshrl.u32 %v3316, 7
    %v3318 = vsub.s32 3, %v3317
    %v3319 = vrot.slane %v3302, %v3318
    %v3324 = vrcp.pop %v3307
    %v3325 = vmul.f32 %v3213, %v3324
    %v3326 = vmul.f32 %v3215, %v3324
    %v3327 = vrcp.pop %v3311
    %v3328 = vmul.f32 %v3217, %v3327
    %v3329 = vmul.f32 %v3219, %v3327
    %v3330 = vrcp.pop %v3315
    %v3331 = vmul.f32 %v3221, %v3330
    %v3332 = vmul.f32 %v3223, %v3330
    %v3333 = vrcp.pop %v3319
    %v3334 = vmul.f32 %v3225, %v3333
    %v3335 = vmul.f32 %v3227, %v3333
    %3337 = vset.pattern.permute.xlu0 0
    %3338 = vperm.xlu0 %3337, %v3325
    %v3339 = vpop.permute.xlu0 %3338
    %3342 = vset.pattern.permute.xlu0 0
    %3343 = vperm.xlu0 %3342, %v3326
    %v3344 = vpop.permute.xlu0 %3343
    %3347 = vset.pattern.permute.xlu0 0
    %3348 = vperm.xlu0 %3347, %v3328
    %v3349 = vpop.permute.xlu0 %3348
    %3352 = vset.pattern.permute.xlu0 0
    %3353 = vperm.xlu0 %3352, %v3329
    %v3354 = vpop.permute.xlu0 %3353
    %3357 = vset.pattern.permute.xlu0 0
    %3358 = vperm.xlu0 %3357, %v3331
    %v3359 = vpop.permute.xlu0 %3358
    %3362 = vset.pattern.permute.xlu0 0
    %3363 = vperm.xlu0 %3362, %v3332
    %v3364 = vpop.permute.xlu0 %3363
    %3367 = vset.pattern.permute.xlu0 0
    %3368 = vperm.xlu0 %3367, %v3334
    %v3369 = vpop.permute.xlu0 %3368
    %3372 = vset.pattern.permute.xlu0 0
    %3373 = vperm.xlu0 %3372, %v3335
    %v3374 = vpop.permute.xlu0 %3373
    %v3376 = vmul.f32 %v3339, %v93
    %v3377 = vmul.f32 %v3344, %v94
    %v3378 = vmul.f32 %v3349, %v95
    %v3379 = vmul.f32 %v3354, %v96
    %v3380 = vmul.f32 %v3359, %v97
    %v3381 = vmul.f32 %v3364, %v98
    %v3382 = vmul.f32 %v3369, %v99
    %v3383 = vmul.f32 %v3374, %v100
    %v3384 = vsel %vm381, %v3376, 0.0
    %v3385 = vsel %vm863, %v3377, 0.0
    %v3386 = vadd.f32 %v3384, %v3385
    %v3387 = vrot.slane %v3386, 4
    %v3388 = vadd.f32 %v3386, %v3387
    %v3389 = vrot.slane %v3388, 2
    %v3390 = vadd.f32 %v3388, %v3389
    %v3391 = vrot.slane %v3390, 1
    %v3392 = vadd.f32 %v3390, %v3391
    %v3393 = vsel %vm381, %v3378, 0.0
    %v3394 = vsel %vm863, %v3379, 0.0
    %v3395 = vadd.f32 %v3393, %v3394
    %v3396 = vrot.slane %v3395, 4
    %v3397 = vadd.f32 %v3395, %v3396
    %v3398 = vrot.slane %v3397, 2
    %v3399 = vadd.f32 %v3397, %v3398
    %v3400 = vrot.slane %v3399, 1
    %v3401 = vadd.f32 %v3399, %v3400
    %v3402 = vsel %vm381, %v3380, 0.0
    %v3403 = vsel %vm863, %v3381, 0.0
    %v3404 = vadd.f32 %v3402, %v3403
    %v3405 = vrot.slane %v3404, 4
    %v3406 = vadd.f32 %v3404, %v3405
    %v3407 = vrot.slane %v3406, 2
    %v3408 = vadd.f32 %v3406, %v3407
    %v3409 = vrot.slane %v3408, 1
    %v3410 = vadd.f32 %v3408, %v3409
    %v3411 = vsel %vm381, %v3382, 0.0
    %v3412 = vsel %vm863, %v3383, 0.0
    %v3413 = vadd.f32 %v3411, %v3412
    %v3414 = vrot.slane %v3413, 4
    %v3415 = vadd.f32 %v3413, %v3414
    %v3416 = vrot.slane %v3415, 2
    %v3417 = vadd.f32 %v3415, %v3416
    %v3418 = vrot.slane %v3417, 1
    %v3419 = vadd.f32 %v3417, %v3418
    %v3424 = vsel %vm940, %v3401, %v3392
    %v3425 = vsel %vm942, %v3410, %v3424
    %v3426 = vsel %vm944, %v3419, %v3425
    %v3427 = vsel %vm381, %v3426, 0
    %3429 = vmatprep.subr.mxu0 0.0
    %3430 = vmatpush1.msra.mxu0 0.0
    %3431 = vmatprep.subr.mxu0 0.0
    %3432 = vmatpush1.msra.mxu0 0.0
    %3433 = vmatprep.subr.mxu0 0.0
    %3434 = vmatpush1.msra.mxu0 0.0
    %3435 = vmatprep.subr.mxu0 0.0
    %3436 = vmatpush1.msra.mxu0 0.0
    %3437 = vmatprep.subr.mxu0 0.0
    %3438 = vmatpush1.msra.mxu0 0.0
    %3439 = vmatprep.subr.mxu0 0.0
    %3440 = vmatpush1.msra.mxu0 0.0
    %3441 = vmatprep.subr.mxu0 0.0
    %3442 = vmatpush1.msra.mxu0 0.0
    %3443 = vmatprep.subr.mxu0 0.0
    %3444 = vmatpush1.msra.mxu0 0.0
    %3445 = vmatprep.subr.mxu0 0.0
    %3446 = vmatpush1.msra.mxu0 0.0
    %3447 = vmatprep.subr.mxu0 0.0
    %3448 = vmatpush1.msra.mxu0 0.0
    %3449 = vmatprep.subr.mxu0 0.0
    %3450 = vmatpush1.msra.mxu0 0.0
    %3451 = vmatprep.subr.mxu0 0.0
    %3452 = vmatpush1.msra.mxu0 0.0
    %3453 = vmatprep.subr.mxu0 0.0
    %3454 = vmatpush1.msra.mxu0 %v77
    %3455 = vmatprep.subr.mxu0 0.0
    %3456 = vmatpush1.msra.mxu0 %v76
    %3457 = vmatprep.subr.mxu0 0.0
    %3458 = vmatpush1.msra.mxu0 %v75
    %3459 = vmatprep.subr.mxu0 0.0
    %3460 = vmatpush1.msra.mxu0 %v74
    %3461 = vmatprep.subr.mxu0 0.0
    %3462 = vmatpush2.msra.mxu0 0.0
    %3463 = vmatprep.subr.mxu0 0.0
    %3464 = vmatpush2.msra.mxu0 0.0
    %3465 = vmatprep.subr.mxu0 0.0
    %3466 = vmatpush2.msra.mxu0 0.0
    %3467 = vmatprep.subr.mxu0 0.0
    %3468 = vmatpush2.msra.mxu0 0.0
    %3469 = vmatprep.subr.mxu0 0.0
    %3470 = vmatpush2.msra.mxu0 0.0
    %3471 = vmatprep.subr.mxu0 0.0
    %3472 = vmatpush2.msra.mxu0 0.0
    %3473 = vmatprep.subr.mxu0 0.0
    %3474 = vmatpush2.msra.mxu0 0.0
    %3475 = vmatprep.subr.mxu0 0.0
    %3476 = vmatpush2.msra.mxu0 0.0
    %3477 = vmatprep.subr.mxu0 0.0
    %3478 = vmatpush2.msra.mxu0 0.0
    %3479 = vmatprep.subr.mxu0 0.0
    %3480 = vmatpush2.msra.mxu0 0.0
    %3481 = vmatprep.subr.mxu0 0.0
    %3482 = vmatpush2.msra.mxu0 0.0
    %3483 = vmatprep.subr.mxu0 0.0
    %3484 = vmatpush2.msra.mxu0 0.0
    %3485 = vmatprep.subr.mxu0 0.0
    %3486 = vmatpush2.msra.mxu0 0.0
    %3487 = vmatprep.subr.mxu0 0.0
    %3488 = vmatpush2.msra.mxu0 0.0
    %3489 = vmatprep.subr.mxu0 0.0
    %3490 = vmatpush2.msra.mxu0 0.0
    %3491 = vmatprep.subr.mxu0 0.0
    %3492 = vmatpush2.msra.mxu0 0.0
    %3493 = vmatprep.mubr.f32.mxu0 0.0
    %3494 = vmatmul.mubr.f32.gmra.mxu0 %v3427
    %v3495 = vpop.f32.mrf.mxu0
    %v3496 = vadd.f32 0.0, %v3495
    %v3497 = vpop.f32.mrf.mxu0
    %3498 = vdwg.mxu0
    %v3500 = vsel %vm1267, %v3030, 0
    %3502 = vmatprep.subr.mxu0 0.0
    %3503 = vmatpush1.msra.mxu0 0.0
    %3504 = vmatprep.subr.mxu0 0.0
    %3505 = vmatpush1.msra.mxu0 0.0
    %3506 = vmatprep.subr.mxu0 0.0
    %3507 = vmatpush1.msra.mxu0 0.0
    %3508 = vmatprep.subr.mxu0 0.0
    %3509 = vmatpush1.msra.mxu0 0.0
    %3510 = vmatprep.subr.mxu0 0.0
    %3511 = vmatpush1.msra.mxu0 0.0
    %3512 = vmatprep.subr.mxu0 0.0
    %3513 = vmatpush1.msra.mxu0 0.0
    %3514 = vmatprep.subr.mxu0 0.0
    %3515 = vmatpush1.msra.mxu0 0.0
    %3516 = vmatprep.subr.mxu0 0.0
    %3517 = vmatpush1.msra.mxu0 0.0
    %3518 = vmatprep.subr.mxu0 0.0
    %3519 = vmatpush1.msra.mxu0 0.0
    %3520 = vmatprep.subr.mxu0 0.0
    %3521 = vmatpush1.msra.mxu0 0.0
    %3522 = vmatprep.subr.mxu0 0.0
    %3523 = vmatpush1.msra.mxu0 0.0
    %3524 = vmatprep.subr.mxu0 0.0
    %3525 = vmatpush1.msra.mxu0 0.0
    %3526 = vmatprep.subr.mxu0 0.0
    %3527 = vmatpush1.msra.mxu0 0.0
    %3528 = vmatprep.subr.mxu0 0.0
    %3529 = vmatpush1.msra.mxu0 %v1273
    %3530 = vmatprep.subr.mxu0 0.0
    %3531 = vmatpush1.msra.mxu0 %v72
    %3532 = vmatprep.subr.mxu0 0.0
    %3533 = vmatpush1.msra.mxu0 %v71
    %3534 = vmatprep.subr.mxu0 0.0
    %3535 = vmatpush2.msra.mxu0 0.0
    %3536 = vmatprep.subr.mxu0 0.0
    %3537 = vmatpush2.msra.mxu0 0.0
    %3538 = vmatprep.subr.mxu0 0.0
    %3539 = vmatpush2.msra.mxu0 0.0
    %3540 = vmatprep.subr.mxu0 0.0
    %3541 = vmatpush2.msra.mxu0 0.0
    %3542 = vmatprep.subr.mxu0 0.0
    %3543 = vmatpush2.msra.mxu0 0.0
    %3544 = vmatprep.subr.mxu0 0.0
    %3545 = vmatpush2.msra.mxu0 0.0
    %3546 = vmatprep.subr.mxu0 0.0
    %3547 = vmatpush2.msra.mxu0 0.0
    %3548 = vmatprep.subr.mxu0 0.0
    %3549 = vmatpush2.msra.mxu0 0.0
    %3550 = vmatprep.subr.mxu0 0.0
    %3551 = vmatpush2.msra.mxu0 0.0
    %3552 = vmatprep.subr.mxu0 0.0
    %3553 = vmatpush2.msra.mxu0 0.0
    %3554 = vmatprep.subr.mxu0 0.0
    %3555 = vmatpush2.msra.mxu0 0.0
    %3556 = vmatprep.subr.mxu0 0.0
    %3557 = vmatpush2.msra.mxu0 0.0
    %3558 = vmatprep.subr.mxu0 0.0
    %3559 = vmatpush2.msra.mxu0 0.0
    %3560 = vmatprep.subr.mxu0 0.0
    %3561 = vmatpush2.msra.mxu0 0.0
    %3562 = vmatprep.subr.mxu0 0.0
    %3563 = vmatpush2.msra.mxu0 0.0
    %3564 = vmatprep.subr.mxu0 0.0
    %3565 = vmatpush2.msra.mxu0 0.0
    %3566 = vmatprep.mubr.f32.mxu0 0.0
    %3567 = vmatmul.mubr.f32.gmra.mxu0 %v3500
    %v3568 = vpop.f32.mrf.mxu0
    %v3569 = vadd.f32 %v3496, %v3568
    %v3570 = vpop.f32.mrf.mxu0
    %3571 = vdwg.mxu0
    %v3572 = vadd.f32 %v3569, %v118
    %3573 = vrot.lane.b32.xlu0 %v2932, 96
    %v3574 = vpop.permute.xlu0 %3573
    %v3576 = vadd.f32 %v3572, %v3574
    %v3577 = vxor.u32 %v3576, 2147483648
    %v3578 = vmul.f32 %v3577, 1.442695
    %v3579 = vpow.pop %v3578
    %v3580 = vadd.f32 %v3579, 1.0
    %v3581 = vrcp.pop %v3580
    %v3582 = vmul.f32 1.0, %v3581
    %3583 = vrot.lane.b32.xlu0 %v2932, 32
    %v3584 = vpop.permute.xlu0 %3583
    %v3586 = vmul.f32 %v3582, %v3584
    %3588 = vrot.lane.b32.xlu0 %v3586, 64
    %v3589 = vpop.permute.xlu0 %3588
    %v3591 = vadd.f32 %v3572, %v3589
    %v3592 = vtanh.pop %v3591
    %v3593 = vsub.f32 1.0, %v3582
    %3595 = vrot.lane.b32.xlu0 %v3592, 96
    %v3596 = vpop.permute.xlu0 %3595
    %v3598 = vmul.f32 %v3593, %v3596
    %v3599 = vmul.f32 %v3582, %v2859
    %v3600 = vadd.f32 %v3598, %v3599
    %3602 = vrot.lane.b32.xlu0 %v3600, 96
    %v3603 = vpop.permute.xlu0 %3602
    %v3604 = vsel %vm381, %v3603, 0
    %3606 = vmatprep.subr.mxu0 0.0
    %3607 = vmatpush1.msra.mxu0 0.0
    %3608 = vmatprep.subr.mxu0 0.0
    %3609 = vmatpush1.msra.mxu0 0.0
    %3610 = vmatprep.subr.mxu0 0.0
    %3611 = vmatpush1.msra.mxu0 0.0
    %3612 = vmatprep.subr.mxu0 0.0
    %3613 = vmatpush1.msra.mxu0 0.0
    %3614 = vmatprep.subr.mxu0 0.0
    %3615 = vmatpush1.msra.mxu0 0.0
    %3616 = vmatprep.subr.mxu0 0.0
    %3617 = vmatpush1.msra.mxu0 0.0
    %3618 = vmatprep.subr.mxu0 0.0
    %3619 = vmatpush1.msra.mxu0 0.0
    %3620 = vmatprep.subr.mxu0 0.0
    %3621 = vmatpush1.msra.mxu0 0.0
    %3622 = vmatprep.subr.mxu0 0.0
    %3623 = vmatpush1.msra.mxu0 0.0
    %3624 = vmatprep.subr.mxu0 0.0
    %3625 = vmatpush1.msra.mxu0 0.0
    %3626 = vmatprep.subr.mxu0 0.0
    %3627 = vmatpush1.msra.mxu0 0.0
    %3628 = vmatprep.subr.mxu0 0.0
    %3629 = vmatpush1.msra.mxu0 0.0
    %3630 = vmatprep.subr.mxu0 %v85
    %3631 = vmatpush1.msra.mxu0 %v84
    %3632 = vmatprep.subr.mxu0 %v83
    %3633 = vmatpush1.msra.mxu0 %v82
    %3634 = vmatprep.subr.mxu0 %v81
    %3635 = vmatpush1.msra.mxu0 %v80
    %3636 = vmatprep.subr.mxu0 %v79
    %3637 = vmatpush1.msra.mxu0 %v78
    %3638 = vmatprep.subr.mxu0 0.0
    %3639 = vmatpush2.msra.mxu0 0.0
    %3640 = vmatprep.subr.mxu0 0.0
    %3641 = vmatpush2.msra.mxu0 0.0
    %3642 = vmatprep.subr.mxu0 0.0
    %3643 = vmatpush2.msra.mxu0 0.0
    %3644 = vmatprep.subr.mxu0 0.0
    %3645 = vmatpush2.msra.mxu0 0.0
    %3646 = vmatprep.subr.mxu0 0.0
    %3647 = vmatpush2.msra.mxu0 0.0
    %3648 = vmatprep.subr.mxu0 0.0
    %3649 = vmatpush2.msra.mxu0 0.0
    %3650 = vmatprep.subr.mxu0 0.0
    %3651 = vmatpush2.msra.mxu0 0.0
    %3652 = vmatprep.subr.mxu0 0.0
    %3653 = vmatpush2.msra.mxu0 0.0
    %3654 = vmatprep.subr.mxu0 0.0
    %3655 = vmatpush2.msra.mxu0 0.0
    %3656 = vmatprep.subr.mxu0 0.0
    %3657 = vmatpush2.msra.mxu0 0.0
    %3658 = vmatprep.subr.mxu0 0.0
    %3659 = vmatpush2.msra.mxu0 0.0
    %3660 = vmatprep.subr.mxu0 0.0
    %3661 = vmatpush2.msra.mxu0 0.0
    %3662 = vmatprep.subr.mxu0 0.0
    %3663 = vmatpush2.msra.mxu0 0.0
    %3664 = vmatprep.subr.mxu0 0.0
    %3665 = vmatpush2.msra.mxu0 0.0
    %3666 = vmatprep.subr.mxu0 0.0
    %3667 = vmatpush2.msra.mxu0 0.0
    %3668 = vmatprep.subr.mxu0 0.0
    %3669 = vmatpush2.msra.mxu0 0.0
    %3670 = vmatprep.mubr.f32.mxu0 0.0
    %3671 = vmatmul.mubr.f32.gmra.mxu0 %v3604
    %v3672 = vpop.f32.mrf.mxu0
    %v3673 = vadd.f32 %v106, %v3672
    %v3674 = vpop.f32.mrf.mxu0
    %v3675 = vadd.f32 %v110, %v3674
    %3676 = vdwg.mxu0
    %v3677 = vsel %vm1271, %v3675, -inf
    %3678 = vmax.xlane.f32.xlu0 %v3677
    %v3679 = vpop.xlane.xlu0 %3678
    %v3680 = vsub.f32 %v3675, %v3679
    %v3681 = vmul.f32 %v3680, 1.442695
    %v3682 = vpow.pop %v3681
    %v3683 = vsel %vm1271, %v3682, 0.0
    %3684 = vadd.xlane.f32.xlu0 %v3683
    %v3685 = vpop.xlane.xlu0 %3684
    %v3686 = vlog2.pop %v3685
    %v3687 = vmul.f32 %v3686, 0.6931472
    %v3688 = vadd.f32 %v3687, %v3679
    %v3689 = vsub.f32 %v3675, %v3688
    %v3692 = vunpack.c.l.s4 1966171168
    %v3693 = vunpack.c.0.s8 %v3692
    %v3694 = vlaneseq
    %v3695 = vshrl.u32 %v3694, 7
    %v3696 = vsub.s32 %v3693, %v3695
    %v3697 = vrot.slane %v3689, %v3696
    %v3698 = vcombine.high %v3697, %v3697
    %v3700 = vunpack.c.l.s4 1966171168
    %v3701 = vunpack.c.0.s8 %v3700
    %v3702 = vlaneseq
    %v3703 = vshrl.u32 %v3702, 7
    %v3704 = vsub.s32 %v3701, %v3703
    %v3705 = vrot.slane %v3697, %v3704
    %v3707 = vunpack.c.l.s4 1966171168
    %v3708 = vunpack.c.0.s8 %v3707
    %v3709 = vlaneseq
    %v3710 = vshrl.u32 %v3709, 7
    %v3711 = vsub.s32 %v3708, %v3710
    %v3712 = vrot.slane %v3698, %v3711
    %v3713 = vcombine.high %v3705, %v3705
    %v3714 = vcombine.high %v3712, %v3712
    %3719 = vst [vmem:[%s11 + $0x3] sm:$0x1] %v3705
    %3720 = vst [vmem:[%s11 + $0x13] sm:$0x1] %v3712
    %3721 = vst [vmem:[%s11 + $0x23] sm:$0x1] %v3713
    %3722 = vst [vmem:[%s11 + $0x33] sm:$0x1] %v3714
    %v3723 = vlaneseq
    %v3724 = vshrl.u32 %v3723, 7
    %v3725 = vsub.s32 %v577, %v3724
    %v3726 = vrot.slane %v3339, %v3725
    %v3727 = vlaneseq
    %v3728 = vshrl.u32 %v3727, 7
    %v3729 = vsub.s32 %v906, %v3728
    %v3730 = vrot.slane %v3344, %v3729
    %v3731 = vsel %vm911, %v3730, %v3726
    %v3732 = vlaneseq
    %v3733 = vshrl.u32 %v3732, 7
    %v3734 = vsub.s32 %v577, %v3733
    %v3735 = vrot.slane %v3349, %v3734
    %v3736 = vlaneseq
    %v3737 = vshrl.u32 %v3736, 7
    %v3738 = vsub.s32 %v906, %v3737
    %v3739 = vrot.slane %v3354, %v3738
    %v3740 = vsel %vm911, %v3739, %v3735
    %v3741 = vlaneseq
    %v3742 = vshrl.u32 %v3741, 7
    %v3743 = vsub.s32 %v577, %v3742
    %v3744 = vrot.slane %v3359, %v3743
    %v3745 = vlaneseq
    %v3746 = vshrl.u32 %v3745, 7
    %v3747 = vsub.s32 %v906, %v3746
    %v3748 = vrot.slane %v3364, %v3747
    %v3749 = vsel %vm911, %v3748, %v3744
    %v3750 = vlaneseq
    %v3751 = vshrl.u32 %v3750, 7
    %v3752 = vsub.s32 %v577, %v3751
    %v3753 = vrot.slane %v3369, %v3752
    %v3754 = vlaneseq
    %v3755 = vshrl.u32 %v3754, 7
    %v3756 = vsub.s32 %v906, %v3755
    %v3757 = vrot.slane %v3374, %v3756
    %v3758 = vsel %vm911, %v3757, %v3753
    %3763 = vst.msk [vmem:[%s13 + $0x3] sm:$0x1] %vm1539, %v3731
    %3764 = vst.msk [vmem:[%s13 + $0x13] sm:$0x1] %vm1539, %v3740
    %3765 = vst.msk [vmem:[%s13 + $0x23] sm:$0x1] %vm1539, %v3749
    %3766 = vst.msk [vmem:[%s13 + $0x33] sm:$0x1] %vm1539, %v3758
    %3767 = vmax.index.xlane.f32.xlu0 %v3677
    %v3768 = vpop.xlane.xlu0 %3767
    %vm3769 = vcmp.eq.s32.totalorder %v577, %v3768
    %v3770 = vsel %vm3769, 1, 0
    %v3771 = vcvt.s32.f32 %v3770
    %v3774 = vunpack.c.l.s4 1966171168
    %v3775 = vunpack.c.0.s8 %v3774
    %v3776 = vlaneseq
    %v3777 = vshrl.u32 %v3776, 7
    %v3778 = vsub.s32 %v3775, %v3777
    %v3779 = vrot.slane %v3673, %v3778
    %v3780 = vcombine.high %v3779, %v3779
    %v3782 = vunpack.c.l.s4 1966171168
    %v3783 = vunpack.c.0.s8 %v3782
    %v3784 = vlaneseq
    %v3785 = vshrl.u32 %v3784, 7
    %v3786 = vsub.s32 %v3783, %v3785
    %v3787 = vrot.slane %v3779, %v3786
    %v3789 = vunpack.c.l.s4 1966171168
    %v3790 = vunpack.c.0.s8 %v3789
    %v3791 = vlaneseq
    %v3792 = vshrl.u32 %v3791, 7
    %v3793 = vsub.s32 %v3790, %v3792
    %v3794 = vrot.slane %v3780, %v3793
    %v3795 = vcombine.high %v3787, %v3787
    %v3796 = vcombine.high %v3794, %v3794
    %v3797 = vlaneseq
    %v3798 = vshrl.u32 %v3797, 7
    %v3799 = vsub.s32 0, %v3798
    %v3800 = vrot.slane %v3787, %v3799
    %v3801 = vlaneseq
    %v3802 = vshrl.u32 %v3801, 7
    %v3803 = vsub.s32 0, %v3802
    %v3804 = vrot.slane %v3794, %v3803
    %v3805 = vlaneseq
    %v3806 = vshrl.u32 %v3805, 7
    %v3807 = vsub.s32 0, %v3806
    %v3808 = vrot.slane %v3795, %v3807
    %v3809 = vlaneseq
    %v3810 = vshrl.u32 %v3809, 7
    %v3811 = vsub.s32 0, %v3810
    %v3812 = vrot.slane %v3796, %v3811
    %v3817 = vadd.f32 %v3800, %v742
    %v3818 = vadd.f32 %v3800, %v749
    %v3819 = vadd.f32 %v3804, %v766
    %v3820 = vadd.f32 %v3804, %v773
    %v3821 = vadd.f32 %v3808, %v790
    %v3822 = vadd.f32 %v3808, %v797
    %v3823 = vadd.f32 %v3812, %v814
    %v3824 = vadd.f32 %v3812, %v821
    %v3825 = vtanh.pop %v3817
    %v3826 = vtanh.pop %v3818
    %v3827 = vtanh.pop %v3819
    %v3828 = vtanh.pop %v3820
    %v3829 = vtanh.pop %v3821
    %v3830 = vtanh.pop %v3822
    %v3831 = vtanh.pop %v3823
    %v3832 = vtanh.pop %v3824
    %v3833 = vmul.f32 %v3825, %v850
    %v3834 = vmul.f32 %v3826, %v850
    %v3835 = vmul.f32 %v3827, %v850
    %v3836 = vmul.f32 %v3828, %v850
    %v3837 = vmul.f32 %v3829, %v850
    %v3838 = vmul.f32 %v3830, %v850
    %v3839 = vmul.f32 %v3831, %v850
    %v3840 = vmul.f32 %v3832, %v850
    %v3841 = vsel %vm381, %v3833, 0.0
    %3842 = vadd.xlane.f32.xlu0 %v3841
    %v3843 = vpop.xlane.xlu0 %3842
    %v3844 = vsel %vm863, %v3834, 0.0
    %3845 = vadd.xlane.f32.xlu0 %v3844
    %v3846 = vpop.xlane.xlu0 %3845
    %v3847 = vsel %vm381, %v3835, 0.0
    %3848 = vadd.xlane.f32.xlu0 %v3847
    %v3849 = vpop.xlane.xlu0 %3848
    %v3850 = vsel %vm863, %v3836, 0.0
    %3851 = vadd.xlane.f32.xlu0 %v3850
    %v3852 = vpop.xlane.xlu0 %3851
    %v3853 = vsel %vm381, %v3837, 0.0
    %3854 = vadd.xlane.f32.xlu0 %v3853
    %v3855 = vpop.xlane.xlu0 %3854
    %v3856 = vsel %vm863, %v3838, 0.0
    %3857 = vadd.xlane.f32.xlu0 %v3856
    %v3858 = vpop.xlane.xlu0 %3857
    %v3859 = vsel %vm381, %v3839, 0.0
    %3860 = vadd.xlane.f32.xlu0 %v3859
    %v3861 = vpop.xlane.xlu0 %3860
    %v3862 = vsel %vm863, %v3840, 0.0
    %3863 = vadd.xlane.f32.xlu0 %v3862
    %v3864 = vpop.xlane.xlu0 %3863
    %v3865 = vadd.f32 %v3843, %v885
    %v3866 = vadd.f32 %v3846, %v885
    %v3867 = vadd.f32 %v3849, %v885
    %v3868 = vadd.f32 %v3852, %v885
    %v3869 = vadd.f32 %v3855, %v885
    %v3870 = vadd.f32 %v3858, %v885
    %v3871 = vadd.f32 %v3861, %v885
    %v3872 = vadd.f32 %v3864, %v885
    %v3881 = vlaneseq
    %v3882 = vshrl.u32 %v3881, 7
    %v3883 = vsub.s32 %v577, %v3882
    %v3884 = vrot.slane %v3865, %v3883
    %v3885 = vlaneseq
    %v3886 = vshrl.u32 %v3885, 7
    %v3887 = vsub.s32 %v906, %v3886
    %v3888 = vrot.slane %v3866, %v3887
    %v3889 = vsel %vm911, %v3888, %v3884
    %v3890 = vlaneseq
    %v3891 = vshrl.u32 %v3890, 7
    %v3892 = vsub.s32 %v577, %v3891
    %v3893 = vrot.slane %v3867, %v3892
    %v3894 = vlaneseq
    %v3895 = vshrl.u32 %v3894, 7
    %v3896 = vsub.s32 %v906, %v3895
    %v3897 = vrot.slane %v3868, %v3896
    %v3898 = vsel %vm911, %v3897, %v3893
    %v3899 = vlaneseq
    %v3900 = vshrl.u32 %v3899, 7
    %v3901 = vsub.s32 %v577, %v3900
    %v3902 = vrot.slane %v3869, %v3901
    %v3903 = vlaneseq
    %v3904 = vshrl.u32 %v3903, 7
    %v3905 = vsub.s32 %v906, %v3904
    %v3906 = vrot.slane %v3870, %v3905
    %v3907 = vsel %vm911, %v3906, %v3902
    %v3908 = vlaneseq
    %v3909 = vshrl.u32 %v3908, 7
    %v3910 = vsub.s32 %v577, %v3909
    %v3911 = vrot.slane %v3871, %v3910
    %v3912 = vlaneseq
    %v3913 = vshrl.u32 %v3912, 7
    %v3914 = vsub.s32 %v906, %v3913
    %v3915 = vrot.slane %v3872, %v3914
    %v3916 = vsel %vm911, %v3915, %v3911
    %v3917 = vsel %vm940, %v3898, %v3889
    %v3918 = vsel %vm942, %v3907, %v3917
    %v3919 = vsel %vm944, %v3916, %v3918
    %v3921 = vsel %vm947, %v3919, -inf
    %3922 = vmax.xlane.f32.xlu0 %v3921
    %v3923 = vpop.xlane.xlu0 %3922
    %v3925 = vlaneseq
    %v3926 = vshrl.u32 %v3925, 7
    %v3927 = vsub.s32 0, %v3926
    %v3928 = vrot.slane %v3923, %v3927
    %v3929 = vlaneseq
    %v3930 = vshrl.u32 %v3929, 7
    %v3931 = vsub.s32 1, %v3930
    %v3932 = vrot.slane %v3923, %v3931
    %v3933 = vlaneseq
    %v3934 = vshrl.u32 %v3933, 7
    %v3935 = vsub.s32 2, %v3934
    %v3936 = vrot.slane %v3923, %v3935
    %v3937 = vlaneseq
    %v3938 = vshrl.u32 %v3937, 7
    %v3939 = vsub.s32 3, %v3938
    %v3940 = vrot.slane %v3923, %v3939
    %v3945 = vsub.f32 %v3865, %v3928
    %v3946 = vsub.f32 %v3866, %v3928
    %v3947 = vsub.f32 %v3867, %v3932
    %v3948 = vsub.f32 %v3868, %v3932
    %v3949 = vsub.f32 %v3869, %v3936
    %v3950 = vsub.f32 %v3870, %v3936
    %v3951 = vsub.f32 %v3871, %v3940
    %v3952 = vsub.f32 %v3872, %v3940
    %v3953 = vmul.f32 %v3945, 1.442695
    %v3954 = vpow.pop %v3953
    %v3955 = vmul.f32 %v3946, 1.442695
    %v3956 = vpow.pop %v3955
    %v3957 = vmul.f32 %v3947, 1.442695
    %v3958 = vpow.pop %v3957
    %v3959 = vmul.f32 %v3948, 1.442695
    %v3960 = vpow.pop %v3959
    %v3961 = vmul.f32 %v3949, 1.442695
    %v3962 = vpow.pop %v3961
    %v3963 = vmul.f32 %v3950, 1.442695
    %v3964 = vpow.pop %v3963
    %v3965 = vmul.f32 %v3951, 1.442695
    %v3966 = vpow.pop %v3965
    %v3967 = vmul.f32 %v3952, 1.442695
    %v3968 = vpow.pop %v3967
    %3977 = vset.pattern.permute.xlu0 0
    %3978 = vperm.xlu0 %3977, %v3954
    %v3979 = vpop.permute.xlu0 %3978
    %3980 = vset.pattern.permute.xlu0 0
    %3981 = vperm.xlu0 %3980, %v3956
    %v3982 = vpop.permute.xlu0 %3981
    %3983 = vset.pattern.permute.xlu0 0
    %3984 = vperm.xlu0 %3983, %v3958
    %v3985 = vpop.permute.xlu0 %3984
    %3986 = vset.pattern.permute.xlu0 0
    %3987 = vperm.xlu0 %3986, %v3960
    %v3988 = vpop.permute.xlu0 %3987
    %3989 = vset.pattern.permute.xlu0 0
    %3990 = vperm.xlu0 %3989, %v3962
    %v3991 = vpop.permute.xlu0 %3990
    %3992 = vset.pattern.permute.xlu0 0
    %3993 = vperm.xlu0 %3992, %v3964
    %v3994 = vpop.permute.xlu0 %3993
    %3995 = vset.pattern.permute.xlu0 0
    %3996 = vperm.xlu0 %3995, %v3966
    %v3997 = vpop.permute.xlu0 %3996
    %3998 = vset.pattern.permute.xlu0 0
    %3999 = vperm.xlu0 %3998, %v3968
    %v4000 = vpop.permute.xlu0 %3999
    %v4001 = vlaneseq
    %v4002 = vshrl.u32 %v4001, 7
    %v4003 = vsub.s32 %v577, %v4002
    %v4004 = vrot.slane %v3979, %v4003
    %v4005 = vlaneseq
    %v4006 = vshrl.u32 %v4005, 7
    %v4007 = vsub.s32 %v906, %v4006
    %v4008 = vrot.slane %v3982, %v4007
    %v4009 = vsel %vm911, %v4008, %v4004
    %v4010 = vlaneseq
    %v4011 = vshrl.u32 %v4010, 7
    %v4012 = vsub.s32 %v577, %v4011
    %v4013 = vrot.slane %v3985, %v4012
    %v4014 = vlaneseq
    %v4015 = vshrl.u32 %v4014, 7
    %v4016 = vsub.s32 %v906, %v4015
    %v4017 = vrot.slane %v3988, %v4016
    %v4018 = vsel %vm911, %v4017, %v4013
    %v4019 = vlaneseq
    %v4020 = vshrl.u32 %v4019, 7
    %v4021 = vsub.s32 %v577, %v4020
    %v4022 = vrot.slane %v3991, %v4021
    %v4023 = vlaneseq
    %v4024 = vshrl.u32 %v4023, 7
    %v4025 = vsub.s32 %v906, %v4024
    %v4026 = vrot.slane %v3994, %v4025
    %v4027 = vsel %vm911, %v4026, %v4022
    %v4028 = vlaneseq
    %v4029 = vshrl.u32 %v4028, 7
    %v4030 = vsub.s32 %v577, %v4029
    %v4031 = vrot.slane %v3997, %v4030
    %v4032 = vlaneseq
    %v4033 = vshrl.u32 %v4032, 7
    %v4034 = vsub.s32 %v906, %v4033
    %v4035 = vrot.slane %v4000, %v4034
    %v4036 = vsel %vm911, %v4035, %v4031
    %v4037 = vsel %vm940, %v4018, %v4009
    %v4038 = vsel %vm942, %v4027, %v4037
    %v4039 = vsel %vm944, %v4036, %v4038
    %v4041 = vsel %vm947, %v4039, 0.0
    %4042 = vadd.xlane.f32.xlu0 %v4041
    %v4043 = vpop.xlane.xlu0 %4042
    %v4045 = vlaneseq
    %v4046 = vshrl.u32 %v4045, 7
    %v4047 = vsub.s32 0, %v4046
    %v4048 = vrot.slane %v4043, %v4047
    %v4049 = vlaneseq
    %v4050 = vshrl.u32 %v4049, 7
    %v4051 = vsub.s32 1, %v4050
    %v4052 = vrot.slane %v4043, %v4051
    %v4053 = vlaneseq
    %v4054 = vshrl.u32 %v4053, 7
    %v4055 = vsub.s32 2, %v4054
    %v4056 = vrot.slane %v4043, %v4055
    %v4057 = vlaneseq
    %v4058 = vshrl.u32 %v4057, 7
    %v4059 = vsub.s32 3, %v4058
    %v4060 = vrot.slane %v4043, %v4059
    %v4065 = vrcp.pop %v4048
    %v4066 = vmul.f32 %v3954, %v4065
    %v4067 = vmul.f32 %v3956, %v4065
    %v4068 = vrcp.pop %v4052
    %v4069 = vmul.f32 %v3958, %v4068
    %v4070 = vmul.f32 %v3960, %v4068
    %v4071 = vrcp.pop %v4056
    %v4072 = vmul.f32 %v3962, %v4071
    %v4073 = vmul.f32 %v3964, %v4071
    %v4074 = vrcp.pop %v4060
    %v4075 = vmul.f32 %v3966, %v4074
    %v4076 = vmul.f32 %v3968, %v4074
    %4078 = vset.pattern.permute.xlu0 0
    %4079 = vperm.xlu0 %4078, %v4066
    %v4080 = vpop.permute.xlu0 %4079
    %4083 = vset.pattern.permute.xlu0 0
    %4084 = vperm.xlu0 %4083, %v4067
    %v4085 = vpop.permute.xlu0 %4084
    %4088 = vset.pattern.permute.xlu0 0
    %4089 = vperm.xlu0 %4088, %v4069
    %v4090 = vpop.permute.xlu0 %4089
    %4093 = vset.pattern.permute.xlu0 0
    %4094 = vperm.xlu0 %4093, %v4070
    %v4095 = vpop.permute.xlu0 %4094
    %4098 = vset.pattern.permute.xlu0 0
    %4099 = vperm.xlu0 %4098, %v4072
    %v4100 = vpop.permute.xlu0 %4099
    %4103 = vset.pattern.permute.xlu0 0
    %4104 = vperm.xlu0 %4103, %v4073
    %v4105 = vpop.permute.xlu0 %4104
    %4108 = vset.pattern.permute.xlu0 0
    %4109 = vperm.xlu0 %4108, %v4075
    %v4110 = vpop.permute.xlu0 %4109
    %4113 = vset.pattern.permute.xlu0 0
    %4114 = vperm.xlu0 %4113, %v4076
    %v4115 = vpop.permute.xlu0 %4114
    %v4117 = vmul.f32 %v4080, %v93
    %v4118 = vmul.f32 %v4085, %v94
    %v4119 = vmul.f32 %v4090, %v95
    %v4120 = vmul.f32 %v4095, %v96
    %v4121 = vmul.f32 %v4100, %v97
    %v4122 = vmul.f32 %v4105, %v98
    %v4123 = vmul.f32 %v4110, %v99
    %v4124 = vmul.f32 %v4115, %v100
    %v4125 = vsel %vm381, %v4117, 0.0
    %v4126 = vsel %vm863, %v4118, 0.0
    %v4127 = vadd.f32 %v4125, %v4126
    %v4128 = vrot.slane %v4127, 4
    %v4129 = vadd.f32 %v4127, %v4128
    %v4130 = vrot.slane %v4129, 2
    %v4131 = vadd.f32 %v4129, %v4130
    %v4132 = vrot.slane %v4131, 1
    %v4133 = vadd.f32 %v4131, %v4132
    %v4134 = vsel %vm381, %v4119, 0.0
    %v4135 = vsel %vm863, %v4120, 0.0
    %v4136 = vadd.f32 %v4134, %v4135
    %v4137 = vrot.slane %v4136, 4
    %v4138 = vadd.f32 %v4136, %v4137
    %v4139 = vrot.slane %v4138, 2
    %v4140 = vadd.f32 %v4138, %v4139
    %v4141 = vrot.slane %v4140, 1
    %v4142 = vadd.f32 %v4140, %v4141
    %v4143 = vsel %vm381, %v4121, 0.0
    %v4144 = vsel %vm863, %v4122, 0.0
    %v4145 = vadd.f32 %v4143, %v4144
    %v4146 = vrot.slane %v4145, 4
    %v4147 = vadd.f32 %v4145, %v4146
    %v4148 = vrot.slane %v4147, 2
    %v4149 = vadd.f32 %v4147, %v4148
    %v4150 = vrot.slane %v4149, 1
    %v4151 = vadd.f32 %v4149, %v4150
    %v4152 = vsel %vm381, %v4123, 0.0
    %v4153 = vsel %vm863, %v4124, 0.0
    %v4154 = vadd.f32 %v4152, %v4153
    %v4155 = vrot.slane %v4154, 4
    %v4156 = vadd.f32 %v4154, %v4155
    %v4157 = vrot.slane %v4156, 2
    %v4158 = vadd.f32 %v4156, %v4157
    %v4159 = vrot.slane %v4158, 1
    %v4160 = vadd.f32 %v4158, %v4159
    %v4165 = vsel %vm940, %v4142, %v4133
    %v4166 = vsel %vm942, %v4151, %v4165
    %v4167 = vsel %vm944, %v4160, %v4166
    %v4168 = vsel %vm381, %v4167, 0
    %4170 = vmatprep.subr.mxu0 0.0
    %4171 = vmatpush1.msra.mxu0 0.0
    %4172 = vmatprep.subr.mxu0 0.0
    %4173 = vmatpush1.msra.mxu0 0.0
    %4174 = vmatprep.subr.mxu0 0.0
    %4175 = vmatpush1.msra.mxu0 0.0
    %4176 = vmatprep.subr.mxu0 0.0
    %4177 = vmatpush1.msra.mxu0 0.0
    %4178 = vmatprep.subr.mxu0 0.0
    %4179 = vmatpush1.msra.mxu0 0.0
    %4180 = vmatprep.subr.mxu0 0.0
    %4181 = vmatpush1.msra.mxu0 0.0
    %4182 = vmatprep.subr.mxu0 0.0
    %4183 = vmatpush1.msra.mxu0 0.0
    %4184 = vmatprep.subr.mxu0 0.0
    %4185 = vmatpush1.msra.mxu0 0.0
    %4186 = vmatprep.subr.mxu0 0.0
    %4187 = vmatpush1.msra.mxu0 0.0
    %4188 = vmatprep.subr.mxu0 0.0
    %4189 = vmatpush1.msra.mxu0 0.0
    %4190 = vmatprep.subr.mxu0 0.0
    %4191 = vmatpush1.msra.mxu0 0.0
    %4192 = vmatprep.subr.mxu0 0.0
    %4193 = vmatpush1.msra.mxu0 0.0
    %4194 = vmatprep.subr.mxu0 0.0
    %4195 = vmatpush1.msra.mxu0 %v77
    %4196 = vmatprep.subr.mxu0 0.0
    %4197 = vmatpush1.msra.mxu0 %v76
    %4198 = vmatprep.subr.mxu0 0.0
    %4199 = vmatpush1.msra.mxu0 %v75
    %4200 = vmatprep.subr.mxu0 0.0
    %4201 = vmatpush1.msra.mxu0 %v74
    %4202 = vmatprep.subr.mxu0 0.0
    %4203 = vmatpush2.msra.mxu0 0.0
    %4204 = vmatprep.subr.mxu0 0.0
    %4205 = vmatpush2.msra.mxu0 0.0
    %4206 = vmatprep.subr.mxu0 0.0
    %4207 = vmatpush2.msra.mxu0 0.0
    %4208 = vmatprep.subr.mxu0 0.0
    %4209 = vmatpush2.msra.mxu0 0.0
    %4210 = vmatprep.subr.mxu0 0.0
    %4211 = vmatpush2.msra.mxu0 0.0
    %4212 = vmatprep.subr.mxu0 0.0
    %4213 = vmatpush2.msra.mxu0 0.0
    %4214 = vmatprep.subr.mxu0 0.0
    %4215 = vmatpush2.msra.mxu0 0.0
    %4216 = vmatprep.subr.mxu0 0.0
    %4217 = vmatpush2.msra.mxu0 0.0
    %4218 = vmatprep.subr.mxu0 0.0
    %4219 = vmatpush2.msra.mxu0 0.0
    %4220 = vmatprep.subr.mxu0 0.0
    %4221 = vmatpush2.msra.mxu0 0.0
    %4222 = vmatprep.subr.mxu0 0.0
    %4223 = vmatpush2.msra.mxu0 0.0
    %4224 = vmatprep.subr.mxu0 0.0
    %4225 = vmatpush2.msra.mxu0 0.0
    %4226 = vmatprep.subr.mxu0 0.0
    %4227 = vmatpush2.msra.mxu0 0.0
    %4228 = vmatprep.subr.mxu0 0.0
    %4229 = vmatpush2.msra.mxu0 0.0
    %4230 = vmatprep.subr.mxu0 0.0
    %4231 = vmatpush2.msra.mxu0 0.0
    %4232 = vmatprep.subr.mxu0 0.0
    %4233 = vmatpush2.msra.mxu0 0.0
    %4234 = vmatprep.mubr.f32.mxu0 0.0
    %4235 = vmatmul.mubr.f32.gmra.mxu0 %v4168
    %v4236 = vpop.f32.mrf.mxu0
    %v4237 = vadd.f32 0.0, %v4236
    %v4238 = vpop.f32.mrf.mxu0
    %4239 = vdwg.mxu0
    %v4241 = vsel %vm1267, %v3771, 0
    %4243 = vmatprep.subr.mxu0 0.0
    %4244 = vmatpush1.msra.mxu0 0.0
    %4245 = vmatprep.subr.mxu0 0.0
    %4246 = vmatpush1.msra.mxu0 0.0
    %4247 = vmatprep.subr.mxu0 0.0
    %4248 = vmatpush1.msra.mxu0 0.0
    %4249 = vmatprep.subr.mxu0 0.0
    %4250 = vmatpush1.msra.mxu0 0.0
    %4251 = vmatprep.subr.mxu0 0.0
    %4252 = vmatpush1.msra.mxu0 0.0
    %4253 = vmatprep.subr.mxu0 0.0
    %4254 = vmatpush1.msra.mxu0 0.0
    %4255 = vmatprep.subr.mxu0 0.0
    %4256 = vmatpush1.msra.mxu0 0.0
    %4257 = vmatprep.subr.mxu0 0.0
    %4258 = vmatpush1.msra.mxu0 0.0
    %4259 = vmatprep.subr.mxu0 0.0
    %4260 = vmatpush1.msra.mxu0 0.0
    %4261 = vmatprep.subr.mxu0 0.0
    %4262 = vmatpush1.msra.mxu0 0.0
    %4263 = vmatprep.subr.mxu0 0.0
    %4264 = vmatpush1.msra.mxu0 0.0
    %4265 = vmatprep.subr.mxu0 0.0
    %4266 = vmatpush1.msra.mxu0 0.0
    %4267 = vmatprep.subr.mxu0 0.0
    %4268 = vmatpush1.msra.mxu0 0.0
    %4269 = vmatprep.subr.mxu0 0.0
    %4270 = vmatpush1.msra.mxu0 %v1273
    %4271 = vmatprep.subr.mxu0 0.0
    %4272 = vmatpush1.msra.mxu0 %v72
    %4273 = vmatprep.subr.mxu0 0.0
    %4274 = vmatpush1.msra.mxu0 %v71
    %4275 = vmatprep.subr.mxu0 0.0
    %4276 = vmatpush2.msra.mxu0 0.0
    %4277 = vmatprep.subr.mxu0 0.0
    %4278 = vmatpush2.msra.mxu0 0.0
    %4279 = vmatprep.subr.mxu0 0.0
    %4280 = vmatpush2.msra.mxu0 0.0
    %4281 = vmatprep.subr.mxu0 0.0
    %4282 = vmatpush2.msra.mxu0 0.0
    %4283 = vmatprep.subr.mxu0 0.0
    %4284 = vmatpush2.msra.mxu0 0.0
    %4285 = vmatprep.subr.mxu0 0.0
    %4286 = vmatpush2.msra.mxu0 0.0
    %4287 = vmatprep.subr.mxu0 0.0
    %4288 = vmatpush2.msra.mxu0 0.0
    %4289 = vmatprep.subr.mxu0 0.0
    %4290 = vmatpush2.msra.mxu0 0.0
    %4291 = vmatprep.subr.mxu0 0.0
    %4292 = vmatpush2.msra.mxu0 0.0
    %4293 = vmatprep.subr.mxu0 0.0
    %4294 = vmatpush2.msra.mxu0 0.0
    %4295 = vmatprep.subr.mxu0 0.0
    %4296 = vmatpush2.msra.mxu0 0.0
    %4297 = vmatprep.subr.mxu0 0.0
    %4298 = vmatpush2.msra.mxu0 0.0
    %4299 = vmatprep.subr.mxu0 0.0
    %4300 = vmatpush2.msra.mxu0 0.0
    %4301 = vmatprep.subr.mxu0 0.0
    %4302 = vmatpush2.msra.mxu0 0.0
    %4303 = vmatprep.subr.mxu0 0.0
    %4304 = vmatpush2.msra.mxu0 0.0
    %4305 = vmatprep.subr.mxu0 0.0
    %4306 = vmatpush2.msra.mxu0 0.0
    %4307 = vmatprep.mubr.f32.mxu0 0.0
    %4308 = vmatmul.mubr.f32.gmra.mxu0 %v4241
    %v4309 = vpop.f32.mrf.mxu0
    %v4310 = vadd.f32 %v4237, %v4309
    %v4311 = vpop.f32.mrf.mxu0
    %4312 = vdwg.mxu0
    %v4313 = vadd.f32 %v4310, %v118
    %4314 = vrot.lane.b32.xlu0 %v3673, 96
    %v4315 = vpop.permute.xlu0 %4314
    %v4317 = vadd.f32 %v4313, %v4315
    %v4318 = vxor.u32 %v4317, 2147483648
    %v4319 = vmul.f32 %v4318, 1.442695
    %v4320 = vpow.pop %v4319
    %v4321 = vadd.f32 %v4320, 1.0
    %v4322 = vrcp.pop %v4321
    %v4323 = vmul.f32 1.0, %v4322
    %4324 = vrot.lane.b32.xlu0 %v3673, 32
    %v4325 = vpop.permute.xlu0 %4324
    %v4327 = vmul.f32 %v4323, %v4325
    %4329 = vrot.lane.b32.xlu0 %v4327, 64
    %v4330 = vpop.permute.xlu0 %4329
    %v4332 = vadd.f32 %v4313, %v4330
    %v4333 = vtanh.pop %v4332
    %v4334 = vsub.f32 1.0, %v4323
    %4336 = vrot.lane.b32.xlu0 %v4333, 96
    %v4337 = vpop.permute.xlu0 %4336
    %v4339 = vmul.f32 %v4334, %v4337
    %v4340 = vmul.f32 %v4323, %v3600
    %v4341 = vadd.f32 %v4339, %v4340
    %4343 = vrot.lane.b32.xlu0 %v4341, 96
    %v4344 = vpop.permute.xlu0 %4343
    %v4345 = vsel %vm381, %v4344, 0
    %4347 = vmatprep.subr.mxu0 0.0
    %4348 = vmatpush1.msra.mxu0 0.0
    %4349 = vmatprep.subr.mxu0 0.0
    %4350 = vmatpush1.msra.mxu0 0.0
    %4351 = vmatprep.subr.mxu0 0.0
    %4352 = vmatpush1.msra.mxu0 0.0
    %4353 = vmatprep.subr.mxu0 0.0
    %4354 = vmatpush1.msra.mxu0 0.0
    %4355 = vmatprep.subr.mxu0 0.0
    %4356 = vmatpush1.msra.mxu0 0.0
    %4357 = vmatprep.subr.mxu0 0.0
    %4358 = vmatpush1.msra.mxu0 0.0
    %4359 = vmatprep.subr.mxu0 0.0
    %4360 = vmatpush1.msra.mxu0 0.0
    %4361 = vmatprep.subr.mxu0 0.0
    %4362 = vmatpush1.msra.mxu0 0.0
    %4363 = vmatprep.subr.mxu0 0.0
    %4364 = vmatpush1.msra.mxu0 0.0
    %4365 = vmatprep.subr.mxu0 0.0
    %4366 = vmatpush1.msra.mxu0 0.0
    %4367 = vmatprep.subr.mxu0 0.0
    %4368 = vmatpush1.msra.mxu0 0.0
    %4369 = vmatprep.subr.mxu0 0.0
    %4370 = vmatpush1.msra.mxu0 0.0
    %4371 = vmatprep.subr.mxu0 %v85
    %4372 = vmatpush1.msra.mxu0 %v84
    %4373 = vmatprep.subr.mxu0 %v83
    %4374 = vmatpush1.msra.mxu0 %v82
    %4375 = vmatprep.subr.mxu0 %v81
    %4376 = vmatpush1.msra.mxu0 %v80
    %4377 = vmatprep.subr.mxu0 %v79
    %4378 = vmatpush1.msra.mxu0 %v78
    %4379 = vmatprep.subr.mxu0 0.0
    %4380 = vmatpush2.msra.mxu0 0.0
    %4381 = vmatprep.subr.mxu0 0.0
    %4382 = vmatpush2.msra.mxu0 0.0
    %4383 = vmatprep.subr.mxu0 0.0
    %4384 = vmatpush2.msra.mxu0 0.0
    %4385 = vmatprep.subr.mxu0 0.0
    %4386 = vmatpush2.msra.mxu0 0.0
    %4387 = vmatprep.subr.mxu0 0.0
    %4388 = vmatpush2.msra.mxu0 0.0
    %4389 = vmatprep.subr.mxu0 0.0
    %4390 = vmatpush2.msra.mxu0 0.0
    %4391 = vmatprep.subr.mxu0 0.0
    %4392 = vmatpush2.msra.mxu0 0.0
    %4393 = vmatprep.subr.mxu0 0.0
    %4394 = vmatpush2.msra.mxu0 0.0
    %4395 = vmatprep.subr.mxu0 0.0
    %4396 = vmatpush2.msra.mxu0 0.0
    %4397 = vmatprep.subr.mxu0 0.0
    %4398 = vmatpush2.msra.mxu0 0.0
    %4399 = vmatprep.subr.mxu0 0.0
    %4400 = vmatpush2.msra.mxu0 0.0
    %4401 = vmatprep.subr.mxu0 0.0
    %4402 = vmatpush2.msra.mxu0 0.0
    %4403 = vmatprep.subr.mxu0 0.0
    %4404 = vmatpush2.msra.mxu0 0.0
    %4405 = vmatprep.subr.mxu0 0.0
    %4406 = vmatpush2.msra.mxu0 0.0
    %4407 = vmatprep.subr.mxu0 0.0
    %4408 = vmatpush2.msra.mxu0 0.0
    %4409 = vmatprep.subr.mxu0 0.0
    %4410 = vmatpush2.msra.mxu0 0.0
    %4411 = vmatprep.mubr.f32.mxu0 0.0
    %4412 = vmatmul.mubr.f32.gmra.mxu0 %v4345
    %v4413 = vpop.f32.mrf.mxu0
    %v4414 = vadd.f32 %v106, %v4413
    %v4415 = vpop.f32.mrf.mxu0
    %v4416 = vadd.f32 %v110, %v4415
    %4417 = vdwg.mxu0
    %v4418 = vsel %vm1271, %v4416, -inf
    %4419 = vmax.xlane.f32.xlu0 %v4418
    %v4420 = vpop.xlane.xlu0 %4419
    %v4421 = vsub.f32 %v4416, %v4420
    %v4422 = vmul.f32 %v4421, 1.442695
    %v4423 = vpow.pop %v4422
    %v4424 = vsel %vm1271, %v4423, 0.0
    %4425 = vadd.xlane.f32.xlu0 %v4424
    %v4426 = vpop.xlane.xlu0 %4425
    %v4427 = vlog2.pop %v4426
    %v4428 = vmul.f32 %v4427, 0.6931472
    %v4429 = vadd.f32 %v4428, %v4420
    %v4430 = vsub.f32 %v4416, %v4429
    %v4433 = vunpack.c.l.s4 1966171168
    %v4434 = vunpack.c.0.s8 %v4433
    %v4435 = vlaneseq
    %v4436 = vshrl.u32 %v4435, 7
    %v4437 = vsub.s32 %v4434, %v4436
    %v4438 = vrot.slane %v4430, %v4437
    %v4439 = vcombine.high %v4438, %v4438
    %v4441 = vunpack.c.l.s4 1966171168
    %v4442 = vunpack.c.0.s8 %v4441
    %v4443 = vlaneseq
    %v4444 = vshrl.u32 %v4443, 7
    %v4445 = vsub.s32 %v4442, %v4444
    %v4446 = vrot.slane %v4438, %v4445
    %v4448 = vunpack.c.l.s4 1966171168
    %v4449 = vunpack.c.0.s8 %v4448
    %v4450 = vlaneseq
    %v4451 = vshrl.u32 %v4450, 7
    %v4452 = vsub.s32 %v4449, %v4451
    %v4453 = vrot.slane %v4439, %v4452
    %v4454 = vcombine.high %v4446, %v4446
    %v4455 = vcombine.high %v4453, %v4453
    %4460 = vst [vmem:[%s11 + $0x4] sm:$0x1] %v4446
    %4461 = vst [vmem:[%s11 + $0x14] sm:$0x1] %v4453
    %4462 = vst [vmem:[%s11 + $0x24] sm:$0x1] %v4454
    %4463 = vst [vmem:[%s11 + $0x34] sm:$0x1] %v4455
    %v4464 = vlaneseq
    %v4465 = vshrl.u32 %v4464, 7
    %v4466 = vsub.s32 %v577, %v4465
    %v4467 = vrot.slane %v4080, %v4466
    %v4468 = vlaneseq
    %v4469 = vshrl.u32 %v4468, 7
    %v4470 = vsub.s32 %v906, %v4469
    %v4471 = vrot.slane %v4085, %v4470
    %v4472 = vsel %vm911, %v4471, %v4467
    %v4473 = vlaneseq
    %v4474 = vshrl.u32 %v4473, 7
    %v4475 = vsub.s32 %v577, %v4474
    %v4476 = vrot.slane %v4090, %v4475
    %v4477 = vlaneseq
    %v4478 = vshrl.u32 %v4477, 7
    %v4479 = vsub.s32 %v906, %v4478
    %v4480 = vrot.slane %v4095, %v4479
    %v4481 = vsel %vm911, %v4480, %v4476
    %v4482 = vlaneseq
    %v4483 = vshrl.u32 %v4482, 7
    %v4484 = vsub.s32 %v577, %v4483
    %v4485 = vrot.slane %v4100, %v4484
    %v4486 = vlaneseq
    %v4487 = vshrl.u32 %v4486, 7
    %v4488 = vsub.s32 %v906, %v4487
    %v4489 = vrot.slane %v4105, %v4488
    %v4490 = vsel %vm911, %v4489, %v4485
    %v4491 = vlaneseq
    %v4492 = vshrl.u32 %v4491, 7
    %v4493 = vsub.s32 %v577, %v4492
    %v4494 = vrot.slane %v4110, %v4493
    %v4495 = vlaneseq
    %v4496 = vshrl.u32 %v4495, 7
    %v4497 = vsub.s32 %v906, %v4496
    %v4498 = vrot.slane %v4115, %v4497
    %v4499 = vsel %vm911, %v4498, %v4494
    %4504 = vst.msk [vmem:[%s13 + $0x4] sm:$0x1] %vm1539, %v4472
    %4505 = vst.msk [vmem:[%s13 + $0x14] sm:$0x1] %vm1539, %v4481
    %4506 = vst.msk [vmem:[%s13 + $0x24] sm:$0x1] %vm1539, %v4490
    %4507 = vst.msk [vmem:[%s13 + $0x34] sm:$0x1] %vm1539, %v4499
    %4508 = vmax.index.xlane.f32.xlu0 %v4418
    %v4509 = vpop.xlane.xlu0 %4508
    %vm4510 = vcmp.eq.s32.totalorder %v577, %v4509
    %v4511 = vsel %vm4510, 1, 0
    %v4512 = vcvt.s32.f32 %v4511
    %v4515 = vunpack.c.l.s4 1966171168
    %v4516 = vunpack.c.0.s8 %v4515
    %v4517 = vlaneseq
    %v4518 = vshrl.u32 %v4517, 7
    %v4519 = vsub.s32 %v4516, %v4518
    %v4520 = vrot.slane %v4414, %v4519
    %v4521 = vcombine.high %v4520, %v4520
    %v4523 = vunpack.c.l.s4 1966171168
    %v4524 = vunpack.c.0.s8 %v4523
    %v4525 = vlaneseq
    %v4526 = vshrl.u32 %v4525, 7
    %v4527 = vsub.s32 %v4524, %v4526
    %v4528 = vrot.slane %v4520, %v4527
    %v4530 = vunpack.c.l.s4 1966171168
    %v4531 = vunpack.c.0.s8 %v4530
    %v4532 = vlaneseq
    %v4533 = vshrl.u32 %v4532, 7
    %v4534 = vsub.s32 %v4531, %v4533
    %v4535 = vrot.slane %v4521, %v4534
    %v4536 = vcombine.high %v4528, %v4528
    %v4537 = vcombine.high %v4535, %v4535
    %v4538 = vlaneseq
    %v4539 = vshrl.u32 %v4538, 7
    %v4540 = vsub.s32 0, %v4539
    %v4541 = vrot.slane %v4528, %v4540
    %v4542 = vlaneseq
    %v4543 = vshrl.u32 %v4542, 7
    %v4544 = vsub.s32 0, %v4543
    %v4545 = vrot.slane %v4535, %v4544
    %v4546 = vlaneseq
    %v4547 = vshrl.u32 %v4546, 7
    %v4548 = vsub.s32 0, %v4547
    %v4549 = vrot.slane %v4536, %v4548
    %v4550 = vlaneseq
    %v4551 = vshrl.u32 %v4550, 7
    %v4552 = vsub.s32 0, %v4551
    %v4553 = vrot.slane %v4537, %v4552
    %v4558 = vadd.f32 %v4541, %v742
    %v4559 = vadd.f32 %v4541, %v749
    %v4560 = vadd.f32 %v4545, %v766
    %v4561 = vadd.f32 %v4545, %v773
    %v4562 = vadd.f32 %v4549, %v790
    %v4563 = vadd.f32 %v4549, %v797
    %v4564 = vadd.f32 %v4553, %v814
    %v4565 = vadd.f32 %v4553, %v821
    %v4566 = vtanh.pop %v4558
    %v4567 = vtanh.pop %v4559
    %v4568 = vtanh.pop %v4560
    %v4569 = vtanh.pop %v4561
    %v4570 = vtanh.pop %v4562
    %v4571 = vtanh.pop %v4563
    %v4572 = vtanh.pop %v4564
    %v4573 = vtanh.pop %v4565
    %v4574 = vmul.f32 %v4566, %v850
    %v4575 = vmul.f32 %v4567, %v850
    %v4576 = vmul.f32 %v4568, %v850
    %v4577 = vmul.f32 %v4569, %v850
    %v4578 = vmul.f32 %v4570, %v850
    %v4579 = vmul.f32 %v4571, %v850
    %v4580 = vmul.f32 %v4572, %v850
    %v4581 = vmul.f32 %v4573, %v850
    %v4582 = vsel %vm381, %v4574, 0.0
    %4583 = vadd.xlane.f32.xlu0 %v4582
    %v4584 = vpop.xlane.xlu0 %4583
    %v4585 = vsel %vm863, %v4575, 0.0
    %4586 = vadd.xlane.f32.xlu0 %v4585
    %v4587 = vpop.xlane.xlu0 %4586
    %v4588 = vsel %vm381, %v4576, 0.0
    %4589 = vadd.xlane.f32.xlu0 %v4588
    %v4590 = vpop.xlane.xlu0 %4589
    %v4591 = vsel %vm863, %v4577, 0.0
    %4592 = vadd.xlane.f32.xlu0 %v4591
    %v4593 = vpop.xlane.xlu0 %4592
    %v4594 = vsel %vm381, %v4578, 0.0
    %4595 = vadd.xlane.f32.xlu0 %v4594
    %v4596 = vpop.xlane.xlu0 %4595
    %v4597 = vsel %vm863, %v4579, 0.0
    %4598 = vadd.xlane.f32.xlu0 %v4597
    %v4599 = vpop.xlane.xlu0 %4598
    %v4600 = vsel %vm381, %v4580, 0.0
    %4601 = vadd.xlane.f32.xlu0 %v4600
    %v4602 = vpop.xlane.xlu0 %4601
    %v4603 = vsel %vm863, %v4581, 0.0
    %4604 = vadd.xlane.f32.xlu0 %v4603
    %v4605 = vpop.xlane.xlu0 %4604
    %v4606 = vadd.f32 %v4584, %v885
    %v4607 = vadd.f32 %v4587, %v885
    %v4608 = vadd.f32 %v4590, %v885
    %v4609 = vadd.f32 %v4593, %v885
    %v4610 = vadd.f32 %v4596, %v885
    %v4611 = vadd.f32 %v4599, %v885
    %v4612 = vadd.f32 %v4602, %v885
    %v4613 = vadd.f32 %v4605, %v885
    %v4622 = vlaneseq
    %v4623 = vshrl.u32 %v4622, 7
    %v4624 = vsub.s32 %v577, %v4623
    %v4625 = vrot.slane %v4606, %v4624
    %v4626 = vlaneseq
    %v4627 = vshrl.u32 %v4626, 7
    %v4628 = vsub.s32 %v906, %v4627
    %v4629 = vrot.slane %v4607, %v4628
    %v4630 = vsel %vm911, %v4629, %v4625
    %v4631 = vlaneseq
    %v4632 = vshrl.u32 %v4631, 7
    %v4633 = vsub.s32 %v577, %v4632
    %v4634 = vrot.slane %v4608, %v4633
    %v4635 = vlaneseq
    %v4636 = vshrl.u32 %v4635, 7
    %v4637 = vsub.s32 %v906, %v4636
    %v4638 = vrot.slane %v4609, %v4637
    %v4639 = vsel %vm911, %v4638, %v4634
    %v4640 = vlaneseq
    %v4641 = vshrl.u32 %v4640, 7
    %v4642 = vsub.s32 %v577, %v4641
    %v4643 = vrot.slane %v4610, %v4642
    %v4644 = vlaneseq
    %v4645 = vshrl.u32 %v4644, 7
    %v4646 = vsub.s32 %v906, %v4645
    %v4647 = vrot.slane %v4611, %v4646
    %v4648 = vsel %vm911, %v4647, %v4643
    %v4649 = vlaneseq
    %v4650 = vshrl.u32 %v4649, 7
    %v4651 = vsub.s32 %v577, %v4650
    %v4652 = vrot.slane %v4612, %v4651
    %v4653 = vlaneseq
    %v4654 = vshrl.u32 %v4653, 7
    %v4655 = vsub.s32 %v906, %v4654
    %v4656 = vrot.slane %v4613, %v4655
    %v4657 = vsel %vm911, %v4656, %v4652
    %v4658 = vsel %vm940, %v4639, %v4630
    %v4659 = vsel %vm942, %v4648, %v4658
    %v4660 = vsel %vm944, %v4657, %v4659
    %v4662 = vsel %vm947, %v4660, -inf
    %4663 = vmax.xlane.f32.xlu0 %v4662
    %v4664 = vpop.xlane.xlu0 %4663
    %v4666 = vlaneseq
    %v4667 = vshrl.u32 %v4666, 7
    %v4668 = vsub.s32 0, %v4667
    %v4669 = vrot.slane %v4664, %v4668
    %v4670 = vlaneseq
    %v4671 = vshrl.u32 %v4670, 7
    %v4672 = vsub.s32 1, %v4671
    %v4673 = vrot.slane %v4664, %v4672
    %v4674 = vlaneseq
    %v4675 = vshrl.u32 %v4674, 7
    %v4676 = vsub.s32 2, %v4675
    %v4677 = vrot.slane %v4664, %v4676
    %v4678 = vlaneseq
    %v4679 = vshrl.u32 %v4678, 7
    %v4680 = vsub.s32 3, %v4679
    %v4681 = vrot.slane %v4664, %v4680
    %v4686 = vsub.f32 %v4606, %v4669
    %v4687 = vsub.f32 %v4607, %v4669
    %v4688 = vsub.f32 %v4608, %v4673
    %v4689 = vsub.f32 %v4609, %v4673
    %v4690 = vsub.f32 %v4610, %v4677
    %v4691 = vsub.f32 %v4611, %v4677
    %v4692 = vsub.f32 %v4612, %v4681
    %v4693 = vsub.f32 %v4613, %v4681
    %v4694 = vmul.f32 %v4686, 1.442695
    %v4695 = vpow.pop %v4694
    %v4696 = vmul.f32 %v4687, 1.442695
    %v4697 = vpow.pop %v4696
    %v4698 = vmul.f32 %v4688, 1.442695
    %v4699 = vpow.pop %v4698
    %v4700 = vmul.f32 %v4689, 1.442695
    %v4701 = vpow.pop %v4700
    %v4702 = vmul.f32 %v4690, 1.442695
    %v4703 = vpow.pop %v4702
    %v4704 = vmul.f32 %v4691, 1.442695
    %v4705 = vpow.pop %v4704
    %v4706 = vmul.f32 %v4692, 1.442695
    %v4707 = vpow.pop %v4706
    %v4708 = vmul.f32 %v4693, 1.442695
    %v4709 = vpow.pop %v4708
    %4718 = vset.pattern.permute.xlu0 0
    %4719 = vperm.xlu0 %4718, %v4695
    %v4720 = vpop.permute.xlu0 %4719
    %4721 = vset.pattern.permute.xlu0 0
    %4722 = vperm.xlu0 %4721, %v4697
    %v4723 = vpop.permute.xlu0 %4722
    %4724 = vset.pattern.permute.xlu0 0
    %4725 = vperm.xlu0 %4724, %v4699
    %v4726 = vpop.permute.xlu0 %4725
    %4727 = vset.pattern.permute.xlu0 0
    %4728 = vperm.xlu0 %4727, %v4701
    %v4729 = vpop.permute.xlu0 %4728
    %4730 = vset.pattern.permute.xlu0 0
    %4731 = vperm.xlu0 %4730, %v4703
    %v4732 = vpop.permute.xlu0 %4731
    %4733 = vset.pattern.permute.xlu0 0
    %4734 = vperm.xlu0 %4733, %v4705
    %v4735 = vpop.permute.xlu0 %4734
    %4736 = vset.pattern.permute.xlu0 0
    %4737 = vperm.xlu0 %4736, %v4707
    %v4738 = vpop.permute.xlu0 %4737
    %4739 = vset.pattern.permute.xlu0 0
    %4740 = vperm.xlu0 %4739, %v4709
    %v4741 = vpop.permute.xlu0 %4740
    %v4742 = vlaneseq
    %v4743 = vshrl.u32 %v4742, 7
    %v4744 = vsub.s32 %v577, %v4743
    %v4745 = vrot.slane %v4720, %v4744
    %v4746 = vlaneseq
    %v4747 = vshrl.u32 %v4746, 7
    %v4748 = vsub.s32 %v906, %v4747
    %v4749 = vrot.slane %v4723, %v4748
    %v4750 = vsel %vm911, %v4749, %v4745
    %v4751 = vlaneseq
    %v4752 = vshrl.u32 %v4751, 7
    %v4753 = vsub.s32 %v577, %v4752
    %v4754 = vrot.slane %v4726, %v4753
    %v4755 = vlaneseq
    %v4756 = vshrl.u32 %v4755, 7
    %v4757 = vsub.s32 %v906, %v4756
    %v4758 = vrot.slane %v4729, %v4757
    %v4759 = vsel %vm911, %v4758, %v4754
    %v4760 = vlaneseq
    %v4761 = vshrl.u32 %v4760, 7
    %v4762 = vsub.s32 %v577, %v4761
    %v4763 = vrot.slane %v4732, %v4762
    %v4764 = vlaneseq
    %v4765 = vshrl.u32 %v4764, 7
    %v4766 = vsub.s32 %v906, %v4765
    %v4767 = vrot.slane %v4735, %v4766
    %v4768 = vsel %vm911, %v4767, %v4763
    %v4769 = vlaneseq
    %v4770 = vshrl.u32 %v4769, 7
    %v4771 = vsub.s32 %v577, %v4770
    %v4772 = vrot.slane %v4738, %v4771
    %v4773 = vlaneseq
    %v4774 = vshrl.u32 %v4773, 7
    %v4775 = vsub.s32 %v906, %v4774
    %v4776 = vrot.slane %v4741, %v4775
    %v4777 = vsel %vm911, %v4776, %v4772
    %v4778 = vsel %vm940, %v4759, %v4750
    %v4779 = vsel %vm942, %v4768, %v4778
    %v4780 = vsel %vm944, %v4777, %v4779
    %v4782 = vsel %vm947, %v4780, 0.0
    %4783 = vadd.xlane.f32.xlu0 %v4782
    %v4784 = vpop.xlane.xlu0 %4783
    %v4786 = vlaneseq
    %v4787 = vshrl.u32 %v4786, 7
    %v4788 = vsub.s32 0, %v4787
    %v4789 = vrot.slane %v4784, %v4788
    %v4790 = vlaneseq
    %v4791 = vshrl.u32 %v4790, 7
    %v4792 = vsub.s32 1, %v4791
    %v4793 = vrot.slane %v4784, %v4792
    %v4794 = vlaneseq
    %v4795 = vshrl.u32 %v4794, 7
    %v4796 = vsub.s32 2, %v4795
    %v4797 = vrot.slane %v4784, %v4796
    %v4798 = vlaneseq
    %v4799 = vshrl.u32 %v4798, 7
    %v4800 = vsub.s32 3, %v4799
    %v4801 = vrot.slane %v4784, %v4800
    %v4806 = vrcp.pop %v4789
    %v4807 = vmul.f32 %v4695, %v4806
    %v4808 = vmul.f32 %v4697, %v4806
    %v4809 = vrcp.pop %v4793
    %v4810 = vmul.f32 %v4699, %v4809
    %v4811 = vmul.f32 %v4701, %v4809
    %v4812 = vrcp.pop %v4797
    %v4813 = vmul.f32 %v4703, %v4812
    %v4814 = vmul.f32 %v4705, %v4812
    %v4815 = vrcp.pop %v4801
    %v4816 = vmul.f32 %v4707, %v4815
    %v4817 = vmul.f32 %v4709, %v4815
    %4819 = vset.pattern.permute.xlu0 0
    %4820 = vperm.xlu0 %4819, %v4807
    %v4821 = vpop.permute.xlu0 %4820
    %4824 = vset.pattern.permute.xlu0 0
    %4825 = vperm.xlu0 %4824, %v4808
    %v4826 = vpop.permute.xlu0 %4825
    %4829 = vset.pattern.permute.xlu0 0
    %4830 = vperm.xlu0 %4829, %v4810
    %v4831 = vpop.permute.xlu0 %4830
    %4834 = vset.pattern.permute.xlu0 0
    %4835 = vperm.xlu0 %4834, %v4811
    %v4836 = vpop.permute.xlu0 %4835
    %4839 = vset.pattern.permute.xlu0 0
    %4840 = vperm.xlu0 %4839, %v4813
    %v4841 = vpop.permute.xlu0 %4840
    %4844 = vset.pattern.permute.xlu0 0
    %4845 = vperm.xlu0 %4844, %v4814
    %v4846 = vpop.permute.xlu0 %4845
    %4849 = vset.pattern.permute.xlu0 0
    %4850 = vperm.xlu0 %4849, %v4816
    %v4851 = vpop.permute.xlu0 %4850
    %4854 = vset.pattern.permute.xlu0 0
    %4855 = vperm.xlu0 %4854, %v4817
    %v4856 = vpop.permute.xlu0 %4855
    %v4858 = vmul.f32 %v4821, %v93
    %v4859 = vmul.f32 %v4826, %v94
    %v4860 = vmul.f32 %v4831, %v95
    %v4861 = vmul.f32 %v4836, %v96
    %v4862 = vmul.f32 %v4841, %v97
    %v4863 = vmul.f32 %v4846, %v98
    %v4864 = vmul.f32 %v4851, %v99
    %v4865 = vmul.f32 %v4856, %v100
    %v4866 = vsel %vm381, %v4858, 0.0
    %v4867 = vsel %vm863, %v4859, 0.0
    %v4868 = vadd.f32 %v4866, %v4867
    %v4869 = vrot.slane %v4868, 4
    %v4870 = vadd.f32 %v4868, %v4869
    %v4871 = vrot.slane %v4870, 2
    %v4872 = vadd.f32 %v4870, %v4871
    %v4873 = vrot.slane %v4872, 1
    %v4874 = vadd.f32 %v4872, %v4873
    %v4875 = vsel %vm381, %v4860, 0.0
    %v4876 = vsel %vm863, %v4861, 0.0
    %v4877 = vadd.f32 %v4875, %v4876
    %v4878 = vrot.slane %v4877, 4
    %v4879 = vadd.f32 %v4877, %v4878
    %v4880 = vrot.slane %v4879, 2
    %v4881 = vadd.f32 %v4879, %v4880
    %v4882 = vrot.slane %v4881, 1
    %v4883 = vadd.f32 %v4881, %v4882
    %v4884 = vsel %vm381, %v4862, 0.0
    %v4885 = vsel %vm863, %v4863, 0.0
    %v4886 = vadd.f32 %v4884, %v4885
    %v4887 = vrot.slane %v4886, 4
    %v4888 = vadd.f32 %v4886, %v4887
    %v4889 = vrot.slane %v4888, 2
    %v4890 = vadd.f32 %v4888, %v4889
    %v4891 = vrot.slane %v4890, 1
    %v4892 = vadd.f32 %v4890, %v4891
    %v4893 = vsel %vm381, %v4864, 0.0
    %v4894 = vsel %vm863, %v4865, 0.0
    %v4895 = vadd.f32 %v4893, %v4894
    %v4896 = vrot.slane %v4895, 4
    %v4897 = vadd.f32 %v4895, %v4896
    %v4898 = vrot.slane %v4897, 2
    %v4899 = vadd.f32 %v4897, %v4898
    %v4900 = vrot.slane %v4899, 1
    %v4901 = vadd.f32 %v4899, %v4900
    %v4906 = vsel %vm940, %v4883, %v4874
    %v4907 = vsel %vm942, %v4892, %v4906
    %v4908 = vsel %vm944, %v4901, %v4907
    %v4909 = vsel %vm381, %v4908, 0
    %4911 = vmatprep.subr.mxu0 0.0
    %4912 = vmatpush1.msra.mxu0 0.0
    %4913 = vmatprep.subr.mxu0 0.0
    %4914 = vmatpush1.msra.mxu0 0.0
    %4915 = vmatprep.subr.mxu0 0.0
    %4916 = vmatpush1.msra.mxu0 0.0
    %4917 = vmatprep.subr.mxu0 0.0
    %4918 = vmatpush1.msra.mxu0 0.0
    %4919 = vmatprep.subr.mxu0 0.0
    %4920 = vmatpush1.msra.mxu0 0.0
    %4921 = vmatprep.subr.mxu0 0.0
    %4922 = vmatpush1.msra.mxu0 0.0
    %4923 = vmatprep.subr.mxu0 0.0
    %4924 = vmatpush1.msra.mxu0 0.0
    %4925 = vmatprep.subr.mxu0 0.0
    %4926 = vmatpush1.msra.mxu0 0.0
    %4927 = vmatprep.subr.mxu0 0.0
    %4928 = vmatpush1.msra.mxu0 0.0
    %4929 = vmatprep.subr.mxu0 0.0
    %4930 = vmatpush1.msra.mxu0 0.0
    %4931 = vmatprep.subr.mxu0 0.0
    %4932 = vmatpush1.msra.mxu0 0.0
    %4933 = vmatprep.subr.mxu0 0.0
    %4934 = vmatpush1.msra.mxu0 0.0
    %4935 = vmatprep.subr.mxu0 0.0
    %4936 = vmatpush1.msra.mxu0 %v77
    %4937 = vmatprep.subr.mxu0 0.0
    %4938 = vmatpush1.msra.mxu0 %v76
    %4939 = vmatprep.subr.mxu0 0.0
    %4940 = vmatpush1.msra.mxu0 %v75
    %4941 = vmatprep.subr.mxu0 0.0
    %4942 = vmatpush1.msra.mxu0 %v74
    %4943 = vmatprep.subr.mxu0 0.0
    %4944 = vmatpush2.msra.mxu0 0.0
    %4945 = vmatprep.subr.mxu0 0.0
    %4946 = vmatpush2.msra.mxu0 0.0
    %4947 = vmatprep.subr.mxu0 0.0
    %4948 = vmatpush2.msra.mxu0 0.0
    %4949 = vmatprep.subr.mxu0 0.0
    %4950 = vmatpush2.msra.mxu0 0.0
    %4951 = vmatprep.subr.mxu0 0.0
    %4952 = vmatpush2.msra.mxu0 0.0
    %4953 = vmatprep.subr.mxu0 0.0
    %4954 = vmatpush2.msra.mxu0 0.0
    %4955 = vmatprep.subr.mxu0 0.0
    %4956 = vmatpush2.msra.mxu0 0.0
    %4957 = vmatprep.subr.mxu0 0.0
    %4958 = vmatpush2.msra.mxu0 0.0
    %4959 = vmatprep.subr.mxu0 0.0
    %4960 = vmatpush2.msra.mxu0 0.0
    %4961 = vmatprep.subr.mxu0 0.0
    %4962 = vmatpush2.msra.mxu0 0.0
    %4963 = vmatprep.subr.mxu0 0.0
    %4964 = vmatpush2.msra.mxu0 0.0
    %4965 = vmatprep.subr.mxu0 0.0
    %4966 = vmatpush2.msra.mxu0 0.0
    %4967 = vmatprep.subr.mxu0 0.0
    %4968 = vmatpush2.msra.mxu0 0.0
    %4969 = vmatprep.subr.mxu0 0.0
    %4970 = vmatpush2.msra.mxu0 0.0
    %4971 = vmatprep.subr.mxu0 0.0
    %4972 = vmatpush2.msra.mxu0 0.0
    %4973 = vmatprep.subr.mxu0 0.0
    %4974 = vmatpush2.msra.mxu0 0.0
    %4975 = vmatprep.mubr.f32.mxu0 0.0
    %4976 = vmatmul.mubr.f32.gmra.mxu0 %v4909
    %v4977 = vpop.f32.mrf.mxu0
    %v4978 = vadd.f32 0.0, %v4977
    %v4979 = vpop.f32.mrf.mxu0
    %4980 = vdwg.mxu0
    %v4982 = vsel %vm1267, %v4512, 0
    %4984 = vmatprep.subr.mxu0 0.0
    %4985 = vmatpush1.msra.mxu0 0.0
    %4986 = vmatprep.subr.mxu0 0.0
    %4987 = vmatpush1.msra.mxu0 0.0
    %4988 = vmatprep.subr.mxu0 0.0
    %4989 = vmatpush1.msra.mxu0 0.0
    %4990 = vmatprep.subr.mxu0 0.0
    %4991 = vmatpush1.msra.mxu0 0.0
    %4992 = vmatprep.subr.mxu0 0.0
    %4993 = vmatpush1.msra.mxu0 0.0
    %4994 = vmatprep.subr.mxu0 0.0
    %4995 = vmatpush1.msra.mxu0 0.0
    %4996 = vmatprep.subr.mxu0 0.0
    %4997 = vmatpush1.msra.mxu0 0.0
    %4998 = vmatprep.subr.mxu0 0.0
    %4999 = vmatpush1.msra.mxu0 0.0
    %5000 = vmatprep.subr.mxu0 0.0
    %5001 = vmatpush1.msra.mxu0 0.0
    %5002 = vmatprep.subr.mxu0 0.0
    %5003 = vmatpush1.msra.mxu0 0.0
    %5004 = vmatprep.subr.mxu0 0.0
    %5005 = vmatpush1.msra.mxu0 0.0
    %5006 = vmatprep.subr.mxu0 0.0
    %5007 = vmatpush1.msra.mxu0 0.0
    %5008 = vmatprep.subr.mxu0 0.0
    %5009 = vmatpush1.msra.mxu0 0.0
    %5010 = vmatprep.subr.mxu0 0.0
    %5011 = vmatpush1.msra.mxu0 %v1273
    %5012 = vmatprep.subr.mxu0 0.0
    %5013 = vmatpush1.msra.mxu0 %v72
    %5014 = vmatprep.subr.mxu0 0.0
    %5015 = vmatpush1.msra.mxu0 %v71
    %5016 = vmatprep.subr.mxu0 0.0
    %5017 = vmatpush2.msra.mxu0 0.0
    %5018 = vmatprep.subr.mxu0 0.0
    %5019 = vmatpush2.msra.mxu0 0.0
    %5020 = vmatprep.subr.mxu0 0.0
    %5021 = vmatpush2.msra.mxu0 0.0
    %5022 = vmatprep.subr.mxu0 0.0
    %5023 = vmatpush2.msra.mxu0 0.0
    %5024 = vmatprep.subr.mxu0 0.0
    %5025 = vmatpush2.msra.mxu0 0.0
    %5026 = vmatprep.subr.mxu0 0.0
    %5027 = vmatpush2.msra.mxu0 0.0
    %5028 = vmatprep.subr.mxu0 0.0
    %5029 = vmatpush2.msra.mxu0 0.0
    %5030 = vmatprep.subr.mxu0 0.0
    %5031 = vmatpush2.msra.mxu0 0.0
    %5032 = vmatprep.subr.mxu0 0.0
    %5033 = vmatpush2.msra.mxu0 0.0
    %5034 = vmatprep.subr.mxu0 0.0
    %5035 = vmatpush2.msra.mxu0 0.0
    %5036 = vmatprep.subr.mxu0 0.0
    %5037 = vmatpush2.msra.mxu0 0.0
    %5038 = vmatprep.subr.mxu0 0.0
    %5039 = vmatpush2.msra.mxu0 0.0
    %5040 = vmatprep.subr.mxu0 0.0
    %5041 = vmatpush2.msra.mxu0 0.0
    %5042 = vmatprep.subr.mxu0 0.0
    %5043 = vmatpush2.msra.mxu0 0.0
    %5044 = vmatprep.subr.mxu0 0.0
    %5045 = vmatpush2.msra.mxu0 0.0
    %5046 = vmatprep.subr.mxu0 0.0
    %5047 = vmatpush2.msra.mxu0 0.0
    %5048 = vmatprep.mubr.f32.mxu0 0.0
    %5049 = vmatmul.mubr.f32.gmra.mxu0 %v4982
    %v5050 = vpop.f32.mrf.mxu0
    %v5051 = vadd.f32 %v4978, %v5050
    %v5052 = vpop.f32.mrf.mxu0
    %5053 = vdwg.mxu0
    %v5054 = vadd.f32 %v5051, %v118
    %5055 = vrot.lane.b32.xlu0 %v4414, 96
    %v5056 = vpop.permute.xlu0 %5055
    %v5058 = vadd.f32 %v5054, %v5056
    %v5059 = vxor.u32 %v5058, 2147483648
    %v5060 = vmul.f32 %v5059, 1.442695
    %v5061 = vpow.pop %v5060
    %v5062 = vadd.f32 %v5061, 1.0
    %v5063 = vrcp.pop %v5062
    %v5064 = vmul.f32 1.0, %v5063
    %5065 = vrot.lane.b32.xlu0 %v4414, 32
    %v5066 = vpop.permute.xlu0 %5065
    %v5068 = vmul.f32 %v5064, %v5066
    %5070 = vrot.lane.b32.xlu0 %v5068, 64
    %v5071 = vpop.permute.xlu0 %5070
    %v5073 = vadd.f32 %v5054, %v5071
    %v5074 = vtanh.pop %v5073
    %v5075 = vsub.f32 1.0, %v5064
    %5077 = vrot.lane.b32.xlu0 %v5074, 96
    %v5078 = vpop.permute.xlu0 %5077
    %v5080 = vmul.f32 %v5075, %v5078
    %v5081 = vmul.f32 %v5064, %v4341
    %v5082 = vadd.f32 %v5080, %v5081
    %5084 = vrot.lane.b32.xlu0 %v5082, 96
    %v5085 = vpop.permute.xlu0 %5084
    %v5086 = vsel %vm381, %v5085, 0
    %5088 = vmatprep.subr.mxu0 0.0
    %5089 = vmatpush1.msra.mxu0 0.0
    %5090 = vmatprep.subr.mxu0 0.0
    %5091 = vmatpush1.msra.mxu0 0.0
    %5092 = vmatprep.subr.mxu0 0.0
    %5093 = vmatpush1.msra.mxu0 0.0
    %5094 = vmatprep.subr.mxu0 0.0
    %5095 = vmatpush1.msra.mxu0 0.0
    %5096 = vmatprep.subr.mxu0 0.0
    %5097 = vmatpush1.msra.mxu0 0.0
    %5098 = vmatprep.subr.mxu0 0.0
    %5099 = vmatpush1.msra.mxu0 0.0
    %5100 = vmatprep.subr.mxu0 0.0
    %5101 = vmatpush1.msra.mxu0 0.0
    %5102 = vmatprep.subr.mxu0 0.0
    %5103 = vmatpush1.msra.mxu0 0.0
    %5104 = vmatprep.subr.mxu0 0.0
    %5105 = vmatpush1.msra.mxu0 0.0
    %5106 = vmatprep.subr.mxu0 0.0
    %5107 = vmatpush1.msra.mxu0 0.0
    %5108 = vmatprep.subr.mxu0 0.0
    %5109 = vmatpush1.msra.mxu0 0.0
    %5110 = vmatprep.subr.mxu0 0.0
    %5111 = vmatpush1.msra.mxu0 0.0
    %5112 = vmatprep.subr.mxu0 %v85
    %5113 = vmatpush1.msra.mxu0 %v84
    %5114 = vmatprep.subr.mxu0 %v83
    %5115 = vmatpush1.msra.mxu0 %v82
    %5116 = vmatprep.subr.mxu0 %v81
    %5117 = vmatpush1.msra.mxu0 %v80
    %5118 = vmatprep.subr.mxu0 %v79
    %5119 = vmatpush1.msra.mxu0 %v78
    %5120 = vmatprep.subr.mxu0 0.0
    %5121 = vmatpush2.msra.mxu0 0.0
    %5122 = vmatprep.subr.mxu0 0.0
    %5123 = vmatpush2.msra.mxu0 0.0
    %5124 = vmatprep.subr.mxu0 0.0
    %5125 = vmatpush2.msra.mxu0 0.0
    %5126 = vmatprep.subr.mxu0 0.0
    %5127 = vmatpush2.msra.mxu0 0.0
    %5128 = vmatprep.subr.mxu0 0.0
    %5129 = vmatpush2.msra.mxu0 0.0
    %5130 = vmatprep.subr.mxu0 0.0
    %5131 = vmatpush2.msra.mxu0 0.0
    %5132 = vmatprep.subr.mxu0 0.0
    %5133 = vmatpush2.msra.mxu0 0.0
    %5134 = vmatprep.subr.mxu0 0.0
    %5135 = vmatpush2.msra.mxu0 0.0
    %5136 = vmatprep.subr.mxu0 0.0
    %5137 = vmatpush2.msra.mxu0 0.0
    %5138 = vmatprep.subr.mxu0 0.0
    %5139 = vmatpush2.msra.mxu0 0.0
    %5140 = vmatprep.subr.mxu0 0.0
    %5141 = vmatpush2.msra.mxu0 0.0
    %5142 = vmatprep.subr.mxu0 0.0
    %5143 = vmatpush2.msra.mxu0 0.0
    %5144 = vmatprep.subr.mxu0 0.0
    %5145 = vmatpush2.msra.mxu0 0.0
    %5146 = vmatprep.subr.mxu0 0.0
    %5147 = vmatpush2.msra.mxu0 0.0
    %5148 = vmatprep.subr.mxu0 0.0
    %5149 = vmatpush2.msra.mxu0 0.0
    %5150 = vmatprep.subr.mxu0 0.0
    %5151 = vmatpush2.msra.mxu0 0.0
    %5152 = vmatprep.mubr.f32.mxu0 0.0
    %5153 = vmatmul.mubr.f32.gmra.mxu0 %v5086
    %v5154 = vpop.f32.mrf.mxu0
    %v5155 = vadd.f32 %v106, %v5154
    %v5156 = vpop.f32.mrf.mxu0
    %v5157 = vadd.f32 %v110, %v5156
    %5158 = vdwg.mxu0
    %v5159 = vsel %vm1271, %v5157, -inf
    %5160 = vmax.xlane.f32.xlu0 %v5159
    %v5161 = vpop.xlane.xlu0 %5160
    %v5162 = vsub.f32 %v5157, %v5161
    %v5163 = vmul.f32 %v5162, 1.442695
    %v5164 = vpow.pop %v5163
    %v5165 = vsel %vm1271, %v5164, 0.0
    %5166 = vadd.xlane.f32.xlu0 %v5165
    %v5167 = vpop.xlane.xlu0 %5166
    %v5168 = vlog2.pop %v5167
    %v5169 = vmul.f32 %v5168, 0.6931472
    %v5170 = vadd.f32 %v5169, %v5161
    %v5171 = vsub.f32 %v5157, %v5170
    %v5174 = vunpack.c.l.s4 1966171168
    %v5175 = vunpack.c.0.s8 %v5174
    %v5176 = vlaneseq
    %v5177 = vshrl.u32 %v5176, 7
    %v5178 = vsub.s32 %v5175, %v5177
    %v5179 = vrot.slane %v5171, %v5178
    %v5180 = vcombine.high %v5179, %v5179
    %v5182 = vunpack.c.l.s4 1966171168
    %v5183 = vunpack.c.0.s8 %v5182
    %v5184 = vlaneseq
    %v5185 = vshrl.u32 %v5184, 7
    %v5186 = vsub.s32 %v5183, %v5185
    %v5187 = vrot.slane %v5179, %v5186
    %v5189 = vunpack.c.l.s4 1966171168
    %v5190 = vunpack.c.0.s8 %v5189
    %v5191 = vlaneseq
    %v5192 = vshrl.u32 %v5191, 7
    %v5193 = vsub.s32 %v5190, %v5192
    %v5194 = vrot.slane %v5180, %v5193
    %v5195 = vcombine.high %v5187, %v5187
    %v5196 = vcombine.high %v5194, %v5194
    %5201 = vst [vmem:[%s11 + $0x5] sm:$0x1] %v5187
    %5202 = vst [vmem:[%s11 + $0x15] sm:$0x1] %v5194
    %5203 = vst [vmem:[%s11 + $0x25] sm:$0x1] %v5195
    %5204 = vst [vmem:[%s11 + $0x35] sm:$0x1] %v5196
    %v5205 = vlaneseq
    %v5206 = vshrl.u32 %v5205, 7
    %v5207 = vsub.s32 %v577, %v5206
    %v5208 = vrot.slane %v4821, %v5207
    %v5209 = vlaneseq
    %v5210 = vshrl.u32 %v5209, 7
    %v5211 = vsub.s32 %v906, %v5210
    %v5212 = vrot.slane %v4826, %v5211
    %v5213 = vsel %vm911, %v5212, %v5208
    %v5214 = vlaneseq
    %v5215 = vshrl.u32 %v5214, 7
    %v5216 = vsub.s32 %v577, %v5215
    %v5217 = vrot.slane %v4831, %v5216
    %v5218 = vlaneseq
    %v5219 = vshrl.u32 %v5218, 7
    %v5220 = vsub.s32 %v906, %v5219
    %v5221 = vrot.slane %v4836, %v5220
    %v5222 = vsel %vm911, %v5221, %v5217
    %v5223 = vlaneseq
    %v5224 = vshrl.u32 %v5223, 7
    %v5225 = vsub.s32 %v577, %v5224
    %v5226 = vrot.slane %v4841, %v5225
    %v5227 = vlaneseq
    %v5228 = vshrl.u32 %v5227, 7
    %v5229 = vsub.s32 %v906, %v5228
    %v5230 = vrot.slane %v4846, %v5229
    %v5231 = vsel %vm911, %v5230, %v5226
    %v5232 = vlaneseq
    %v5233 = vshrl.u32 %v5232, 7
    %v5234 = vsub.s32 %v577, %v5233
    %v5235 = vrot.slane %v4851, %v5234
    %v5236 = vlaneseq
    %v5237 = vshrl.u32 %v5236, 7
    %v5238 = vsub.s32 %v906, %v5237
    %v5239 = vrot.slane %v4856, %v5238
    %v5240 = vsel %vm911, %v5239, %v5235
    %5245 = vst.msk [vmem:[%s13 + $0x5] sm:$0x1] %vm1539, %v5213
    %5246 = vst.msk [vmem:[%s13 + $0x15] sm:$0x1] %vm1539, %v5222
    %5247 = vst.msk [vmem:[%s13 + $0x25] sm:$0x1] %vm1539, %v5231
    %5248 = vst.msk [vmem:[%s13 + $0x35] sm:$0x1] %vm1539, %v5240
    %5249 = vmax.index.xlane.f32.xlu0 %v5159
    %v5250 = vpop.xlane.xlu0 %5249
    %vm5251 = vcmp.eq.s32.totalorder %v577, %v5250
    %v5252 = vsel %vm5251, 1, 0
    %v5253 = vcvt.s32.f32 %v5252
    %v5256 = vunpack.c.l.s4 1966171168
    %v5257 = vunpack.c.0.s8 %v5256
    %v5258 = vlaneseq
    %v5259 = vshrl.u32 %v5258, 7
    %v5260 = vsub.s32 %v5257, %v5259
    %v5261 = vrot.slane %v5155, %v5260
    %v5262 = vcombine.high %v5261, %v5261
    %v5264 = vunpack.c.l.s4 1966171168
    %v5265 = vunpack.c.0.s8 %v5264
    %v5266 = vlaneseq
    %v5267 = vshrl.u32 %v5266, 7
    %v5268 = vsub.s32 %v5265, %v5267
    %v5269 = vrot.slane %v5261, %v5268
    %v5271 = vunpack.c.l.s4 1966171168
    %v5272 = vunpack.c.0.s8 %v5271
    %v5273 = vlaneseq
    %v5274 = vshrl.u32 %v5273, 7
    %v5275 = vsub.s32 %v5272, %v5274
    %v5276 = vrot.slane %v5262, %v5275
    %v5277 = vcombine.high %v5269, %v5269
    %v5278 = vcombine.high %v5276, %v5276
    %v5279 = vlaneseq
    %v5280 = vshrl.u32 %v5279, 7
    %v5281 = vsub.s32 0, %v5280
    %v5282 = vrot.slane %v5269, %v5281
    %v5283 = vlaneseq
    %v5284 = vshrl.u32 %v5283, 7
    %v5285 = vsub.s32 0, %v5284
    %v5286 = vrot.slane %v5276, %v5285
    %v5287 = vlaneseq
    %v5288 = vshrl.u32 %v5287, 7
    %v5289 = vsub.s32 0, %v5288
    %v5290 = vrot.slane %v5277, %v5289
    %v5291 = vlaneseq
    %v5292 = vshrl.u32 %v5291, 7
    %v5293 = vsub.s32 0, %v5292
    %v5294 = vrot.slane %v5278, %v5293
    %v5299 = vadd.f32 %v5282, %v742
    %v5300 = vadd.f32 %v5282, %v749
    %v5301 = vadd.f32 %v5286, %v766
    %v5302 = vadd.f32 %v5286, %v773
    %v5303 = vadd.f32 %v5290, %v790
    %v5304 = vadd.f32 %v5290, %v797
    %v5305 = vadd.f32 %v5294, %v814
    %v5306 = vadd.f32 %v5294, %v821
    %v5307 = vtanh.pop %v5299
    %v5308 = vtanh.pop %v5300
    %v5309 = vtanh.pop %v5301
    %v5310 = vtanh.pop %v5302
    %v5311 = vtanh.pop %v5303
    %v5312 = vtanh.pop %v5304
    %v5313 = vtanh.pop %v5305
    %v5314 = vtanh.pop %v5306
    %v5315 = vmul.f32 %v5307, %v850
    %v5316 = vmul.f32 %v5308, %v850
    %v5317 = vmul.f32 %v5309, %v850
    %v5318 = vmul.f32 %v5310, %v850
    %v5319 = vmul.f32 %v5311, %v850
    %v5320 = vmul.f32 %v5312, %v850
    %v5321 = vmul.f32 %v5313, %v850
    %v5322 = vmul.f32 %v5314, %v850
    %v5323 = vsel %vm381, %v5315, 0.0
    %5324 = vadd.xlane.f32.xlu0 %v5323
    %v5325 = vpop.xlane.xlu0 %5324
    %v5326 = vsel %vm863, %v5316, 0.0
    %5327 = vadd.xlane.f32.xlu0 %v5326
    %v5328 = vpop.xlane.xlu0 %5327
    %v5329 = vsel %vm381, %v5317, 0.0
    %5330 = vadd.xlane.f32.xlu0 %v5329
    %v5331 = vpop.xlane.xlu0 %5330
    %v5332 = vsel %vm863, %v5318, 0.0
    %5333 = vadd.xlane.f32.xlu0 %v5332
    %v5334 = vpop.xlane.xlu0 %5333
    %v5335 = vsel %vm381, %v5319, 0.0
    %5336 = vadd.xlane.f32.xlu0 %v5335
    %v5337 = vpop.xlane.xlu0 %5336
    %v5338 = vsel %vm863, %v5320, 0.0
    %5339 = vadd.xlane.f32.xlu0 %v5338
    %v5340 = vpop.xlane.xlu0 %5339
    %v5341 = vsel %vm381, %v5321, 0.0
    %5342 = vadd.xlane.f32.xlu0 %v5341
    %v5343 = vpop.xlane.xlu0 %5342
    %v5344 = vsel %vm863, %v5322, 0.0
    %5345 = vadd.xlane.f32.xlu0 %v5344
    %v5346 = vpop.xlane.xlu0 %5345
    %v5347 = vadd.f32 %v5325, %v885
    %v5348 = vadd.f32 %v5328, %v885
    %v5349 = vadd.f32 %v5331, %v885
    %v5350 = vadd.f32 %v5334, %v885
    %v5351 = vadd.f32 %v5337, %v885
    %v5352 = vadd.f32 %v5340, %v885
    %v5353 = vadd.f32 %v5343, %v885
    %v5354 = vadd.f32 %v5346, %v885
    %v5363 = vlaneseq
    %v5364 = vshrl.u32 %v5363, 7
    %v5365 = vsub.s32 %v577, %v5364
    %v5366 = vrot.slane %v5347, %v5365
    %v5367 = vlaneseq
    %v5368 = vshrl.u32 %v5367, 7
    %v5369 = vsub.s32 %v906, %v5368
    %v5370 = vrot.slane %v5348, %v5369
    %v5371 = vsel %vm911, %v5370, %v5366
    %v5372 = vlaneseq
    %v5373 = vshrl.u32 %v5372, 7
    %v5374 = vsub.s32 %v577, %v5373
    %v5375 = vrot.slane %v5349, %v5374
    %v5376 = vlaneseq
    %v5377 = vshrl.u32 %v5376, 7
    %v5378 = vsub.s32 %v906, %v5377
    %v5379 = vrot.slane %v5350, %v5378
    %v5380 = vsel %vm911, %v5379, %v5375
    %v5381 = vlaneseq
    %v5382 = vshrl.u32 %v5381, 7
    %v5383 = vsub.s32 %v577, %v5382
    %v5384 = vrot.slane %v5351, %v5383
    %v5385 = vlaneseq
    %v5386 = vshrl.u32 %v5385, 7
    %v5387 = vsub.s32 %v906, %v5386
    %v5388 = vrot.slane %v5352, %v5387
    %v5389 = vsel %vm911, %v5388, %v5384
    %v5390 = vlaneseq
    %v5391 = vshrl.u32 %v5390, 7
    %v5392 = vsub.s32 %v577, %v5391
    %v5393 = vrot.slane %v5353, %v5392
    %v5394 = vlaneseq
    %v5395 = vshrl.u32 %v5394, 7
    %v5396 = vsub.s32 %v906, %v5395
    %v5397 = vrot.slane %v5354, %v5396
    %v5398 = vsel %vm911, %v5397, %v5393
    %v5399 = vsel %vm940, %v5380, %v5371
    %v5400 = vsel %vm942, %v5389, %v5399
    %v5401 = vsel %vm944, %v5398, %v5400
    %v5403 = vsel %vm947, %v5401, -inf
    %5404 = vmax.xlane.f32.xlu0 %v5403
    %v5405 = vpop.xlane.xlu0 %5404
    %v5407 = vlaneseq
    %v5408 = vshrl.u32 %v5407, 7
    %v5409 = vsub.s32 0, %v5408
    %v5410 = vrot.slane %v5405, %v5409
    %v5411 = vlaneseq
    %v5412 = vshrl.u32 %v5411, 7
    %v5413 = vsub.s32 1, %v5412
    %v5414 = vrot.slane %v5405, %v5413
    %v5415 = vlaneseq
    %v5416 = vshrl.u32 %v5415, 7
    %v5417 = vsub.s32 2, %v5416
    %v5418 = vrot.slane %v5405, %v5417
    %v5419 = vlaneseq
    %v5420 = vshrl.u32 %v5419, 7
    %v5421 = vsub.s32 3, %v5420
    %v5422 = vrot.slane %v5405, %v5421
    %v5427 = vsub.f32 %v5347, %v5410
    %v5428 = vsub.f32 %v5348, %v5410
    %v5429 = vsub.f32 %v5349, %v5414
    %v5430 = vsub.f32 %v5350, %v5414
    %v5431 = vsub.f32 %v5351, %v5418
    %v5432 = vsub.f32 %v5352, %v5418
    %v5433 = vsub.f32 %v5353, %v5422
    %v5434 = vsub.f32 %v5354, %v5422
    %v5435 = vmul.f32 %v5427, 1.442695
    %v5436 = vpow.pop %v5435
    %v5437 = vmul.f32 %v5428, 1.442695
    %v5438 = vpow.pop %v5437
    %v5439 = vmul.f32 %v5429, 1.442695
    %v5440 = vpow.pop %v5439
    %v5441 = vmul.f32 %v5430, 1.442695
    %v5442 = vpow.pop %v5441
    %v5443 = vmul.f32 %v5431, 1.442695
    %v5444 = vpow.pop %v5443
    %v5445 = vmul.f32 %v5432, 1.442695
    %v5446 = vpow.pop %v5445
    %v5447 = vmul.f32 %v5433, 1.442695
    %v5448 = vpow.pop %v5447
    %v5449 = vmul.f32 %v5434, 1.442695
    %v5450 = vpow.pop %v5449
    %5459 = vset.pattern.permute.xlu0 0
    %5460 = vperm.xlu0 %5459, %v5436
    %v5461 = vpop.permute.xlu0 %5460
    %5462 = vset.pattern.permute.xlu0 0
    %5463 = vperm.xlu0 %5462, %v5438
    %v5464 = vpop.permute.xlu0 %5463
    %5465 = vset.pattern.permute.xlu0 0
    %5466 = vperm.xlu0 %5465, %v5440
    %v5467 = vpop.permute.xlu0 %5466
    %5468 = vset.pattern.permute.xlu0 0
    %5469 = vperm.xlu0 %5468, %v5442
    %v5470 = vpop.permute.xlu0 %5469
    %5471 = vset.pattern.permute.xlu0 0
    %5472 = vperm.xlu0 %5471, %v5444
    %v5473 = vpop.permute.xlu0 %5472
    %5474 = vset.pattern.permute.xlu0 0
    %5475 = vperm.xlu0 %5474, %v5446
    %v5476 = vpop.permute.xlu0 %5475
    %5477 = vset.pattern.permute.xlu0 0
    %5478 = vperm.xlu0 %5477, %v5448
    %v5479 = vpop.permute.xlu0 %5478
    %5480 = vset.pattern.permute.xlu0 0
    %5481 = vperm.xlu0 %5480, %v5450
    %v5482 = vpop.permute.xlu0 %5481
    %v5483 = vlaneseq
    %v5484 = vshrl.u32 %v5483, 7
    %v5485 = vsub.s32 %v577, %v5484
    %v5486 = vrot.slane %v5461, %v5485
    %v5487 = vlaneseq
    %v5488 = vshrl.u32 %v5487, 7
    %v5489 = vsub.s32 %v906, %v5488
    %v5490 = vrot.slane %v5464, %v5489
    %v5491 = vsel %vm911, %v5490, %v5486
    %v5492 = vlaneseq
    %v5493 = vshrl.u32 %v5492, 7
    %v5494 = vsub.s32 %v577, %v5493
    %v5495 = vrot.slane %v5467, %v5494
    %v5496 = vlaneseq
    %v5497 = vshrl.u32 %v5496, 7
    %v5498 = vsub.s32 %v906, %v5497
    %v5499 = vrot.slane %v5470, %v5498
    %v5500 = vsel %vm911, %v5499, %v5495
    %v5501 = vlaneseq
    %v5502 = vshrl.u32 %v5501, 7
    %v5503 = vsub.s32 %v577, %v5502
    %v5504 = vrot.slane %v5473, %v5503
    %v5505 = vlaneseq
    %v5506 = vshrl.u32 %v5505, 7
    %v5507 = vsub.s32 %v906, %v5506
    %v5508 = vrot.slane %v5476, %v5507
    %v5509 = vsel %vm911, %v5508, %v5504
    %v5510 = vlaneseq
    %v5511 = vshrl.u32 %v5510, 7
    %v5512 = vsub.s32 %v577, %v5511
    %v5513 = vrot.slane %v5479, %v5512
    %v5514 = vlaneseq
    %v5515 = vshrl.u32 %v5514, 7
    %v5516 = vsub.s32 %v906, %v5515
    %v5517 = vrot.slane %v5482, %v5516
    %v5518 = vsel %vm911, %v5517, %v5513
    %v5519 = vsel %vm940, %v5500, %v5491
    %v5520 = vsel %vm942, %v5509, %v5519
    %v5521 = vsel %vm944, %v5518, %v5520
    %v5523 = vsel %vm947, %v5521, 0.0
    %5524 = vadd.xlane.f32.xlu0 %v5523
    %v5525 = vpop.xlane.xlu0 %5524
    %v5527 = vlaneseq
    %v5528 = vshrl.u32 %v5527, 7
    %v5529 = vsub.s32 0, %v5528
    %v5530 = vrot.slane %v5525, %v5529
    %v5531 = vlaneseq
    %v5532 = vshrl.u32 %v5531, 7
    %v5533 = vsub.s32 1, %v5532
    %v5534 = vrot.slane %v5525, %v5533
    %v5535 = vlaneseq
    %v5536 = vshrl.u32 %v5535, 7
    %v5537 = vsub.s32 2, %v5536
    %v5538 = vrot.slane %v5525, %v5537
    %v5539 = vlaneseq
    %v5540 = vshrl.u32 %v5539, 7
    %v5541 = vsub.s32 3, %v5540
    %v5542 = vrot.slane %v5525, %v5541
    %v5547 = vrcp.pop %v5530
    %v5548 = vmul.f32 %v5436, %v5547
    %v5549 = vmul.f32 %v5438, %v5547
    %v5550 = vrcp.pop %v5534
    %v5551 = vmul.f32 %v5440, %v5550
    %v5552 = vmul.f32 %v5442, %v5550
    %v5553 = vrcp.pop %v5538
    %v5554 = vmul.f32 %v5444, %v5553
    %v5555 = vmul.f32 %v5446, %v5553
    %v5556 = vrcp.pop %v5542
    %v5557 = vmul.f32 %v5448, %v5556
    %v5558 = vmul.f32 %v5450, %v5556
    %5560 = vset.pattern.permute.xlu0 0
    %5561 = vperm.xlu0 %5560, %v5548
    %v5562 = vpop.permute.xlu0 %5561
    %5565 = vset.pattern.permute.xlu0 0
    %5566 = vperm.xlu0 %5565, %v5549
    %v5567 = vpop.permute.xlu0 %5566
    %5570 = vset.pattern.permute.xlu0 0
    %5571 = vperm.xlu0 %5570, %v5551
    %v5572 = vpop.permute.xlu0 %5571
    %5575 = vset.pattern.permute.xlu0 0
    %5576 = vperm.xlu0 %5575, %v5552
    %v5577 = vpop.permute.xlu0 %5576
    %5580 = vset.pattern.permute.xlu0 0
    %5581 = vperm.xlu0 %5580, %v5554
    %v5582 = vpop.permute.xlu0 %5581
    %5585 = vset.pattern.permute.xlu0 0
    %5586 = vperm.xlu0 %5585, %v5555
    %v5587 = vpop.permute.xlu0 %5586
    %5590 = vset.pattern.permute.xlu0 0
    %5591 = vperm.xlu0 %5590, %v5557
    %v5592 = vpop.permute.xlu0 %5591
    %5595 = vset.pattern.permute.xlu0 0
    %5596 = vperm.xlu0 %5595, %v5558
    %v5597 = vpop.permute.xlu0 %5596
    %v5599 = vmul.f32 %v5562, %v93
    %v5600 = vmul.f32 %v5567, %v94
    %v5601 = vmul.f32 %v5572, %v95
    %v5602 = vmul.f32 %v5577, %v96
    %v5603 = vmul.f32 %v5582, %v97
    %v5604 = vmul.f32 %v5587, %v98
    %v5605 = vmul.f32 %v5592, %v99
    %v5606 = vmul.f32 %v5597, %v100
    %v5607 = vsel %vm381, %v5599, 0.0
    %v5608 = vsel %vm863, %v5600, 0.0
    %v5609 = vadd.f32 %v5607, %v5608
    %v5610 = vrot.slane %v5609, 4
    %v5611 = vadd.f32 %v5609, %v5610
    %v5612 = vrot.slane %v5611, 2
    %v5613 = vadd.f32 %v5611, %v5612
    %v5614 = vrot.slane %v5613, 1
    %v5615 = vadd.f32 %v5613, %v5614
    %v5616 = vsel %vm381, %v5601, 0.0
    %v5617 = vsel %vm863, %v5602, 0.0
    %v5618 = vadd.f32 %v5616, %v5617
    %v5619 = vrot.slane %v5618, 4
    %v5620 = vadd.f32 %v5618, %v5619
    %v5621 = vrot.slane %v5620, 2
    %v5622 = vadd.f32 %v5620, %v5621
    %v5623 = vrot.slane %v5622, 1
    %v5624 = vadd.f32 %v5622, %v5623
    %v5625 = vsel %vm381, %v5603, 0.0
    %v5626 = vsel %vm863, %v5604, 0.0
    %v5627 = vadd.f32 %v5625, %v5626
    %v5628 = vrot.slane %v5627, 4
    %v5629 = vadd.f32 %v5627, %v5628
    %v5630 = vrot.slane %v5629, 2
    %v5631 = vadd.f32 %v5629, %v5630
    %v5632 = vrot.slane %v5631, 1
    %v5633 = vadd.f32 %v5631, %v5632
    %v5634 = vsel %vm381, %v5605, 0.0
    %v5635 = vsel %vm863, %v5606, 0.0
    %v5636 = vadd.f32 %v5634, %v5635
    %v5637 = vrot.slane %v5636, 4
    %v5638 = vadd.f32 %v5636, %v5637
    %v5639 = vrot.slane %v5638, 2
    %v5640 = vadd.f32 %v5638, %v5639
    %v5641 = vrot.slane %v5640, 1
    %v5642 = vadd.f32 %v5640, %v5641
    %v5647 = vsel %vm940, %v5624, %v5615
    %v5648 = vsel %vm942, %v5633, %v5647
    %v5649 = vsel %vm944, %v5642, %v5648
    %v5650 = vsel %vm381, %v5649, 0
    %5652 = vmatprep.subr.mxu0 0.0
    %5653 = vmatpush1.msra.mxu0 0.0
    %5654 = vmatprep.subr.mxu0 0.0
    %5655 = vmatpush1.msra.mxu0 0.0
    %5656 = vmatprep.subr.mxu0 0.0
    %5657 = vmatpush1.msra.mxu0 0.0
    %5658 = vmatprep.subr.mxu0 0.0
    %5659 = vmatpush1.msra.mxu0 0.0
    %5660 = vmatprep.subr.mxu0 0.0
    %5661 = vmatpush1.msra.mxu0 0.0
    %5662 = vmatprep.subr.mxu0 0.0
    %5663 = vmatpush1.msra.mxu0 0.0
    %5664 = vmatprep.subr.mxu0 0.0
    %5665 = vmatpush1.msra.mxu0 0.0
    %5666 = vmatprep.subr.mxu0 0.0
    %5667 = vmatpush1.msra.mxu0 0.0
    %5668 = vmatprep.subr.mxu0 0.0
    %5669 = vmatpush1.msra.mxu0 0.0
    %5670 = vmatprep.subr.mxu0 0.0
    %5671 = vmatpush1.msra.mxu0 0.0
    %5672 = vmatprep.subr.mxu0 0.0
    %5673 = vmatpush1.msra.mxu0 0.0
    %5674 = vmatprep.subr.mxu0 0.0
    %5675 = vmatpush1.msra.mxu0 0.0
    %5676 = vmatprep.subr.mxu0 0.0
    %5677 = vmatpush1.msra.mxu0 %v77
    %5678 = vmatprep.subr.mxu0 0.0
    %5679 = vmatpush1.msra.mxu0 %v76
    %5680 = vmatprep.subr.mxu0 0.0
    %5681 = vmatpush1.msra.mxu0 %v75
    %5682 = vmatprep.subr.mxu0 0.0
    %5683 = vmatpush1.msra.mxu0 %v74
    %5684 = vmatprep.subr.mxu0 0.0
    %5685 = vmatpush2.msra.mxu0 0.0
    %5686 = vmatprep.subr.mxu0 0.0
    %5687 = vmatpush2.msra.mxu0 0.0
    %5688 = vmatprep.subr.mxu0 0.0
    %5689 = vmatpush2.msra.mxu0 0.0
    %5690 = vmatprep.subr.mxu0 0.0
    %5691 = vmatpush2.msra.mxu0 0.0
    %5692 = vmatprep.subr.mxu0 0.0
    %5693 = vmatpush2.msra.mxu0 0.0
    %5694 = vmatprep.subr.mxu0 0.0
    %5695 = vmatpush2.msra.mxu0 0.0
    %5696 = vmatprep.subr.mxu0 0.0
    %5697 = vmatpush2.msra.mxu0 0.0
    %5698 = vmatprep.subr.mxu0 0.0
    %5699 = vmatpush2.msra.mxu0 0.0
    %5700 = vmatprep.subr.mxu0 0.0
    %5701 = vmatpush2.msra.mxu0 0.0
    %5702 = vmatprep.subr.mxu0 0.0
    %5703 = vmatpush2.msra.mxu0 0.0
    %5704 = vmatprep.subr.mxu0 0.0
    %5705 = vmatpush2.msra.mxu0 0.0
    %5706 = vmatprep.subr.mxu0 0.0
    %5707 = vmatpush2.msra.mxu0 0.0
    %5708 = vmatprep.subr.mxu0 0.0
    %5709 = vmatpush2.msra.mxu0 0.0
    %5710 = vmatprep.subr.mxu0 0.0
    %5711 = vmatpush2.msra.mxu0 0.0
    %5712 = vmatprep.subr.mxu0 0.0
    %5713 = vmatpush2.msra.mxu0 0.0
    %5714 = vmatprep.subr.mxu0 0.0
    %5715 = vmatpush2.msra.mxu0 0.0
    %5716 = vmatprep.mubr.f32.mxu0 0.0
    %5717 = vmatmul.mubr.f32.gmra.mxu0 %v5650
    %v5718 = vpop.f32.mrf.mxu0
    %v5719 = vadd.f32 0.0, %v5718
    %v5720 = vpop.f32.mrf.mxu0
    %5721 = vdwg.mxu0
    %v5723 = vsel %vm1267, %v5253, 0
    %5725 = vmatprep.subr.mxu0 0.0
    %5726 = vmatpush1.msra.mxu0 0.0
    %5727 = vmatprep.subr.mxu0 0.0
    %5728 = vmatpush1.msra.mxu0 0.0
    %5729 = vmatprep.subr.mxu0 0.0
    %5730 = vmatpush1.msra.mxu0 0.0
    %5731 = vmatprep.subr.mxu0 0.0
    %5732 = vmatpush1.msra.mxu0 0.0
    %5733 = vmatprep.subr.mxu0 0.0
    %5734 = vmatpush1.msra.mxu0 0.0
    %5735 = vmatprep.subr.mxu0 0.0
    %5736 = vmatpush1.msra.mxu0 0.0
    %5737 = vmatprep.subr.mxu0 0.0
    %5738 = vmatpush1.msra.mxu0 0.0
    %5739 = vmatprep.subr.mxu0 0.0
    %5740 = vmatpush1.msra.mxu0 0.0
    %5741 = vmatprep.subr.mxu0 0.0
    %5742 = vmatpush1.msra.mxu0 0.0
    %5743 = vmatprep.subr.mxu0 0.0
    %5744 = vmatpush1.msra.mxu0 0.0
    %5745 = vmatprep.subr.mxu0 0.0
    %5746 = vmatpush1.msra.mxu0 0.0
    %5747 = vmatprep.subr.mxu0 0.0
    %5748 = vmatpush1.msra.mxu0 0.0
    %5749 = vmatprep.subr.mxu0 0.0
    %5750 = vmatpush1.msra.mxu0 0.0
    %5751 = vmatprep.subr.mxu0 0.0
    %5752 = vmatpush1.msra.mxu0 %v1273
    %5753 = vmatprep.subr.mxu0 0.0
    %5754 = vmatpush1.msra.mxu0 %v72
    %5755 = vmatprep.subr.mxu0 0.0
    %5756 = vmatpush1.msra.mxu0 %v71
    %5757 = vmatprep.subr.mxu0 0.0
    %5758 = vmatpush2.msra.mxu0 0.0
    %5759 = vmatprep.subr.mxu0 0.0
    %5760 = vmatpush2.msra.mxu0 0.0
    %5761 = vmatprep.subr.mxu0 0.0
    %5762 = vmatpush2.msra.mxu0 0.0
    %5763 = vmatprep.subr.mxu0 0.0
    %5764 = vmatpush2.msra.mxu0 0.0
    %5765 = vmatprep.subr.mxu0 0.0
    %5766 = vmatpush2.msra.mxu0 0.0
    %5767 = vmatprep.subr.mxu0 0.0
    %5768 = vmatpush2.msra.mxu0 0.0
    %5769 = vmatprep.subr.mxu0 0.0
    %5770 = vmatpush2.msra.mxu0 0.0
    %5771 = vmatprep.subr.mxu0 0.0
    %5772 = vmatpush2.msra.mxu0 0.0
    %5773 = vmatprep.subr.mxu0 0.0
    %5774 = vmatpush2.msra.mxu0 0.0
    %5775 = vmatprep.subr.mxu0 0.0
    %5776 = vmatpush2.msra.mxu0 0.0
    %5777 = vmatprep.subr.mxu0 0.0
    %5778 = vmatpush2.msra.mxu0 0.0
    %5779 = vmatprep.subr.mxu0 0.0
    %5780 = vmatpush2.msra.mxu0 0.0
    %5781 = vmatprep.subr.mxu0 0.0
    %5782 = vmatpush2.msra.mxu0 0.0
    %5783 = vmatprep.subr.mxu0 0.0
    %5784 = vmatpush2.msra.mxu0 0.0
    %5785 = vmatprep.subr.mxu0 0.0
    %5786 = vmatpush2.msra.mxu0 0.0
    %5787 = vmatprep.subr.mxu0 0.0
    %5788 = vmatpush2.msra.mxu0 0.0
    %5789 = vmatprep.mubr.f32.mxu0 0.0
    %5790 = vmatmul.mubr.f32.gmra.mxu0 %v5723
    %v5791 = vpop.f32.mrf.mxu0
    %v5792 = vadd.f32 %v5719, %v5791
    %v5793 = vpop.f32.mrf.mxu0
    %5794 = vdwg.mxu0
    %v5795 = vadd.f32 %v5792, %v118
    %5796 = vrot.lane.b32.xlu0 %v5155, 96
    %v5797 = vpop.permute.xlu0 %5796
    %v5799 = vadd.f32 %v5795, %v5797
    %v5800 = vxor.u32 %v5799, 2147483648
    %v5801 = vmul.f32 %v5800, 1.442695
    %v5802 = vpow.pop %v5801
    %v5803 = vadd.f32 %v5802, 1.0
    %v5804 = vrcp.pop %v5803
    %v5805 = vmul.f32 1.0, %v5804
    %5806 = vrot.lane.b32.xlu0 %v5155, 32
    %v5807 = vpop.permute.xlu0 %5806
    %v5809 = vmul.f32 %v5805, %v5807
    %5811 = vrot.lane.b32.xlu0 %v5809, 64
    %v5812 = vpop.permute.xlu0 %5811
    %v5814 = vadd.f32 %v5795, %v5812
    %v5815 = vtanh.pop %v5814
    %v5816 = vsub.f32 1.0, %v5805
    %5818 = vrot.lane.b32.xlu0 %v5815, 96
    %v5819 = vpop.permute.xlu0 %5818
    %v5821 = vmul.f32 %v5816, %v5819
    %v5822 = vmul.f32 %v5805, %v5082
    %v5823 = vadd.f32 %v5821, %v5822
    %5825 = vrot.lane.b32.xlu0 %v5823, 96
    %v5826 = vpop.permute.xlu0 %5825
    %v5827 = vsel %vm381, %v5826, 0
    %5829 = vmatprep.subr.mxu0 0.0
    %5830 = vmatpush1.msra.mxu0 0.0
    %5831 = vmatprep.subr.mxu0 0.0
    %5832 = vmatpush1.msra.mxu0 0.0
    %5833 = vmatprep.subr.mxu0 0.0
    %5834 = vmatpush1.msra.mxu0 0.0
    %5835 = vmatprep.subr.mxu0 0.0
    %5836 = vmatpush1.msra.mxu0 0.0
    %5837 = vmatprep.subr.mxu0 0.0
    %5838 = vmatpush1.msra.mxu0 0.0
    %5839 = vmatprep.subr.mxu0 0.0
    %5840 = vmatpush1.msra.mxu0 0.0
    %5841 = vmatprep.subr.mxu0 0.0
    %5842 = vmatpush1.msra.mxu0 0.0
    %5843 = vmatprep.subr.mxu0 0.0
    %5844 = vmatpush1.msra.mxu0 0.0
    %5845 = vmatprep.subr.mxu0 0.0
    %5846 = vmatpush1.msra.mxu0 0.0
    %5847 = vmatprep.subr.mxu0 0.0
    %5848 = vmatpush1.msra.mxu0 0.0
    %5849 = vmatprep.subr.mxu0 0.0
    %5850 = vmatpush1.msra.mxu0 0.0
    %5851 = vmatprep.subr.mxu0 0.0
    %5852 = vmatpush1.msra.mxu0 0.0
    %5853 = vmatprep.subr.mxu0 %v85
    %5854 = vmatpush1.msra.mxu0 %v84
    %5855 = vmatprep.subr.mxu0 %v83
    %5856 = vmatpush1.msra.mxu0 %v82
    %5857 = vmatprep.subr.mxu0 %v81
    %5858 = vmatpush1.msra.mxu0 %v80
    %5859 = vmatprep.subr.mxu0 %v79
    %5860 = vmatpush1.msra.mxu0 %v78
    %5861 = vmatprep.subr.mxu0 0.0
    %5862 = vmatpush2.msra.mxu0 0.0
    %5863 = vmatprep.subr.mxu0 0.0
    %5864 = vmatpush2.msra.mxu0 0.0
    %5865 = vmatprep.subr.mxu0 0.0
    %5866 = vmatpush2.msra.mxu0 0.0
    %5867 = vmatprep.subr.mxu0 0.0
    %5868 = vmatpush2.msra.mxu0 0.0
    %5869 = vmatprep.subr.mxu0 0.0
    %5870 = vmatpush2.msra.mxu0 0.0
    %5871 = vmatprep.subr.mxu0 0.0
    %5872 = vmatpush2.msra.mxu0 0.0
    %5873 = vmatprep.subr.mxu0 0.0
    %5874 = vmatpush2.msra.mxu0 0.0
    %5875 = vmatprep.subr.mxu0 0.0
    %5876 = vmatpush2.msra.mxu0 0.0
    %5877 = vmatprep.subr.mxu0 0.0
    %5878 = vmatpush2.msra.mxu0 0.0
    %5879 = vmatprep.subr.mxu0 0.0
    %5880 = vmatpush2.msra.mxu0 0.0
    %5881 = vmatprep.subr.mxu0 0.0
    %5882 = vmatpush2.msra.mxu0 0.0
    %5883 = vmatprep.subr.mxu0 0.0
    %5884 = vmatpush2.msra.mxu0 0.0
    %5885 = vmatprep.subr.mxu0 0.0
    %5886 = vmatpush2.msra.mxu0 0.0
    %5887 = vmatprep.subr.mxu0 0.0
    %5888 = vmatpush2.msra.mxu0 0.0
    %5889 = vmatprep.subr.mxu0 0.0
    %5890 = vmatpush2.msra.mxu0 0.0
    %5891 = vmatprep.subr.mxu0 0.0
    %5892 = vmatpush2.msra.mxu0 0.0
    %5893 = vmatprep.mubr.f32.mxu0 0.0
    %5894 = vmatmul.mubr.f32.gmra.mxu0 %v5827
    %v5895 = vpop.f32.mrf.mxu0
    %v5896 = vadd.f32 %v106, %v5895
    %v5897 = vpop.f32.mrf.mxu0
    %v5898 = vadd.f32 %v110, %v5897
    %5899 = vdwg.mxu0
    %v5900 = vsel %vm1271, %v5898, -inf
    %5901 = vmax.xlane.f32.xlu0 %v5900
    %v5902 = vpop.xlane.xlu0 %5901
    %v5903 = vsub.f32 %v5898, %v5902
    %v5904 = vmul.f32 %v5903, 1.442695
    %v5905 = vpow.pop %v5904
    %v5906 = vsel %vm1271, %v5905, 0.0
    %5907 = vadd.xlane.f32.xlu0 %v5906
    %v5908 = vpop.xlane.xlu0 %5907
    %v5909 = vlog2.pop %v5908
    %v5910 = vmul.f32 %v5909, 0.6931472
    %v5911 = vadd.f32 %v5910, %v5902
    %v5912 = vsub.f32 %v5898, %v5911
    %v5915 = vunpack.c.l.s4 1966171168
    %v5916 = vunpack.c.0.s8 %v5915
    %v5917 = vlaneseq
    %v5918 = vshrl.u32 %v5917, 7
    %v5919 = vsub.s32 %v5916, %v5918
    %v5920 = vrot.slane %v5912, %v5919
    %v5921 = vcombine.high %v5920, %v5920
    %v5923 = vunpack.c.l.s4 1966171168
    %v5924 = vunpack.c.0.s8 %v5923
    %v5925 = vlaneseq
    %v5926 = vshrl.u32 %v5925, 7
    %v5927 = vsub.s32 %v5924, %v5926
    %v5928 = vrot.slane %v5920, %v5927
    %v5930 = vunpack.c.l.s4 1966171168
    %v5931 = vunpack.c.0.s8 %v5930
    %v5932 = vlaneseq
    %v5933 = vshrl.u32 %v5932, 7
    %v5934 = vsub.s32 %v5931, %v5933
    %v5935 = vrot.slane %v5921, %v5934
    %v5936 = vcombine.high %v5928, %v5928
    %v5937 = vcombine.high %v5935, %v5935
    %5942 = vst [vmem:[%s11 + $0x6] sm:$0x1] %v5928
    %5943 = vst [vmem:[%s11 + $0x16] sm:$0x1] %v5935
    %5944 = vst [vmem:[%s11 + $0x26] sm:$0x1] %v5936
    %5945 = vst [vmem:[%s11 + $0x36] sm:$0x1] %v5937
    %v5946 = vlaneseq
    %v5947 = vshrl.u32 %v5946, 7
    %v5948 = vsub.s32 %v577, %v5947
    %v5949 = vrot.slane %v5562, %v5948
    %v5950 = vlaneseq
    %v5951 = vshrl.u32 %v5950, 7
    %v5952 = vsub.s32 %v906, %v5951
    %v5953 = vrot.slane %v5567, %v5952
    %v5954 = vsel %vm911, %v5953, %v5949
    %v5955 = vlaneseq
    %v5956 = vshrl.u32 %v5955, 7
    %v5957 = vsub.s32 %v577, %v5956
    %v5958 = vrot.slane %v5572, %v5957
    %v5959 = vlaneseq
    %v5960 = vshrl.u32 %v5959, 7
    %v5961 = vsub.s32 %v906, %v5960
    %v5962 = vrot.slane %v5577, %v5961
    %v5963 = vsel %vm911, %v5962, %v5958
    %v5964 = vlaneseq
    %v5965 = vshrl.u32 %v5964, 7
    %v5966 = vsub.s32 %v577, %v5965
    %v5967 = vrot.slane %v5582, %v5966
    %v5968 = vlaneseq
    %v5969 = vshrl.u32 %v5968, 7
    %v5970 = vsub.s32 %v906, %v5969
    %v5971 = vrot.slane %v5587, %v5970
    %v5972 = vsel %vm911, %v5971, %v5967
    %v5973 = vlaneseq
    %v5974 = vshrl.u32 %v5973, 7
    %v5975 = vsub.s32 %v577, %v5974
    %v5976 = vrot.slane %v5592, %v5975
    %v5977 = vlaneseq
    %v5978 = vshrl.u32 %v5977, 7
    %v5979 = vsub.s32 %v906, %v5978
    %v5980 = vrot.slane %v5597, %v5979
    %v5981 = vsel %vm911, %v5980, %v5976
    %5986 = vst.msk [vmem:[%s13 + $0x6] sm:$0x1] %vm1539, %v5954
    %5987 = vst.msk [vmem:[%s13 + $0x16] sm:$0x1] %vm1539, %v5963
    %5988 = vst.msk [vmem:[%s13 + $0x26] sm:$0x1] %vm1539, %v5972
    %5989 = vst.msk [vmem:[%s13 + $0x36] sm:$0x1] %vm1539, %v5981
    %5990 = vmax.index.xlane.f32.xlu0 %v5900
    %v5991 = vpop.xlane.xlu0 %5990
    %vm5992 = vcmp.eq.s32.totalorder %v577, %v5991
    %v5993 = vsel %vm5992, 1, 0
    %v5994 = vcvt.s32.f32 %v5993
    %v5997 = vunpack.c.l.s4 1966171168
    %v5998 = vunpack.c.0.s8 %v5997
    %v5999 = vlaneseq
    %v6000 = vshrl.u32 %v5999, 7
    %v6001 = vsub.s32 %v5998, %v6000
    %v6002 = vrot.slane %v5896, %v6001
    %v6003 = vcombine.high %v6002, %v6002
    %v6005 = vunpack.c.l.s4 1966171168
    %v6006 = vunpack.c.0.s8 %v6005
    %v6007 = vlaneseq
    %v6008 = vshrl.u32 %v6007, 7
    %v6009 = vsub.s32 %v6006, %v6008
    %v6010 = vrot.slane %v6002, %v6009
    %v6012 = vunpack.c.l.s4 1966171168
    %v6013 = vunpack.c.0.s8 %v6012
    %v6014 = vlaneseq
    %v6015 = vshrl.u32 %v6014, 7
    %v6016 = vsub.s32 %v6013, %v6015
    %v6017 = vrot.slane %v6003, %v6016
    %v6018 = vcombine.high %v6010, %v6010
    %v6019 = vcombine.high %v6017, %v6017
    %v6020 = vlaneseq
    %v6021 = vshrl.u32 %v6020, 7
    %v6022 = vsub.s32 0, %v6021
    %v6023 = vrot.slane %v6010, %v6022
    %v6024 = vlaneseq
    %v6025 = vshrl.u32 %v6024, 7
    %v6026 = vsub.s32 0, %v6025
    %v6027 = vrot.slane %v6017, %v6026
    %v6028 = vlaneseq
    %v6029 = vshrl.u32 %v6028, 7
    %v6030 = vsub.s32 0, %v6029
    %v6031 = vrot.slane %v6018, %v6030
    %v6032 = vlaneseq
    %v6033 = vshrl.u32 %v6032, 7
    %v6034 = vsub.s32 0, %v6033
    %v6035 = vrot.slane %v6019, %v6034
    %v6040 = vadd.f32 %v6023, %v742
    %v6041 = vadd.f32 %v6023, %v749
    %v6042 = vadd.f32 %v6027, %v766
    %v6043 = vadd.f32 %v6027, %v773
    %v6044 = vadd.f32 %v6031, %v790
    %v6045 = vadd.f32 %v6031, %v797
    %v6046 = vadd.f32 %v6035, %v814
    %v6047 = vadd.f32 %v6035, %v821
    %v6048 = vtanh.pop %v6040
    %v6049 = vtanh.pop %v6041
    %v6050 = vtanh.pop %v6042
    %v6051 = vtanh.pop %v6043
    %v6052 = vtanh.pop %v6044
    %v6053 = vtanh.pop %v6045
    %v6054 = vtanh.pop %v6046
    %v6055 = vtanh.pop %v6047
    %v6056 = vmul.f32 %v6048, %v850
    %v6057 = vmul.f32 %v6049, %v850
    %v6058 = vmul.f32 %v6050, %v850
    %v6059 = vmul.f32 %v6051, %v850
    %v6060 = vmul.f32 %v6052, %v850
    %v6061 = vmul.f32 %v6053, %v850
    %v6062 = vmul.f32 %v6054, %v850
    %v6063 = vmul.f32 %v6055, %v850
    %v6064 = vsel %vm381, %v6056, 0.0
    %6065 = vadd.xlane.f32.xlu0 %v6064
    %v6066 = vpop.xlane.xlu0 %6065
    %v6067 = vsel %vm863, %v6057, 0.0
    %6068 = vadd.xlane.f32.xlu0 %v6067
    %v6069 = vpop.xlane.xlu0 %6068
    %v6070 = vsel %vm381, %v6058, 0.0
    %6071 = vadd.xlane.f32.xlu0 %v6070
    %v6072 = vpop.xlane.xlu0 %6071
    %v6073 = vsel %vm863, %v6059, 0.0
    %6074 = vadd.xlane.f32.xlu0 %v6073
    %v6075 = vpop.xlane.xlu0 %6074
    %v6076 = vsel %vm381, %v6060, 0.0
    %6077 = vadd.xlane.f32.xlu0 %v6076
    %v6078 = vpop.xlane.xlu0 %6077
    %v6079 = vsel %vm863, %v6061, 0.0
    %6080 = vadd.xlane.f32.xlu0 %v6079
    %v6081 = vpop.xlane.xlu0 %6080
    %v6082 = vsel %vm381, %v6062, 0.0
    %6083 = vadd.xlane.f32.xlu0 %v6082
    %v6084 = vpop.xlane.xlu0 %6083
    %v6085 = vsel %vm863, %v6063, 0.0
    %6086 = vadd.xlane.f32.xlu0 %v6085
    %v6087 = vpop.xlane.xlu0 %6086
    %v6088 = vadd.f32 %v6066, %v885
    %v6089 = vadd.f32 %v6069, %v885
    %v6090 = vadd.f32 %v6072, %v885
    %v6091 = vadd.f32 %v6075, %v885
    %v6092 = vadd.f32 %v6078, %v885
    %v6093 = vadd.f32 %v6081, %v885
    %v6094 = vadd.f32 %v6084, %v885
    %v6095 = vadd.f32 %v6087, %v885
    %v6104 = vlaneseq
    %v6105 = vshrl.u32 %v6104, 7
    %v6106 = vsub.s32 %v577, %v6105
    %v6107 = vrot.slane %v6088, %v6106
    %v6108 = vlaneseq
    %v6109 = vshrl.u32 %v6108, 7
    %v6110 = vsub.s32 %v906, %v6109
    %v6111 = vrot.slane %v6089, %v6110
    %v6112 = vsel %vm911, %v6111, %v6107
    %v6113 = vlaneseq
    %v6114 = vshrl.u32 %v6113, 7
    %v6115 = vsub.s32 %v577, %v6114
    %v6116 = vrot.slane %v6090, %v6115
    %v6117 = vlaneseq
    %v6118 = vshrl.u32 %v6117, 7
    %v6119 = vsub.s32 %v906, %v6118
    %v6120 = vrot.slane %v6091, %v6119
    %v6121 = vsel %vm911, %v6120, %v6116
    %v6122 = vlaneseq
    %v6123 = vshrl.u32 %v6122, 7
    %v6124 = vsub.s32 %v577, %v6123
    %v6125 = vrot.slane %v6092, %v6124
    %v6126 = vlaneseq
    %v6127 = vshrl.u32 %v6126, 7
    %v6128 = vsub.s32 %v906, %v6127
    %v6129 = vrot.slane %v6093, %v6128
    %v6130 = vsel %vm911, %v6129, %v6125
    %v6131 = vlaneseq
    %v6132 = vshrl.u32 %v6131, 7
    %v6133 = vsub.s32 %v577, %v6132
    %v6134 = vrot.slane %v6094, %v6133
    %v6135 = vlaneseq
    %v6136 = vshrl.u32 %v6135, 7
    %v6137 = vsub.s32 %v906, %v6136
    %v6138 = vrot.slane %v6095, %v6137
    %v6139 = vsel %vm911, %v6138, %v6134
    %v6140 = vsel %vm940, %v6121, %v6112
    %v6141 = vsel %vm942, %v6130, %v6140
    %v6142 = vsel %vm944, %v6139, %v6141
    %v6144 = vsel %vm947, %v6142, -inf
    %6145 = vmax.xlane.f32.xlu0 %v6144
    %v6146 = vpop.xlane.xlu0 %6145
    %v6148 = vlaneseq
    %v6149 = vshrl.u32 %v6148, 7
    %v6150 = vsub.s32 0, %v6149
    %v6151 = vrot.slane %v6146, %v6150
    %v6152 = vlaneseq
    %v6153 = vshrl.u32 %v6152, 7
    %v6154 = vsub.s32 1, %v6153
    %v6155 = vrot.slane %v6146, %v6154
    %v6156 = vlaneseq
    %v6157 = vshrl.u32 %v6156, 7
    %v6158 = vsub.s32 2, %v6157
    %v6159 = vrot.slane %v6146, %v6158
    %v6160 = vlaneseq
    %v6161 = vshrl.u32 %v6160, 7
    %v6162 = vsub.s32 3, %v6161
    %v6163 = vrot.slane %v6146, %v6162
    %v6168 = vsub.f32 %v6088, %v6151
    %v6169 = vsub.f32 %v6089, %v6151
    %v6170 = vsub.f32 %v6090, %v6155
    %v6171 = vsub.f32 %v6091, %v6155
    %v6172 = vsub.f32 %v6092, %v6159
    %v6173 = vsub.f32 %v6093, %v6159
    %v6174 = vsub.f32 %v6094, %v6163
    %v6175 = vsub.f32 %v6095, %v6163
    %v6176 = vmul.f32 %v6168, 1.442695
    %v6177 = vpow.pop %v6176
    %v6178 = vmul.f32 %v6169, 1.442695
    %v6179 = vpow.pop %v6178
    %v6180 = vmul.f32 %v6170, 1.442695
    %v6181 = vpow.pop %v6180
    %v6182 = vmul.f32 %v6171, 1.442695
    %v6183 = vpow.pop %v6182
    %v6184 = vmul.f32 %v6172, 1.442695
    %v6185 = vpow.pop %v6184
    %v6186 = vmul.f32 %v6173, 1.442695
    %v6187 = vpow.pop %v6186
    %v6188 = vmul.f32 %v6174, 1.442695
    %v6189 = vpow.pop %v6188
    %v6190 = vmul.f32 %v6175, 1.442695
    %v6191 = vpow.pop %v6190
    %6200 = vset.pattern.permute.xlu0 0
    %6201 = vperm.xlu0 %6200, %v6177
    %v6202 = vpop.permute.xlu0 %6201
    %6203 = vset.pattern.permute.xlu0 0
    %6204 = vperm.xlu0 %6203, %v6179
    %v6205 = vpop.permute.xlu0 %6204
    %6206 = vset.pattern.permute.xlu0 0
    %6207 = vperm.xlu0 %6206, %v6181
    %v6208 = vpop.permute.xlu0 %6207
    %6209 = vset.pattern.permute.xlu0 0
    %6210 = vperm.xlu0 %6209, %v6183
    %v6211 = vpop.permute.xlu0 %6210
    %6212 = vset.pattern.permute.xlu0 0
    %6213 = vperm.xlu0 %6212, %v6185
    %v6214 = vpop.permute.xlu0 %6213
    %6215 = vset.pattern.permute.xlu0 0
    %6216 = vperm.xlu0 %6215, %v6187
    %v6217 = vpop.permute.xlu0 %6216
    %6218 = vset.pattern.permute.xlu0 0
    %6219 = vperm.xlu0 %6218, %v6189
    %v6220 = vpop.permute.xlu0 %6219
    %6221 = vset.pattern.permute.xlu0 0
    %6222 = vperm.xlu0 %6221, %v6191
    %v6223 = vpop.permute.xlu0 %6222
    %v6224 = vlaneseq
    %v6225 = vshrl.u32 %v6224, 7
    %v6226 = vsub.s32 %v577, %v6225
    %v6227 = vrot.slane %v6202, %v6226
    %v6228 = vlaneseq
    %v6229 = vshrl.u32 %v6228, 7
    %v6230 = vsub.s32 %v906, %v6229
    %v6231 = vrot.slane %v6205, %v6230
    %v6232 = vsel %vm911, %v6231, %v6227
    %v6233 = vlaneseq
    %v6234 = vshrl.u32 %v6233, 7
    %v6235 = vsub.s32 %v577, %v6234
    %v6236 = vrot.slane %v6208, %v6235
    %v6237 = vlaneseq
    %v6238 = vshrl.u32 %v6237, 7
    %v6239 = vsub.s32 %v906, %v6238
    %v6240 = vrot.slane %v6211, %v6239
    %v6241 = vsel %vm911, %v6240, %v6236
    %v6242 = vlaneseq
    %v6243 = vshrl.u32 %v6242, 7
    %v6244 = vsub.s32 %v577, %v6243
    %v6245 = vrot.slane %v6214, %v6244
    %v6246 = vlaneseq
    %v6247 = vshrl.u32 %v6246, 7
    %v6248 = vsub.s32 %v906, %v6247
    %v6249 = vrot.slane %v6217, %v6248
    %v6250 = vsel %vm911, %v6249, %v6245
    %v6251 = vlaneseq
    %v6252 = vshrl.u32 %v6251, 7
    %v6253 = vsub.s32 %v577, %v6252
    %v6254 = vrot.slane %v6220, %v6253
    %v6255 = vlaneseq
    %v6256 = vshrl.u32 %v6255, 7
    %v6257 = vsub.s32 %v906, %v6256
    %v6258 = vrot.slane %v6223, %v6257
    %v6259 = vsel %vm911, %v6258, %v6254
    %v6260 = vsel %vm940, %v6241, %v6232
    %v6261 = vsel %vm942, %v6250, %v6260
    %v6262 = vsel %vm944, %v6259, %v6261
    %v6264 = vsel %vm947, %v6262, 0.0
    %6265 = vadd.xlane.f32.xlu0 %v6264
    %v6266 = vpop.xlane.xlu0 %6265
    %v6268 = vlaneseq
    %v6269 = vshrl.u32 %v6268, 7
    %v6270 = vsub.s32 0, %v6269
    %v6271 = vrot.slane %v6266, %v6270
    %v6272 = vlaneseq
    %v6273 = vshrl.u32 %v6272, 7
    %v6274 = vsub.s32 1, %v6273
    %v6275 = vrot.slane %v6266, %v6274
    %v6276 = vlaneseq
    %v6277 = vshrl.u32 %v6276, 7
    %v6278 = vsub.s32 2, %v6277
    %v6279 = vrot.slane %v6266, %v6278
    %v6280 = vlaneseq
    %v6281 = vshrl.u32 %v6280, 7
    %v6282 = vsub.s32 3, %v6281
    %v6283 = vrot.slane %v6266, %v6282
    %v6288 = vrcp.pop %v6271
    %v6289 = vmul.f32 %v6177, %v6288
    %v6290 = vmul.f32 %v6179, %v6288
    %v6291 = vrcp.pop %v6275
    %v6292 = vmul.f32 %v6181, %v6291
    %v6293 = vmul.f32 %v6183, %v6291
    %v6294 = vrcp.pop %v6279
    %v6295 = vmul.f32 %v6185, %v6294
    %v6296 = vmul.f32 %v6187, %v6294
    %v6297 = vrcp.pop %v6283
    %v6298 = vmul.f32 %v6189, %v6297
    %v6299 = vmul.f32 %v6191, %v6297
    %6301 = vset.pattern.permute.xlu0 0
    %6302 = vperm.xlu0 %6301, %v6289
    %v6303 = vpop.permute.xlu0 %6302
    %6306 = vset.pattern.permute.xlu0 0
    %6307 = vperm.xlu0 %6306, %v6290
    %v6308 = vpop.permute.xlu0 %6307
    %6311 = vset.pattern.permute.xlu0 0
    %6312 = vperm.xlu0 %6311, %v6292
    %v6313 = vpop.permute.xlu0 %6312
    %6316 = vset.pattern.permute.xlu0 0
    %6317 = vperm.xlu0 %6316, %v6293
    %v6318 = vpop.permute.xlu0 %6317
    %6321 = vset.pattern.permute.xlu0 0
    %6322 = vperm.xlu0 %6321, %v6295
    %v6323 = vpop.permute.xlu0 %6322
    %6326 = vset.pattern.permute.xlu0 0
    %6327 = vperm.xlu0 %6326, %v6296
    %v6328 = vpop.permute.xlu0 %6327
    %6331 = vset.pattern.permute.xlu0 0
    %6332 = vperm.xlu0 %6331, %v6298
    %v6333 = vpop.permute.xlu0 %6332
    %6336 = vset.pattern.permute.xlu0 0
    %6337 = vperm.xlu0 %6336, %v6299
    %v6338 = vpop.permute.xlu0 %6337
    %v6340 = vmul.f32 %v6303, %v93
    %v6341 = vmul.f32 %v6308, %v94
    %v6342 = vmul.f32 %v6313, %v95
    %v6343 = vmul.f32 %v6318, %v96
    %v6344 = vmul.f32 %v6323, %v97
    %v6345 = vmul.f32 %v6328, %v98
    %v6346 = vmul.f32 %v6333, %v99
    %v6347 = vmul.f32 %v6338, %v100
    %v6348 = vsel %vm381, %v6340, 0.0
    %v6349 = vsel %vm863, %v6341, 0.0
    %v6350 = vadd.f32 %v6348, %v6349
    %v6351 = vrot.slane %v6350, 4
    %v6352 = vadd.f32 %v6350, %v6351
    %v6353 = vrot.slane %v6352, 2
    %v6354 = vadd.f32 %v6352, %v6353
    %v6355 = vrot.slane %v6354, 1
    %v6356 = vadd.f32 %v6354, %v6355
    %v6357 = vsel %vm381, %v6342, 0.0
    %v6358 = vsel %vm863, %v6343, 0.0
    %v6359 = vadd.f32 %v6357, %v6358
    %v6360 = vrot.slane %v6359, 4
    %v6361 = vadd.f32 %v6359, %v6360
    %v6362 = vrot.slane %v6361, 2
    %v6363 = vadd.f32 %v6361, %v6362
    %v6364 = vrot.slane %v6363, 1
    %v6365 = vadd.f32 %v6363, %v6364
    %v6366 = vsel %vm381, %v6344, 0.0
    %v6367 = vsel %vm863, %v6345, 0.0
    %v6368 = vadd.f32 %v6366, %v6367
    %v6369 = vrot.slane %v6368, 4
    %v6370 = vadd.f32 %v6368, %v6369
    %v6371 = vrot.slane %v6370, 2
    %v6372 = vadd.f32 %v6370, %v6371
    %v6373 = vrot.slane %v6372, 1
    %v6374 = vadd.f32 %v6372, %v6373
    %v6375 = vsel %vm381, %v6346, 0.0
    %v6376 = vsel %vm863, %v6347, 0.0
    %v6377 = vadd.f32 %v6375, %v6376
    %v6378 = vrot.slane %v6377, 4
    %v6379 = vadd.f32 %v6377, %v6378
    %v6380 = vrot.slane %v6379, 2
    %v6381 = vadd.f32 %v6379, %v6380
    %v6382 = vrot.slane %v6381, 1
    %v6383 = vadd.f32 %v6381, %v6382
    %v6388 = vsel %vm940, %v6365, %v6356
    %v6389 = vsel %vm942, %v6374, %v6388
    %v6390 = vsel %vm944, %v6383, %v6389
    %v6391 = vsel %vm381, %v6390, 0
    %6393 = vmatprep.subr.mxu0 0.0
    %6394 = vmatpush1.msra.mxu0 0.0
    %6395 = vmatprep.subr.mxu0 0.0
    %6396 = vmatpush1.msra.mxu0 0.0
    %6397 = vmatprep.subr.mxu0 0.0
    %6398 = vmatpush1.msra.mxu0 0.0
    %6399 = vmatprep.subr.mxu0 0.0
    %6400 = vmatpush1.msra.mxu0 0.0
    %6401 = vmatprep.subr.mxu0 0.0
    %6402 = vmatpush1.msra.mxu0 0.0
    %6403 = vmatprep.subr.mxu0 0.0
    %6404 = vmatpush1.msra.mxu0 0.0
    %6405 = vmatprep.subr.mxu0 0.0
    %6406 = vmatpush1.msra.mxu0 0.0
    %6407 = vmatprep.subr.mxu0 0.0
    %6408 = vmatpush1.msra.mxu0 0.0
    %6409 = vmatprep.subr.mxu0 0.0
    %6410 = vmatpush1.msra.mxu0 0.0
    %6411 = vmatprep.subr.mxu0 0.0
    %6412 = vmatpush1.msra.mxu0 0.0
    %6413 = vmatprep.subr.mxu0 0.0
    %6414 = vmatpush1.msra.mxu0 0.0
    %6415 = vmatprep.subr.mxu0 0.0
    %6416 = vmatpush1.msra.mxu0 0.0
    %6417 = vmatprep.subr.mxu0 0.0
    %6418 = vmatpush1.msra.mxu0 %v77
    %6419 = vmatprep.subr.mxu0 0.0
    %6420 = vmatpush1.msra.mxu0 %v76
    %6421 = vmatprep.subr.mxu0 0.0
    %6422 = vmatpush1.msra.mxu0 %v75
    %6423 = vmatprep.subr.mxu0 0.0
    %6424 = vmatpush1.msra.mxu0 %v74
    %6425 = vmatprep.subr.mxu0 0.0
    %6426 = vmatpush2.msra.mxu0 0.0
    %6427 = vmatprep.subr.mxu0 0.0
    %6428 = vmatpush2.msra.mxu0 0.0
    %6429 = vmatprep.subr.mxu0 0.0
    %6430 = vmatpush2.msra.mxu0 0.0
    %6431 = vmatprep.subr.mxu0 0.0
    %6432 = vmatpush2.msra.mxu0 0.0
    %6433 = vmatprep.subr.mxu0 0.0
    %6434 = vmatpush2.msra.mxu0 0.0
    %6435 = vmatprep.subr.mxu0 0.0
    %6436 = vmatpush2.msra.mxu0 0.0
    %6437 = vmatprep.subr.mxu0 0.0
    %6438 = vmatpush2.msra.mxu0 0.0
    %6439 = vmatprep.subr.mxu0 0.0
    %6440 = vmatpush2.msra.mxu0 0.0
    %6441 = vmatprep.subr.mxu0 0.0
    %6442 = vmatpush2.msra.mxu0 0.0
    %6443 = vmatprep.subr.mxu0 0.0
    %6444 = vmatpush2.msra.mxu0 0.0
    %6445 = vmatprep.subr.mxu0 0.0
    %6446 = vmatpush2.msra.mxu0 0.0
    %6447 = vmatprep.subr.mxu0 0.0
    %6448 = vmatpush2.msra.mxu0 0.0
    %6449 = vmatprep.subr.mxu0 0.0
    %6450 = vmatpush2.msra.mxu0 0.0
    %6451 = vmatprep.subr.mxu0 0.0
    %6452 = vmatpush2.msra.mxu0 0.0
    %6453 = vmatprep.subr.mxu0 0.0
    %6454 = vmatpush2.msra.mxu0 0.0
    %6455 = vmatprep.subr.mxu0 0.0
    %6456 = vmatpush2.msra.mxu0 0.0
    %6457 = vmatprep.mubr.f32.mxu0 0.0
    %6458 = vmatmul.mubr.f32.gmra.mxu0 %v6391
    %v6459 = vpop.f32.mrf.mxu0
    %v6460 = vadd.f32 0.0, %v6459
    %v6461 = vpop.f32.mrf.mxu0
    %6462 = vdwg.mxu0
    %v6464 = vsel %vm1267, %v5994, 0
    %6466 = vmatprep.subr.mxu0 0.0
    %6467 = vmatpush1.msra.mxu0 0.0
    %6468 = vmatprep.subr.mxu0 0.0
    %6469 = vmatpush1.msra.mxu0 0.0
    %6470 = vmatprep.subr.mxu0 0.0
    %6471 = vmatpush1.msra.mxu0 0.0
    %6472 = vmatprep.subr.mxu0 0.0
    %6473 = vmatpush1.msra.mxu0 0.0
    %6474 = vmatprep.subr.mxu0 0.0
    %6475 = vmatpush1.msra.mxu0 0.0
    %6476 = vmatprep.subr.mxu0 0.0
    %6477 = vmatpush1.msra.mxu0 0.0
    %6478 = vmatprep.subr.mxu0 0.0
    %6479 = vmatpush1.msra.mxu0 0.0
    %6480 = vmatprep.subr.mxu0 0.0
    %6481 = vmatpush1.msra.mxu0 0.0
    %6482 = vmatprep.subr.mxu0 0.0
    %6483 = vmatpush1.msra.mxu0 0.0
    %6484 = vmatprep.subr.mxu0 0.0
    %6485 = vmatpush1.msra.mxu0 0.0
    %6486 = vmatprep.subr.mxu0 0.0
    %6487 = vmatpush1.msra.mxu0 0.0
    %6488 = vmatprep.subr.mxu0 0.0
    %6489 = vmatpush1.msra.mxu0 0.0
    %6490 = vmatprep.subr.mxu0 0.0
    %6491 = vmatpush1.msra.mxu0 0.0
    %6492 = vmatprep.subr.mxu0 0.0
    %6493 = vmatpush1.msra.mxu0 %v1273
    %6494 = vmatprep.subr.mxu0 0.0
    %6495 = vmatpush1.msra.mxu0 %v72
    %6496 = vmatprep.subr.mxu0 0.0
    %6497 = vmatpush1.msra.mxu0 %v71
    %6498 = vmatprep.subr.mxu0 0.0
    %6499 = vmatpush2.msra.mxu0 0.0
    %6500 = vmatprep.subr.mxu0 0.0
    %6501 = vmatpush2.msra.mxu0 0.0
    %6502 = vmatprep.subr.mxu0 0.0
    %6503 = vmatpush2.msra.mxu0 0.0
    %6504 = vmatprep.subr.mxu0 0.0
    %6505 = vmatpush2.msra.mxu0 0.0
    %6506 = vmatprep.subr.mxu0 0.0
    %6507 = vmatpush2.msra.mxu0 0.0
    %6508 = vmatprep.subr.mxu0 0.0
    %6509 = vmatpush2.msra.mxu0 0.0
    %6510 = vmatprep.subr.mxu0 0.0
    %6511 = vmatpush2.msra.mxu0 0.0
    %6512 = vmatprep.subr.mxu0 0.0
    %6513 = vmatpush2.msra.mxu0 0.0
    %6514 = vmatprep.subr.mxu0 0.0
    %6515 = vmatpush2.msra.mxu0 0.0
    %6516 = vmatprep.subr.mxu0 0.0
    %6517 = vmatpush2.msra.mxu0 0.0
    %6518 = vmatprep.subr.mxu0 0.0
    %6519 = vmatpush2.msra.mxu0 0.0
    %6520 = vmatprep.subr.mxu0 0.0
    %6521 = vmatpush2.msra.mxu0 0.0
    %6522 = vmatprep.subr.mxu0 0.0
    %6523 = vmatpush2.msra.mxu0 0.0
    %6524 = vmatprep.subr.mxu0 0.0
    %6525 = vmatpush2.msra.mxu0 0.0
    %6526 = vmatprep.subr.mxu0 0.0
    %6527 = vmatpush2.msra.mxu0 0.0
    %6528 = vmatprep.subr.mxu0 0.0
    %6529 = vmatpush2.msra.mxu0 0.0
    %6530 = vmatprep.mubr.f32.mxu0 0.0
    %6531 = vmatmul.mubr.f32.gmra.mxu0 %v6464
    %v6532 = vpop.f32.mrf.mxu0
    %v6533 = vadd.f32 %v6460, %v6532
    %v6534 = vpop.f32.mrf.mxu0
    %6535 = vdwg.mxu0
    %v6536 = vadd.f32 %v6533, %v118
    %6537 = vrot.lane.b32.xlu0 %v5896, 96
    %v6538 = vpop.permute.xlu0 %6537
    %v6540 = vadd.f32 %v6536, %v6538
    %v6541 = vxor.u32 %v6540, 2147483648
    %v6542 = vmul.f32 %v6541, 1.442695
    %v6543 = vpow.pop %v6542
    %v6544 = vadd.f32 %v6543, 1.0
    %v6545 = vrcp.pop %v6544
    %v6546 = vmul.f32 1.0, %v6545
    %6547 = vrot.lane.b32.xlu0 %v5896, 32
    %v6548 = vpop.permute.xlu0 %6547
    %v6550 = vmul.f32 %v6546, %v6548
    %6552 = vrot.lane.b32.xlu0 %v6550, 64
    %v6553 = vpop.permute.xlu0 %6552
    %v6555 = vadd.f32 %v6536, %v6553
    %v6556 = vtanh.pop %v6555
    %v6557 = vsub.f32 1.0, %v6546
    %6559 = vrot.lane.b32.xlu0 %v6556, 96
    %v6560 = vpop.permute.xlu0 %6559
    %v6562 = vmul.f32 %v6557, %v6560
    %v6563 = vmul.f32 %v6546, %v5823
    %v6564 = vadd.f32 %v6562, %v6563
    %6566 = vrot.lane.b32.xlu0 %v6564, 96
    %v6567 = vpop.permute.xlu0 %6566
    %v6568 = vsel %vm381, %v6567, 0
    %6570 = vmatprep.subr.mxu0 0.0
    %6571 = vmatpush1.msra.mxu0 0.0
    %6572 = vmatprep.subr.mxu0 0.0
    %6573 = vmatpush1.msra.mxu0 0.0
    %6574 = vmatprep.subr.mxu0 0.0
    %6575 = vmatpush1.msra.mxu0 0.0
    %6576 = vmatprep.subr.mxu0 0.0
    %6577 = vmatpush1.msra.mxu0 0.0
    %6578 = vmatprep.subr.mxu0 0.0
    %6579 = vmatpush1.msra.mxu0 0.0
    %6580 = vmatprep.subr.mxu0 0.0
    %6581 = vmatpush1.msra.mxu0 0.0
    %6582 = vmatprep.subr.mxu0 0.0
    %6583 = vmatpush1.msra.mxu0 0.0
    %6584 = vmatprep.subr.mxu0 0.0
    %6585 = vmatpush1.msra.mxu0 0.0
    %6586 = vmatprep.subr.mxu0 0.0
    %6587 = vmatpush1.msra.mxu0 0.0
    %6588 = vmatprep.subr.mxu0 0.0
    %6589 = vmatpush1.msra.mxu0 0.0
    %6590 = vmatprep.subr.mxu0 0.0
    %6591 = vmatpush1.msra.mxu0 0.0
    %6592 = vmatprep.subr.mxu0 0.0
    %6593 = vmatpush1.msra.mxu0 0.0
    %6594 = vmatprep.subr.mxu0 %v85
    %6595 = vmatpush1.msra.mxu0 %v84
    %6596 = vmatprep.subr.mxu0 %v83
    %6597 = vmatpush1.msra.mxu0 %v82
    %6598 = vmatprep.subr.mxu0 %v81
    %6599 = vmatpush1.msra.mxu0 %v80
    %6600 = vmatprep.subr.mxu0 %v79
    %6601 = vmatpush1.msra.mxu0 %v78
    %6602 = vmatprep.subr.mxu0 0.0
    %6603 = vmatpush2.msra.mxu0 0.0
    %6604 = vmatprep.subr.mxu0 0.0
    %6605 = vmatpush2.msra.mxu0 0.0
    %6606 = vmatprep.subr.mxu0 0.0
    %6607 = vmatpush2.msra.mxu0 0.0
    %6608 = vmatprep.subr.mxu0 0.0
    %6609 = vmatpush2.msra.mxu0 0.0
    %6610 = vmatprep.subr.mxu0 0.0
    %6611 = vmatpush2.msra.mxu0 0.0
    %6612 = vmatprep.subr.mxu0 0.0
    %6613 = vmatpush2.msra.mxu0 0.0
    %6614 = vmatprep.subr.mxu0 0.0
    %6615 = vmatpush2.msra.mxu0 0.0
    %6616 = vmatprep.subr.mxu0 0.0
    %6617 = vmatpush2.msra.mxu0 0.0
    %6618 = vmatprep.subr.mxu0 0.0
    %6619 = vmatpush2.msra.mxu0 0.0
    %6620 = vmatprep.subr.mxu0 0.0
    %6621 = vmatpush2.msra.mxu0 0.0
    %6622 = vmatprep.subr.mxu0 0.0
    %6623 = vmatpush2.msra.mxu0 0.0
    %6624 = vmatprep.subr.mxu0 0.0
    %6625 = vmatpush2.msra.mxu0 0.0
    %6626 = vmatprep.subr.mxu0 0.0
    %6627 = vmatpush2.msra.mxu0 0.0
    %6628 = vmatprep.subr.mxu0 0.0
    %6629 = vmatpush2.msra.mxu0 0.0
    %6630 = vmatprep.subr.mxu0 0.0
    %6631 = vmatpush2.msra.mxu0 0.0
    %6632 = vmatprep.subr.mxu0 0.0
    %6633 = vmatpush2.msra.mxu0 0.0
    %6634 = vmatprep.mubr.f32.mxu0 0.0
    %6635 = vmatmul.mubr.f32.gmra.mxu0 %v6568
    %v6636 = vpop.f32.mrf.mxu0
    %v6637 = vadd.f32 %v106, %v6636
    %v6638 = vpop.f32.mrf.mxu0
    %v6639 = vadd.f32 %v110, %v6638
    %6640 = vdwg.mxu0
    %v6641 = vsel %vm1271, %v6639, -inf
    %6642 = vmax.xlane.f32.xlu0 %v6641
    %v6643 = vpop.xlane.xlu0 %6642
    %v6644 = vsub.f32 %v6639, %v6643
    %v6645 = vmul.f32 %v6644, 1.442695
    %v6646 = vpow.pop %v6645
    %v6647 = vsel %vm1271, %v6646, 0.0
    %6648 = vadd.xlane.f32.xlu0 %v6647
    %v6649 = vpop.xlane.xlu0 %6648
    %v6650 = vlog2.pop %v6649
    %v6651 = vmul.f32 %v6650, 0.6931472
    %v6652 = vadd.f32 %v6651, %v6643
    %v6653 = vsub.f32 %v6639, %v6652
    %v6656 = vunpack.c.l.s4 1966171168
    %v6657 = vunpack.c.0.s8 %v6656
    %v6658 = vlaneseq
    %v6659 = vshrl.u32 %v6658, 7
    %v6660 = vsub.s32 %v6657, %v6659
    %v6661 = vrot.slane %v6653, %v6660
    %v6662 = vcombine.high %v6661, %v6661
    %v6664 = vunpack.c.l.s4 1966171168
    %v6665 = vunpack.c.0.s8 %v6664
    %v6666 = vlaneseq
    %v6667 = vshrl.u32 %v6666, 7
    %v6668 = vsub.s32 %v6665, %v6667
    %v6669 = vrot.slane %v6661, %v6668
    %v6671 = vunpack.c.l.s4 1966171168
    %v6672 = vunpack.c.0.s8 %v6671
    %v6673 = vlaneseq
    %v6674 = vshrl.u32 %v6673, 7
    %v6675 = vsub.s32 %v6672, %v6674
    %v6676 = vrot.slane %v6662, %v6675
    %v6677 = vcombine.high %v6669, %v6669
    %v6678 = vcombine.high %v6676, %v6676
    %6683 = vst [vmem:[%s11 + $0x7] sm:$0x1] %v6669
    %6684 = vst [vmem:[%s11 + $0x17] sm:$0x1] %v6676
    %6685 = vst [vmem:[%s11 + $0x27] sm:$0x1] %v6677
    %6686 = vst [vmem:[%s11 + $0x37] sm:$0x1] %v6678
    %v6687 = vlaneseq
    %v6688 = vshrl.u32 %v6687, 7
    %v6689 = vsub.s32 %v577, %v6688
    %v6690 = vrot.slane %v6303, %v6689
    %v6691 = vlaneseq
    %v6692 = vshrl.u32 %v6691, 7
    %v6693 = vsub.s32 %v906, %v6692
    %v6694 = vrot.slane %v6308, %v6693
    %v6695 = vsel %vm911, %v6694, %v6690
    %v6696 = vlaneseq
    %v6697 = vshrl.u32 %v6696, 7
    %v6698 = vsub.s32 %v577, %v6697
    %v6699 = vrot.slane %v6313, %v6698
    %v6700 = vlaneseq
    %v6701 = vshrl.u32 %v6700, 7
    %v6702 = vsub.s32 %v906, %v6701
    %v6703 = vrot.slane %v6318, %v6702
    %v6704 = vsel %vm911, %v6703, %v6699
    %v6705 = vlaneseq
    %v6706 = vshrl.u32 %v6705, 7
    %v6707 = vsub.s32 %v577, %v6706
    %v6708 = vrot.slane %v6323, %v6707
    %v6709 = vlaneseq
    %v6710 = vshrl.u32 %v6709, 7
    %v6711 = vsub.s32 %v906, %v6710
    %v6712 = vrot.slane %v6328, %v6711
    %v6713 = vsel %vm911, %v6712, %v6708
    %v6714 = vlaneseq
    %v6715 = vshrl.u32 %v6714, 7
    %v6716 = vsub.s32 %v577, %v6715
    %v6717 = vrot.slane %v6333, %v6716
    %v6718 = vlaneseq
    %v6719 = vshrl.u32 %v6718, 7
    %v6720 = vsub.s32 %v906, %v6719
    %v6721 = vrot.slane %v6338, %v6720
    %v6722 = vsel %vm911, %v6721, %v6717
    %6727 = vst.msk [vmem:[%s13 + $0x7] sm:$0x1] %vm1539, %v6695
    %6728 = vst.msk [vmem:[%s13 + $0x17] sm:$0x1] %vm1539, %v6704
    %6729 = vst.msk [vmem:[%s13 + $0x27] sm:$0x1] %vm1539, %v6713
    %6730 = vst.msk [vmem:[%s13 + $0x37] sm:$0x1] %vm1539, %v6722
    %6731 = vmax.index.xlane.f32.xlu0 %v6641
    %v6732 = vpop.xlane.xlu0 %6731
    %vm6733 = vcmp.eq.s32.totalorder %v577, %v6732
    %v6734 = vsel %vm6733, 1, 0
    %v6735 = vcvt.s32.f32 %v6734
    %v6738 = vunpack.c.l.s4 1966171168
    %v6739 = vunpack.c.0.s8 %v6738
    %v6740 = vlaneseq
    %v6741 = vshrl.u32 %v6740, 7
    %v6742 = vsub.s32 %v6739, %v6741
    %v6743 = vrot.slane %v6637, %v6742
    %v6744 = vcombine.high %v6743, %v6743
    %v6746 = vunpack.c.l.s4 1966171168
    %v6747 = vunpack.c.0.s8 %v6746
    %v6748 = vlaneseq
    %v6749 = vshrl.u32 %v6748, 7
    %v6750 = vsub.s32 %v6747, %v6749
    %v6751 = vrot.slane %v6743, %v6750
    %v6753 = vunpack.c.l.s4 1966171168
    %v6754 = vunpack.c.0.s8 %v6753
    %v6755 = vlaneseq
    %v6756 = vshrl.u32 %v6755, 7
    %v6757 = vsub.s32 %v6754, %v6756
    %v6758 = vrot.slane %v6744, %v6757
    %v6759 = vcombine.high %v6751, %v6751
    %v6760 = vcombine.high %v6758, %v6758
    %v6761 = vlaneseq
    %v6762 = vshrl.u32 %v6761, 7
    %v6763 = vsub.s32 0, %v6762
    %v6764 = vrot.slane %v6751, %v6763
    %v6765 = vlaneseq
    %v6766 = vshrl.u32 %v6765, 7
    %v6767 = vsub.s32 0, %v6766
    %v6768 = vrot.slane %v6758, %v6767
    %v6769 = vlaneseq
    %v6770 = vshrl.u32 %v6769, 7
    %v6771 = vsub.s32 0, %v6770
    %v6772 = vrot.slane %v6759, %v6771
    %v6773 = vlaneseq
    %v6774 = vshrl.u32 %v6773, 7
    %v6775 = vsub.s32 0, %v6774
    %v6776 = vrot.slane %v6760, %v6775
    %v6781 = vadd.f32 %v6764, %v742
    %v6782 = vadd.f32 %v6764, %v749
    %v6783 = vadd.f32 %v6768, %v766
    %v6784 = vadd.f32 %v6768, %v773
    %v6785 = vadd.f32 %v6772, %v790
    %v6786 = vadd.f32 %v6772, %v797
    %v6787 = vadd.f32 %v6776, %v814
    %v6788 = vadd.f32 %v6776, %v821
    %v6789 = vtanh.pop %v6781
    %v6790 = vtanh.pop %v6782
    %v6791 = vtanh.pop %v6783
    %v6792 = vtanh.pop %v6784
    %v6793 = vtanh.pop %v6785
    %v6794 = vtanh.pop %v6786
    %v6795 = vtanh.pop %v6787
    %v6796 = vtanh.pop %v6788
    %v6797 = vmul.f32 %v6789, %v850
    %v6798 = vmul.f32 %v6790, %v850
    %v6799 = vmul.f32 %v6791, %v850
    %v6800 = vmul.f32 %v6792, %v850
    %v6801 = vmul.f32 %v6793, %v850
    %v6802 = vmul.f32 %v6794, %v850
    %v6803 = vmul.f32 %v6795, %v850
    %v6804 = vmul.f32 %v6796, %v850
    %v6805 = vsel %vm381, %v6797, 0.0
    %6806 = vadd.xlane.f32.xlu0 %v6805
    %v6807 = vpop.xlane.xlu0 %6806
    %v6808 = vsel %vm863, %v6798, 0.0
    %6809 = vadd.xlane.f32.xlu0 %v6808
    %v6810 = vpop.xlane.xlu0 %6809
    %v6811 = vsel %vm381, %v6799, 0.0
    %6812 = vadd.xlane.f32.xlu0 %v6811
    %v6813 = vpop.xlane.xlu0 %6812
    %v6814 = vsel %vm863, %v6800, 0.0
    %6815 = vadd.xlane.f32.xlu0 %v6814
    %v6816 = vpop.xlane.xlu0 %6815
    %v6817 = vsel %vm381, %v6801, 0.0
    %6818 = vadd.xlane.f32.xlu0 %v6817
    %v6819 = vpop.xlane.xlu0 %6818
    %v6820 = vsel %vm863, %v6802, 0.0
    %6821 = vadd.xlane.f32.xlu0 %v6820
    %v6822 = vpop.xlane.xlu0 %6821
    %v6823 = vsel %vm381, %v6803, 0.0
    %6824 = vadd.xlane.f32.xlu0 %v6823
    %v6825 = vpop.xlane.xlu0 %6824
    %v6826 = vsel %vm863, %v6804, 0.0
    %6827 = vadd.xlane.f32.xlu0 %v6826
    %v6828 = vpop.xlane.xlu0 %6827
    %v6829 = vadd.f32 %v6807, %v885
    %v6830 = vadd.f32 %v6810, %v885
    %v6831 = vadd.f32 %v6813, %v885
    %v6832 = vadd.f32 %v6816, %v885
    %v6833 = vadd.f32 %v6819, %v885
    %v6834 = vadd.f32 %v6822, %v885
    %v6835 = vadd.f32 %v6825, %v885
    %v6836 = vadd.f32 %v6828, %v885
    %v6845 = vlaneseq
    %v6846 = vshrl.u32 %v6845, 7
    %v6847 = vsub.s32 %v577, %v6846
    %v6848 = vrot.slane %v6829, %v6847
    %v6849 = vlaneseq
    %v6850 = vshrl.u32 %v6849, 7
    %v6851 = vsub.s32 %v906, %v6850
    %v6852 = vrot.slane %v6830, %v6851
    %v6853 = vsel %vm911, %v6852, %v6848
    %v6854 = vlaneseq
    %v6855 = vshrl.u32 %v6854, 7
    %v6856 = vsub.s32 %v577, %v6855
    %v6857 = vrot.slane %v6831, %v6856
    %v6858 = vlaneseq
    %v6859 = vshrl.u32 %v6858, 7
    %v6860 = vsub.s32 %v906, %v6859
    %v6861 = vrot.slane %v6832, %v6860
    %v6862 = vsel %vm911, %v6861, %v6857
    %v6863 = vlaneseq
    %v6864 = vshrl.u32 %v6863, 7
    %v6865 = vsub.s32 %v577, %v6864
    %v6866 = vrot.slane %v6833, %v6865
    %v6867 = vlaneseq
    %v6868 = vshrl.u32 %v6867, 7
    %v6869 = vsub.s32 %v906, %v6868
    %v6870 = vrot.slane %v6834, %v6869
    %v6871 = vsel %vm911, %v6870, %v6866
    %v6872 = vlaneseq
    %v6873 = vshrl.u32 %v6872, 7
    %v6874 = vsub.s32 %v577, %v6873
    %v6875 = vrot.slane %v6835, %v6874
    %v6876 = vlaneseq
    %v6877 = vshrl.u32 %v6876, 7
    %v6878 = vsub.s32 %v906, %v6877
    %v6879 = vrot.slane %v6836, %v6878
    %v6880 = vsel %vm911, %v6879, %v6875
    %v6881 = vsel %vm940, %v6862, %v6853
    %v6882 = vsel %vm942, %v6871, %v6881
    %v6883 = vsel %vm944, %v6880, %v6882
    %v6885 = vsel %vm947, %v6883, -inf
    %6886 = vmax.xlane.f32.xlu0 %v6885
    %v6887 = vpop.xlane.xlu0 %6886
    %v6889 = vlaneseq
    %v6890 = vshrl.u32 %v6889, 7
    %v6891 = vsub.s32 0, %v6890
    %v6892 = vrot.slane %v6887, %v6891
    %v6893 = vlaneseq
    %v6894 = vshrl.u32 %v6893, 7
    %v6895 = vsub.s32 1, %v6894
    %v6896 = vrot.slane %v6887, %v6895
    %v6897 = vlaneseq
    %v6898 = vshrl.u32 %v6897, 7
    %v6899 = vsub.s32 2, %v6898
    %v6900 = vrot.slane %v6887, %v6899
    %v6901 = vlaneseq
    %v6902 = vshrl.u32 %v6901, 7
    %v6903 = vsub.s32 3, %v6902
    %v6904 = vrot.slane %v6887, %v6903
    %v6909 = vsub.f32 %v6829, %v6892
    %v6910 = vsub.f32 %v6830, %v6892
    %v6911 = vsub.f32 %v6831, %v6896
    %v6912 = vsub.f32 %v6832, %v6896
    %v6913 = vsub.f32 %v6833, %v6900
    %v6914 = vsub.f32 %v6834, %v6900
    %v6915 = vsub.f32 %v6835, %v6904
    %v6916 = vsub.f32 %v6836, %v6904
    %v6917 = vmul.f32 %v6909, 1.442695
    %v6918 = vpow.pop %v6917
    %v6919 = vmul.f32 %v6910, 1.442695
    %v6920 = vpow.pop %v6919
    %v6921 = vmul.f32 %v6911, 1.442695
    %v6922 = vpow.pop %v6921
    %v6923 = vmul.f32 %v6912, 1.442695
    %v6924 = vpow.pop %v6923
    %v6925 = vmul.f32 %v6913, 1.442695
    %v6926 = vpow.pop %v6925
    %v6927 = vmul.f32 %v6914, 1.442695
    %v6928 = vpow.pop %v6927
    %v6929 = vmul.f32 %v6915, 1.442695
    %v6930 = vpow.pop %v6929
    %v6931 = vmul.f32 %v6916, 1.442695
    %v6932 = vpow.pop %v6931
    %6941 = vset.pattern.permute.xlu0 0
    %6942 = vperm.xlu0 %6941, %v6918
    %v6943 = vpop.permute.xlu0 %6942
    %6944 = vset.pattern.permute.xlu0 0
    %6945 = vperm.xlu0 %6944, %v6920
    %v6946 = vpop.permute.xlu0 %6945
    %6947 = vset.pattern.permute.xlu0 0
    %6948 = vperm.xlu0 %6947, %v6922
    %v6949 = vpop.permute.xlu0 %6948
    %6950 = vset.pattern.permute.xlu0 0
    %6951 = vperm.xlu0 %6950, %v6924
    %v6952 = vpop.permute.xlu0 %6951
    %6953 = vset.pattern.permute.xlu0 0
    %6954 = vperm.xlu0 %6953, %v6926
    %v6955 = vpop.permute.xlu0 %6954
    %6956 = vset.pattern.permute.xlu0 0
    %6957 = vperm.xlu0 %6956, %v6928
    %v6958 = vpop.permute.xlu0 %6957
    %6959 = vset.pattern.permute.xlu0 0
    %6960 = vperm.xlu0 %6959, %v6930
    %v6961 = vpop.permute.xlu0 %6960
    %6962 = vset.pattern.permute.xlu0 0
    %6963 = vperm.xlu0 %6962, %v6932
    %v6964 = vpop.permute.xlu0 %6963
    %v6965 = vlaneseq
    %v6966 = vshrl.u32 %v6965, 7
    %v6967 = vsub.s32 %v577, %v6966
    %v6968 = vrot.slane %v6943, %v6967
    %v6969 = vlaneseq
    %v6970 = vshrl.u32 %v6969, 7
    %v6971 = vsub.s32 %v906, %v6970
    %v6972 = vrot.slane %v6946, %v6971
    %v6973 = vsel %vm911, %v6972, %v6968
    %v6974 = vlaneseq
    %v6975 = vshrl.u32 %v6974, 7
    %v6976 = vsub.s32 %v577, %v6975
    %v6977 = vrot.slane %v6949, %v6976
    %v6978 = vlaneseq
    %v6979 = vshrl.u32 %v6978, 7
    %v6980 = vsub.s32 %v906, %v6979
    %v6981 = vrot.slane %v6952, %v6980
    %v6982 = vsel %vm911, %v6981, %v6977
    %v6983 = vlaneseq
    %v6984 = vshrl.u32 %v6983, 7
    %v6985 = vsub.s32 %v577, %v6984
    %v6986 = vrot.slane %v6955, %v6985
    %v6987 = vlaneseq
    %v6988 = vshrl.u32 %v6987, 7
    %v6989 = vsub.s32 %v906, %v6988
    %v6990 = vrot.slane %v6958, %v6989
    %v6991 = vsel %vm911, %v6990, %v6986
    %v6992 = vlaneseq
    %v6993 = vshrl.u32 %v6992, 7
    %v6994 = vsub.s32 %v577, %v6993
    %v6995 = vrot.slane %v6961, %v6994
    %v6996 = vlaneseq
    %v6997 = vshrl.u32 %v6996, 7
    %v6998 = vsub.s32 %v906, %v6997
    %v6999 = vrot.slane %v6964, %v6998
    %v7000 = vsel %vm911, %v6999, %v6995
    %v7001 = vsel %vm940, %v6982, %v6973
    %v7002 = vsel %vm942, %v6991, %v7001
    %v7003 = vsel %vm944, %v7000, %v7002
    %v7005 = vsel %vm947, %v7003, 0.0
    %7006 = vadd.xlane.f32.xlu0 %v7005
    %v7007 = vpop.xlane.xlu0 %7006
    %v7009 = vlaneseq
    %v7010 = vshrl.u32 %v7009, 7
    %v7011 = vsub.s32 0, %v7010
    %v7012 = vrot.slane %v7007, %v7011
    %v7013 = vlaneseq
    %v7014 = vshrl.u32 %v7013, 7
    %v7015 = vsub.s32 1, %v7014
    %v7016 = vrot.slane %v7007, %v7015
    %v7017 = vlaneseq
    %v7018 = vshrl.u32 %v7017, 7
    %v7019 = vsub.s32 2, %v7018
    %v7020 = vrot.slane %v7007, %v7019
    %v7021 = vlaneseq
    %v7022 = vshrl.u32 %v7021, 7
    %v7023 = vsub.s32 3, %v7022
    %v7024 = vrot.slane %v7007, %v7023
    %v7029 = vrcp.pop %v7012
    %v7030 = vmul.f32 %v6918, %v7029
    %v7031 = vmul.f32 %v6920, %v7029
    %v7032 = vrcp.pop %v7016
    %v7033 = vmul.f32 %v6922, %v7032
    %v7034 = vmul.f32 %v6924, %v7032
    %v7035 = vrcp.pop %v7020
    %v7036 = vmul.f32 %v6926, %v7035
    %v7037 = vmul.f32 %v6928, %v7035
    %v7038 = vrcp.pop %v7024
    %v7039 = vmul.f32 %v6930, %v7038
    %v7040 = vmul.f32 %v6932, %v7038
    %7042 = vset.pattern.permute.xlu0 0
    %7043 = vperm.xlu0 %7042, %v7030
    %v7044 = vpop.permute.xlu0 %7043
    %7047 = vset.pattern.permute.xlu0 0
    %7048 = vperm.xlu0 %7047, %v7031
    %v7049 = vpop.permute.xlu0 %7048
    %7052 = vset.pattern.permute.xlu0 0
    %7053 = vperm.xlu0 %7052, %v7033
    %v7054 = vpop.permute.xlu0 %7053
    %7057 = vset.pattern.permute.xlu0 0
    %7058 = vperm.xlu0 %7057, %v7034
    %v7059 = vpop.permute.xlu0 %7058
    %7062 = vset.pattern.permute.xlu0 0
    %7063 = vperm.xlu0 %7062, %v7036
    %v7064 = vpop.permute.xlu0 %7063
    %7067 = vset.pattern.permute.xlu0 0
    %7068 = vperm.xlu0 %7067, %v7037
    %v7069 = vpop.permute.xlu0 %7068
    %7072 = vset.pattern.permute.xlu0 0
    %7073 = vperm.xlu0 %7072, %v7039
    %v7074 = vpop.permute.xlu0 %7073
    %7077 = vset.pattern.permute.xlu0 0
    %7078 = vperm.xlu0 %7077, %v7040
    %v7079 = vpop.permute.xlu0 %7078
    %v7081 = vmul.f32 %v7044, %v93
    %v7082 = vmul.f32 %v7049, %v94
    %v7083 = vmul.f32 %v7054, %v95
    %v7084 = vmul.f32 %v7059, %v96
    %v7085 = vmul.f32 %v7064, %v97
    %v7086 = vmul.f32 %v7069, %v98
    %v7087 = vmul.f32 %v7074, %v99
    %v7088 = vmul.f32 %v7079, %v100
    %v7089 = vsel %vm381, %v7081, 0.0
    %v7090 = vsel %vm863, %v7082, 0.0
    %v7091 = vadd.f32 %v7089, %v7090
    %v7092 = vrot.slane %v7091, 4
    %v7093 = vadd.f32 %v7091, %v7092
    %v7094 = vrot.slane %v7093, 2
    %v7095 = vadd.f32 %v7093, %v7094
    %v7096 = vrot.slane %v7095, 1
    %v7097 = vadd.f32 %v7095, %v7096
    %v7098 = vsel %vm381, %v7083, 0.0
    %v7099 = vsel %vm863, %v7084, 0.0
    %v7100 = vadd.f32 %v7098, %v7099
    %v7101 = vrot.slane %v7100, 4
    %v7102 = vadd.f32 %v7100, %v7101
    %v7103 = vrot.slane %v7102, 2
    %v7104 = vadd.f32 %v7102, %v7103
    %v7105 = vrot.slane %v7104, 1
    %v7106 = vadd.f32 %v7104, %v7105
    %v7107 = vsel %vm381, %v7085, 0.0
    %v7108 = vsel %vm863, %v7086, 0.0
    %v7109 = vadd.f32 %v7107, %v7108
    %v7110 = vrot.slane %v7109, 4
    %v7111 = vadd.f32 %v7109, %v7110
    %v7112 = vrot.slane %v7111, 2
    %v7113 = vadd.f32 %v7111, %v7112
    %v7114 = vrot.slane %v7113, 1
    %v7115 = vadd.f32 %v7113, %v7114
    %v7116 = vsel %vm381, %v7087, 0.0
    %v7117 = vsel %vm863, %v7088, 0.0
    %v7118 = vadd.f32 %v7116, %v7117
    %v7119 = vrot.slane %v7118, 4
    %v7120 = vadd.f32 %v7118, %v7119
    %v7121 = vrot.slane %v7120, 2
    %v7122 = vadd.f32 %v7120, %v7121
    %v7123 = vrot.slane %v7122, 1
    %v7124 = vadd.f32 %v7122, %v7123
    %v7129 = vsel %vm940, %v7106, %v7097
    %v7130 = vsel %vm942, %v7115, %v7129
    %v7131 = vsel %vm944, %v7124, %v7130
    %v7132 = vsel %vm381, %v7131, 0
    %7134 = vmatprep.subr.mxu0 0.0
    %7135 = vmatpush1.msra.mxu0 0.0
    %7136 = vmatprep.subr.mxu0 0.0
    %7137 = vmatpush1.msra.mxu0 0.0
    %7138 = vmatprep.subr.mxu0 0.0
    %7139 = vmatpush1.msra.mxu0 0.0
    %7140 = vmatprep.subr.mxu0 0.0
    %7141 = vmatpush1.msra.mxu0 0.0
    %7142 = vmatprep.subr.mxu0 0.0
    %7143 = vmatpush1.msra.mxu0 0.0
    %7144 = vmatprep.subr.mxu0 0.0
    %7145 = vmatpush1.msra.mxu0 0.0
    %7146 = vmatprep.subr.mxu0 0.0
    %7147 = vmatpush1.msra.mxu0 0.0
    %7148 = vmatprep.subr.mxu0 0.0
    %7149 = vmatpush1.msra.mxu0 0.0
    %7150 = vmatprep.subr.mxu0 0.0
    %7151 = vmatpush1.msra.mxu0 0.0
    %7152 = vmatprep.subr.mxu0 0.0
    %7153 = vmatpush1.msra.mxu0 0.0
    %7154 = vmatprep.subr.mxu0 0.0
    %7155 = vmatpush1.msra.mxu0 0.0
    %7156 = vmatprep.subr.mxu0 0.0
    %7157 = vmatpush1.msra.mxu0 0.0
    %7158 = vmatprep.subr.mxu0 0.0
    %7159 = vmatpush1.msra.mxu0 %v77
    %7160 = vmatprep.subr.mxu0 0.0
    %7161 = vmatpush1.msra.mxu0 %v76
    %7162 = vmatprep.subr.mxu0 0.0
    %7163 = vmatpush1.msra.mxu0 %v75
    %7164 = vmatprep.subr.mxu0 0.0
    %7165 = vmatpush1.msra.mxu0 %v74
    %7166 = vmatprep.subr.mxu0 0.0
    %7167 = vmatpush2.msra.mxu0 0.0
    %7168 = vmatprep.subr.mxu0 0.0
    %7169 = vmatpush2.msra.mxu0 0.0
    %7170 = vmatprep.subr.mxu0 0.0
    %7171 = vmatpush2.msra.mxu0 0.0
    %7172 = vmatprep.subr.mxu0 0.0
    %7173 = vmatpush2.msra.mxu0 0.0
    %7174 = vmatprep.subr.mxu0 0.0
    %7175 = vmatpush2.msra.mxu0 0.0
    %7176 = vmatprep.subr.mxu0 0.0
    %7177 = vmatpush2.msra.mxu0 0.0
    %7178 = vmatprep.subr.mxu0 0.0
    %7179 = vmatpush2.msra.mxu0 0.0
    %7180 = vmatprep.subr.mxu0 0.0
    %7181 = vmatpush2.msra.mxu0 0.0
    %7182 = vmatprep.subr.mxu0 0.0
    %7183 = vmatpush2.msra.mxu0 0.0
    %7184 = vmatprep.subr.mxu0 0.0
    %7185 = vmatpush2.msra.mxu0 0.0
    %7186 = vmatprep.subr.mxu0 0.0
    %7187 = vmatpush2.msra.mxu0 0.0
    %7188 = vmatprep.subr.mxu0 0.0
    %7189 = vmatpush2.msra.mxu0 0.0
    %7190 = vmatprep.subr.mxu0 0.0
    %7191 = vmatpush2.msra.mxu0 0.0
    %7192 = vmatprep.subr.mxu0 0.0
    %7193 = vmatpush2.msra.mxu0 0.0
    %7194 = vmatprep.subr.mxu0 0.0
    %7195 = vmatpush2.msra.mxu0 0.0
    %7196 = vmatprep.subr.mxu0 0.0
    %7197 = vmatpush2.msra.mxu0 0.0
    %7198 = vmatprep.mubr.f32.mxu0 0.0
    %7199 = vmatmul.mubr.f32.gmra.mxu0 %v7132
    %v7200 = vpop.f32.mrf.mxu0
    %v7201 = vadd.f32 0.0, %v7200
    %v7202 = vpop.f32.mrf.mxu0
    %7203 = vdwg.mxu0
    %v7205 = vsel %vm1267, %v6735, 0
    %7207 = vmatprep.subr.mxu0 0.0
    %7208 = vmatpush1.msra.mxu0 0.0
    %7209 = vmatprep.subr.mxu0 0.0
    %7210 = vmatpush1.msra.mxu0 0.0
    %7211 = vmatprep.subr.mxu0 0.0
    %7212 = vmatpush1.msra.mxu0 0.0
    %7213 = vmatprep.subr.mxu0 0.0
    %7214 = vmatpush1.msra.mxu0 0.0
    %7215 = vmatprep.subr.mxu0 0.0
    %7216 = vmatpush1.msra.mxu0 0.0
    %7217 = vmatprep.subr.mxu0 0.0
    %7218 = vmatpush1.msra.mxu0 0.0
    %7219 = vmatprep.subr.mxu0 0.0
    %7220 = vmatpush1.msra.mxu0 0.0
    %7221 = vmatprep.subr.mxu0 0.0
    %7222 = vmatpush1.msra.mxu0 0.0
    %7223 = vmatprep.subr.mxu0 0.0
    %7224 = vmatpush1.msra.mxu0 0.0
    %7225 = vmatprep.subr.mxu0 0.0
    %7226 = vmatpush1.msra.mxu0 0.0
    %7227 = vmatprep.subr.mxu0 0.0
    %7228 = vmatpush1.msra.mxu0 0.0
    %7229 = vmatprep.subr.mxu0 0.0
    %7230 = vmatpush1.msra.mxu0 0.0
    %7231 = vmatprep.subr.mxu0 0.0
    %7232 = vmatpush1.msra.mxu0 0.0
    %7233 = vmatprep.subr.mxu0 0.0
    %7234 = vmatpush1.msra.mxu0 %v1273
    %7235 = vmatprep.subr.mxu0 0.0
    %7236 = vmatpush1.msra.mxu0 %v72
    %7237 = vmatprep.subr.mxu0 0.0
    %7238 = vmatpush1.msra.mxu0 %v71
    %7239 = vmatprep.subr.mxu0 0.0
    %7240 = vmatpush2.msra.mxu0 0.0
    %7241 = vmatprep.subr.mxu0 0.0
    %7242 = vmatpush2.msra.mxu0 0.0
    %7243 = vmatprep.subr.mxu0 0.0
    %7244 = vmatpush2.msra.mxu0 0.0
    %7245 = vmatprep.subr.mxu0 0.0
    %7246 = vmatpush2.msra.mxu0 0.0
    %7247 = vmatprep.subr.mxu0 0.0
    %7248 = vmatpush2.msra.mxu0 0.0
    %7249 = vmatprep.subr.mxu0 0.0
    %7250 = vmatpush2.msra.mxu0 0.0
    %7251 = vmatprep.subr.mxu0 0.0
    %7252 = vmatpush2.msra.mxu0 0.0
    %7253 = vmatprep.subr.mxu0 0.0
    %7254 = vmatpush2.msra.mxu0 0.0
    %7255 = vmatprep.subr.mxu0 0.0
    %7256 = vmatpush2.msra.mxu0 0.0
    %7257 = vmatprep.subr.mxu0 0.0
    %7258 = vmatpush2.msra.mxu0 0.0
    %7259 = vmatprep.subr.mxu0 0.0
    %7260 = vmatpush2.msra.mxu0 0.0
    %7261 = vmatprep.subr.mxu0 0.0
    %7262 = vmatpush2.msra.mxu0 0.0
    %7263 = vmatprep.subr.mxu0 0.0
    %7264 = vmatpush2.msra.mxu0 0.0
    %7265 = vmatprep.subr.mxu0 0.0
    %7266 = vmatpush2.msra.mxu0 0.0
    %7267 = vmatprep.subr.mxu0 0.0
    %7268 = vmatpush2.msra.mxu0 0.0
    %7269 = vmatprep.subr.mxu0 0.0
    %7270 = vmatpush2.msra.mxu0 0.0
    %7271 = vmatprep.mubr.f32.mxu0 0.0
    %7272 = vmatmul.mubr.f32.gmra.mxu0 %v7205
    %v7273 = vpop.f32.mrf.mxu0
    %v7274 = vadd.f32 %v7201, %v7273
    %v7275 = vpop.f32.mrf.mxu0
    %7276 = vdwg.mxu0
    %v7277 = vadd.f32 %v7274, %v118
    %7278 = vrot.lane.b32.xlu0 %v6637, 96
    %v7279 = vpop.permute.xlu0 %7278
    %v7281 = vadd.f32 %v7277, %v7279
    %v7282 = vxor.u32 %v7281, 2147483648
    %v7283 = vmul.f32 %v7282, 1.442695
    %v7284 = vpow.pop %v7283
    %v7285 = vadd.f32 %v7284, 1.0
    %v7286 = vrcp.pop %v7285
    %v7287 = vmul.f32 1.0, %v7286
    %7288 = vrot.lane.b32.xlu0 %v6637, 32
    %v7289 = vpop.permute.xlu0 %7288
    %v7291 = vmul.f32 %v7287, %v7289
    %7293 = vrot.lane.b32.xlu0 %v7291, 64
    %v7294 = vpop.permute.xlu0 %7293
    %v7296 = vadd.f32 %v7277, %v7294
    %v7297 = vtanh.pop %v7296
    %v7298 = vsub.f32 1.0, %v7287
    %7300 = vrot.lane.b32.xlu0 %v7297, 96
    %v7301 = vpop.permute.xlu0 %7300
    %v7303 = vmul.f32 %v7298, %v7301
    %v7304 = vmul.f32 %v7287, %v6564
    %v7305 = vadd.f32 %v7303, %v7304
    %7307 = vrot.lane.b32.xlu0 %v7305, 96
    %v7308 = vpop.permute.xlu0 %7307
    %v7309 = vsel %vm381, %v7308, 0
    %7311 = vmatprep.subr.mxu0 0.0
    %7312 = vmatpush1.msra.mxu0 0.0
    %7313 = vmatprep.subr.mxu0 0.0
    %7314 = vmatpush1.msra.mxu0 0.0
    %7315 = vmatprep.subr.mxu0 0.0
    %7316 = vmatpush1.msra.mxu0 0.0
    %7317 = vmatprep.subr.mxu0 0.0
    %7318 = vmatpush1.msra.mxu0 0.0
    %7319 = vmatprep.subr.mxu0 0.0
    %7320 = vmatpush1.msra.mxu0 0.0
    %7321 = vmatprep.subr.mxu0 0.0
    %7322 = vmatpush1.msra.mxu0 0.0
    %7323 = vmatprep.subr.mxu0 0.0
    %7324 = vmatpush1.msra.mxu0 0.0
    %7325 = vmatprep.subr.mxu0 0.0
    %7326 = vmatpush1.msra.mxu0 0.0
    %7327 = vmatprep.subr.mxu0 0.0
    %7328 = vmatpush1.msra.mxu0 0.0
    %7329 = vmatprep.subr.mxu0 0.0
    %7330 = vmatpush1.msra.mxu0 0.0
    %7331 = vmatprep.subr.mxu0 0.0
    %7332 = vmatpush1.msra.mxu0 0.0
    %7333 = vmatprep.subr.mxu0 0.0
    %7334 = vmatpush1.msra.mxu0 0.0
    %7335 = vmatprep.subr.mxu0 %v85
    %7336 = vmatpush1.msra.mxu0 %v84
    %7337 = vmatprep.subr.mxu0 %v83
    %7338 = vmatpush1.msra.mxu0 %v82
    %7339 = vmatprep.subr.mxu0 %v81
    %7340 = vmatpush1.msra.mxu0 %v80
    %7341 = vmatprep.subr.mxu0 %v79
    %7342 = vmatpush1.msra.mxu0 %v78
    %7343 = vmatprep.subr.mxu0 0.0
    %7344 = vmatpush2.msra.mxu0 0.0
    %7345 = vmatprep.subr.mxu0 0.0
    %7346 = vmatpush2.msra.mxu0 0.0
    %7347 = vmatprep.subr.mxu0 0.0
    %7348 = vmatpush2.msra.mxu0 0.0
    %7349 = vmatprep.subr.mxu0 0.0
    %7350 = vmatpush2.msra.mxu0 0.0
    %7351 = vmatprep.subr.mxu0 0.0
    %7352 = vmatpush2.msra.mxu0 0.0
    %7353 = vmatprep.subr.mxu0 0.0
    %7354 = vmatpush2.msra.mxu0 0.0
    %7355 = vmatprep.subr.mxu0 0.0
    %7356 = vmatpush2.msra.mxu0 0.0
    %7357 = vmatprep.subr.mxu0 0.0
    %7358 = vmatpush2.msra.mxu0 0.0
    %7359 = vmatprep.subr.mxu0 0.0
    %7360 = vmatpush2.msra.mxu0 0.0
    %7361 = vmatprep.subr.mxu0 0.0
    %7362 = vmatpush2.msra.mxu0 0.0
    %7363 = vmatprep.subr.mxu0 0.0
    %7364 = vmatpush2.msra.mxu0 0.0
    %7365 = vmatprep.subr.mxu0 0.0
    %7366 = vmatpush2.msra.mxu0 0.0
    %7367 = vmatprep.subr.mxu0 0.0
    %7368 = vmatpush2.msra.mxu0 0.0
    %7369 = vmatprep.subr.mxu0 0.0
    %7370 = vmatpush2.msra.mxu0 0.0
    %7371 = vmatprep.subr.mxu0 0.0
    %7372 = vmatpush2.msra.mxu0 0.0
    %7373 = vmatprep.subr.mxu0 0.0
    %7374 = vmatpush2.msra.mxu0 0.0
    %7375 = vmatprep.mubr.f32.mxu0 0.0
    %7376 = vmatmul.mubr.f32.gmra.mxu0 %v7309
    %v7377 = vpop.f32.mrf.mxu0
    %v7378 = vadd.f32 %v106, %v7377
    %v7379 = vpop.f32.mrf.mxu0
    %v7380 = vadd.f32 %v110, %v7379
    %7381 = vdwg.mxu0
    %v7382 = vsel %vm1271, %v7380, -inf
    %7383 = vmax.xlane.f32.xlu0 %v7382
    %v7384 = vpop.xlane.xlu0 %7383
    %v7385 = vsub.f32 %v7380, %v7384
    %v7386 = vmul.f32 %v7385, 1.442695
    %v7387 = vpow.pop %v7386
    %v7388 = vsel %vm1271, %v7387, 0.0
    %7389 = vadd.xlane.f32.xlu0 %v7388
    %v7390 = vpop.xlane.xlu0 %7389
    %v7391 = vlog2.pop %v7390
    %v7392 = vmul.f32 %v7391, 0.6931472
    %v7393 = vadd.f32 %v7392, %v7384
    %v7394 = vsub.f32 %v7380, %v7393
    %v7397 = vunpack.c.l.s4 1966171168
    %v7398 = vunpack.c.0.s8 %v7397
    %v7399 = vlaneseq
    %v7400 = vshrl.u32 %v7399, 7
    %v7401 = vsub.s32 %v7398, %v7400
    %v7402 = vrot.slane %v7394, %v7401
    %v7403 = vcombine.high %v7402, %v7402
    %v7405 = vunpack.c.l.s4 1966171168
    %v7406 = vunpack.c.0.s8 %v7405
    %v7407 = vlaneseq
    %v7408 = vshrl.u32 %v7407, 7
    %v7409 = vsub.s32 %v7406, %v7408
    %v7410 = vrot.slane %v7402, %v7409
    %v7412 = vunpack.c.l.s4 1966171168
    %v7413 = vunpack.c.0.s8 %v7412
    %v7414 = vlaneseq
    %v7415 = vshrl.u32 %v7414, 7
    %v7416 = vsub.s32 %v7413, %v7415
    %v7417 = vrot.slane %v7403, %v7416
    %v7418 = vcombine.high %v7410, %v7410
    %v7419 = vcombine.high %v7417, %v7417
    %7424 = vst [vmem:[%s11 + $0x8] sm:$0x1] %v7410
    %7425 = vst [vmem:[%s11 + $0x18] sm:$0x1] %v7417
    %7426 = vst [vmem:[%s11 + $0x28] sm:$0x1] %v7418
    %7427 = vst [vmem:[%s11 + $0x38] sm:$0x1] %v7419
    %v7428 = vlaneseq
    %v7429 = vshrl.u32 %v7428, 7
    %v7430 = vsub.s32 %v577, %v7429
    %v7431 = vrot.slane %v7044, %v7430
    %v7432 = vlaneseq
    %v7433 = vshrl.u32 %v7432, 7
    %v7434 = vsub.s32 %v906, %v7433
    %v7435 = vrot.slane %v7049, %v7434
    %v7436 = vsel %vm911, %v7435, %v7431
    %v7437 = vlaneseq
    %v7438 = vshrl.u32 %v7437, 7
    %v7439 = vsub.s32 %v577, %v7438
    %v7440 = vrot.slane %v7054, %v7439
    %v7441 = vlaneseq
    %v7442 = vshrl.u32 %v7441, 7
    %v7443 = vsub.s32 %v906, %v7442
    %v7444 = vrot.slane %v7059, %v7443
    %v7445 = vsel %vm911, %v7444, %v7440
    %v7446 = vlaneseq
    %v7447 = vshrl.u32 %v7446, 7
    %v7448 = vsub.s32 %v577, %v7447
    %v7449 = vrot.slane %v7064, %v7448
    %v7450 = vlaneseq
    %v7451 = vshrl.u32 %v7450, 7
    %v7452 = vsub.s32 %v906, %v7451
    %v7453 = vrot.slane %v7069, %v7452
    %v7454 = vsel %vm911, %v7453, %v7449
    %v7455 = vlaneseq
    %v7456 = vshrl.u32 %v7455, 7
    %v7457 = vsub.s32 %v577, %v7456
    %v7458 = vrot.slane %v7074, %v7457
    %v7459 = vlaneseq
    %v7460 = vshrl.u32 %v7459, 7
    %v7461 = vsub.s32 %v906, %v7460
    %v7462 = vrot.slane %v7079, %v7461
    %v7463 = vsel %vm911, %v7462, %v7458
    %7468 = vst.msk [vmem:[%s13 + $0x8] sm:$0x1] %vm1539, %v7436
    %7469 = vst.msk [vmem:[%s13 + $0x18] sm:$0x1] %vm1539, %v7445
    %7470 = vst.msk [vmem:[%s13 + $0x28] sm:$0x1] %vm1539, %v7454
    %7471 = vst.msk [vmem:[%s13 + $0x38] sm:$0x1] %vm1539, %v7463
    %7472 = vmax.index.xlane.f32.xlu0 %v7382
    %v7473 = vpop.xlane.xlu0 %7472
    %vm7474 = vcmp.eq.s32.totalorder %v577, %v7473
    %v7475 = vsel %vm7474, 1, 0
    %v7476 = vcvt.s32.f32 %v7475
    %v7479 = vunpack.c.l.s4 1966171168
    %v7480 = vunpack.c.0.s8 %v7479
    %v7481 = vlaneseq
    %v7482 = vshrl.u32 %v7481, 7
    %v7483 = vsub.s32 %v7480, %v7482
    %v7484 = vrot.slane %v7378, %v7483
    %v7485 = vcombine.high %v7484, %v7484
    %v7487 = vunpack.c.l.s4 1966171168
    %v7488 = vunpack.c.0.s8 %v7487
    %v7489 = vlaneseq
    %v7490 = vshrl.u32 %v7489, 7
    %v7491 = vsub.s32 %v7488, %v7490
    %v7492 = vrot.slane %v7484, %v7491
    %v7494 = vunpack.c.l.s4 1966171168
    %v7495 = vunpack.c.0.s8 %v7494
    %v7496 = vlaneseq
    %v7497 = vshrl.u32 %v7496, 7
    %v7498 = vsub.s32 %v7495, %v7497
    %v7499 = vrot.slane %v7485, %v7498
    %v7500 = vcombine.high %v7492, %v7492
    %v7501 = vcombine.high %v7499, %v7499
    %v7502 = vlaneseq
    %v7503 = vshrl.u32 %v7502, 7
    %v7504 = vsub.s32 0, %v7503
    %v7505 = vrot.slane %v7492, %v7504
    %v7506 = vlaneseq
    %v7507 = vshrl.u32 %v7506, 7
    %v7508 = vsub.s32 0, %v7507
    %v7509 = vrot.slane %v7499, %v7508
    %v7510 = vlaneseq
    %v7511 = vshrl.u32 %v7510, 7
    %v7512 = vsub.s32 0, %v7511
    %v7513 = vrot.slane %v7500, %v7512
    %v7514 = vlaneseq
    %v7515 = vshrl.u32 %v7514, 7
    %v7516 = vsub.s32 0, %v7515
    %v7517 = vrot.slane %v7501, %v7516
    %v7522 = vadd.f32 %v7505, %v742
    %v7523 = vadd.f32 %v7505, %v749
    %v7524 = vadd.f32 %v7509, %v766
    %v7525 = vadd.f32 %v7509, %v773
    %v7526 = vadd.f32 %v7513, %v790
    %v7527 = vadd.f32 %v7513, %v797
    %v7528 = vadd.f32 %v7517, %v814
    %v7529 = vadd.f32 %v7517, %v821
    %v7530 = vtanh.pop %v7522
    %v7531 = vtanh.pop %v7523
    %v7532 = vtanh.pop %v7524
    %v7533 = vtanh.pop %v7525
    %v7534 = vtanh.pop %v7526
    %v7535 = vtanh.pop %v7527
    %v7536 = vtanh.pop %v7528
    %v7537 = vtanh.pop %v7529
    %v7538 = vmul.f32 %v7530, %v850
    %v7539 = vmul.f32 %v7531, %v850
    %v7540 = vmul.f32 %v7532, %v850
    %v7541 = vmul.f32 %v7533, %v850
    %v7542 = vmul.f32 %v7534, %v850
    %v7543 = vmul.f32 %v7535, %v850
    %v7544 = vmul.f32 %v7536, %v850
    %v7545 = vmul.f32 %v7537, %v850
    %v7546 = vsel %vm381, %v7538, 0.0
    %7547 = vadd.xlane.f32.xlu0 %v7546
    %v7548 = vpop.xlane.xlu0 %7547
    %v7549 = vsel %vm863, %v7539, 0.0
    %7550 = vadd.xlane.f32.xlu0 %v7549
    %v7551 = vpop.xlane.xlu0 %7550
    %v7552 = vsel %vm381, %v7540, 0.0
    %7553 = vadd.xlane.f32.xlu0 %v7552
    %v7554 = vpop.xlane.xlu0 %7553
    %v7555 = vsel %vm863, %v7541, 0.0
    %7556 = vadd.xlane.f32.xlu0 %v7555
    %v7557 = vpop.xlane.xlu0 %7556
    %v7558 = vsel %vm381, %v7542, 0.0
    %7559 = vadd.xlane.f32.xlu0 %v7558
    %v7560 = vpop.xlane.xlu0 %7559
    %v7561 = vsel %vm863, %v7543, 0.0
    %7562 = vadd.xlane.f32.xlu0 %v7561
    %v7563 = vpop.xlane.xlu0 %7562
    %v7564 = vsel %vm381, %v7544, 0.0
    %7565 = vadd.xlane.f32.xlu0 %v7564
    %v7566 = vpop.xlane.xlu0 %7565
    %v7567 = vsel %vm863, %v7545, 0.0
    %7568 = vadd.xlane.f32.xlu0 %v7567
    %v7569 = vpop.xlane.xlu0 %7568
    %v7570 = vadd.f32 %v7548, %v885
    %v7571 = vadd.f32 %v7551, %v885
    %v7572 = vadd.f32 %v7554, %v885
    %v7573 = vadd.f32 %v7557, %v885
    %v7574 = vadd.f32 %v7560, %v885
    %v7575 = vadd.f32 %v7563, %v885
    %v7576 = vadd.f32 %v7566, %v885
    %v7577 = vadd.f32 %v7569, %v885
    %v7586 = vlaneseq
    %v7587 = vshrl.u32 %v7586, 7
    %v7588 = vsub.s32 %v577, %v7587
    %v7589 = vrot.slane %v7570, %v7588
    %v7590 = vlaneseq
    %v7591 = vshrl.u32 %v7590, 7
    %v7592 = vsub.s32 %v906, %v7591
    %v7593 = vrot.slane %v7571, %v7592
    %v7594 = vsel %vm911, %v7593, %v7589
    %v7595 = vlaneseq
    %v7596 = vshrl.u32 %v7595, 7
    %v7597 = vsub.s32 %v577, %v7596
    %v7598 = vrot.slane %v7572, %v7597
    %v7599 = vlaneseq
    %v7600 = vshrl.u32 %v7599, 7
    %v7601 = vsub.s32 %v906, %v7600
    %v7602 = vrot.slane %v7573, %v7601
    %v7603 = vsel %vm911, %v7602, %v7598
    %v7604 = vlaneseq
    %v7605 = vshrl.u32 %v7604, 7
    %v7606 = vsub.s32 %v577, %v7605
    %v7607 = vrot.slane %v7574, %v7606
    %v7608 = vlaneseq
    %v7609 = vshrl.u32 %v7608, 7
    %v7610 = vsub.s32 %v906, %v7609
    %v7611 = vrot.slane %v7575, %v7610
    %v7612 = vsel %vm911, %v7611, %v7607
    %v7613 = vlaneseq
    %v7614 = vshrl.u32 %v7613, 7
    %v7615 = vsub.s32 %v577, %v7614
    %v7616 = vrot.slane %v7576, %v7615
    %v7617 = vlaneseq
    %v7618 = vshrl.u32 %v7617, 7
    %v7619 = vsub.s32 %v906, %v7618
    %v7620 = vrot.slane %v7577, %v7619
    %v7621 = vsel %vm911, %v7620, %v7616
    %v7622 = vsel %vm940, %v7603, %v7594
    %v7623 = vsel %vm942, %v7612, %v7622
    %v7624 = vsel %vm944, %v7621, %v7623
    %v7626 = vsel %vm947, %v7624, -inf
    %7627 = vmax.xlane.f32.xlu0 %v7626
    %v7628 = vpop.xlane.xlu0 %7627
    %v7630 = vlaneseq
    %v7631 = vshrl.u32 %v7630, 7
    %v7632 = vsub.s32 0, %v7631
    %v7633 = vrot.slane %v7628, %v7632
    %v7634 = vlaneseq
    %v7635 = vshrl.u32 %v7634, 7
    %v7636 = vsub.s32 1, %v7635
    %v7637 = vrot.slane %v7628, %v7636
    %v7638 = vlaneseq
    %v7639 = vshrl.u32 %v7638, 7
    %v7640 = vsub.s32 2, %v7639
    %v7641 = vrot.slane %v7628, %v7640
    %v7642 = vlaneseq
    %v7643 = vshrl.u32 %v7642, 7
    %v7644 = vsub.s32 3, %v7643
    %v7645 = vrot.slane %v7628, %v7644
    %v7650 = vsub.f32 %v7570, %v7633
    %v7651 = vsub.f32 %v7571, %v7633
    %v7652 = vsub.f32 %v7572, %v7637
    %v7653 = vsub.f32 %v7573, %v7637
    %v7654 = vsub.f32 %v7574, %v7641
    %v7655 = vsub.f32 %v7575, %v7641
    %v7656 = vsub.f32 %v7576, %v7645
    %v7657 = vsub.f32 %v7577, %v7645
    %v7658 = vmul.f32 %v7650, 1.442695
    %v7659 = vpow.pop %v7658
    %v7660 = vmul.f32 %v7651, 1.442695
    %v7661 = vpow.pop %v7660
    %v7662 = vmul.f32 %v7652, 1.442695
    %v7663 = vpow.pop %v7662
    %v7664 = vmul.f32 %v7653, 1.442695
    %v7665 = vpow.pop %v7664
    %v7666 = vmul.f32 %v7654, 1.442695
    %v7667 = vpow.pop %v7666
    %v7668 = vmul.f32 %v7655, 1.442695
    %v7669 = vpow.pop %v7668
    %v7670 = vmul.f32 %v7656, 1.442695
    %v7671 = vpow.pop %v7670
    %v7672 = vmul.f32 %v7657, 1.442695
    %v7673 = vpow.pop %v7672
    %7682 = vset.pattern.permute.xlu0 0
    %7683 = vperm.xlu0 %7682, %v7659
    %v7684 = vpop.permute.xlu0 %7683
    %7685 = vset.pattern.permute.xlu0 0
    %7686 = vperm.xlu0 %7685, %v7661
    %v7687 = vpop.permute.xlu0 %7686
    %7688 = vset.pattern.permute.xlu0 0
    %7689 = vperm.xlu0 %7688, %v7663
    %v7690 = vpop.permute.xlu0 %7689
    %7691 = vset.pattern.permute.xlu0 0
    %7692 = vperm.xlu0 %7691, %v7665
    %v7693 = vpop.permute.xlu0 %7692
    %7694 = vset.pattern.permute.xlu0 0
    %7695 = vperm.xlu0 %7694, %v7667
    %v7696 = vpop.permute.xlu0 %7695
    %7697 = vset.pattern.permute.xlu0 0
    %7698 = vperm.xlu0 %7697, %v7669
    %v7699 = vpop.permute.xlu0 %7698
    %7700 = vset.pattern.permute.xlu0 0
    %7701 = vperm.xlu0 %7700, %v7671
    %v7702 = vpop.permute.xlu0 %7701
    %7703 = vset.pattern.permute.xlu0 0
    %7704 = vperm.xlu0 %7703, %v7673
    %v7705 = vpop.permute.xlu0 %7704
    %v7706 = vlaneseq
    %v7707 = vshrl.u32 %v7706, 7
    %v7708 = vsub.s32 %v577, %v7707
    %v7709 = vrot.slane %v7684, %v7708
    %v7710 = vlaneseq
    %v7711 = vshrl.u32 %v7710, 7
    %v7712 = vsub.s32 %v906, %v7711
    %v7713 = vrot.slane %v7687, %v7712
    %v7714 = vsel %vm911, %v7713, %v7709
    %v7715 = vlaneseq
    %v7716 = vshrl.u32 %v7715, 7
    %v7717 = vsub.s32 %v577, %v7716
    %v7718 = vrot.slane %v7690, %v7717
    %v7719 = vlaneseq
    %v7720 = vshrl.u32 %v7719, 7
    %v7721 = vsub.s32 %v906, %v7720
    %v7722 = vrot.slane %v7693, %v7721
    %v7723 = vsel %vm911, %v7722, %v7718
    %v7724 = vlaneseq
    %v7725 = vshrl.u32 %v7724, 7
    %v7726 = vsub.s32 %v577, %v7725
    %v7727 = vrot.slane %v7696, %v7726
    %v7728 = vlaneseq
    %v7729 = vshrl.u32 %v7728, 7
    %v7730 = vsub.s32 %v906, %v7729
    %v7731 = vrot.slane %v7699, %v7730
    %v7732 = vsel %vm911, %v7731, %v7727
    %v7733 = vlaneseq
    %v7734 = vshrl.u32 %v7733, 7
    %v7735 = vsub.s32 %v577, %v7734
    %v7736 = vrot.slane %v7702, %v7735
    %v7737 = vlaneseq
    %v7738 = vshrl.u32 %v7737, 7
    %v7739 = vsub.s32 %v906, %v7738
    %v7740 = vrot.slane %v7705, %v7739
    %v7741 = vsel %vm911, %v7740, %v7736
    %v7742 = vsel %vm940, %v7723, %v7714
    %v7743 = vsel %vm942, %v7732, %v7742
    %v7744 = vsel %vm944, %v7741, %v7743
    %v7746 = vsel %vm947, %v7744, 0.0
    %7747 = vadd.xlane.f32.xlu0 %v7746
    %v7748 = vpop.xlane.xlu0 %7747
    %v7750 = vlaneseq
    %v7751 = vshrl.u32 %v7750, 7
    %v7752 = vsub.s32 0, %v7751
    %v7753 = vrot.slane %v7748, %v7752
    %v7754 = vlaneseq
    %v7755 = vshrl.u32 %v7754, 7
    %v7756 = vsub.s32 1, %v7755
    %v7757 = vrot.slane %v7748, %v7756
    %v7758 = vlaneseq
    %v7759 = vshrl.u32 %v7758, 7
    %v7760 = vsub.s32 2, %v7759
    %v7761 = vrot.slane %v7748, %v7760
    %v7762 = vlaneseq
    %v7763 = vshrl.u32 %v7762, 7
    %v7764 = vsub.s32 3, %v7763
    %v7765 = vrot.slane %v7748, %v7764
    %v7770 = vrcp.pop %v7753
    %v7771 = vmul.f32 %v7659, %v7770
    %v7772 = vmul.f32 %v7661, %v7770
    %v7773 = vrcp.pop %v7757
    %v7774 = vmul.f32 %v7663, %v7773
    %v7775 = vmul.f32 %v7665, %v7773
    %v7776 = vrcp.pop %v7761
    %v7777 = vmul.f32 %v7667, %v7776
    %v7778 = vmul.f32 %v7669, %v7776
    %v7779 = vrcp.pop %v7765
    %v7780 = vmul.f32 %v7671, %v7779
    %v7781 = vmul.f32 %v7673, %v7779
    %7783 = vset.pattern.permute.xlu0 0
    %7784 = vperm.xlu0 %7783, %v7771
    %v7785 = vpop.permute.xlu0 %7784
    %7788 = vset.pattern.permute.xlu0 0
    %7789 = vperm.xlu0 %7788, %v7772
    %v7790 = vpop.permute.xlu0 %7789
    %7793 = vset.pattern.permute.xlu0 0
    %7794 = vperm.xlu0 %7793, %v7774
    %v7795 = vpop.permute.xlu0 %7794
    %7798 = vset.pattern.permute.xlu0 0
    %7799 = vperm.xlu0 %7798, %v7775
    %v7800 = vpop.permute.xlu0 %7799
    %7803 = vset.pattern.permute.xlu0 0
    %7804 = vperm.xlu0 %7803, %v7777
    %v7805 = vpop.permute.xlu0 %7804
    %7808 = vset.pattern.permute.xlu0 0
    %7809 = vperm.xlu0 %7808, %v7778
    %v7810 = vpop.permute.xlu0 %7809
    %7813 = vset.pattern.permute.xlu0 0
    %7814 = vperm.xlu0 %7813, %v7780
    %v7815 = vpop.permute.xlu0 %7814
    %7818 = vset.pattern.permute.xlu0 0
    %7819 = vperm.xlu0 %7818, %v7781
    %v7820 = vpop.permute.xlu0 %7819
    %v7822 = vmul.f32 %v7785, %v93
    %v7823 = vmul.f32 %v7790, %v94
    %v7824 = vmul.f32 %v7795, %v95
    %v7825 = vmul.f32 %v7800, %v96
    %v7826 = vmul.f32 %v7805, %v97
    %v7827 = vmul.f32 %v7810, %v98
    %v7828 = vmul.f32 %v7815, %v99
    %v7829 = vmul.f32 %v7820, %v100
    %v7830 = vsel %vm381, %v7822, 0.0
    %v7831 = vsel %vm863, %v7823, 0.0
    %v7832 = vadd.f32 %v7830, %v7831
    %v7833 = vrot.slane %v7832, 4
    %v7834 = vadd.f32 %v7832, %v7833
    %v7835 = vrot.slane %v7834, 2
    %v7836 = vadd.f32 %v7834, %v7835
    %v7837 = vrot.slane %v7836, 1
    %v7838 = vadd.f32 %v7836, %v7837
    %v7839 = vsel %vm381, %v7824, 0.0
    %v7840 = vsel %vm863, %v7825, 0.0
    %v7841 = vadd.f32 %v7839, %v7840
    %v7842 = vrot.slane %v7841, 4
    %v7843 = vadd.f32 %v7841, %v7842
    %v7844 = vrot.slane %v7843, 2
    %v7845 = vadd.f32 %v7843, %v7844
    %v7846 = vrot.slane %v7845, 1
    %v7847 = vadd.f32 %v7845, %v7846
    %v7848 = vsel %vm381, %v7826, 0.0
    %v7849 = vsel %vm863, %v7827, 0.0
    %v7850 = vadd.f32 %v7848, %v7849
    %v7851 = vrot.slane %v7850, 4
    %v7852 = vadd.f32 %v7850, %v7851
    %v7853 = vrot.slane %v7852, 2
    %v7854 = vadd.f32 %v7852, %v7853
    %v7855 = vrot.slane %v7854, 1
    %v7856 = vadd.f32 %v7854, %v7855
    %v7857 = vsel %vm381, %v7828, 0.0
    %v7858 = vsel %vm863, %v7829, 0.0
    %v7859 = vadd.f32 %v7857, %v7858
    %v7860 = vrot.slane %v7859, 4
    %v7861 = vadd.f32 %v7859, %v7860
    %v7862 = vrot.slane %v7861, 2
    %v7863 = vadd.f32 %v7861, %v7862
    %v7864 = vrot.slane %v7863, 1
    %v7865 = vadd.f32 %v7863, %v7864
    %v7870 = vsel %vm940, %v7847, %v7838
    %v7871 = vsel %vm942, %v7856, %v7870
    %v7872 = vsel %vm944, %v7865, %v7871
    %v7873 = vsel %vm381, %v7872, 0
    %7875 = vmatprep.subr.mxu0 0.0
    %7876 = vmatpush1.msra.mxu0 0.0
    %7877 = vmatprep.subr.mxu0 0.0
    %7878 = vmatpush1.msra.mxu0 0.0
    %7879 = vmatprep.subr.mxu0 0.0
    %7880 = vmatpush1.msra.mxu0 0.0
    %7881 = vmatprep.subr.mxu0 0.0
    %7882 = vmatpush1.msra.mxu0 0.0
    %7883 = vmatprep.subr.mxu0 0.0
    %7884 = vmatpush1.msra.mxu0 0.0
    %7885 = vmatprep.subr.mxu0 0.0
    %7886 = vmatpush1.msra.mxu0 0.0
    %7887 = vmatprep.subr.mxu0 0.0
    %7888 = vmatpush1.msra.mxu0 0.0
    %7889 = vmatprep.subr.mxu0 0.0
    %7890 = vmatpush1.msra.mxu0 0.0
    %7891 = vmatprep.subr.mxu0 0.0
    %7892 = vmatpush1.msra.mxu0 0.0
    %7893 = vmatprep.subr.mxu0 0.0
    %7894 = vmatpush1.msra.mxu0 0.0
    %7895 = vmatprep.subr.mxu0 0.0
    %7896 = vmatpush1.msra.mxu0 0.0
    %7897 = vmatprep.subr.mxu0 0.0
    %7898 = vmatpush1.msra.mxu0 0.0
    %7899 = vmatprep.subr.mxu0 0.0
    %7900 = vmatpush1.msra.mxu0 %v77
    %7901 = vmatprep.subr.mxu0 0.0
    %7902 = vmatpush1.msra.mxu0 %v76
    %7903 = vmatprep.subr.mxu0 0.0
    %7904 = vmatpush1.msra.mxu0 %v75
    %7905 = vmatprep.subr.mxu0 0.0
    %7906 = vmatpush1.msra.mxu0 %v74
    %7907 = vmatprep.subr.mxu0 0.0
    %7908 = vmatpush2.msra.mxu0 0.0
    %7909 = vmatprep.subr.mxu0 0.0
    %7910 = vmatpush2.msra.mxu0 0.0
    %7911 = vmatprep.subr.mxu0 0.0
    %7912 = vmatpush2.msra.mxu0 0.0
    %7913 = vmatprep.subr.mxu0 0.0
    %7914 = vmatpush2.msra.mxu0 0.0
    %7915 = vmatprep.subr.mxu0 0.0
    %7916 = vmatpush2.msra.mxu0 0.0
    %7917 = vmatprep.subr.mxu0 0.0
    %7918 = vmatpush2.msra.mxu0 0.0
    %7919 = vmatprep.subr.mxu0 0.0
    %7920 = vmatpush2.msra.mxu0 0.0
    %7921 = vmatprep.subr.mxu0 0.0
    %7922 = vmatpush2.msra.mxu0 0.0
    %7923 = vmatprep.subr.mxu0 0.0
    %7924 = vmatpush2.msra.mxu0 0.0
    %7925 = vmatprep.subr.mxu0 0.0
    %7926 = vmatpush2.msra.mxu0 0.0
    %7927 = vmatprep.subr.mxu0 0.0
    %7928 = vmatpush2.msra.mxu0 0.0
    %7929 = vmatprep.subr.mxu0 0.0
    %7930 = vmatpush2.msra.mxu0 0.0
    %7931 = vmatprep.subr.mxu0 0.0
    %7932 = vmatpush2.msra.mxu0 0.0
    %7933 = vmatprep.subr.mxu0 0.0
    %7934 = vmatpush2.msra.mxu0 0.0
    %7935 = vmatprep.subr.mxu0 0.0
    %7936 = vmatpush2.msra.mxu0 0.0
    %7937 = vmatprep.subr.mxu0 0.0
    %7938 = vmatpush2.msra.mxu0 0.0
    %7939 = vmatprep.mubr.f32.mxu0 0.0
    %7940 = vmatmul.mubr.f32.gmra.mxu0 %v7873
    %v7941 = vpop.f32.mrf.mxu0
    %v7942 = vadd.f32 0.0, %v7941
    %v7943 = vpop.f32.mrf.mxu0
    %7944 = vdwg.mxu0
    %v7946 = vsel %vm1267, %v7476, 0
    %7948 = vmatprep.subr.mxu0 0.0
    %7949 = vmatpush1.msra.mxu0 0.0
    %7950 = vmatprep.subr.mxu0 0.0
    %7951 = vmatpush1.msra.mxu0 0.0
    %7952 = vmatprep.subr.mxu0 0.0
    %7953 = vmatpush1.msra.mxu0 0.0
    %7954 = vmatprep.subr.mxu0 0.0
    %7955 = vmatpush1.msra.mxu0 0.0
    %7956 = vmatprep.subr.mxu0 0.0
    %7957 = vmatpush1.msra.mxu0 0.0
    %7958 = vmatprep.subr.mxu0 0.0
    %7959 = vmatpush1.msra.mxu0 0.0
    %7960 = vmatprep.subr.mxu0 0.0
    %7961 = vmatpush1.msra.mxu0 0.0
    %7962 = vmatprep.subr.mxu0 0.0
    %7963 = vmatpush1.msra.mxu0 0.0
    %7964 = vmatprep.subr.mxu0 0.0
    %7965 = vmatpush1.msra.mxu0 0.0
    %7966 = vmatprep.subr.mxu0 0.0
    %7967 = vmatpush1.msra.mxu0 0.0
    %7968 = vmatprep.subr.mxu0 0.0
    %7969 = vmatpush1.msra.mxu0 0.0
    %7970 = vmatprep.subr.mxu0 0.0
    %7971 = vmatpush1.msra.mxu0 0.0
    %7972 = vmatprep.subr.mxu0 0.0
    %7973 = vmatpush1.msra.mxu0 0.0
    %7974 = vmatprep.subr.mxu0 0.0
    %7975 = vmatpush1.msra.mxu0 %v1273
    %7976 = vmatprep.subr.mxu0 0.0
    %7977 = vmatpush1.msra.mxu0 %v72
    %7978 = vmatprep.subr.mxu0 0.0
    %7979 = vmatpush1.msra.mxu0 %v71
    %7980 = vmatprep.subr.mxu0 0.0
    %7981 = vmatpush2.msra.mxu0 0.0
    %7982 = vmatprep.subr.mxu0 0.0
    %7983 = vmatpush2.msra.mxu0 0.0
    %7984 = vmatprep.subr.mxu0 0.0
    %7985 = vmatpush2.msra.mxu0 0.0
    %7986 = vmatprep.subr.mxu0 0.0
    %7987 = vmatpush2.msra.mxu0 0.0
    %7988 = vmatprep.subr.mxu0 0.0
    %7989 = vmatpush2.msra.mxu0 0.0
    %7990 = vmatprep.subr.mxu0 0.0
    %7991 = vmatpush2.msra.mxu0 0.0
    %7992 = vmatprep.subr.mxu0 0.0
    %7993 = vmatpush2.msra.mxu0 0.0
    %7994 = vmatprep.subr.mxu0 0.0
    %7995 = vmatpush2.msra.mxu0 0.0
    %7996 = vmatprep.subr.mxu0 0.0
    %7997 = vmatpush2.msra.mxu0 0.0
    %7998 = vmatprep.subr.mxu0 0.0
    %7999 = vmatpush2.msra.mxu0 0.0
    %8000 = vmatprep.subr.mxu0 0.0
    %8001 = vmatpush2.msra.mxu0 0.0
    %8002 = vmatprep.subr.mxu0 0.0
    %8003 = vmatpush2.msra.mxu0 0.0
    %8004 = vmatprep.subr.mxu0 0.0
    %8005 = vmatpush2.msra.mxu0 0.0
    %8006 = vmatprep.subr.mxu0 0.0
    %8007 = vmatpush2.msra.mxu0 0.0
    %8008 = vmatprep.subr.mxu0 0.0
    %8009 = vmatpush2.msra.mxu0 0.0
    %8010 = vmatprep.subr.mxu0 0.0
    %8011 = vmatpush2.msra.mxu0 0.0
    %8012 = vmatprep.mubr.f32.mxu0 0.0
    %8013 = vmatmul.mubr.f32.gmra.mxu0 %v7946
    %v8014 = vpop.f32.mrf.mxu0
    %v8015 = vadd.f32 %v7942, %v8014
    %v8016 = vpop.f32.mrf.mxu0
    %8017 = vdwg.mxu0
    %v8018 = vadd.f32 %v8015, %v118
    %8019 = vrot.lane.b32.xlu0 %v7378, 96
    %v8020 = vpop.permute.xlu0 %8019
    %v8022 = vadd.f32 %v8018, %v8020
    %v8023 = vxor.u32 %v8022, 2147483648
    %v8024 = vmul.f32 %v8023, 1.442695
    %v8025 = vpow.pop %v8024
    %v8026 = vadd.f32 %v8025, 1.0
    %v8027 = vrcp.pop %v8026
    %v8028 = vmul.f32 1.0, %v8027
    %8029 = vrot.lane.b32.xlu0 %v7378, 32
    %v8030 = vpop.permute.xlu0 %8029
    %v8032 = vmul.f32 %v8028, %v8030
    %8034 = vrot.lane.b32.xlu0 %v8032, 64
    %v8035 = vpop.permute.xlu0 %8034
    %v8037 = vadd.f32 %v8018, %v8035
    %v8038 = vtanh.pop %v8037
    %v8039 = vsub.f32 1.0, %v8028
    %8041 = vrot.lane.b32.xlu0 %v8038, 96
    %v8042 = vpop.permute.xlu0 %8041
    %v8044 = vmul.f32 %v8039, %v8042
    %v8045 = vmul.f32 %v8028, %v7305
    %v8046 = vadd.f32 %v8044, %v8045
    %8048 = vrot.lane.b32.xlu0 %v8046, 96
    %v8049 = vpop.permute.xlu0 %8048
    %v8050 = vsel %vm381, %v8049, 0
    %8052 = vmatprep.subr.mxu0 0.0
    %8053 = vmatpush1.msra.mxu0 0.0
    %8054 = vmatprep.subr.mxu0 0.0
    %8055 = vmatpush1.msra.mxu0 0.0
    %8056 = vmatprep.subr.mxu0 0.0
    %8057 = vmatpush1.msra.mxu0 0.0
    %8058 = vmatprep.subr.mxu0 0.0
    %8059 = vmatpush1.msra.mxu0 0.0
    %8060 = vmatprep.subr.mxu0 0.0
    %8061 = vmatpush1.msra.mxu0 0.0
    %8062 = vmatprep.subr.mxu0 0.0
    %8063 = vmatpush1.msra.mxu0 0.0
    %8064 = vmatprep.subr.mxu0 0.0
    %8065 = vmatpush1.msra.mxu0 0.0
    %8066 = vmatprep.subr.mxu0 0.0
    %8067 = vmatpush1.msra.mxu0 0.0
    %8068 = vmatprep.subr.mxu0 0.0
    %8069 = vmatpush1.msra.mxu0 0.0
    %8070 = vmatprep.subr.mxu0 0.0
    %8071 = vmatpush1.msra.mxu0 0.0
    %8072 = vmatprep.subr.mxu0 0.0
    %8073 = vmatpush1.msra.mxu0 0.0
    %8074 = vmatprep.subr.mxu0 0.0
    %8075 = vmatpush1.msra.mxu0 0.0
    %8076 = vmatprep.subr.mxu0 %v85
    %8077 = vmatpush1.msra.mxu0 %v84
    %8078 = vmatprep.subr.mxu0 %v83
    %8079 = vmatpush1.msra.mxu0 %v82
    %8080 = vmatprep.subr.mxu0 %v81
    %8081 = vmatpush1.msra.mxu0 %v80
    %8082 = vmatprep.subr.mxu0 %v79
    %8083 = vmatpush1.msra.mxu0 %v78
    %8084 = vmatprep.subr.mxu0 0.0
    %8085 = vmatpush2.msra.mxu0 0.0
    %8086 = vmatprep.subr.mxu0 0.0
    %8087 = vmatpush2.msra.mxu0 0.0
    %8088 = vmatprep.subr.mxu0 0.0
    %8089 = vmatpush2.msra.mxu0 0.0
    %8090 = vmatprep.subr.mxu0 0.0
    %8091 = vmatpush2.msra.mxu0 0.0
    %8092 = vmatprep.subr.mxu0 0.0
    %8093 = vmatpush2.msra.mxu0 0.0
    %8094 = vmatprep.subr.mxu0 0.0
    %8095 = vmatpush2.msra.mxu0 0.0
    %8096 = vmatprep.subr.mxu0 0.0
    %8097 = vmatpush2.msra.mxu0 0.0
    %8098 = vmatprep.subr.mxu0 0.0
    %8099 = vmatpush2.msra.mxu0 0.0
    %8100 = vmatprep.subr.mxu0 0.0
    %8101 = vmatpush2.msra.mxu0 0.0
    %8102 = vmatprep.subr.mxu0 0.0
    %8103 = vmatpush2.msra.mxu0 0.0
    %8104 = vmatprep.subr.mxu0 0.0
    %8105 = vmatpush2.msra.mxu0 0.0
    %8106 = vmatprep.subr.mxu0 0.0
    %8107 = vmatpush2.msra.mxu0 0.0
    %8108 = vmatprep.subr.mxu0 0.0
    %8109 = vmatpush2.msra.mxu0 0.0
    %8110 = vmatprep.subr.mxu0 0.0
    %8111 = vmatpush2.msra.mxu0 0.0
    %8112 = vmatprep.subr.mxu0 0.0
    %8113 = vmatpush2.msra.mxu0 0.0
    %8114 = vmatprep.subr.mxu0 0.0
    %8115 = vmatpush2.msra.mxu0 0.0
    %8116 = vmatprep.mubr.f32.mxu0 0.0
    %8117 = vmatmul.mubr.f32.gmra.mxu0 %v8050
    %v8118 = vpop.f32.mrf.mxu0
    %v8119 = vpop.f32.mrf.mxu0
    %v8120 = vadd.f32 %v110, %v8119
    %8121 = vdwg.mxu0
    %v8122 = vsel %vm1271, %v8120, -inf
    %8123 = vmax.xlane.f32.xlu0 %v8122
    %v8124 = vpop.xlane.xlu0 %8123
    %v8125 = vsub.f32 %v8120, %v8124
    %v8126 = vmul.f32 %v8125, 1.442695
    %v8127 = vpow.pop %v8126
    %v8128 = vsel %vm1271, %v8127, 0.0
    %8129 = vadd.xlane.f32.xlu0 %v8128
    %v8130 = vpop.xlane.xlu0 %8129
    %v8131 = vlog2.pop %v8130
    %v8132 = vmul.f32 %v8131, 0.6931472
    %v8133 = vadd.f32 %v8132, %v8124
    %v8134 = vsub.f32 %v8120, %v8133
    %v8137 = vunpack.c.l.s4 1966171168
    %v8138 = vunpack.c.0.s8 %v8137
    %v8139 = vlaneseq
    %v8140 = vshrl.u32 %v8139, 7
    %v8141 = vsub.s32 %v8138, %v8140
    %v8142 = vrot.slane %v8134, %v8141
    %v8143 = vcombine.high %v8142, %v8142
    %v8145 = vunpack.c.l.s4 1966171168
    %v8146 = vunpack.c.0.s8 %v8145
    %v8147 = vlaneseq
    %v8148 = vshrl.u32 %v8147, 7
    %v8149 = vsub.s32 %v8146, %v8148
    %v8150 = vrot.slane %v8142, %v8149
    %v8152 = vunpack.c.l.s4 1966171168
    %v8153 = vunpack.c.0.s8 %v8152
    %v8154 = vlaneseq
    %v8155 = vshrl.u32 %v8154, 7
    %v8156 = vsub.s32 %v8153, %v8155
    %v8157 = vrot.slane %v8143, %v8156
    %v8158 = vcombine.high %v8150, %v8150
    %v8159 = vcombine.high %v8157, %v8157
    %8164 = vst [vmem:[%s11 + $0x9] sm:$0x1] %v8150
    %8165 = vst [vmem:[%s11 + $0x19] sm:$0x1] %v8157
    %8166 = vst [vmem:[%s11 + $0x29] sm:$0x1] %v8158
    %8167 = vst [vmem:[%s11 + $0x39] sm:$0x1] %v8159
    %v8168 = vlaneseq
    %v8169 = vshrl.u32 %v8168, 7
    %v8170 = vsub.s32 %v577, %v8169
    %v8171 = vrot.slane %v7785, %v8170
    %v8172 = vlaneseq
    %v8173 = vshrl.u32 %v8172, 7
    %v8174 = vsub.s32 %v906, %v8173
    %v8175 = vrot.slane %v7790, %v8174
    %v8176 = vsel %vm911, %v8175, %v8171
    %v8177 = vlaneseq
    %v8178 = vshrl.u32 %v8177, 7
    %v8179 = vsub.s32 %v577, %v8178
    %v8180 = vrot.slane %v7795, %v8179
    %v8181 = vlaneseq
    %v8182 = vshrl.u32 %v8181, 7
    %v8183 = vsub.s32 %v906, %v8182
    %v8184 = vrot.slane %v7800, %v8183
    %v8185 = vsel %vm911, %v8184, %v8180
    %v8186 = vlaneseq
    %v8187 = vshrl.u32 %v8186, 7
    %v8188 = vsub.s32 %v577, %v8187
    %v8189 = vrot.slane %v7805, %v8188
    %v8190 = vlaneseq
    %v8191 = vshrl.u32 %v8190, 7
    %v8192 = vsub.s32 %v906, %v8191
    %v8193 = vrot.slane %v7810, %v8192
    %v8194 = vsel %vm911, %v8193, %v8189
    %v8195 = vlaneseq
    %v8196 = vshrl.u32 %v8195, 7
    %v8197 = vsub.s32 %v577, %v8196
    %v8198 = vrot.slane %v7815, %v8197
    %v8199 = vlaneseq
    %v8200 = vshrl.u32 %v8199, 7
    %v8201 = vsub.s32 %v906, %v8200
    %v8202 = vrot.slane %v7820, %v8201
    %v8203 = vsel %vm911, %v8202, %v8198
    %8208 = vst.msk [vmem:[%s13 + $0x9] sm:$0x1] %vm1539, %v8176
    %8209 = vst.msk [vmem:[%s13 + $0x19] sm:$0x1] %vm1539, %v8185
    %8210 = vst.msk [vmem:[%s13 + $0x29] sm:$0x1] %vm1539, %v8194
    %8211 = vst.msk [vmem:[%s13 + $0x39] sm:$0x1] %vm1539, %v8203
    %v8213 = vunpack.c.l.s4 1966171168
    %v8214 = vunpack.c.0.s8 %v8213
    %v8215 = vlaneseq
    %v8216 = vshrl.u32 %v8215, 7
    %v8217 = vsub.s32 %v8214, %v8216
    %v8218 = vrot.slane %v8046, %v8217
    %v8219 = vcombine.high %v8218, %v8218
    %v8221 = vunpack.c.l.s4 1966171168
    %v8222 = vunpack.c.0.s8 %v8221
    %v8223 = vlaneseq
    %v8224 = vshrl.u32 %v8223, 7
    %v8225 = vsub.s32 %v8222, %v8224
    %v8226 = vrot.slane %v8218, %v8225
    %v8228 = vunpack.c.l.s4 1966171168
    %v8229 = vunpack.c.0.s8 %v8228
    %v8230 = vlaneseq
    %v8231 = vshrl.u32 %v8230, 7
    %v8232 = vsub.s32 %v8229, %v8231
    %v8233 = vrot.slane %v8219, %v8232
    %v8234 = vcombine.high %v8226, %v8226
    %v8235 = vcombine.high %v8233, %v8233
    %v8236 = vlaneseq
    %v8237 = vshrl.u32 %v8236, 7
    %v8238 = vsub.s32 0, %v8237
    %v8239 = vrot.slane %v8226, %v8238
    %v8240 = vlaneseq
    %v8241 = vshrl.u32 %v8240, 7
    %v8242 = vsub.s32 0, %v8241
    %v8243 = vrot.slane %v8233, %v8242
    %v8244 = vlaneseq
    %v8245 = vshrl.u32 %v8244, 7
    %v8246 = vsub.s32 0, %v8245
    %v8247 = vrot.slane %v8234, %v8246
    %v8248 = vlaneseq
    %v8249 = vshrl.u32 %v8248, 7
    %v8250 = vsub.s32 0, %v8249
    %v8251 = vrot.slane %v8235, %v8250
    %8252 = vrot.lane.b32.xlu0 %v8239, 96
    %v8253 = vpop.permute.xlu0 %8252
    %8254 = vrot.lane.b32.xlu0 %v8243, 96
    %v8255 = vpop.permute.xlu0 %8254
    %8256 = vrot.lane.b32.xlu0 %v8247, 96
    %v8257 = vpop.permute.xlu0 %8256
    %8258 = vrot.lane.b32.xlu0 %v8251, 96
    %v8259 = vpop.permute.xlu0 %8258
    %vm8264 = vcmask 253952
    %8265 = vst.msk [vmem:[#allocation8] sm:$0x1] %vm8264, %v8253
    %8266 = vst.msk [vmem:[#allocation8 + $0x1] sm:$0x1] %vm8264, %v8255
    %8267 = vst.msk [vmem:[#allocation8 + $0x2] sm:$0x1] %vm8264, %v8257
    %8268 = vst.msk [vmem:[#allocation8 + $0x3] sm:$0x1] %vm8264, %v8259
    // Predicated region
    $region54: #{tpu_custom_call.1} parent=1 // pred_check
      _
    $region55: #{tpu_custom_call.1} parent=1 // pred_check_branch
      %8270 = sbr.rel (0) target = $region57
    $region56: #{tpu_custom_call.1} parent=1 // pred_region
      _
    $region57: #{tpu_custom_call.1} parent=1 // pred_fallthru
      _
    // Predicated region
    $region58: #{tpu_custom_call.1} parent=1 // pred_check
      _
    $region59: #{tpu_custom_call.1} parent=1 // pred_check_branch
      %8272 = sbr.rel (0) target = $region61
    $region60: #{tpu_custom_call.1} parent=1 // pred_region
      %s8274 = ssub.s32 64, 64
      %8275 = vsyncadd [#allocation5], %s8274
      %s8276 = sshll.u32 [#allocation8], 4
      %s8277 = int_to_ptr.vmem [resolvable:$true] %s8276
      %8282 = dma.vmem_to_hbm [thread:$0]  %s8277, 64, %s12, [#allocation5], 16, 16, 1
    $region61: #{tpu_custom_call.1} parent=1 // pred_fallthru
      _
    // Predicated region
    $region62: #{tpu_custom_call.1} parent=1 // pred_check
      _
    $region63: #{tpu_custom_call.1} parent=1 // pred_check_branch
      %8284 = sbr.rel (0) target = $region65
    $region64: #{tpu_custom_call.1} parent=1 // pred_region
      _
    $region65: #{tpu_custom_call.1} parent=1 // pred_fallthru
      _
    // Predicated region
    $region66: #{tpu_custom_call.1} parent=1 // pred_check
      _
    $region67: #{tpu_custom_call.1} parent=1 // pred_check_branch
      %8286 = sbr.rel (0) target = $region69
    $region68: #{tpu_custom_call.1} parent=1 // pred_region
      _
    $region69: #{tpu_custom_call.1} parent=1 // pred_fallthru
      _
    // Predicated region
    $region70: #{tpu_custom_call.1} parent=1 // pred_check
      _
    $region71: #{tpu_custom_call.1} parent=1 // pred_check_branch
      %8288 = sbr.rel (0) target = $region73
    $region72: #{tpu_custom_call.1} parent=1 // pred_region
      %8289 = dma.done [#allocation5], 64
    $region73: #{tpu_custom_call.1} parent=1 // pred_fallthru
      _
    // Predicated region
    $region74: #{tpu_custom_call.1} parent=1 // pred_check
      _
    $region75: #{tpu_custom_call.1} parent=1 // pred_check_branch
      %8291 = sbr.rel (0) target = $region77
    $region76: #{tpu_custom_call.1} parent=1 // pred_region
      _
    $region77: #{tpu_custom_call.1} parent=1 // pred_fallthru
      _
    %8292 = vsyncpa [#allocation4], 1
    %8293 = vsyncpa [#allocation7], 1
    %8294 = vsyncpa [#allocation5], 1

</llo_original>
